<compile_context>
chip_gen: v7x
topology: tpu7x:2x2x1
jax: 0.10.0
libtpu: 0.0.40
codegen_flags: <defaults>
</compile_context>

<pallas_src>
import functools

import jax
import jax.numpy as jnp
from jax.experimental import pallas as pl
from jax.experimental.pallas import tpu as pltpu

EPS = 1e-5
COMPUTE_DTYPE = jnp.bfloat16          # MXU operand dtype (accumulate in f32)
VMEM_LIMIT_BYTES = 32 * 1024 * 1024   # safe on v5e/v6e/v7x


# ----------------------------- conv kernel --------------------------------- #

def _conv3x3x3_kernel(prev_ref, cur_ref, nxt_ref, scale_ref, shift_ref, w_ref,
                      y_ref, stats_ref, pad_ref, *, apply_input_act):
    """One output D-plane of a 3x3x3 conv (stride=1, pad=1) + BN-stat accum.

    prev/cur/nxt : (1, 1, H, W, Cin)  input planes d-1, d, d+1 (clamped)
    scale/shift  : (1, Cin)           fused BN+ReLU applied to the INPUT
    w            : (27*Cin, Cout)     im2col'd conv weight (bf16)
    y            : (1, 1, H, W, Cout) raw conv output (f32)
    stats        : (2, Cout)          grid-resident [sum; sumsq] accumulator
    pad          : (3, H+2, W+2, Cin) VMEM scratch (zero halo persists)
    """
    n = pl.program_id(0)
    d = pl.program_id(1)
    num_d = pl.num_programs(1)

    H = y_ref.shape[2]
    W = y_ref.shape[3]
    Cin = cur_ref.shape[4]
    Cout = y_ref.shape[4]

    first_step = jnp.logical_and(n == 0, d == 0)

    # Zero the whole scratch once; the halo border then stays zero forever and
    # only the interior is rewritten each step.
    @pl.when(first_step)
    def _():
        pad_ref[...] = jnp.zeros_like(pad_ref)

    def put_plane(kd, ref, valid):
        p = ref[0, 0].astype(jnp.float32)                      # (H, W, Cin)
        if apply_input_act:                                    # fused BN1+ReLU
            p = jnp.maximum(p * scale_ref[...] + shift_ref[...], 0.0)
        p = p * valid                                          # zero D-padding
        pad_ref[kd, 1:H + 1, 1:W + 1, :] = p

    put_plane(0, prev_ref, jnp.where(d > 0, 1.0, 0.0))
    put_plane(1, cur_ref, 1.0)
    put_plane(2, nxt_ref, jnp.where(d < num_d - 1, 1.0, 0.0))

    # In-VMEM im2col: 27 shifted taps laid along K -> one big-K MXU matmul.
    taps = []
    for kd in range(3):
        plane = pad_ref[kd]                                    # (H+2, W+2, Cin)
        for kh in range(3):
            for kw in range(3):
                taps.append(plane[kh:kh + H, kw:kw + W, :].reshape(H * W, Cin))
    patch = jnp.concatenate(taps, axis=-1)                     # (H*W, 27*Cin)

    y = jnp.dot(patch.astype(w_ref.dtype), w_ref[...],
                preferred_element_type=jnp.float32)            # (H*W, Cout) f32

    y_ref[0, 0] = y.reshape(H, W, Cout)

    # Per-channel batch statistics (train-mode BatchNorm3d) accumulated over
    # the whole grid into a resident output block.
    s = jnp.sum(y, axis=0, keepdims=True)                      # (1, Cout)
    ss = jnp.sum(y * y, axis=0, keepdims=True)                 # (1, Cout)

    @pl.when(first_step)
    def _():
        stats_ref[...] = jnp.zeros_like(stats_ref)

    stats_ref[...] = stats_ref[...] + jnp.concatenate([s, ss], axis=0)


def _conv3x3x3_with_stats(x_cl, w_mat, in_scale, in_shift, *, apply_input_act):
    """x_cl: (N, D, H, W, Cin) -> raw conv output (N, D, H, W, Cout), stats (2, Cout)."""
    N, D, H, W, Cin = x_cl.shape
    Cout = w_mat.shape[-1]
    M = N * D * H * W

    kernel = functools.partial(_conv3x3x3_kernel, apply_input_act=apply_input_act)

    plane = (1, 1, H, W, Cin)
    in_specs = [
        # d-1 / d / d+1 planes of the SAME array (clamped at the boundary,
        # masked to zero inside the kernel) -> halo without HBM im2col.
        pl.BlockSpec(plane, lambda n, d: (n, jnp.maximum(d - 1, 0), 0, 0, 0)),
        pl.BlockSpec(plane, lambda n, d: (n, d, 0, 0, 0)),
        pl.BlockSpec(plane, lambda n, d: (n, jnp.minimum(d + 1, D - 1), 0, 0, 0)),
        pl.BlockSpec((1, Cin), lambda n, d: (0, 0)),
        pl.BlockSpec((1, Cin), lambda n, d: (0, 0)),
        pl.BlockSpec(w_mat.shape, lambda n, d: (0, 0)),          # VMEM-resident
    ]
    out_shape = (jax.ShapeDtypeStruct((N, D, H, W, Cout), jnp.float32),
                 jax.ShapeDtypeStruct((2, Cout), jnp.float32))
    out_specs = (pl.BlockSpec((1, 1, H, W, Cout), lambda n, d: (n, d, 0, 0, 0)),
                 pl.BlockSpec((2, Cout), lambda n, d: (0, 0)))   # resident accum

    cost = pl.CostEstimate(
        flops=2 * M * (27 * Cin) * Cout,
        transcendentals=0,
        bytes_accessed=4 * (3 * M * Cin + M * Cout + 2 * Cout)
                       + int(w_mat.size) * 2)

    y, stats = pl.pallas_call(
        kernel,
        grid=(N, D),
        in_specs=in_specs,
        out_specs=out_specs,
        out_shape=out_shape,
        scratch_shapes=[pltpu.VMEM((3, H + 2, W + 2, Cin), jnp.float32)],
        compiler_params=pltpu.CompilerParams(
            # "arbitrary" on both axes: the stats block is revisited by every
            # grid step (global reduction), so the grid must run sequentially.
            dimension_semantics=("arbitrary", "arbitrary"),
            vmem_limit_bytes=VMEM_LIMIT_BYTES),
        cost_estimate=cost,
    )(x_cl, x_cl, x_cl, in_scale, in_shift, w_mat)
    return y, stats


# ------------------------ bn2 + residual + relu ----------------------------- #

def _bn_add_relu_kernel(y_ref, r_ref, scale_ref, shift_ref, o_ref):
    o_ref[...] = jnp.maximum(
        y_ref[...] * scale_ref[...] + shift_ref[...] + r_ref[...], 0.0)


def _pick_tile(m, cap=2048):
    for t in (2048, 1024, 512, 256, 128, 64, 32, 16, 8):
        if t <= cap and m % t == 0:
            return t
    return m


def _bn_add_relu(y_flat, res_flat, scale, shift):
    M, C = y_flat.shape
    tile = _pick_tile(M)
    return pl.pallas_call(
        _bn_add_relu_kernel,
        grid=(M // tile,),
        in_specs=[pl.BlockSpec((tile, C), lambda i: (i, 0)),
                  pl.BlockSpec((tile, C), lambda i: (i, 0)),
                  pl.BlockSpec((1, C), lambda i: (0, 0)),
                  pl.BlockSpec((1, C), lambda i: (0, 0))],
        out_specs=pl.BlockSpec((tile, C), lambda i: (i, 0)),
        out_shape=jax.ShapeDtypeStruct((M, C), jnp.float32),
        compiler_params=pltpu.CompilerParams(
            dimension_semantics=("parallel",),
            vmem_limit_bytes=VMEM_LIMIT_BYTES),
        cost_estimate=pl.CostEstimate(flops=3 * M * C, transcendentals=0,
                                      bytes_accessed=3 * M * C * 4),
    )(y_flat, res_flat, scale, shift)


# ----------------------------- parameters ----------------------------------- #

def _conv_weight_to_matmul(w_oi333):
    # PyTorch (Cout, Cin, 3, 3, 3) -> (27*Cin, Cout), kd-major/kh/kw/cin rows
    # to match the in-kernel tap ordering.
    w = jnp.transpose(w_oi333, (2, 3, 4, 1, 0))
    return w.reshape(-1, w.shape[-1])


def init_params(key, inplanes, planes):
    k1, k2 = jax.random.split(key, 2)
    fan1 = inplanes * 27
    fan2 = planes * 27
    w1 = jax.random.normal(k1, (planes, inplanes, 3, 3, 3), jnp.float32) * (2.0 / fan1) ** 0.5
    w2 = jax.random.normal(k2, (planes, planes, 3, 3, 3), jnp.float32) * (2.0 / fan2) ** 0.5
    return dict(
        w1=_conv_weight_to_matmul(w1).astype(COMPUTE_DTYPE),
        w2=_conv_weight_to_matmul(w2).astype(COMPUTE_DTYPE),
        # fresh nn.BatchNorm3d: weight=1, bias=0
        g1=jnp.ones((planes,), jnp.float32), b1=jnp.zeros((planes,), jnp.float32),
        g2=jnp.ones((planes,), jnp.float32), b2=jnp.zeros((planes,), jnp.float32),
    )


def _bn_scale_shift(stats, gamma, beta, count):
    # train-mode BatchNorm: biased batch variance.
    mean = stats[0] / count
    var = jnp.maximum(stats[1] / count - mean * mean, 0.0)
    scale = gamma * jax.lax.rsqrt(var + EPS)
    shift = beta - mean * scale
    return scale.reshape(1, -1), shift.reshape(1, -1)


# ----------------------------- forward --------------------------------------- #

def basic_block_forward(x_ncdhw, params):
    N, Cin, D, H, W = x_ncdhw.shape
    planes = params["w1"].shape[-1]
    if Cin != planes:
        # TODO(synk): downsample / stride>1 residual path not implemented.
        raise ValueError("BasicBlock with downsample=None requires inplanes == planes")
    M = N * D * H * W

    x_cl = jnp.transpose(x_ncdhw, (0, 2, 3, 4, 1)).astype(jnp.float32)  # NDHWC

    ones = jnp.ones((1, Cin), jnp.float32)
    zeros = jnp.zeros((1, Cin), jnp.float32)

    # conv1 (raw) + bn1 batch statistics
    y1, stats1 = _conv3x3x3_with_stats(x_cl, params["w1"], ones, zeros,
                                       apply_input_act=False)
    scale1, shift1 = _bn_scale_shift(stats1, params["g1"], params["b1"], M)

    # bn1 + relu fused into conv2's input read; conv2 (raw) + bn2 statistics
    y2, stats2 = _conv3x3x3_with_stats(y1, params["w2"], scale1, shift1,
                                       apply_input_act=True)
    scale2, shift2 = _bn_scale_shift(stats2, params["g2"], params["b2"], M)

    # bn2 + residual add + relu (lane-dense (TILE_M, C) tiles)
    out_flat = _bn_add_relu(y2.reshape(M, planes), x_cl.reshape(M, Cin),
                            scale2, shift2)
    out = out_flat.reshape(N, D, H, W, planes)
    return jnp.transpose(out, (0, 4, 1, 2, 3))  # back to NCDHW


# ----------------------------- main ------------------------------------------ #

if __name__ == "__main__":
    key = jax.random.PRNGKey(0)
    kx, kp = jax.random.split(key)

    # stride=1, downsample=None => inplanes == planes.  128 channels keeps
    # every matmul operand / output store lane-dense (C is the lane axis).
    inplanes = planes = 128
    N, D, H, W = 2, 4, 8, 8

    x = jax.random.normal(kx, (N, inplanes, D, H, W), jnp.float32)
    params = init_params(kp, inplanes, planes)

    fwd = jax.jit(functools.partial(basic_block_forward, params=params))
    out = jax.block_until_ready(fwd(x))

    assert out.shape == (N, planes, D, H, W), out.shape
    assert bool(jnp.all(jnp.isfinite(out)))
    print("KERNEL_OK")
</pallas_src>

<mosaic_0001>
module attributes {stable_mosaic.version = 11 : i64} {
  func.func @_conv3x3x3_kernel(%arg0: i32, %arg1: i32, %arg2: memref<1x1x8x8x128xf32, #tpu.memory_space<vmem>>, %arg3: memref<1x1x8x8x128xf32, #tpu.memory_space<vmem>>, %arg4: memref<1x1x8x8x128xf32, #tpu.memory_space<vmem>>, %arg5: memref<1x128xf32, #tpu.memory_space<vmem>>, %arg6: memref<1x128xf32, #tpu.memory_space<vmem>>, %arg7: memref<3456x128xbf16, #tpu.memory_space<vmem>>, %arg8: memref<1x1x8x8x128xf32, #tpu.memory_space<vmem>>, %arg9: memref<2x128xf32, #tpu.memory_space<vmem>>, %arg10: memref<3x10x10x128xf32, #tpu.memory_space<vmem>>) attributes {dimension_semantics = [#tpu.dimension_semantics<arbitrary>, #tpu.dimension_semantics<arbitrary>], iteration_bounds = array<i64: 2, 4>, scalar_prefetch = 0 : i64, scratch_operands = 1 : i64, tpu.core_type = #tpu.core_type<tc>, window_params = [{transform_indices = @transform_0, window_bounds = array<i64: 1, 1, 8, 8, 128>}, {transform_indices = @transform_1, window_bounds = array<i64: 1, 1, 8, 8, 128>}, {transform_indices = @transform_2, window_bounds = array<i64: 1, 1, 8, 8, 128>}, {pipeline_mode = #tpu.pipeline_mode<synchronous>, transform_indices = @transform_3, window_bounds = array<i64: 1, 128>}, {pipeline_mode = #tpu.pipeline_mode<synchronous>, transform_indices = @transform_4, window_bounds = array<i64: 1, 128>}, {pipeline_mode = #tpu.pipeline_mode<synchronous>, transform_indices = @transform_5, window_bounds = array<i64: 3456, 128>}, {transform_indices = @transform_6, window_bounds = array<i64: 1, 1, 8, 8, 128>}, {pipeline_mode = #tpu.pipeline_mode<synchronous>, transform_indices = @transform_7, window_bounds = array<i64: 2, 128>}]} {
    %c0_i32 = arith.constant 0 : i32
    %0 = arith.cmpi eq, %arg0, %c0_i32 : i32
    %c0_i32_0 = arith.constant 0 : i32
    %1 = arith.cmpi eq, %arg1, %c0_i32_0 : i32
    %2 = arith.andi %0, %1 : i1
    %3 = arith.extui %2 : i1 to i32
    %c0_i32_1 = arith.constant 0 : i32
    %4 = arith.cmpi ne, %3, %c0_i32_1 : i32
    scf.if %4 {
      %cst_73 = arith.constant 0.000000e+00 : f32
      %141 = vector.broadcast %cst_73 : f32 to vector<3x10x10x128xf32>
      %c0_74 = arith.constant 0 : index
      %c0_75 = arith.constant 0 : index
      %c0_76 = arith.constant 0 : index
      %c0_77 = arith.constant 0 : index
      %142 = vector.load %arg10[%c0_74, %c0_75, %c0_76, %c0_77] : memref<3x10x10x128xf32, #tpu.memory_space<vmem>>, vector<3x10x10x128xf32>
      tpu.vector_store %arg10[%c0_74, %c0_75, %c0_76, %c0_77], %141 {strides = array<i32>} : memref<3x10x10x128xf32, #tpu.memory_space<vmem>>, vector<3x10x10x128xf32>,
    } else {
    }
    %c0_i32_2 = arith.constant 0 : i32
    %5 = arith.cmpi sgt, %arg1, %c0_i32_2 : i32
    %cst = arith.constant 1.000000e+00 : f32
    %cst_3 = arith.constant 0.000000e+00 : f32
    %6 = arith.select %5, %cst, %cst_3 : f32
    %c0 = arith.constant 0 : index
    %c0_4 = arith.constant 0 : index
    %c0_5 = arith.constant 0 : index
    %c0_6 = arith.constant 0 : index
    %c0_7 = arith.constant 0 : index
    %7 = vector.load %arg2[%c0, %c0_4, %c0_5, %c0_6, %c0_7] : memref<1x1x8x8x128xf32, #tpu.memory_space<vmem>>, vector<1x1x8x8x128xf32>
    %8 = vector.shape_cast %7 : vector<1x1x8x8x128xf32> to vector<8x8x128xf32>
    %c0_8 = arith.constant 0 : index
    %c0_9 = arith.constant 0 : index
    %9 = vector.load %arg5[%c0_8, %c0_9] : memref<1x128xf32, #tpu.memory_space<vmem>>, vector<1x128xf32>
    %10 = vector.shape_cast %9 : vector<1x128xf32> to vector<1x1x128xf32>
    %11 = vector.broadcast %10 : vector<1x1x128xf32> to vector<8x8x128xf32>
    %12 = arith.mulf %8, %11 : vector<8x8x128xf32>
    %c0_10 = arith.constant 0 : index
    %c0_11 = arith.constant 0 : index
    %13 = vector.load %arg6[%c0_10, %c0_11] : memref<1x128xf32, #tpu.memory_space<vmem>>, vector<1x128xf32>
    %14 = vector.shape_cast %13 : vector<1x128xf32> to vector<1x1x128xf32>
    %15 = vector.broadcast %14 : vector<1x1x128xf32> to vector<8x8x128xf32>
    %16 = arith.addf %12, %15 : vector<8x8x128xf32>
    %cst_12 = arith.constant 0.000000e+00 : f32
    %17 = vector.broadcast %cst_12 : f32 to vector<8x8x128xf32>
    %18 = arith.maximumf %16, %17 : vector<8x8x128xf32>
    %19 = vector.broadcast %6 : f32 to vector<8x8x128xf32>
    %20 = arith.mulf %18, %19 : vector<8x8x128xf32>
    %c0_13 = arith.constant 0 : index
    %c1 = arith.constant 1 : index
    %c1_14 = arith.constant 1 : index
    %c0_15 = arith.constant 0 : index
    %21 = vector.load %arg10[%c0_13, %c1, %c1_14, %c0_15] : memref<3x10x10x128xf32, #tpu.memory_space<vmem>>, vector<1x8x8x128xf32>
    %22 = vector.shape_cast %21 : vector<1x8x8x128xf32> to vector<8x8x128xf32>
    %23 = vector.shape_cast %20 : vector<8x8x128xf32> to vector<1x8x8x128xf32>
    tpu.vector_store %arg10[%c0_13, %c1, %c1_14, %c0_15], %23 {strides = array<i32>} : memref<3x10x10x128xf32, #tpu.memory_space<vmem>>, vector<1x8x8x128xf32>,
    %c0_16 = arith.constant 0 : index
    %c0_17 = arith.constant 0 : index
    %c0_18 = arith.constant 0 : index
    %c0_19 = arith.constant 0 : index
    %c0_20 = arith.constant 0 : index
    %24 = vector.load %arg3[%c0_16, %c0_17, %c0_18, %c0_19, %c0_20] : memref<1x1x8x8x128xf32, #tpu.memory_space<vmem>>, vector<1x1x8x8x128xf32>
    %25 = vector.shape_cast %24 : vector<1x1x8x8x128xf32> to vector<8x8x128xf32>
    %c0_21 = arith.constant 0 : index
    %c0_22 = arith.constant 0 : index
    %26 = vector.load %arg5[%c0_21, %c0_22] : memref<1x128xf32, #tpu.memory_space<vmem>>, vector<1x128xf32>
    %27 = vector.shape_cast %26 : vector<1x128xf32> to vector<1x1x128xf32>
    %28 = vector.broadcast %27 : vector<1x1x128xf32> to vector<8x8x128xf32>
    %29 = arith.mulf %25, %28 : vector<8x8x128xf32>
    %c0_23 = arith.constant 0 : index
    %c0_24 = arith.constant 0 : index
    %30 = vector.load %arg6[%c0_23, %c0_24] : memref<1x128xf32, #tpu.memory_space<vmem>>, vector<1x128xf32>
    %31 = vector.shape_cast %30 : vector<1x128xf32> to vector<1x1x128xf32>
    %32 = vector.broadcast %31 : vector<1x1x128xf32> to vector<8x8x128xf32>
    %33 = arith.addf %29, %32 : vector<8x8x128xf32>
    %cst_25 = arith.constant 0.000000e+00 : f32
    %34 = vector.broadcast %cst_25 : f32 to vector<8x8x128xf32>
    %35 = arith.maximumf %33, %34 : vector<8x8x128xf32>
    %cst_26 = arith.constant 1.000000e+00 : f32
    %36 = vector.broadcast %cst_26 : f32 to vector<8x8x128xf32>
    %37 = arith.mulf %35, %36 : vector<8x8x128xf32>
    %c1_27 = arith.constant 1 : index
    %c1_28 = arith.constant 1 : index
    %c1_29 = arith.constant 1 : index
    %c0_30 = arith.constant 0 : index
    %38 = vector.load %arg10[%c1_27, %c1_28, %c1_29, %c0_30] : memref<3x10x10x128xf32, #tpu.memory_space<vmem>>, vector<1x8x8x128xf32>
    %39 = vector.shape_cast %38 : vector<1x8x8x128xf32> to vector<8x8x128xf32>
    %40 = vector.shape_cast %37 : vector<8x8x128xf32> to vector<1x8x8x128xf32>
    tpu.vector_store %arg10[%c1_27, %c1_28, %c1_29, %c0_30], %40 {strides = array<i32>} : memref<3x10x10x128xf32, #tpu.memory_space<vmem>>, vector<1x8x8x128xf32>,
    %c3_i32 = arith.constant 3 : i32
    %41 = arith.cmpi slt, %arg1, %c3_i32 : i32
    %cst_31 = arith.constant 1.000000e+00 : f32
    %cst_32 = arith.constant 0.000000e+00 : f32
    %42 = arith.select %41, %cst_31, %cst_32 : f32
    %c0_33 = arith.constant 0 : index
    %c0_34 = arith.constant 0 : index
    %c0_35 = arith.constant 0 : index
    %c0_36 = arith.constant 0 : index
    %c0_37 = arith.constant 0 : index
    %43 = vector.load %arg4[%c0_33, %c0_34, %c0_35, %c0_36, %c0_37] : memref<1x1x8x8x128xf32, #tpu.memory_space<vmem>>, vector<1x1x8x8x128xf32>
    %44 = vector.shape_cast %43 : vector<1x1x8x8x128xf32> to vector<8x8x128xf32>
    %c0_38 = arith.constant 0 : index
    %c0_39 = arith.constant 0 : index
    %45 = vector.load %arg5[%c0_38, %c0_39] : memref<1x128xf32, #tpu.memory_space<vmem>>, vector<1x128xf32>
    %46 = vector.shape_cast %45 : vector<1x128xf32> to vector<1x1x128xf32>
    %47 = vector.broadcast %46 : vector<1x1x128xf32> to vector<8x8x128xf32>
    %48 = arith.mulf %44, %47 : vector<8x8x128xf32>
    %c0_40 = arith.constant 0 : index
    %c0_41 = arith.constant 0 : index
    %49 = vector.load %arg6[%c0_40, %c0_41] : memref<1x128xf32, #tpu.memory_space<vmem>>, vector<1x128xf32>
    %50 = vector.shape_cast %49 : vector<1x128xf32> to vector<1x1x128xf32>
    %51 = vector.broadcast %50 : vector<1x1x128xf32> to vector<8x8x128xf32>
    %52 = arith.addf %48, %51 : vector<8x8x128xf32>
    %cst_42 = arith.constant 0.000000e+00 : f32
    %53 = vector.broadcast %cst_42 : f32 to vector<8x8x128xf32>
    %54 = arith.maximumf %52, %53 : vector<8x8x128xf32>
    %55 = vector.broadcast %42 : f32 to vector<8x8x128xf32>
    %56 = arith.mulf %54, %55 : vector<8x8x128xf32>
    %c2 = arith.constant 2 : index
    %c1_43 = arith.constant 1 : index
    %c1_44 = arith.constant 1 : index
    %c0_45 = arith.constant 0 : index
    %57 = vector.load %arg10[%c2, %c1_43, %c1_44, %c0_45] : memref<3x10x10x128xf32, #tpu.memory_space<vmem>>, vector<1x8x8x128xf32>
    %58 = vector.shape_cast %57 : vector<1x8x8x128xf32> to vector<8x8x128xf32>
    %59 = vector.shape_cast %56 : vector<8x8x128xf32> to vector<1x8x8x128xf32>
    tpu.vector_store %arg10[%c2, %c1_43, %c1_44, %c0_45], %59 {strides = array<i32>} : memref<3x10x10x128xf32, #tpu.memory_space<vmem>>, vector<1x8x8x128xf32>,
    %c0_46 = arith.constant 0 : index
    %c0_47 = arith.constant 0 : index
    %c0_48 = arith.constant 0 : index
    %c0_49 = arith.constant 0 : index
    %60 = vector.load %arg10[%c0_46, %c0_47, %c0_48, %c0_49] : memref<3x10x10x128xf32, #tpu.memory_space<vmem>>, vector<1x10x10x128xf32>
    %61 = vector.shape_cast %60 : vector<1x10x10x128xf32> to vector<10x10x128xf32>
    %62 = vector.extract_strided_slice %61 {offsets = [0, 0, 0], sizes = [8, 8, 128], strides = [1, 1, 1]} : vector<10x10x128xf32> to vector<8x8x128xf32>
    %63 = vector.shape_cast %62 : vector<8x8x128xf32> to vector<64x128xf32>
    %64 = vector.extract_strided_slice %61 {offsets = [0, 1, 0], sizes = [8, 8, 128], strides = [1, 1, 1]} : vector<10x10x128xf32> to vector<8x8x128xf32>
    %65 = vector.shape_cast %64 : vector<8x8x128xf32> to vector<64x128xf32>
    %66 = vector.extract_strided_slice %61 {offsets = [0, 2, 0], sizes = [8, 8, 128], strides = [1, 1, 1]} : vector<10x10x128xf32> to vector<8x8x128xf32>
    %67 = vector.shape_cast %66 : vector<8x8x128xf32> to vector<64x128xf32>
    %68 = vector.extract_strided_slice %61 {offsets = [1, 0, 0], sizes = [8, 8, 128], strides = [1, 1, 1]} : vector<10x10x128xf32> to vector<8x8x128xf32>
    %69 = vector.shape_cast %68 : vector<8x8x128xf32> to vector<64x128xf32>
    %70 = vector.extract_strided_slice %61 {offsets = [1, 1, 0], sizes = [8, 8, 128], strides = [1, 1, 1]} : vector<10x10x128xf32> to vector<8x8x128xf32>
    %71 = vector.shape_cast %70 : vector<8x8x128xf32> to vector<64x128xf32>
    %72 = vector.extract_strided_slice %61 {offsets = [1, 2, 0], sizes = [8, 8, 128], strides = [1, 1, 1]} : vector<10x10x128xf32> to vector<8x8x128xf32>
    %73 = vector.shape_cast %72 : vector<8x8x128xf32> to vector<64x128xf32>
    %74 = vector.extract_strided_slice %61 {offsets = [2, 0, 0], sizes = [8, 8, 128], strides = [1, 1, 1]} : vector<10x10x128xf32> to vector<8x8x128xf32>
    %75 = vector.shape_cast %74 : vector<8x8x128xf32> to vector<64x128xf32>
    %76 = vector.extract_strided_slice %61 {offsets = [2, 1, 0], sizes = [8, 8, 128], strides = [1, 1, 1]} : vector<10x10x128xf32> to vector<8x8x128xf32>
    %77 = vector.shape_cast %76 : vector<8x8x128xf32> to vector<64x128xf32>
    %78 = vector.extract_strided_slice %61 {offsets = [2, 2, 0], sizes = [8, 8, 128], strides = [1, 1, 1]} : vector<10x10x128xf32> to vector<8x8x128xf32>
    %79 = vector.shape_cast %78 : vector<8x8x128xf32> to vector<64x128xf32>
    %c1_50 = arith.constant 1 : index
    %c0_51 = arith.constant 0 : index
    %c0_52 = arith.constant 0 : index
    %c0_53 = arith.constant 0 : index
    %80 = vector.load %arg10[%c1_50, %c0_51, %c0_52, %c0_53] : memref<3x10x10x128xf32, #tpu.memory_space<vmem>>, vector<1x10x10x128xf32>
    %81 = vector.shape_cast %80 : vector<1x10x10x128xf32> to vector<10x10x128xf32>
    %82 = vector.extract_strided_slice %81 {offsets = [0, 0, 0], sizes = [8, 8, 128], strides = [1, 1, 1]} : vector<10x10x128xf32> to vector<8x8x128xf32>
    %83 = vector.shape_cast %82 : vector<8x8x128xf32> to vector<64x128xf32>
    %84 = vector.extract_strided_slice %81 {offsets = [0, 1, 0], sizes = [8, 8, 128], strides = [1, 1, 1]} : vector<10x10x128xf32> to vector<8x8x128xf32>
    %85 = vector.shape_cast %84 : vector<8x8x128xf32> to vector<64x128xf32>
    %86 = vector.extract_strided_slice %81 {offsets = [0, 2, 0], sizes = [8, 8, 128], strides = [1, 1, 1]} : vector<10x10x128xf32> to vector<8x8x128xf32>
    %87 = vector.shape_cast %86 : vector<8x8x128xf32> to vector<64x128xf32>
    %88 = vector.extract_strided_slice %81 {offsets = [1, 0, 0], sizes = [8, 8, 128], strides = [1, 1, 1]} : vector<10x10x128xf32> to vector<8x8x128xf32>
    %89 = vector.shape_cast %88 : vector<8x8x128xf32> to vector<64x128xf32>
    %90 = vector.extract_strided_slice %81 {offsets = [1, 1, 0], sizes = [8, 8, 128], strides = [1, 1, 1]} : vector<10x10x128xf32> to vector<8x8x128xf32>
    %91 = vector.shape_cast %90 : vector<8x8x128xf32> to vector<64x128xf32>
    %92 = vector.extract_strided_slice %81 {offsets = [1, 2, 0], sizes = [8, 8, 128], strides = [1, 1, 1]} : vector<10x10x128xf32> to vector<8x8x128xf32>
    %93 = vector.shape_cast %92 : vector<8x8x128xf32> to vector<64x128xf32>
    %94 = vector.extract_strided_slice %81 {offsets = [2, 0, 0], sizes = [8, 8, 128], strides = [1, 1, 1]} : vector<10x10x128xf32> to vector<8x8x128xf32>
    %95 = vector.shape_cast %94 : vector<8x8x128xf32> to vector<64x128xf32>
    %96 = vector.extract_strided_slice %81 {offsets = [2, 1, 0], sizes = [8, 8, 128], strides = [1, 1, 1]} : vector<10x10x128xf32> to vector<8x8x128xf32>
    %97 = vector.shape_cast %96 : vector<8x8x128xf32> to vector<64x128xf32>
    %98 = vector.extract_strided_slice %81 {offsets = [2, 2, 0], sizes = [8, 8, 128], strides = [1, 1, 1]} : vector<10x10x128xf32> to vector<8x8x128xf32>
    %99 = vector.shape_cast %98 : vector<8x8x128xf32> to vector<64x128xf32>
    %c2_54 = arith.constant 2 : index
    %c0_55 = arith.constant 0 : index
    %c0_56 = arith.constant 0 : index
    %c0_57 = arith.constant 0 : index
    %100 = vector.load %arg10[%c2_54, %c0_55, %c0_56, %c0_57] : memref<3x10x10x128xf32, #tpu.memory_space<vmem>>, vector<1x10x10x128xf32>
    %101 = vector.shape_cast %100 : vector<1x10x10x128xf32> to vector<10x10x128xf32>
    %102 = vector.extract_strided_slice %101 {offsets = [0, 0, 0], sizes = [8, 8, 128], strides = [1, 1, 1]} : vector<10x10x128xf32> to vector<8x8x128xf32>
    %103 = vector.shape_cast %102 : vector<8x8x128xf32> to vector<64x128xf32>
    %104 = vector.extract_strided_slice %101 {offsets = [0, 1, 0], sizes = [8, 8, 128], strides = [1, 1, 1]} : vector<10x10x128xf32> to vector<8x8x128xf32>
    %105 = vector.shape_cast %104 : vector<8x8x128xf32> to vector<64x128xf32>
    %106 = vector.extract_strided_slice %101 {offsets = [0, 2, 0], sizes = [8, 8, 128], strides = [1, 1, 1]} : vector<10x10x128xf32> to vector<8x8x128xf32>
    %107 = vector.shape_cast %106 : vector<8x8x128xf32> to vector<64x128xf32>
    %108 = vector.extract_strided_slice %101 {offsets = [1, 0, 0], sizes = [8, 8, 128], strides = [1, 1, 1]} : vector<10x10x128xf32> to vector<8x8x128xf32>
    %109 = vector.shape_cast %108 : vector<8x8x128xf32> to vector<64x128xf32>
    %110 = vector.extract_strided_slice %101 {offsets = [1, 1, 0], sizes = [8, 8, 128], strides = [1, 1, 1]} : vector<10x10x128xf32> to vector<8x8x128xf32>
    %111 = vector.shape_cast %110 : vector<8x8x128xf32> to vector<64x128xf32>
    %112 = vector.extract_strided_slice %101 {offsets = [1, 2, 0], sizes = [8, 8, 128], strides = [1, 1, 1]} : vector<10x10x128xf32> to vector<8x8x128xf32>
    %113 = vector.shape_cast %112 : vector<8x8x128xf32> to vector<64x128xf32>
    %114 = vector.extract_strided_slice %101 {offsets = [2, 0, 0], sizes = [8, 8, 128], strides = [1, 1, 1]} : vector<10x10x128xf32> to vector<8x8x128xf32>
    %115 = vector.shape_cast %114 : vector<8x8x128xf32> to vector<64x128xf32>
    %116 = vector.extract_strided_slice %101 {offsets = [2, 1, 0], sizes = [8, 8, 128], strides = [1, 1, 1]} : vector<10x10x128xf32> to vector<8x8x128xf32>
    %117 = vector.shape_cast %116 : vector<8x8x128xf32> to vector<64x128xf32>
    %118 = vector.extract_strided_slice %101 {offsets = [2, 2, 0], sizes = [8, 8, 128], strides = [1, 1, 1]} : vector<10x10x128xf32> to vector<8x8x128xf32>
    %119 = vector.shape_cast %118 : vector<8x8x128xf32> to vector<64x128xf32>
    %120 = tpu.concatenate %63, %65, %67, %69, %71, %73, %75, %77, %79, %83, %85, %87, %89, %91, %93, %95 in 1 : vector<64x128xf32>, vector<64x128xf32>, vector<64x128xf32>, vector<64x128xf32>, vector<64x128xf32>, vector<64x128xf32>, vector<64x128xf32>, vector<64x128xf32>, vector<64x128xf32>, vector<64x128xf32>, vector<64x128xf32>, vector<64x128xf32>, vector<64x128xf32>, vector<64x128xf32>, vector<64x128xf32>, vector<64x128xf32> -> vector<64x2048xf32>
    %121 = tpu.concatenate %97, %99, %103, %105, %107, %109, %111, %113, %115, %117, %119 in 1 : vector<64x128xf32>, vector<64x128xf32>, vector<64x128xf32>, vector<64x128xf32>, vector<64x128xf32>, vector<64x128xf32>, vector<64x128xf32>, vector<64x128xf32>, vector<64x128xf32>, vector<64x128xf32>, vector<64x128xf32> -> vector<64x1408xf32>
    %122 = tpu.concatenate %120, %121 in 1 : vector<64x2048xf32>, vector<64x1408xf32> -> vector<64x3456xf32>
    %123 = arith.truncf %122 : vector<64x3456xf32> to vector<64x3456xbf16>
    %c0_58 = arith.constant 0 : index
    %c0_59 = arith.constant 0 : index
    %124 = vector.load %arg7[%c0_58, %c0_59] : memref<3456x128xbf16, #tpu.memory_space<vmem>>, vector<3456x128xbf16>
    %cst_60 = arith.constant dense<0.000000e+00> : vector<64x128xf32>
    %125 = tpu.matmul %123, %124, %cst_60 {dimension_numbers = #tpu.dot_dimension_numbers<[1], [0], [0], [1], [0, 0, 1, 1], [], []>} : vector<64x3456xbf16>, vector<3456x128xbf16>, vector<64x128xf32> -> vector<64x128xf32>
    %126 = vector.shape_cast %125 : vector<64x128xf32> to vector<8x8x128xf32>
    %c0_61 = arith.constant 0 : index
    %c0_62 = arith.constant 0 : index
    %c0_63 = arith.constant 0 : index
    %c0_64 = arith.constant 0 : index
    %c0_65 = arith.constant 0 : index
    %127 = vector.load %arg8[%c0_61, %c0_62, %c0_63, %c0_64, %c0_65] : memref<1x1x8x8x128xf32, #tpu.memory_space<vmem>>, vector<1x1x8x8x128xf32>
    %128 = vector.shape_cast %127 : vector<1x1x8x8x128xf32> to vector<8x8x128xf32>
    %129 = vector.shape_cast %126 : vector<8x8x128xf32> to vector<1x1x8x8x128xf32>
    tpu.vector_store %arg8[%c0_61, %c0_62, %c0_63, %c0_64, %c0_65], %129 {strides = array<i32>} : memref<1x1x8x8x128xf32, #tpu.memory_space<vmem>>, vector<1x1x8x8x128xf32>,
    %cst_66 = arith.constant dense<0.000000e+00> : vector<128xf32>
    %130 = vector.multi_reduction <add>, %125, %cst_66 [0] : vector<64x128xf32> to vector<128xf32>
    %131 = vector.shape_cast %130 : vector<128xf32> to vector<1x128xf32>
    %132 = arith.mulf %125, %125 : vector<64x128xf32>
    %cst_67 = arith.constant dense<0.000000e+00> : vector<128xf32>
    %133 = vector.multi_reduction <add>, %132, %cst_67 [0] : vector<64x128xf32> to vector<128xf32>
    %134 = vector.shape_cast %133 : vector<128xf32> to vector<1x128xf32>
    %135 = arith.extui %2 : i1 to i32
    %c0_i32_68 = arith.constant 0 : i32
    %136 = arith.cmpi ne, %135, %c0_i32_68 : i32
    scf.if %136 {
      %cst_73 = arith.constant 0.000000e+00 : f32
      %141 = vector.broadcast %cst_73 : f32 to vector<2x128xf32>
      %c0_74 = arith.constant 0 : index
      %c0_75 = arith.constant 0 : index
      %142 = vector.load %arg9[%c0_74, %c0_75] : memref<2x128xf32, #tpu.memory_space<vmem>>, vector<2x128xf32>
      tpu.vector_store %arg9[%c0_74, %c0_75], %141 {strides = array<i32>} : memref<2x128xf32, #tpu.memory_space<vmem>>, vector<2x128xf32>,
    } else {
    }
    %c0_69 = arith.constant 0 : index
    %c0_70 = arith.constant 0 : index
    %137 = vector.load %arg9[%c0_69, %c0_70] : memref<2x128xf32, #tpu.memory_space<vmem>>, vector<2x128xf32>
    %138 = tpu.concatenate %131, %134 in 0 : vector<1x128xf32>, vector<1x128xf32> -> vector<2x128xf32>
    %139 = arith.addf %137, %138 : vector<2x128xf32>
    %c0_71 = arith.constant 0 : index
    %c0_72 = arith.constant 0 : index
    %140 = vector.load %arg9[%c0_71, %c0_72] : memref<2x128xf32, #tpu.memory_space<vmem>>, vector<2x128xf32>
    tpu.vector_store %arg9[%c0_71, %c0_72], %139 {strides = array<i32>} : memref<2x128xf32, #tpu.memory_space<vmem>>, vector<2x128xf32>,
    return
  }
  func.func @transform_0(%arg0: i32, %arg1: i32) -> (i32, i32, i32, i32, i32) {
    %c1_i32 = arith.constant 1 : i32
    %0 = arith.subi %arg1, %c1_i32 : i32
    %c0_i32 = arith.constant 0 : i32
    %1 = arith.maxsi %0, %c0_i32 : i32
    %c0_i32_0 = arith.constant 0 : i32
    %c0_i32_1 = arith.constant 0 : i32
    %c0_i32_2 = arith.constant 0 : i32
    %c0_i32_3 = arith.constant 0 : i32
    return %arg0, %1, %c0_i32_0, %c0_i32_1, %c0_i32_2 : i32, i32, i32, i32, i32
  }
  func.func @transform_1(%arg0: i32, %arg1: i32) -> (i32, i32, i32, i32, i32) {
    %c0_i32 = arith.constant 0 : i32
    %c0_i32_0 = arith.constant 0 : i32
    %c0_i32_1 = arith.constant 0 : i32
    %c0_i32_2 = arith.constant 0 : i32
    return %arg0, %arg1, %c0_i32, %c0_i32_0, %c0_i32_1 : i32, i32, i32, i32, i32
  }
  func.func @transform_2(%arg0: i32, %arg1: i32) -> (i32, i32, i32, i32, i32) {
    %c1_i32 = arith.constant 1 : i32
    %0 = arith.addi %arg1, %c1_i32 : i32
    %c3_i32 = arith.constant 3 : i32
    %1 = arith.minsi %0, %c3_i32 : i32
    %c0_i32 = arith.constant 0 : i32
    %c0_i32_0 = arith.constant 0 : i32
    %c0_i32_1 = arith.constant 0 : i32
    %c0_i32_2 = arith.constant 0 : i32
    return %arg0, %1, %c0_i32, %c0_i32_0, %c0_i32_1 : i32, i32, i32, i32, i32
  }
  func.func @transform_3(%arg0: i32, %arg1: i32) -> (i32, i32) {
    %c0_i32 = arith.constant 0 : i32
    %c0_i32_0 = arith.constant 0 : i32
    %c0_i32_1 = arith.constant 0 : i32
    return %c0_i32, %c0_i32_0 : i32, i32
  }
  func.func @transform_4(%arg0: i32, %arg1: i32) -> (i32, i32) {
    %c0_i32 = arith.constant 0 : i32
    %c0_i32_0 = arith.constant 0 : i32
    %c0_i32_1 = arith.constant 0 : i32
    return %c0_i32, %c0_i32_0 : i32, i32
  }
  func.func @transform_5(%arg0: i32, %arg1: i32) -> (i32, i32) {
    %c0_i32 = arith.constant 0 : i32
    %c0_i32_0 = arith.constant 0 : i32
    %c0_i32_1 = arith.constant 0 : i32
    return %c0_i32, %c0_i32_0 : i32, i32
  }
  func.func @transform_6(%arg0: i32, %arg1: i32) -> (i32, i32, i32, i32, i32) {
    %c0_i32 = arith.constant 0 : i32
    %c0_i32_0 = arith.constant 0 : i32
    %c0_i32_1 = arith.constant 0 : i32
    %c0_i32_2 = arith.constant 0 : i32
    return %arg0, %arg1, %c0_i32, %c0_i32_0, %c0_i32_1 : i32, i32, i32, i32, i32
  }
  func.func @transform_7(%arg0: i32, %arg1: i32) -> (i32, i32) {
    %c0_i32 = arith.constant 0 : i32
    %c0_i32_0 = arith.constant 0 : i32
    %c0_i32_1 = arith.constant 0 : i32
    return %c0_i32, %c0_i32_0 : i32, i32
  }
}

module attributes {stable_mosaic.version = 11 : i64} {
  func.func @_conv3x3x3_kernel(%arg0: i32, %arg1: i32, %arg2: memref<1x1x8x8x128xf32, #tpu.memory_space<vmem>>, %arg3: memref<1x1x8x8x128xf32, #tpu.memory_space<vmem>>, %arg4: memref<1x1x8x8x128xf32, #tpu.memory_space<vmem>>, %arg5: memref<1x128xf32, #tpu.memory_space<vmem>>, %arg6: memref<1x128xf32, #tpu.memory_space<vmem>>, %arg7: memref<3456x128xbf16, #tpu.memory_space<vmem>>, %arg8: memref<1x1x8x8x128xf32, #tpu.memory_space<vmem>>, %arg9: memref<2x128xf32, #tpu.memory_space<vmem>>, %arg10: memref<3x10x10x128xf32, #tpu.memory_space<vmem>>) attributes {dimension_semantics = [#tpu.dimension_semantics<arbitrary>, #tpu.dimension_semantics<arbitrary>], iteration_bounds = array<i64: 2, 4>, scalar_prefetch = 0 : i64, scratch_operands = 1 : i64, tpu.core_type = #tpu.core_type<tc>, window_params = [{transform_indices = @transform_0, window_bounds = array<i64: 1, 1, 8, 8, 128>}, {transform_indices = @transform_1, window_bounds = array<i64: 1, 1, 8, 8, 128>}, {transform_indices = @transform_2, window_bounds = array<i64: 1, 1, 8, 8, 128>}, {pipeline_mode = #tpu.pipeline_mode<synchronous>, transform_indices = @transform_3, window_bounds = array<i64: 1, 128>}, {pipeline_mode = #tpu.pipeline_mode<synchronous>, transform_indices = @transform_4, window_bounds = array<i64: 1, 128>}, {pipeline_mode = #tpu.pipeline_mode<synchronous>, transform_indices = @transform_5, window_bounds = array<i64: 3456, 128>}, {transform_indices = @transform_6, window_bounds = array<i64: 1, 1, 8, 8, 128>}, {pipeline_mode = #tpu.pipeline_mode<synchronous>, transform_indices = @transform_7, window_bounds = array<i64: 2, 128>}]} {
    %c0_i32 = arith.constant 0 : i32
    %0 = arith.cmpi eq, %arg0, %c0_i32 : i32
    %c0_i32_0 = arith.constant 0 : i32
    %1 = arith.cmpi eq, %arg1, %c0_i32_0 : i32
    %2 = arith.andi %0, %1 : i1
    %3 = arith.extui %2 : i1 to i32
    %c0_i32_1 = arith.constant 0 : i32
    %4 = arith.cmpi ne, %3, %c0_i32_1 : i32
    scf.if %4 {
      %cst_58 = arith.constant 0.000000e+00 : f32
      %111 = vector.broadcast %cst_58 : f32 to vector<3x10x10x128xf32>
      %c0_59 = arith.constant 0 : index
      %c0_60 = arith.constant 0 : index
      %c0_61 = arith.constant 0 : index
      %c0_62 = arith.constant 0 : index
      %112 = vector.load %arg10[%c0_59, %c0_60, %c0_61, %c0_62] : memref<3x10x10x128xf32, #tpu.memory_space<vmem>>, vector<3x10x10x128xf32>
      tpu.vector_store %arg10[%c0_59, %c0_60, %c0_61, %c0_62], %111 {strides = array<i32>} : memref<3x10x10x128xf32, #tpu.memory_space<vmem>>, vector<3x10x10x128xf32>,
    } else {
    }
    %c0_i32_2 = arith.constant 0 : i32
    %5 = arith.cmpi sgt, %arg1, %c0_i32_2 : i32
    %cst = arith.constant 1.000000e+00 : f32
    %cst_3 = arith.constant 0.000000e+00 : f32
    %6 = arith.select %5, %cst, %cst_3 : f32
    %c0 = arith.constant 0 : index
    %c0_4 = arith.constant 0 : index
    %c0_5 = arith.constant 0 : index
    %c0_6 = arith.constant 0 : index
    %c0_7 = arith.constant 0 : index
    %7 = vector.load %arg2[%c0, %c0_4, %c0_5, %c0_6, %c0_7] : memref<1x1x8x8x128xf32, #tpu.memory_space<vmem>>, vector<1x1x8x8x128xf32>
    %8 = vector.shape_cast %7 : vector<1x1x8x8x128xf32> to vector<8x8x128xf32>
    %9 = vector.broadcast %6 : f32 to vector<8x8x128xf32>
    %10 = arith.mulf %8, %9 : vector<8x8x128xf32>
    %c0_8 = arith.constant 0 : index
    %c1 = arith.constant 1 : index
    %c1_9 = arith.constant 1 : index
    %c0_10 = arith.constant 0 : index
    %11 = vector.load %arg10[%c0_8, %c1, %c1_9, %c0_10] : memref<3x10x10x128xf32, #tpu.memory_space<vmem>>, vector<1x8x8x128xf32>
    %12 = vector.shape_cast %11 : vector<1x8x8x128xf32> to vector<8x8x128xf32>
    %13 = vector.shape_cast %10 : vector<8x8x128xf32> to vector<1x8x8x128xf32>
    tpu.vector_store %arg10[%c0_8, %c1, %c1_9, %c0_10], %13 {strides = array<i32>} : memref<3x10x10x128xf32, #tpu.memory_space<vmem>>, vector<1x8x8x128xf32>,
    %c0_11 = arith.constant 0 : index
    %c0_12 = arith.constant 0 : index
    %c0_13 = arith.constant 0 : index
    %c0_14 = arith.constant 0 : index
    %c0_15 = arith.constant 0 : index
    %14 = vector.load %arg3[%c0_11, %c0_12, %c0_13, %c0_14, %c0_15] : memref<1x1x8x8x128xf32, #tpu.memory_space<vmem>>, vector<1x1x8x8x128xf32>
    %15 = vector.shape_cast %14 : vector<1x1x8x8x128xf32> to vector<8x8x128xf32>
    %cst_16 = arith.constant 1.000000e+00 : f32
    %16 = vector.broadcast %cst_16 : f32 to vector<8x8x128xf32>
    %17 = arith.mulf %15, %16 : vector<8x8x128xf32>
    %c1_17 = arith.constant 1 : index
    %c1_18 = arith.constant 1 : index
    %c1_19 = arith.constant 1 : index
    %c0_20 = arith.constant 0 : index
    %18 = vector.load %arg10[%c1_17, %c1_18, %c1_19, %c0_20] : memref<3x10x10x128xf32, #tpu.memory_space<vmem>>, vector<1x8x8x128xf32>
    %19 = vector.shape_cast %18 : vector<1x8x8x128xf32> to vector<8x8x128xf32>
    %20 = vector.shape_cast %17 : vector<8x8x128xf32> to vector<1x8x8x128xf32>
    tpu.vector_store %arg10[%c1_17, %c1_18, %c1_19, %c0_20], %20 {strides = array<i32>} : memref<3x10x10x128xf32, #tpu.memory_space<vmem>>, vector<1x8x8x128xf32>,
    %c3_i32 = arith.constant 3 : i32
    %21 = arith.cmpi slt, %arg1, %c3_i32 : i32
    %cst_21 = arith.constant 1.000000e+00 : f32
    %cst_22 = arith.constant 0.000000e+00 : f32
    %22 = arith.select %21, %cst_21, %cst_22 : f32
    %c0_23 = arith.constant 0 : index
    %c0_24 = arith.constant 0 : index
    %c0_25 = arith.constant 0 : index
    %c0_26 = arith.constant 0 : index
    %c0_27 = arith.constant 0 : index
    %23 = vector.load %arg4[%c0_23, %c0_24, %c0_25, %c0_26, %c0_27] : memref<1x1x8x8x128xf32, #tpu.memory_space<vmem>>, vector<1x1x8x8x128xf32>
    %24 = vector.shape_cast %23 : vector<1x1x8x8x128xf32> to vector<8x8x128xf32>
    %25 = vector.broadcast %22 : f32 to vector<8x8x128xf32>
    %26 = arith.mulf %24, %25 : vector<8x8x128xf32>
    %c2 = arith.constant 2 : index
    %c1_28 = arith.constant 1 : index
    %c1_29 = arith.constant 1 : index
    %c0_30 = arith.constant 0 : index
    %27 = vector.load %arg10[%c2, %c1_28, %c1_29, %c0_30] : memref<3x10x10x128xf32, #tpu.memory_space<vmem>>, vector<1x8x8x128xf32>
    %28 = vector.shape_cast %27 : vector<1x8x8x128xf32> to vector<8x8x128xf32>
    %29 = vector.shape_cast %26 : vector<8x8x128xf32> to vector<1x8x8x128xf32>
    tpu.vector_store %arg10[%c2, %c1_28, %c1_29, %c0_30], %29 {strides = array<i32>} : memref<3x10x10x128xf32, #tpu.memory_space<vmem>>, vector<1x8x8x128xf32>,
    %c0_31 = arith.constant 0 : index
    %c0_32 = arith.constant 0 : index
    %c0_33 = arith.constant 0 : index
    %c0_34 = arith.constant 0 : index
    %30 = vector.load %arg10[%c0_31, %c0_32, %c0_33, %c0_34] : memref<3x10x10x128xf32, #tpu.memory_space<vmem>>, vector<1x10x10x128xf32>
    %31 = vector.shape_cast %30 : vector<1x10x10x128xf32> to vector<10x10x128xf32>
    %32 = vector.extract_strided_slice %31 {offsets = [0, 0, 0], sizes = [8, 8, 128], strides = [1, 1, 1]} : vector<10x10x128xf32> to vector<8x8x128xf32>
    %33 = vector.shape_cast %32 : vector<8x8x128xf32> to vector<64x128xf32>
    %34 = vector.extract_strided_slice %31 {offsets = [0, 1, 0], sizes = [8, 8, 128], strides = [1, 1, 1]} : vector<10x10x128xf32> to vector<8x8x128xf32>
    %35 = vector.shape_cast %34 : vector<8x8x128xf32> to vector<64x128xf32>
    %36 = vector.extract_strided_slice %31 {offsets = [0, 2, 0], sizes = [8, 8, 128], strides = [1, 1, 1]} : vector<10x10x128xf32> to vector<8x8x128xf32>
    %37 = vector.shape_cast %36 : vector<8x8x128xf32> to vector<64x128xf32>
    %38 = vector.extract_strided_slice %31 {offsets = [1, 0, 0], sizes = [8, 8, 128], strides = [1, 1, 1]} : vector<10x10x128xf32> to vector<8x8x128xf32>
    %39 = vector.shape_cast %38 : vector<8x8x128xf32> to vector<64x128xf32>
    %40 = vector.extract_strided_slice %31 {offsets = [1, 1, 0], sizes = [8, 8, 128], strides = [1, 1, 1]} : vector<10x10x128xf32> to vector<8x8x128xf32>
    %41 = vector.shape_cast %40 : vector<8x8x128xf32> to vector<64x128xf32>
    %42 = vector.extract_strided_slice %31 {offsets = [1, 2, 0], sizes = [8, 8, 128], strides = [1, 1, 1]} : vector<10x10x128xf32> to vector<8x8x128xf32>
    %43 = vector.shape_cast %42 : vector<8x8x128xf32> to vector<64x128xf32>
    %44 = vector.extract_strided_slice %31 {offsets = [2, 0, 0], sizes = [8, 8, 128], strides = [1, 1, 1]} : vector<10x10x128xf32> to vector<8x8x128xf32>
    %45 = vector.shape_cast %44 : vector<8x8x128xf32> to vector<64x128xf32>
    %46 = vector.extract_strided_slice %31 {offsets = [2, 1, 0], sizes = [8, 8, 128], strides = [1, 1, 1]} : vector<10x10x128xf32> to vector<8x8x128xf32>
    %47 = vector.shape_cast %46 : vector<8x8x128xf32> to vector<64x128xf32>
    %48 = vector.extract_strided_slice %31 {offsets = [2, 2, 0], sizes = [8, 8, 128], strides = [1, 1, 1]} : vector<10x10x128xf32> to vector<8x8x128xf32>
    %49 = vector.shape_cast %48 : vector<8x8x128xf32> to vector<64x128xf32>
    %c1_35 = arith.constant 1 : index
    %c0_36 = arith.constant 0 : index
    %c0_37 = arith.constant 0 : index
    %c0_38 = arith.constant 0 : index
    %50 = vector.load %arg10[%c1_35, %c0_36, %c0_37, %c0_38] : memref<3x10x10x128xf32, #tpu.memory_space<vmem>>, vector<1x10x10x128xf32>
    %51 = vector.shape_cast %50 : vector<1x10x10x128xf32> to vector<10x10x128xf32>
    %52 = vector.extract_strided_slice %51 {offsets = [0, 0, 0], sizes = [8, 8, 128], strides = [1, 1, 1]} : vector<10x10x128xf32> to vector<8x8x128xf32>
    %53 = vector.shape_cast %52 : vector<8x8x128xf32> to vector<64x128xf32>
    %54 = vector.extract_strided_slice %51 {offsets = [0, 1, 0], sizes = [8, 8, 128], strides = [1, 1, 1]} : vector<10x10x128xf32> to vector<8x8x128xf32>
    %55 = vector.shape_cast %54 : vector<8x8x128xf32> to vector<64x128xf32>
    %56 = vector.extract_strided_slice %51 {offsets = [0, 2, 0], sizes = [8, 8, 128], strides = [1, 1, 1]} : vector<10x10x128xf32> to vector<8x8x128xf32>
    %57 = vector.shape_cast %56 : vector<8x8x128xf32> to vector<64x128xf32>
    %58 = vector.extract_strided_slice %51 {offsets = [1, 0, 0], sizes = [8, 8, 128], strides = [1, 1, 1]} : vector<10x10x128xf32> to vector<8x8x128xf32>
    %59 = vector.shape_cast %58 : vector<8x8x128xf32> to vector<64x128xf32>
    %60 = vector.extract_strided_slice %51 {offsets = [1, 1, 0], sizes = [8, 8, 128], strides = [1, 1, 1]} : vector<10x10x128xf32> to vector<8x8x128xf32>
    %61 = vector.shape_cast %60 : vector<8x8x128xf32> to vector<64x128xf32>
    %62 = vector.extract_strided_slice %51 {offsets = [1, 2, 0], sizes = [8, 8, 128], strides = [1, 1, 1]} : vector<10x10x128xf32> to vector<8x8x128xf32>
    %63 = vector.shape_cast %62 : vector<8x8x128xf32> to vector<64x128xf32>
    %64 = vector.extract_strided_slice %51 {offsets = [2, 0, 0], sizes = [8, 8, 128], strides = [1, 1, 1]} : vector<10x10x128xf32> to vector<8x8x128xf32>
    %65 = vector.shape_cast %64 : vector<8x8x128xf32> to vector<64x128xf32>
    %66 = vector.extract_strided_slice %51 {offsets = [2, 1, 0], sizes = [8, 8, 128], strides = [1, 1, 1]} : vector<10x10x128xf32> to vector<8x8x128xf32>
    %67 = vector.shape_cast %66 : vector<8x8x128xf32> to vector<64x128xf32>
    %68 = vector.extract_strided_slice %51 {offsets = [2, 2, 0], sizes = [8, 8, 128], strides = [1, 1, 1]} : vector<10x10x128xf32> to vector<8x8x128xf32>
    %69 = vector.shape_cast %68 : vector<8x8x128xf32> to vector<64x128xf32>
    %c2_39 = arith.constant 2 : index
    %c0_40 = arith.constant 0 : index
    %c0_41 = arith.constant 0 : index
    %c0_42 = arith.constant 0 : index
    %70 = vector.load %arg10[%c2_39, %c0_40, %c0_41, %c0_42] : memref<3x10x10x128xf32, #tpu.memory_space<vmem>>, vector<1x10x10x128xf32>
    %71 = vector.shape_cast %70 : vector<1x10x10x128xf32> to vector<10x10x128xf32>
    %72 = vector.extract_strided_slice %71 {offsets = [0, 0, 0], sizes = [8, 8, 128], strides = [1, 1, 1]} : vector<10x10x128xf32> to vector<8x8x128xf32>
    %73 = vector.shape_cast %72 : vector<8x8x128xf32> to vector<64x128xf32>
    %74 = vector.extract_strided_slice %71 {offsets = [0, 1, 0], sizes = [8, 8, 128], strides = [1, 1, 1]} : vector<10x10x128xf32> to vector<8x8x128xf32>
    %75 = vector.shape_cast %74 : vector<8x8x128xf32> to vector<64x128xf32>
    %76 = vector.extract_strided_slice %71 {offsets = [0, 2, 0], sizes = [8, 8, 128], strides = [1, 1, 1]} : vector<10x10x128xf32> to vector<8x8x128xf32>
    %77 = vector.shape_cast %76 : vector<8x8x128xf32> to vector<64x128xf32>
    %78 = vector.extract_strided_slice %71 {offsets = [1, 0, 0], sizes = [8, 8, 128], strides = [1, 1, 1]} : vector<10x10x128xf32> to vector<8x8x128xf32>
    %79 = vector.shape_cast %78 : vector<8x8x128xf32> to vector<64x128xf32>
    %80 = vector.extract_strided_slice %71 {offsets = [1, 1, 0], sizes = [8, 8, 128], strides = [1, 1, 1]} : vector<10x10x128xf32> to vector<8x8x128xf32>
    %81 = vector.shape_cast %80 : vector<8x8x128xf32> to vector<64x128xf32>
    %82 = vector.extract_strided_slice %71 {offsets = [1, 2, 0], sizes = [8, 8, 128], strides = [1, 1, 1]} : vector<10x10x128xf32> to vector<8x8x128xf32>
    %83 = vector.shape_cast %82 : vector<8x8x128xf32> to vector<64x128xf32>
    %84 = vector.extract_strided_slice %71 {offsets = [2, 0, 0], sizes = [8, 8, 128], strides = [1, 1, 1]} : vector<10x10x128xf32> to vector<8x8x128xf32>
    %85 = vector.shape_cast %84 : vector<8x8x128xf32> to vector<64x128xf32>
    %86 = vector.extract_strided_slice %71 {offsets = [2, 1, 0], sizes = [8, 8, 128], strides = [1, 1, 1]} : vector<10x10x128xf32> to vector<8x8x128xf32>
    %87 = vector.shape_cast %86 : vector<8x8x128xf32> to vector<64x128xf32>
    %88 = vector.extract_strided_slice %71 {offsets = [2, 2, 0], sizes = [8, 8, 128], strides = [1, 1, 1]} : vector<10x10x128xf32> to vector<8x8x128xf32>
    %89 = vector.shape_cast %88 : vector<8x8x128xf32> to vector<64x128xf32>
    %90 = tpu.concatenate %33, %35, %37, %39, %41, %43, %45, %47, %49, %53, %55, %57, %59, %61, %63, %65 in 1 : vector<64x128xf32>, vector<64x128xf32>, vector<64x128xf32>, vector<64x128xf32>, vector<64x128xf32>, vector<64x128xf32>, vector<64x128xf32>, vector<64x128xf32>, vector<64x128xf32>, vector<64x128xf32>, vector<64x128xf32>, vector<64x128xf32>, vector<64x128xf32>, vector<64x128xf32>, vector<64x128xf32>, vector<64x128xf32> -> vector<64x2048xf32>
    %91 = tpu.concatenate %67, %69, %73, %75, %77, %79, %81, %83, %85, %87, %89 in 1 : vector<64x128xf32>, vector<64x128xf32>, vector<64x128xf32>, vector<64x128xf32>, vector<64x128xf32>, vector<64x128xf32>, vector<64x128xf32>, vector<64x128xf32>, vector<64x128xf32>, vector<64x128xf32>, vector<64x128xf32> -> vector<64x1408xf32>
    %92 = tpu.concatenate %90, %91 in 1 : vector<64x2048xf32>, vector<64x1408xf32> -> vector<64x3456xf32>
    %93 = arith.truncf %92 : vector<64x3456xf32> to vector<64x3456xbf16>
    %c0_43 = arith.constant 0 : index
    %c0_44 = arith.constant 0 : index
    %94 = vector.load %arg7[%c0_43, %c0_44] : memref<3456x128xbf16, #tpu.memory_space<vmem>>, vector<3456x128xbf16>
    %cst_45 = arith.constant dense<0.000000e+00> : vector<64x128xf32>
    %95 = tpu.matmul %93, %94, %cst_45 {dimension_numbers = #tpu.dot_dimension_numbers<[1], [0], [0], [1], [0, 0, 1, 1], [], []>} : vector<64x3456xbf16>, vector<3456x128xbf16>, vector<64x128xf32> -> vector<64x128xf32>
    %96 = vector.shape_cast %95 : vector<64x128xf32> to vector<8x8x128xf32>
    %c0_46 = arith.constant 0 : index
    %c0_47 = arith.constant 0 : index
    %c0_48 = arith.constant 0 : index
    %c0_49 = arith.constant 0 : index
    %c0_50 = arith.constant 0 : index
    %97 = vector.load %arg8[%c0_46, %c0_47, %c0_48, %c0_49, %c0_50] : memref<1x1x8x8x128xf32, #tpu.memory_space<vmem>>, vector<1x1x8x8x128xf32>
    %98 = vector.shape_cast %97 : vector<1x1x8x8x128xf32> to vector<8x8x128xf32>
    %99 = vector.shape_cast %96 : vector<8x8x128xf32> to vector<1x1x8x8x128xf32>
    tpu.vector_store %arg8[%c0_46, %c0_47, %c0_48, %c0_49, %c0_50], %99 {strides = array<i32>} : memref<1x1x8x8x128xf32, #tpu.memory_space<vmem>>, vector<1x1x8x8x128xf32>,
    %cst_51 = arith.constant dense<0.000000e+00> : vector<128xf32>
    %100 = vector.multi_reduction <add>, %95, %cst_51 [0] : vector<64x128xf32> to vector<128xf32>
    %101 = vector.shape_cast %100 : vector<128xf32> to vector<1x128xf32>
    %102 = arith.mulf %95, %95 : vector<64x128xf32>
    %cst_52 = arith.constant dense<0.000000e+00> : vector<128xf32>
    %103 = vector.multi_reduction <add>, %102, %cst_52 [0] : vector<64x128xf32> to vector<128xf32>
    %104 = vector.shape_cast %103 : vector<128xf32> to vector<1x128xf32>
    %105 = arith.extui %2 : i1 to i32
    %c0_i32_53 = arith.constant 0 : i32
    %106 = arith.cmpi ne, %105, %c0_i32_53 : i32
    scf.if %106 {
      %cst_58 = arith.constant 0.000000e+00 : f32
      %111 = vector.broadcast %cst_58 : f32 to vector<2x128xf32>
      %c0_59 = arith.constant 0 : index
      %c0_60 = arith.constant 0 : index
      %112 = vector.load %arg9[%c0_59, %c0_60] : memref<2x128xf32, #tpu.memory_space<vmem>>, vector<2x128xf32>
      tpu.vector_store %arg9[%c0_59, %c0_60], %111 {strides = array<i32>} : memref<2x128xf32, #tpu.memory_space<vmem>>, vector<2x128xf32>,
    } else {
    }
    %c0_54 = arith.constant 0 : index
    %c0_55 = arith.constant 0 : index
    %107 = vector.load %arg9[%c0_54, %c0_55] : memref<2x128xf32, #tpu.memory_space<vmem>>, vector<2x128xf32>
    %108 = tpu.concatenate %101, %104 in 0 : vector<1x128xf32>, vector<1x128xf32> -> vector<2x128xf32>
    %109 = arith.addf %107, %108 : vector<2x128xf32>
    %c0_56 = arith.constant 0 : index
    %c0_57 = arith.constant 0 : index
    %110 = vector.load %arg9[%c0_56, %c0_57] : memref<2x128xf32, #tpu.memory_space<vmem>>, vector<2x128xf32>
    tpu.vector_store %arg9[%c0_56, %c0_57], %109 {strides = array<i32>} : memref<2x128xf32, #tpu.memory_space<vmem>>, vector<2x128xf32>,
    return
  }
  func.func @transform_0(%arg0: i32, %arg1: i32) -> (i32, i32, i32, i32, i32) {
    %c1_i32 = arith.constant 1 : i32
    %0 = arith.subi %arg1, %c1_i32 : i32
    %c0_i32 = arith.constant 0 : i32
    %1 = arith.maxsi %0, %c0_i32 : i32
    %c0_i32_0 = arith.constant 0 : i32
    %c0_i32_1 = arith.constant 0 : i32
    %c0_i32_2 = arith.constant 0 : i32
    %c0_i32_3 = arith.constant 0 : i32
    return %arg0, %1, %c0_i32_0, %c0_i32_1, %c0_i32_2 : i32, i32, i32, i32, i32
  }
  func.func @transform_1(%arg0: i32, %arg1: i32) -> (i32, i32, i32, i32, i32) {
    %c0_i32 = arith.constant 0 : i32
    %c0_i32_0 = arith.constant 0 : i32
    %c0_i32_1 = arith.constant 0 : i32
    %c0_i32_2 = arith.constant 0 : i32
    return %arg0, %arg1, %c0_i32, %c0_i32_0, %c0_i32_1 : i32, i32, i32, i32, i32
  }
  func.func @transform_2(%arg0: i32, %arg1: i32) -> (i32, i32, i32, i32, i32) {
    %c1_i32 = arith.constant 1 : i32
    %0 = arith.addi %arg1, %c1_i32 : i32
    %c3_i32 = arith.constant 3 : i32
    %1 = arith.minsi %0, %c3_i32 : i32
    %c0_i32 = arith.constant 0 : i32
    %c0_i32_0 = arith.constant 0 : i32
    %c0_i32_1 = arith.constant 0 : i32
    %c0_i32_2 = arith.constant 0 : i32
    return %arg0, %1, %c0_i32, %c0_i32_0, %c0_i32_1 : i32, i32, i32, i32, i32
  }
  func.func @transform_3(%arg0: i32, %arg1: i32) -> (i32, i32) {
    %c0_i32 = arith.constant 0 : i32
    %c0_i32_0 = arith.constant 0 : i32
    %c0_i32_1 = arith.constant 0 : i32
    return %c0_i32, %c0_i32_0 : i32, i32
  }
  func.func @transform_4(%arg0: i32, %arg1: i32) -> (i32, i32) {
    %c0_i32 = arith.constant 0 : i32
    %c0_i32_0 = arith.constant 0 : i32
    %c0_i32_1 = arith.constant 0 : i32
    return %c0_i32, %c0_i32_0 : i32, i32
  }
  func.func @transform_5(%arg0: i32, %arg1: i32) -> (i32, i32) {
    %c0_i32 = arith.constant 0 : i32
    %c0_i32_0 = arith.constant 0 : i32
    %c0_i32_1 = arith.constant 0 : i32
    return %c0_i32, %c0_i32_0 : i32, i32
  }
  func.func @transform_6(%arg0: i32, %arg1: i32) -> (i32, i32, i32, i32, i32) {
    %c0_i32 = arith.constant 0 : i32
    %c0_i32_0 = arith.constant 0 : i32
    %c0_i32_1 = arith.constant 0 : i32
    %c0_i32_2 = arith.constant 0 : i32
    return %arg0, %arg1, %c0_i32, %c0_i32_0, %c0_i32_1 : i32, i32, i32, i32, i32
  }
  func.func @transform_7(%arg0: i32, %arg1: i32) -> (i32, i32) {
    %c0_i32 = arith.constant 0 : i32
    %c0_i32_0 = arith.constant 0 : i32
    %c0_i32_1 = arith.constant 0 : i32
    return %c0_i32, %c0_i32_0 : i32, i32
  }
}

module attributes {stable_mosaic.version = 11 : i64} {
  func.func @_bn_add_relu_kernel(%arg0: i32, %arg1: memref<512x128xf32, #tpu.memory_space<vmem>>, %arg2: memref<512x128xf32, #tpu.memory_space<vmem>>, %arg3: memref<1x128xf32, #tpu.memory_space<vmem>>, %arg4: memref<1x128xf32, #tpu.memory_space<vmem>>, %arg5: memref<512x128xf32, #tpu.memory_space<vmem>>) attributes {dimension_semantics = [#tpu.dimension_semantics<parallel>], iteration_bounds = array<i64: 1>, scalar_prefetch = 0 : i64, scratch_operands = 0 : i64, tpu.core_type = #tpu.core_type<tc>, window_params = [{transform_indices = @transform_0, window_bounds = array<i64: 512, 128>}, {transform_indices = @transform_1, window_bounds = array<i64: 512, 128>}, {pipeline_mode = #tpu.pipeline_mode<synchronous>, transform_indices = @transform_2, window_bounds = array<i64: 1, 128>}, {pipeline_mode = #tpu.pipeline_mode<synchronous>, transform_indices = @transform_3, window_bounds = array<i64: 1, 128>}, {transform_indices = @transform_4, window_bounds = array<i64: 512, 128>}]} {
    %c0 = arith.constant 0 : index
    %c0_0 = arith.constant 0 : index
    %0 = vector.load %arg1[%c0, %c0_0] : memref<512x128xf32, #tpu.memory_space<vmem>>, vector<512x128xf32>
    %c0_1 = arith.constant 0 : index
    %c0_2 = arith.constant 0 : index
    %1 = vector.load %arg3[%c0_1, %c0_2] : memref<1x128xf32, #tpu.memory_space<vmem>>, vector<1x128xf32>
    %2 = vector.broadcast %1 : vector<1x128xf32> to vector<512x128xf32>
    %3 = arith.mulf %0, %2 : vector<512x128xf32>
    %c0_3 = arith.constant 0 : index
    %c0_4 = arith.constant 0 : index
    %4 = vector.load %arg4[%c0_3, %c0_4] : memref<1x128xf32, #tpu.memory_space<vmem>>, vector<1x128xf32>
    %5 = vector.broadcast %4 : vector<1x128xf32> to vector<512x128xf32>
    %6 = arith.addf %3, %5 : vector<512x128xf32>
    %c0_5 = arith.constant 0 : index
    %c0_6 = arith.constant 0 : index
    %7 = vector.load %arg2[%c0_5, %c0_6] : memref<512x128xf32, #tpu.memory_space<vmem>>, vector<512x128xf32>
    %8 = arith.addf %6, %7 : vector<512x128xf32>
    %cst = arith.constant 0.000000e+00 : f32
    %9 = vector.broadcast %cst : f32 to vector<512x128xf32>
    %10 = arith.maximumf %8, %9 : vector<512x128xf32>
    %c0_7 = arith.constant 0 : index
    %c0_8 = arith.constant 0 : index
    %11 = vector.load %arg5[%c0_7, %c0_8] : memref<512x128xf32, #tpu.memory_space<vmem>>, vector<512x128xf32>
    tpu.vector_store %arg5[%c0_7, %c0_8], %10 {strides = array<i32>} : memref<512x128xf32, #tpu.memory_space<vmem>>, vector<512x128xf32>,
    return
  }
  func.func @transform_0(%arg0: i32) -> (i32, i32) {
    %c0_i32 = arith.constant 0 : i32
    %c0_i32_0 = arith.constant 0 : i32
    return %arg0, %c0_i32 : i32, i32
  }
  func.func @transform_1(%arg0: i32) -> (i32, i32) {
    %c0_i32 = arith.constant 0 : i32
    %c0_i32_0 = arith.constant 0 : i32
    return %arg0, %c0_i32 : i32, i32
  }
  func.func @transform_2(%arg0: i32) -> (i32, i32) {
    %c0_i32 = arith.constant 0 : i32
    %c0_i32_0 = arith.constant 0 : i32
    %c0_i32_1 = arith.constant 0 : i32
    return %c0_i32, %c0_i32_0 : i32, i32
  }
  func.func @transform_3(%arg0: i32) -> (i32, i32) {
    %c0_i32 = arith.constant 0 : i32
    %c0_i32_0 = arith.constant 0 : i32
    %c0_i32_1 = arith.constant 0 : i32
    return %c0_i32, %c0_i32_0 : i32, i32
  }
  func.func @transform_4(%arg0: i32) -> (i32, i32) {
    %c0_i32 = arith.constant 0 : i32
    %c0_i32_0 = arith.constant 0 : i32
    return %arg0, %c0_i32 : i32, i32
  }
}

</mosaic_0001>

<llo_original>
// kernel: basic_block_forward.5
$region0: #{basic_block_forward.5}
  #allocation0 [shape = 'u32[]', space=smem, size = 0x4, offset = 0x4, fixed_abs, tag = 'smem constant byte address 0x4 - core index']
  #allocation1 [shape = 'u32[144,128]{1,0:T(1,128)}', space=vmem, size = 0x12000, scoped, tag = 'internal scratch']
  %s0 = inlined_call_operand.vmem [shape: f32[512,128], index: 0, kind: input, shape index: {}]
  %s1 = inlined_call_operand.vmem [shape: f32[512,128], index: 1, kind: input, shape index: {}]
  %s2 = inlined_call_operand.vmem [shape: f32[1,128], index: 2, kind: input, shape index: {}]
  %s3 = inlined_call_operand.vmem [shape: f32[1,128], index: 3, kind: input, shape index: {}]
  %s4 = inlined_call_operand.hbm [shape: f32[512,128], index: 4, kind: output, shape index: {}]
  %s5 = sld [smem:[#allocation0]]
  $region26: #{basic_block_forward.5} parent=0
    _
  %s7 = ssub.s32 1, %s5
  %s8 = scalar_select 0, %s7, %s5
  $region1: #{basic_block_forward.5} parent=0
    #allocation2 [shape = 'u8[262144]{0}', space=vmem, size = 0x40000, scoped, tag = 'output window, operand 0, single buffered']
    #allocation3 [shape = 's32[1]{0}', space=sflag, size = 0x4, scoped, tag = 'scoped memory for basic_block_forward.5']
    %9 = vsyncpa [#allocation3], 0
    // Predicated region
    $region2: #{basic_block_forward.5} parent=1 // pred_check
      _
    $region3: #{basic_block_forward.5} parent=1 // pred_check_branch
      %11 = sbr.rel (0) target = $region5
    $region4: #{basic_block_forward.5} parent=1 // pred_region
      _
    $region5: #{basic_block_forward.5} parent=1 // pred_fallthru
      _
    // Predicated region
    $region6: #{basic_block_forward.5} parent=1 // pred_check
      _
    $region7: #{basic_block_forward.5} parent=1 // pred_check_branch
      %13 = sbr.rel (0) target = $region9
    $region8: #{basic_block_forward.5} parent=1 // pred_region
      _
    $region9: #{basic_block_forward.5} parent=1 // pred_fallthru
      _
    // Predicated region
    $region10: #{basic_block_forward.5} parent=1 // pred_check
      _
    $region11: #{basic_block_forward.5} parent=1 // pred_check_branch
      %15 = sbr.rel (0) target = $region13
    $region12: #{basic_block_forward.5} parent=1 // pred_region
      _
    $region13: #{basic_block_forward.5} parent=1 // pred_fallthru
      _
    // Predicated region
    $region14: #{basic_block_forward.5} parent=1 // pred_check
      _
    $region15: #{basic_block_forward.5} parent=1 // pred_check_branch
      %17 = sbr.rel (0) target = $region17
    $region16: #{basic_block_forward.5} parent=1 // pred_region
      _
    $region17: #{basic_block_forward.5} parent=1 // pred_fallthru
      _
    %v18 = vld [vmem:[%s0] sm:$0xff]
    %v19 = vld [vmem:[%s0 + $0x8] sm:$0xff]
    %v20 = vld [vmem:[%s0 + $0x10] sm:$0xff]
    %v21 = vld [vmem:[%s0 + $0x18] sm:$0xff]
    %v22 = vld [vmem:[%s0 + $0x20] sm:$0xff]
    %v23 = vld [vmem:[%s0 + $0x28] sm:$0xff]
    %v24 = vld [vmem:[%s0 + $0x30] sm:$0xff]
    %v25 = vld [vmem:[%s0 + $0x38] sm:$0xff]
    %v26 = vld [vmem:[%s0 + $0x40] sm:$0xff]
    %v27 = vld [vmem:[%s0 + $0x48] sm:$0xff]
    %v28 = vld [vmem:[%s0 + $0x50] sm:$0xff]
    %v29 = vld [vmem:[%s0 + $0x58] sm:$0xff]
    %v30 = vld [vmem:[%s0 + $0x60] sm:$0xff]
    %v31 = vld [vmem:[%s0 + $0x68] sm:$0xff]
    %v32 = vld [vmem:[%s0 + $0x70] sm:$0xff]
    %v33 = vld [vmem:[%s0 + $0x78] sm:$0xff]
    %v34 = vld [vmem:[%s0 + $0x80] sm:$0xff]
    %v35 = vld [vmem:[%s0 + $0x88] sm:$0xff]
    %v36 = vld [vmem:[%s0 + $0x90] sm:$0xff]
    %v37 = vld [vmem:[%s0 + $0x98] sm:$0xff]
    %v38 = vld [vmem:[%s0 + $0xa0] sm:$0xff]
    %v39 = vld [vmem:[%s0 + $0xa8] sm:$0xff]
    %v40 = vld [vmem:[%s0 + $0xb0] sm:$0xff]
    %v41 = vld [vmem:[%s0 + $0xb8] sm:$0xff]
    %v42 = vld [vmem:[%s0 + $0xc0] sm:$0xff]
    %v43 = vld [vmem:[%s0 + $0xc8] sm:$0xff]
    %v44 = vld [vmem:[%s0 + $0xd0] sm:$0xff]
    %v45 = vld [vmem:[%s0 + $0xd8] sm:$0xff]
    %v46 = vld [vmem:[%s0 + $0xe0] sm:$0xff]
    %v47 = vld [vmem:[%s0 + $0xe8] sm:$0xff]
    %v48 = vld [vmem:[%s0 + $0xf0] sm:$0xff]
    %v49 = vld [vmem:[%s0 + $0xf8] sm:$0xff]
    %v50 = vld [vmem:[%s0 + $0x100] sm:$0xff]
    %v51 = vld [vmem:[%s0 + $0x108] sm:$0xff]
    %v52 = vld [vmem:[%s0 + $0x110] sm:$0xff]
    %v53 = vld [vmem:[%s0 + $0x118] sm:$0xff]
    %v54 = vld [vmem:[%s0 + $0x120] sm:$0xff]
    %v55 = vld [vmem:[%s0 + $0x128] sm:$0xff]
    %v56 = vld [vmem:[%s0 + $0x130] sm:$0xff]
    %v57 = vld [vmem:[%s0 + $0x138] sm:$0xff]
    %v58 = vld [vmem:[%s0 + $0x140] sm:$0xff]
    %v59 = vld [vmem:[%s0 + $0x148] sm:$0xff]
    %v60 = vld [vmem:[%s0 + $0x150] sm:$0xff]
    %v61 = vld [vmem:[%s0 + $0x158] sm:$0xff]
    %v62 = vld [vmem:[%s0 + $0x160] sm:$0xff]
    %v63 = vld [vmem:[%s0 + $0x168] sm:$0xff]
    %v64 = vld [vmem:[%s0 + $0x170] sm:$0xff]
    %v65 = vld [vmem:[%s0 + $0x178] sm:$0xff]
    %v66 = vld [vmem:[%s0 + $0x180] sm:$0xff]
    %v67 = vld [vmem:[%s0 + $0x188] sm:$0xff]
    %v68 = vld [vmem:[%s0 + $0x190] sm:$0xff]
    %v69 = vld [vmem:[%s0 + $0x198] sm:$0xff]
    %v70 = vld [vmem:[%s0 + $0x1a0] sm:$0xff]
    %v71 = vld [vmem:[%s0 + $0x1a8] sm:$0xff]
    %v72 = vld [vmem:[%s0 + $0x1b0] sm:$0xff]
    %v73 = vld [vmem:[%s0 + $0x1b8] sm:$0xff]
    %v74 = vld [vmem:[%s0 + $0x1c0] sm:$0xff]
    %v75 = vld [vmem:[%s0 + $0x1c8] sm:$0xff]
    %v76 = vld [vmem:[%s0 + $0x1d0] sm:$0xff]
    %v77 = vld [vmem:[%s0 + $0x1d8] sm:$0xff]
    %v78 = vld [vmem:[%s0 + $0x1e0] sm:$0xff]
    %v79 = vld [vmem:[%s0 + $0x1e8] sm:$0xff]
    %v80 = vld [vmem:[%s0 + $0x1f0] sm:$0xff]
    %v81 = vld [vmem:[%s0 + $0x1f8] sm:$0xff]
    %v82 = vld [vmem:[%s2] sm:$0x1]
    %v84 = vlaneseq
    %v85 = vshrl.u32 %v84, 7
    %v86 = vsub.s32 0, %v85
    %v87 = vrot.slane %v82, %v86
    %v89 = vmul.f32 %v18, %v87
    %v90 = vmul.f32 %v19, %v87
    %v91 = vmul.f32 %v20, %v87
    %v92 = vmul.f32 %v21, %v87
    %v93 = vmul.f32 %v22, %v87
    %v94 = vmul.f32 %v23, %v87
    %v95 = vmul.f32 %v24, %v87
    %v96 = vmul.f32 %v25, %v87
    %v97 = vmul.f32 %v26, %v87
    %v98 = vmul.f32 %v27, %v87
    %v99 = vmul.f32 %v28, %v87
    %v100 = vmul.f32 %v29, %v87
    %v101 = vmul.f32 %v30, %v87
    %v102 = vmul.f32 %v31, %v87
    %v103 = vmul.f32 %v32, %v87
    %v104 = vmul.f32 %v33, %v87
    %v105 = vmul.f32 %v34, %v87
    %v106 = vmul.f32 %v35, %v87
    %v107 = vmul.f32 %v36, %v87
    %v108 = vmul.f32 %v37, %v87
    %v109 = vmul.f32 %v38, %v87
    %v110 = vmul.f32 %v39, %v87
    %v111 = vmul.f32 %v40, %v87
    %v112 = vmul.f32 %v41, %v87
    %v113 = vmul.f32 %v42, %v87
    %v114 = vmul.f32 %v43, %v87
    %v115 = vmul.f32 %v44, %v87
    %v116 = vmul.f32 %v45, %v87
    %v117 = vmul.f32 %v46, %v87
    %v118 = vmul.f32 %v47, %v87
    %v119 = vmul.f32 %v48, %v87
    %v120 = vmul.f32 %v49, %v87
    %v121 = vmul.f32 %v50, %v87
    %v122 = vmul.f32 %v51, %v87
    %v123 = vmul.f32 %v52, %v87
    %v124 = vmul.f32 %v53, %v87
    %v125 = vmul.f32 %v54, %v87
    %v126 = vmul.f32 %v55, %v87
    %v127 = vmul.f32 %v56, %v87
    %v128 = vmul.f32 %v57, %v87
    %v129 = vmul.f32 %v58, %v87
    %v130 = vmul.f32 %v59, %v87
    %v131 = vmul.f32 %v60, %v87
    %v132 = vmul.f32 %v61, %v87
    %v133 = vmul.f32 %v62, %v87
    %v134 = vmul.f32 %v63, %v87
    %v135 = vmul.f32 %v64, %v87
    %v136 = vmul.f32 %v65, %v87
    %v137 = vmul.f32 %v66, %v87
    %v138 = vmul.f32 %v67, %v87
    %v139 = vmul.f32 %v68, %v87
    %v140 = vmul.f32 %v69, %v87
    %v141 = vmul.f32 %v70, %v87
    %v142 = vmul.f32 %v71, %v87
    %v143 = vmul.f32 %v72, %v87
    %v144 = vmul.f32 %v73, %v87
    %v145 = vmul.f32 %v74, %v87
    %v146 = vmul.f32 %v75, %v87
    %v147 = vmul.f32 %v76, %v87
    %v148 = vmul.f32 %v77, %v87
    %v149 = vmul.f32 %v78, %v87
    %v150 = vmul.f32 %v79, %v87
    %v151 = vmul.f32 %v80, %v87
    %v152 = vmul.f32 %v81, %v87
    %v153 = vld [vmem:[%s3] sm:$0x1]
    %v155 = vlaneseq
    %v156 = vshrl.u32 %v155, 7
    %v157 = vsub.s32 0, %v156
    %v158 = vrot.slane %v153, %v157
    %v160 = vadd.f32 %v89, %v158
    %v161 = vadd.f32 %v90, %v158
    %v162 = vadd.f32 %v91, %v158
    %v163 = vadd.f32 %v92, %v158
    %v164 = vadd.f32 %v93, %v158
    %v165 = vadd.f32 %v94, %v158
    %v166 = vadd.f32 %v95, %v158
    %v167 = vadd.f32 %v96, %v158
    %v168 = vadd.f32 %v97, %v158
    %v169 = vadd.f32 %v98, %v158
    %v170 = vadd.f32 %v99, %v158
    %v171 = vadd.f32 %v100, %v158
    %v172 = vadd.f32 %v101, %v158
    %v173 = vadd.f32 %v102, %v158
    %v174 = vadd.f32 %v103, %v158
    %v175 = vadd.f32 %v104, %v158
    %v176 = vadd.f32 %v105, %v158
    %v177 = vadd.f32 %v106, %v158
    %v178 = vadd.f32 %v107, %v158
    %v179 = vadd.f32 %v108, %v158
    %v180 = vadd.f32 %v109, %v158
    %v181 = vadd.f32 %v110, %v158
    %v182 = vadd.f32 %v111, %v158
    %v183 = vadd.f32 %v112, %v158
    %v184 = vadd.f32 %v113, %v158
    %v185 = vadd.f32 %v114, %v158
    %v186 = vadd.f32 %v115, %v158
    %v187 = vadd.f32 %v116, %v158
    %v188 = vadd.f32 %v117, %v158
    %v189 = vadd.f32 %v118, %v158
    %v190 = vadd.f32 %v119, %v158
    %v191 = vadd.f32 %v120, %v158
    %v192 = vadd.f32 %v121, %v158
    %v193 = vadd.f32 %v122, %v158
    %v194 = vadd.f32 %v123, %v158
    %v195 = vadd.f32 %v124, %v158
    %v196 = vadd.f32 %v125, %v158
    %v197 = vadd.f32 %v126, %v158
    %v198 = vadd.f32 %v127, %v158
    %v199 = vadd.f32 %v128, %v158
    %v200 = vadd.f32 %v129, %v158
    %v201 = vadd.f32 %v130, %v158
    %v202 = vadd.f32 %v131, %v158
    %v203 = vadd.f32 %v132, %v158
    %v204 = vadd.f32 %v133, %v158
    %v205 = vadd.f32 %v134, %v158
    %v206 = vadd.f32 %v135, %v158
    %v207 = vadd.f32 %v136, %v158
    %v208 = vadd.f32 %v137, %v158
    %v209 = vadd.f32 %v138, %v158
    %v210 = vadd.f32 %v139, %v158
    %v211 = vadd.f32 %v140, %v158
    %v212 = vadd.f32 %v141, %v158
    %v213 = vadd.f32 %v142, %v158
    %v214 = vadd.f32 %v143, %v158
    %v215 = vadd.f32 %v144, %v158
    %v216 = vadd.f32 %v145, %v158
    %v217 = vadd.f32 %v146, %v158
    %v218 = vadd.f32 %v147, %v158
    %v219 = vadd.f32 %v148, %v158
    %v220 = vadd.f32 %v149, %v158
    %v221 = vadd.f32 %v150, %v158
    %v222 = vadd.f32 %v151, %v158
    %v223 = vadd.f32 %v152, %v158
    %v224 = vld [vmem:[%s1] sm:$0xff]
    %v225 = vld [vmem:[%s1 + $0x8] sm:$0xff]
    %v226 = vld [vmem:[%s1 + $0x10] sm:$0xff]
    %v227 = vld [vmem:[%s1 + $0x18] sm:$0xff]
    %v228 = vld [vmem:[%s1 + $0x20] sm:$0xff]
    %v229 = vld [vmem:[%s1 + $0x28] sm:$0xff]
    %v230 = vld [vmem:[%s1 + $0x30] sm:$0xff]
    %v231 = vld [vmem:[%s1 + $0x38] sm:$0xff]
    %v232 = vld [vmem:[%s1 + $0x40] sm:$0xff]
    %v233 = vld [vmem:[%s1 + $0x48] sm:$0xff]
    %v234 = vld [vmem:[%s1 + $0x50] sm:$0xff]
    %v235 = vld [vmem:[%s1 + $0x58] sm:$0xff]
    %v236 = vld [vmem:[%s1 + $0x60] sm:$0xff]
    %v237 = vld [vmem:[%s1 + $0x68] sm:$0xff]
    %v238 = vld [vmem:[%s1 + $0x70] sm:$0xff]
    %v239 = vld [vmem:[%s1 + $0x78] sm:$0xff]
    %v240 = vld [vmem:[%s1 + $0x80] sm:$0xff]
    %v241 = vld [vmem:[%s1 + $0x88] sm:$0xff]
    %v242 = vld [vmem:[%s1 + $0x90] sm:$0xff]
    %v243 = vld [vmem:[%s1 + $0x98] sm:$0xff]
    %v244 = vld [vmem:[%s1 + $0xa0] sm:$0xff]
    %v245 = vld [vmem:[%s1 + $0xa8] sm:$0xff]
    %v246 = vld [vmem:[%s1 + $0xb0] sm:$0xff]
    %v247 = vld [vmem:[%s1 + $0xb8] sm:$0xff]
    %v248 = vld [vmem:[%s1 + $0xc0] sm:$0xff]
    %v249 = vld [vmem:[%s1 + $0xc8] sm:$0xff]
    %v250 = vld [vmem:[%s1 + $0xd0] sm:$0xff]
    %v251 = vld [vmem:[%s1 + $0xd8] sm:$0xff]
    %v252 = vld [vmem:[%s1 + $0xe0] sm:$0xff]
    %v253 = vld [vmem:[%s1 + $0xe8] sm:$0xff]
    %v254 = vld [vmem:[%s1 + $0xf0] sm:$0xff]
    %v255 = vld [vmem:[%s1 + $0xf8] sm:$0xff]
    %v256 = vld [vmem:[%s1 + $0x100] sm:$0xff]
    %v257 = vld [vmem:[%s1 + $0x108] sm:$0xff]
    %v258 = vld [vmem:[%s1 + $0x110] sm:$0xff]
    %v259 = vld [vmem:[%s1 + $0x118] sm:$0xff]
    %v260 = vld [vmem:[%s1 + $0x120] sm:$0xff]
    %v261 = vld [vmem:[%s1 + $0x128] sm:$0xff]
    %v262 = vld [vmem:[%s1 + $0x130] sm:$0xff]
    %v263 = vld [vmem:[%s1 + $0x138] sm:$0xff]
    %v264 = vld [vmem:[%s1 + $0x140] sm:$0xff]
    %v265 = vld [vmem:[%s1 + $0x148] sm:$0xff]
    %v266 = vld [vmem:[%s1 + $0x150] sm:$0xff]
    %v267 = vld [vmem:[%s1 + $0x158] sm:$0xff]
    %v268 = vld [vmem:[%s1 + $0x160] sm:$0xff]
    %v269 = vld [vmem:[%s1 + $0x168] sm:$0xff]
    %v270 = vld [vmem:[%s1 + $0x170] sm:$0xff]
    %v271 = vld [vmem:[%s1 + $0x178] sm:$0xff]
    %v272 = vld [vmem:[%s1 + $0x180] sm:$0xff]
    %v273 = vld [vmem:[%s1 + $0x188] sm:$0xff]
    %v274 = vld [vmem:[%s1 + $0x190] sm:$0xff]
    %v275 = vld [vmem:[%s1 + $0x198] sm:$0xff]
    %v276 = vld [vmem:[%s1 + $0x1a0] sm:$0xff]
    %v277 = vld [vmem:[%s1 + $0x1a8] sm:$0xff]
    %v278 = vld [vmem:[%s1 + $0x1b0] sm:$0xff]
    %v279 = vld [vmem:[%s1 + $0x1b8] sm:$0xff]
    %v280 = vld [vmem:[%s1 + $0x1c0] sm:$0xff]
    %v281 = vld [vmem:[%s1 + $0x1c8] sm:$0xff]
    %v282 = vld [vmem:[%s1 + $0x1d0] sm:$0xff]
    %v283 = vld [vmem:[%s1 + $0x1d8] sm:$0xff]
    %v284 = vld [vmem:[%s1 + $0x1e0] sm:$0xff]
    %v285 = vld [vmem:[%s1 + $0x1e8] sm:$0xff]
    %v286 = vld [vmem:[%s1 + $0x1f0] sm:$0xff]
    %v287 = vld [vmem:[%s1 + $0x1f8] sm:$0xff]
    %v288 = vadd.f32 %v160, %v224
    %v289 = vadd.f32 %v161, %v225
    %v290 = vadd.f32 %v162, %v226
    %v291 = vadd.f32 %v163, %v227
    %v292 = vadd.f32 %v164, %v228
    %v293 = vadd.f32 %v165, %v229
    %v294 = vadd.f32 %v166, %v230
    %v295 = vadd.f32 %v167, %v231
    %v296 = vadd.f32 %v168, %v232
    %v297 = vadd.f32 %v169, %v233
    %v298 = vadd.f32 %v170, %v234
    %v299 = vadd.f32 %v171, %v235
    %v300 = vadd.f32 %v172, %v236
    %v301 = vadd.f32 %v173, %v237
    %v302 = vadd.f32 %v174, %v238
    %v303 = vadd.f32 %v175, %v239
    %v304 = vadd.f32 %v176, %v240
    %v305 = vadd.f32 %v177, %v241
    %v306 = vadd.f32 %v178, %v242
    %v307 = vadd.f32 %v179, %v243
    %v308 = vadd.f32 %v180, %v244
    %v309 = vadd.f32 %v181, %v245
    %v310 = vadd.f32 %v182, %v246
    %v311 = vadd.f32 %v183, %v247
    %v312 = vadd.f32 %v184, %v248
    %v313 = vadd.f32 %v185, %v249
    %v314 = vadd.f32 %v186, %v250
    %v315 = vadd.f32 %v187, %v251
    %v316 = vadd.f32 %v188, %v252
    %v317 = vadd.f32 %v189, %v253
    %v318 = vadd.f32 %v190, %v254
    %v319 = vadd.f32 %v191, %v255
    %v320 = vadd.f32 %v192, %v256
    %v321 = vadd.f32 %v193, %v257
    %v322 = vadd.f32 %v194, %v258
    %v323 = vadd.f32 %v195, %v259
    %v324 = vadd.f32 %v196, %v260
    %v325 = vadd.f32 %v197, %v261
    %v326 = vadd.f32 %v198, %v262
    %v327 = vadd.f32 %v199, %v263
    %v328 = vadd.f32 %v200, %v264
    %v329 = vadd.f32 %v201, %v265
    %v330 = vadd.f32 %v202, %v266
    %v331 = vadd.f32 %v203, %v267
    %v332 = vadd.f32 %v204, %v268
    %v333 = vadd.f32 %v205, %v269
    %v334 = vadd.f32 %v206, %v270
    %v335 = vadd.f32 %v207, %v271
    %v336 = vadd.f32 %v208, %v272
    %v337 = vadd.f32 %v209, %v273
    %v338 = vadd.f32 %v210, %v274
    %v339 = vadd.f32 %v211, %v275
    %v340 = vadd.f32 %v212, %v276
    %v341 = vadd.f32 %v213, %v277
    %v342 = vadd.f32 %v214, %v278
    %v343 = vadd.f32 %v215, %v279
    %v344 = vadd.f32 %v216, %v280
    %v345 = vadd.f32 %v217, %v281
    %v346 = vadd.f32 %v218, %v282
    %v347 = vadd.f32 %v219, %v283
    %v348 = vadd.f32 %v220, %v284
    %v349 = vadd.f32 %v221, %v285
    %v350 = vadd.f32 %v222, %v286
    %v351 = vadd.f32 %v223, %v287
    %v352 = vmax.f32 %v288, 0.0
    %v353 = vmax.f32 %v289, 0.0
    %v354 = vmax.f32 %v290, 0.0
    %v355 = vmax.f32 %v291, 0.0
    %v356 = vmax.f32 %v292, 0.0
    %v357 = vmax.f32 %v293, 0.0
    %v358 = vmax.f32 %v294, 0.0
    %v359 = vmax.f32 %v295, 0.0
    %v360 = vmax.f32 %v296, 0.0
    %v361 = vmax.f32 %v297, 0.0
    %v362 = vmax.f32 %v298, 0.0
    %v363 = vmax.f32 %v299, 0.0
    %v364 = vmax.f32 %v300, 0.0
    %v365 = vmax.f32 %v301, 0.0
    %v366 = vmax.f32 %v302, 0.0
    %v367 = vmax.f32 %v303, 0.0
    %v368 = vmax.f32 %v304, 0.0
    %v369 = vmax.f32 %v305, 0.0
    %v370 = vmax.f32 %v306, 0.0
    %v371 = vmax.f32 %v307, 0.0
    %v372 = vmax.f32 %v308, 0.0
    %v373 = vmax.f32 %v309, 0.0
    %v374 = vmax.f32 %v310, 0.0
    %v375 = vmax.f32 %v311, 0.0
    %v376 = vmax.f32 %v312, 0.0
    %v377 = vmax.f32 %v313, 0.0
    %v378 = vmax.f32 %v314, 0.0
    %v379 = vmax.f32 %v315, 0.0
    %v380 = vmax.f32 %v316, 0.0
    %v381 = vmax.f32 %v317, 0.0
    %v382 = vmax.f32 %v318, 0.0
    %v383 = vmax.f32 %v319, 0.0
    %v384 = vmax.f32 %v320, 0.0
    %v385 = vmax.f32 %v321, 0.0
    %v386 = vmax.f32 %v322, 0.0
    %v387 = vmax.f32 %v323, 0.0
    %v388 = vmax.f32 %v324, 0.0
    %v389 = vmax.f32 %v325, 0.0
    %v390 = vmax.f32 %v326, 0.0
    %v391 = vmax.f32 %v327, 0.0
    %v392 = vmax.f32 %v328, 0.0
    %v393 = vmax.f32 %v329, 0.0
    %v394 = vmax.f32 %v330, 0.0
    %v395 = vmax.f32 %v331, 0.0
    %v396 = vmax.f32 %v332, 0.0
    %v397 = vmax.f32 %v333, 0.0
    %v398 = vmax.f32 %v334, 0.0
    %v399 = vmax.f32 %v335, 0.0
    %v400 = vmax.f32 %v336, 0.0
    %v401 = vmax.f32 %v337, 0.0
    %v402 = vmax.f32 %v338, 0.0
    %v403 = vmax.f32 %v339, 0.0
    %v404 = vmax.f32 %v340, 0.0
    %v405 = vmax.f32 %v341, 0.0
    %v406 = vmax.f32 %v342, 0.0
    %v407 = vmax.f32 %v343, 0.0
    %v408 = vmax.f32 %v344, 0.0
    %v409 = vmax.f32 %v345, 0.0
    %v410 = vmax.f32 %v346, 0.0
    %v411 = vmax.f32 %v347, 0.0
    %v412 = vmax.f32 %v348, 0.0
    %v413 = vmax.f32 %v349, 0.0
    %v414 = vmax.f32 %v350, 0.0
    %v415 = vmax.f32 %v351, 0.0
    %416 = vst [vmem:[#allocation2] sm:$0xff] %v352
    %417 = vst [vmem:[#allocation2 + $0x8] sm:$0xff] %v353
    %418 = vst [vmem:[#allocation2 + $0x10] sm:$0xff] %v354
    %419 = vst [vmem:[#allocation2 + $0x18] sm:$0xff] %v355
    %420 = vst [vmem:[#allocation2 + $0x20] sm:$0xff] %v356
    %421 = vst [vmem:[#allocation2 + $0x28] sm:$0xff] %v357
    %422 = vst [vmem:[#allocation2 + $0x30] sm:$0xff] %v358
    %423 = vst [vmem:[#allocation2 + $0x38] sm:$0xff] %v359
    %424 = vst [vmem:[#allocation2 + $0x40] sm:$0xff] %v360
    %425 = vst [vmem:[#allocation2 + $0x48] sm:$0xff] %v361
    %426 = vst [vmem:[#allocation2 + $0x50] sm:$0xff] %v362
    %427 = vst [vmem:[#allocation2 + $0x58] sm:$0xff] %v363
    %428 = vst [vmem:[#allocation2 + $0x60] sm:$0xff] %v364
    %429 = vst [vmem:[#allocation2 + $0x68] sm:$0xff] %v365
    %430 = vst [vmem:[#allocation2 + $0x70] sm:$0xff] %v366
    %431 = vst [vmem:[#allocation2 + $0x78] sm:$0xff] %v367
    %432 = vst [vmem:[#allocation2 + $0x80] sm:$0xff] %v368
    %433 = vst [vmem:[#allocation2 + $0x88] sm:$0xff] %v369
    %434 = vst [vmem:[#allocation2 + $0x90] sm:$0xff] %v370
    %435 = vst [vmem:[#allocation2 + $0x98] sm:$0xff] %v371
    %436 = vst [vmem:[#allocation2 + $0xa0] sm:$0xff] %v372
    %437 = vst [vmem:[#allocation2 + $0xa8] sm:$0xff] %v373
    %438 = vst [vmem:[#allocation2 + $0xb0] sm:$0xff] %v374
    %439 = vst [vmem:[#allocation2 + $0xb8] sm:$0xff] %v375
    %440 = vst [vmem:[#allocation2 + $0xc0] sm:$0xff] %v376
    %441 = vst [vmem:[#allocation2 + $0xc8] sm:$0xff] %v377
    %442 = vst [vmem:[#allocation2 + $0xd0] sm:$0xff] %v378
    %443 = vst [vmem:[#allocation2 + $0xd8] sm:$0xff] %v379
    %444 = vst [vmem:[#allocation2 + $0xe0] sm:$0xff] %v380
    %445 = vst [vmem:[#allocation2 + $0xe8] sm:$0xff] %v381
    %446 = vst [vmem:[#allocation2 + $0xf0] sm:$0xff] %v382
    %447 = vst [vmem:[#allocation2 + $0xf8] sm:$0xff] %v383
    %448 = vst [vmem:[#allocation2 + $0x100] sm:$0xff] %v384
    %449 = vst [vmem:[#allocation2 + $0x108] sm:$0xff] %v385
    %450 = vst [vmem:[#allocation2 + $0x110] sm:$0xff] %v386
    %451 = vst [vmem:[#allocation2 + $0x118] sm:$0xff] %v387
    %452 = vst [vmem:[#allocation2 + $0x120] sm:$0xff] %v388
    %453 = vst [vmem:[#allocation2 + $0x128] sm:$0xff] %v389
    %454 = vst [vmem:[#allocation2 + $0x130] sm:$0xff] %v390
    %455 = vst [vmem:[#allocation2 + $0x138] sm:$0xff] %v391
    %456 = vst [vmem:[#allocation2 + $0x140] sm:$0xff] %v392
    %457 = vst [vmem:[#allocation2 + $0x148] sm:$0xff] %v393
    %458 = vst [vmem:[#allocation2 + $0x150] sm:$0xff] %v394
    %459 = vst [vmem:[#allocation2 + $0x158] sm:$0xff] %v395
    %460 = vst [vmem:[#allocation2 + $0x160] sm:$0xff] %v396
    %461 = vst [vmem:[#allocation2 + $0x168] sm:$0xff] %v397
    %462 = vst [vmem:[#allocation2 + $0x170] sm:$0xff] %v398
    %463 = vst [vmem:[#allocation2 + $0x178] sm:$0xff] %v399
    %464 = vst [vmem:[#allocation2 + $0x180] sm:$0xff] %v400
    %465 = vst [vmem:[#allocation2 + $0x188] sm:$0xff] %v401
    %466 = vst [vmem:[#allocation2 + $0x190] sm:$0xff] %v402
    %467 = vst [vmem:[#allocation2 + $0x198] sm:$0xff] %v403
    %468 = vst [vmem:[#allocation2 + $0x1a0] sm:$0xff] %v404
    %469 = vst [vmem:[#allocation2 + $0x1a8] sm:$0xff] %v405
    %470 = vst [vmem:[#allocation2 + $0x1b0] sm:$0xff] %v406
    %471 = vst [vmem:[#allocation2 + $0x1b8] sm:$0xff] %v407
    %472 = vst [vmem:[#allocation2 + $0x1c0] sm:$0xff] %v408
    %473 = vst [vmem:[#allocation2 + $0x1c8] sm:$0xff] %v409
    %474 = vst [vmem:[#allocation2 + $0x1d0] sm:$0xff] %v410
    %475 = vst [vmem:[#allocation2 + $0x1d8] sm:$0xff] %v411
    %476 = vst [vmem:[#allocation2 + $0x1e0] sm:$0xff] %v412
    %477 = vst [vmem:[#allocation2 + $0x1e8] sm:$0xff] %v413
    %478 = vst [vmem:[#allocation2 + $0x1f0] sm:$0xff] %v414
    %479 = vst [vmem:[#allocation2 + $0x1f8] sm:$0xff] %v415
    // Predicated region
    $region18: #{basic_block_forward.5} parent=1 // pred_check
      _
    $region19: #{basic_block_forward.5} parent=1 // pred_check_branch
      %481 = sbr.rel (0) target = $region21
    $region20: #{basic_block_forward.5} parent=1 // pred_region
      %s483 = ssub.s32 8192, 8192
      %484 = vsyncadd [#allocation3], %s483
      %s485 = sshll.u32 [#allocation2], 4
      %s486 = int_to_ptr.vmem [resolvable:$true] %s485
      %491 = dma.vmem_to_hbm [thread:$0]  %s486, 8192, %s4, [#allocation3], 128, 128, 8
    $region21: #{basic_block_forward.5} parent=1 // pred_fallthru
      _
    // Predicated region
    $region22: #{basic_block_forward.5} parent=1 // pred_check
      _
    $region23: #{basic_block_forward.5} parent=1 // pred_check_branch
      %493 = sbr.rel (0) target = $region25
    $region24: #{basic_block_forward.5} parent=1 // pred_region
      %494 = dma.done [#allocation3], 8192
    $region25: #{basic_block_forward.5} parent=1 // pred_fallthru
      _
    %495 = vsyncpa [#allocation3], 1

// kernel: basic_block_forward.4
$region0: #{basic_block_forward.4}
  #allocation0 [shape = 'u32[]', space=smem, size = 0x4, offset = 0x4, fixed_abs, tag = 'smem constant byte address 0x4 - core index']
  #allocation1 [shape = 'u32[144,128]{1,0:T(1,128)}', space=vmem, size = 0x12000, scoped, tag = 'internal scratch']
  #allocation2 [shape = 'f32[3,10,10,128]{3,2,1,0:T(8,128)}', space=vmem, size = 0x3c000, scoped, tag = 'scratch operand']
  %s0 = inlined_call_operand.vmem [shape: f32[2,4,8,8,128], index: 0, kind: input, shape index: {}, may-alias: {0,1,2}]
  %s1 = inlined_call_operand.vmem [shape: f32[2,4,8,8,128], index: 1, kind: input, shape index: {}, may-alias: {0,1,2}]
  %s2 = inlined_call_operand.vmem [shape: f32[2,4,8,8,128], index: 2, kind: input, shape index: {}, may-alias: {0,1,2}]
  %s3 = inlined_call_operand.vmem [shape: f32[1,128], index: 3, kind: input, shape index: {}]
  %s4 = inlined_call_operand.vmem [shape: f32[1,128], index: 4, kind: input, shape index: {}]
  %s5 = inlined_call_operand.vmem [shape: bf16[3456,128], index: 5, kind: input, shape index: {}]
  %s6 = inlined_call_operand.vmem [shape: f32[2,4,8,8,128], index: 6, kind: output, shape index: {0}]
  %s7 = inlined_call_operand.vmem [shape: f32[2,128], index: 7, kind: output, shape index: {1}]
  %8 = xla_tuple %s6, %s7
  %s9 = sld [smem:[#allocation0]]
  $region73: #{basic_block_forward.4} parent=0
    _
  %s11 = ssub.s32 1, %s9
  %s12 = scalar_select 0, %s11, %s9
  loop: start=0, step=1, limit=10
  $region2: #{basic_block_forward.4} parent=0 // loop_pre_header
    _
  $region3: #{basic_block_forward.4} parent=0 // loop_header
    %s14 = sphi 0, %s18
    %p15 = scmp.ge.s32.totalorder %s14, 10
    %s21 = sphi 0, %s33
    %s22 = sphi 0, %s29
    %s23 = sphi 0, %s21
    %s24 = sphi 0, %s22
    %s25 = sphi 0, %s23
    %s26 = sphi 0, %s24
    %s44 = sphi 0, %s46
    %s47 = sphi 0, %s44
    %s48 = sphi 0, %s47
    %s64 = sphi 0, %s48
    %s72 = sphi 0, %s74
    %s75 = sphi 0, %s72
    %s76 = sphi 0, %s75
    %s92 = sphi 0, %s76
    %s106 = sphi 0, %s108
    %s109 = sphi 0, %s106
    %s110 = sphi 0, %s109
    %s126 = sphi 0, %s110
    %s130 = sphi 0, %s130
    %s132 = sphi 0, %s130
    %s133 = sphi 0, %s132
    %s147 = sphi 0, %s133
    %s151 = sphi 0, %s151
    %s153 = sphi 0, %s151
    %s154 = sphi 0, %s153
    %s168 = sphi 0, %s154
    %s172 = sphi 0, %s172
    %s174 = sphi 0, %s172
    %s175 = sphi 0, %s174
    %s189 = sphi 0, %s175
    %s197 = sphi 0, %s199
    %s200 = sphi 0, %s197
    %s201 = sphi 0, %s200
    %s217 = sphi 0, %s201
    %s221 = sphi 0, %s221
    %s223 = sphi 0, %s221
    %s224 = sphi 0, %s223
    %s238 = sphi 0, %s224
  $region4: #{basic_block_forward.4} parent=0 // loop_header_branch
    %17 = sbr.rel (%p15) target = $region8
  $region5: #{basic_block_forward.4} parent=0 // loop_body
    %s19 = ssub.s32 %s14, 1
    %s20 = ssub.s32 %s14, 2
    %s27 = sadd.s32 1, %s22
    %p28 = scmp.ge.s32.totalorder %s27, 4
    %s29 = scalar_select %p28, 0, %s27
    %s30 = sadd.s32 1, %s21
    %s31 = scalar_select %p28, %s30, %s21
    %p32 = scmp.ge.s32.totalorder %s31, 2
    %s33 = scalar_select %p32, 0, %s31
    %s34 = ssub.s32 %s22, 1
    %p35 = scmp.gt.s32.totalorder %s34, 0
    %s36 = scalar_select %p35, %s34, 0
    %s37 = ssub.s32 %s29, 1
    %p38 = scmp.gt.s32.totalorder %s37, 0
    %s39 = scalar_select %p38, %s37, 0
    %s40 = ssub.s32 %s21, %s33
    %s41 = ssub.s32 %s36, %s39
    %s42 = sor.u32 %s40, %s41
    %p43 = scmp.eq.s32.totalorder %s42, 0
    %s45 = sadd.s32 %s44, 1
    %s46 = scalar_select %p43, %s44, %s45
    %p49 = pneg %p43
    %p50 = scmp.eq.s32.totalorder %s14, 7
    %p51 = por %p49, %p50
    %p52 = scmp.ne.s32.totalorder %s44, %s47
    %p53 = scmp.eq.s32.totalorder %s14, 0
    %p54 = por %p52, %p53
    %p55 = scmp.ne.s32.totalorder %s44, %s47
    %p56 = scmp.eq.s32.totalorder %s19, 7
    %p57 = por %p55, %p56
    %p58 = scmp.ne.s32.totalorder %s47, %s48
    %p59 = scmp.eq.s32.totalorder %s19, 0
    %p60 = por %p58, %p59
    %p61 = scmp.ne.s32.totalorder %s47, %s48
    %p62 = scmp.eq.s32.totalorder %s20, 7
    %p63 = por %p61, %p62
    %p65 = scmp.ne.s32.totalorder %s48, %s64
    %p66 = scmp.eq.s32.totalorder %s20, 0
    %p67 = por %p65, %p66
    %s68 = ssub.s32 %s21, %s33
    %s69 = ssub.s32 %s22, %s29
    %s70 = sor.u32 %s68, %s69
    %p71 = scmp.eq.s32.totalorder %s70, 0
    %s73 = sadd.s32 %s72, 1
    %s74 = scalar_select %p71, %s72, %s73
    %p77 = pneg %p71
    %p78 = scmp.eq.s32.totalorder %s14, 7
    %p79 = por %p77, %p78
    %p80 = scmp.ne.s32.totalorder %s72, %s75
    %p81 = scmp.eq.s32.totalorder %s14, 0
    %p82 = por %p80, %p81
    %p83 = scmp.ne.s32.totalorder %s72, %s75
    %p84 = scmp.eq.s32.totalorder %s19, 7
    %p85 = por %p83, %p84
    %p86 = scmp.ne.s32.totalorder %s75, %s76
    %p87 = scmp.eq.s32.totalorder %s19, 0
    %p88 = por %p86, %p87
    %p89 = scmp.ne.s32.totalorder %s75, %s76
    %p90 = scmp.eq.s32.totalorder %s20, 7
    %p91 = por %p89, %p90
    %p93 = scmp.ne.s32.totalorder %s76, %s92
    %p94 = scmp.eq.s32.totalorder %s20, 0
    %p95 = por %p93, %p94
    %s96 = sadd.s32 %s22, 1
    %p97 = scmp.lt.s32.totalorder %s96, 3
    %s98 = scalar_select %p97, %s96, 3
    %s99 = sadd.s32 %s29, 1
    %p100 = scmp.lt.s32.totalorder %s99, 3
    %s101 = scalar_select %p100, %s99, 3
    %s102 = ssub.s32 %s21, %s33
    %s103 = ssub.s32 %s98, %s101
    %s104 = sor.u32 %s102, %s103
    %p105 = scmp.eq.s32.totalorder %s104, 0
    %s107 = sadd.s32 %s106, 1
    %s108 = scalar_select %p105, %s106, %s107
    %p111 = pneg %p105
    %p112 = scmp.eq.s32.totalorder %s14, 7
    %p113 = por %p111, %p112
    %p114 = scmp.ne.s32.totalorder %s106, %s109
    %p115 = scmp.eq.s32.totalorder %s14, 0
    %p116 = por %p114, %p115
    %p117 = scmp.ne.s32.totalorder %s106, %s109
    %p118 = scmp.eq.s32.totalorder %s19, 7
    %p119 = por %p117, %p118
    %p120 = scmp.ne.s32.totalorder %s109, %s110
    %p121 = scmp.eq.s32.totalorder %s19, 0
    %p122 = por %p120, %p121
    %p123 = scmp.ne.s32.totalorder %s109, %s110
    %p124 = scmp.eq.s32.totalorder %s20, 7
    %p125 = por %p123, %p124
    %p127 = scmp.ne.s32.totalorder %s110, %s126
    %p128 = scmp.eq.s32.totalorder %s20, 0
    %p129 = por %p127, %p128
    %s131 = sadd.s32 %s130, 1
    %p134 = scmp.eq.s32.totalorder %s14, 7
    %p135 = scmp.ne.s32.totalorder %s130, %s132
    %p136 = scmp.eq.s32.totalorder %s14, 0
    %p137 = por %p135, %p136
    %p138 = scmp.ne.s32.totalorder %s130, %s132
    %p139 = scmp.eq.s32.totalorder %s19, 7
    %p140 = por %p138, %p139
    %p141 = scmp.ne.s32.totalorder %s132, %s133
    %p142 = scmp.eq.s32.totalorder %s19, 0
    %p143 = por %p141, %p142
    %p144 = scmp.ne.s32.totalorder %s132, %s133
    %p145 = scmp.eq.s32.totalorder %s20, 7
    %p146 = por %p144, %p145
    %p148 = scmp.ne.s32.totalorder %s133, %s147
    %p149 = scmp.eq.s32.totalorder %s20, 0
    %p150 = por %p148, %p149
    %s152 = sadd.s32 %s151, 1
    %p155 = scmp.eq.s32.totalorder %s14, 7
    %p156 = scmp.ne.s32.totalorder %s151, %s153
    %p157 = scmp.eq.s32.totalorder %s14, 0
    %p158 = por %p156, %p157
    %p159 = scmp.ne.s32.totalorder %s151, %s153
    %p160 = scmp.eq.s32.totalorder %s19, 7
    %p161 = por %p159, %p160
    %p162 = scmp.ne.s32.totalorder %s153, %s154
    %p163 = scmp.eq.s32.totalorder %s19, 0
    %p164 = por %p162, %p163
    %p165 = scmp.ne.s32.totalorder %s153, %s154
    %p166 = scmp.eq.s32.totalorder %s20, 7
    %p167 = por %p165, %p166
    %p169 = scmp.ne.s32.totalorder %s154, %s168
    %p170 = scmp.eq.s32.totalorder %s20, 0
    %p171 = por %p169, %p170
    %s173 = sadd.s32 %s172, 1
    %p176 = scmp.eq.s32.totalorder %s14, 7
    %p177 = scmp.ne.s32.totalorder %s172, %s174
    %p178 = scmp.eq.s32.totalorder %s14, 0
    %p179 = por %p177, %p178
    %p180 = scmp.ne.s32.totalorder %s172, %s174
    %p181 = scmp.eq.s32.totalorder %s19, 7
    %p182 = por %p180, %p181
    %p183 = scmp.ne.s32.totalorder %s174, %s175
    %p184 = scmp.eq.s32.totalorder %s19, 0
    %p185 = por %p183, %p184
    %p186 = scmp.ne.s32.totalorder %s174, %s175
    %p187 = scmp.eq.s32.totalorder %s20, 7
    %p188 = por %p186, %p187
    %p190 = scmp.ne.s32.totalorder %s175, %s189
    %p191 = scmp.eq.s32.totalorder %s20, 0
    %p192 = por %p190, %p191
    %s193 = ssub.s32 %s21, %s33
    %s194 = ssub.s32 %s22, %s29
    %s195 = sor.u32 %s193, %s194
    %p196 = scmp.eq.s32.totalorder %s195, 0
    %s198 = sadd.s32 %s197, 1
    %s199 = scalar_select %p196, %s197, %s198
    %p202 = pneg %p196
    %p203 = scmp.eq.s32.totalorder %s14, 7
    %p204 = por %p202, %p203
    %p205 = scmp.ne.s32.totalorder %s197, %s200
    %p206 = scmp.eq.s32.totalorder %s14, 0
    %p207 = por %p205, %p206
    %p208 = scmp.ne.s32.totalorder %s197, %s200
    %p209 = scmp.eq.s32.totalorder %s19, 7
    %p210 = por %p208, %p209
    %p211 = scmp.ne.s32.totalorder %s200, %s201
    %p212 = scmp.eq.s32.totalorder %s19, 0
    %p213 = por %p211, %p212
    %p214 = scmp.ne.s32.totalorder %s200, %s201
    %p215 = scmp.eq.s32.totalorder %s20, 7
    %p216 = por %p214, %p215
    %p218 = scmp.ne.s32.totalorder %s201, %s217
    %p219 = scmp.eq.s32.totalorder %s20, 0
    %p220 = por %p218, %p219
    %s222 = sadd.s32 %s221, 1
    %p225 = scmp.eq.s32.totalorder %s14, 7
    %p226 = scmp.ne.s32.totalorder %s221, %s223
    %p227 = scmp.eq.s32.totalorder %s14, 0
    %p228 = por %p226, %p227
    %p229 = scmp.ne.s32.totalorder %s221, %s223
    %p230 = scmp.eq.s32.totalorder %s19, 7
    %p231 = por %p229, %p230
    %p232 = scmp.ne.s32.totalorder %s223, %s224
    %p233 = scmp.eq.s32.totalorder %s19, 0
    %p234 = por %p232, %p233
    %p235 = scmp.ne.s32.totalorder %s223, %s224
    %p236 = scmp.eq.s32.totalorder %s20, 7
    %p237 = por %p235, %p236
    %p239 = scmp.ne.s32.totalorder %s224, %s238
    %p240 = scmp.eq.s32.totalorder %s20, 0
    %p241 = por %p239, %p240
    %p242 = scmp.le.s32.totalorder 1, %s14
    %p243 = scmp.lt.s32.totalorder %s14, 9
    %p244 = pnand %p242, %p243
    %p245 = pneg %p244
    // Predicated region
    $region9: #{basic_block_forward.4} parent=5 // pred_check
      _
    $region10: #{basic_block_forward.4} parent=5 // pred_check_branch
      %247 = sbr.rel (%p244) target = $region12
    $region11: #{basic_block_forward.4} parent=5 // pred_region
      %s248 = ssub.s32 %s14, 1
      // Predicated region
      $region13: #{basic_block_forward.4} parent=11 // pred_check
        %p249 = pneg %p143
      $region14: #{basic_block_forward.4} parent=11 // pred_check_branch
        %251 = sbr.rel (%p249) target = $region16
      $region15: #{basic_block_forward.4} parent=11 // pred_region
        _
      $region16: #{basic_block_forward.4} parent=11 // pred_fallthru
        _
      // Predicated region
      $region17: #{basic_block_forward.4} parent=11 // pred_check
        %p252 = pneg %p164
      $region18: #{basic_block_forward.4} parent=11 // pred_check_branch
        %254 = sbr.rel (%p252) target = $region20
      $region19: #{basic_block_forward.4} parent=11 // pred_region
        _
      $region20: #{basic_block_forward.4} parent=11 // pred_fallthru
        _
      // Predicated region
      $region21: #{basic_block_forward.4} parent=11 // pred_check
        %p255 = pneg %p185
      $region22: #{basic_block_forward.4} parent=11 // pred_check_branch
        %257 = sbr.rel (%p255) target = $region24
      $region23: #{basic_block_forward.4} parent=11 // pred_region
        _
      $region24: #{basic_block_forward.4} parent=11 // pred_fallthru
        _
    $region12: #{basic_block_forward.4} parent=5 // pred_fallthru
      _
    %p258 = scmp.lt.s32.totalorder %s14, 8
    // Predicated region
    $region25: #{basic_block_forward.4} parent=5 // pred_check
      %p259 = pneg %p258
    $region26: #{basic_block_forward.4} parent=5 // pred_check_branch
      %261 = sbr.rel (%p259) target = $region28
    $region27: #{basic_block_forward.4} parent=5 // pred_region
      // Predicated region
      $region29: #{basic_block_forward.4} parent=27 // pred_check
        %p262 = pneg %p54
      $region30: #{basic_block_forward.4} parent=27 // pred_check_branch
        %264 = sbr.rel (%p262) target = $region32
      $region31: #{basic_block_forward.4} parent=27 // pred_region
        %s265 = ssub.s32 %s22, 1
        %p266 = scmp.gt.s32.totalorder %s265, 0
        %s267 = scalar_select %p266, %s265, 0
        %p268 = scmp.lt.s32.totalorder %s21, 1
        %s269 = scalar_select %p268, %s21, 1
        %p270 = scmp.lt.s32.totalorder %s267, 3
        %s271 = scalar_select %p270, %s267, 3
        %s272 = smul.addr %s271, 8
        %s273 = smul.addr %s269, 32
        %s274 = sadd.s32 %s272, %s273
        %s275 = smul.addr %s274, 8
        %s276 = scalar_lea.vmem %s0, %s275
        %s277 = ssub.s32 %s22, 1
        %p278 = scmp.gt.s32.totalorder %s277, 0
        %s279 = scalar_select %p278, %s277, 0
      $region32: #{basic_block_forward.4} parent=27 // pred_fallthru
        _
      // Predicated region
      $region33: #{basic_block_forward.4} parent=27 // pred_check
        %p280 = pneg %p82
      $region34: #{basic_block_forward.4} parent=27 // pred_check_branch
        %282 = sbr.rel (%p280) target = $region36
      $region35: #{basic_block_forward.4} parent=27 // pred_region
        %p283 = scmp.lt.s32.totalorder %s21, 1
        %s284 = scalar_select %p283, %s21, 1
        %p285 = scmp.lt.s32.totalorder %s22, 3
        %s286 = scalar_select %p285, %s22, 3
        %s287 = smul.addr %s286, 8
        %s288 = smul.addr %s284, 32
        %s289 = sadd.s32 %s287, %s288
        %s290 = smul.addr %s289, 8
        %s291 = scalar_lea.vmem %s1, %s290
      $region36: #{basic_block_forward.4} parent=27 // pred_fallthru
        _
      // Predicated region
      $region37: #{basic_block_forward.4} parent=27 // pred_check
        %p292 = pneg %p116
      $region38: #{basic_block_forward.4} parent=27 // pred_check_branch
        %294 = sbr.rel (%p292) target = $region40
      $region39: #{basic_block_forward.4} parent=27 // pred_region
        %s295 = sadd.s32 %s22, 1
        %p296 = scmp.lt.s32.totalorder %s295, 3
        %s297 = scalar_select %p296, %s295, 3
        %p298 = scmp.lt.s32.totalorder %s21, 1
        %s299 = scalar_select %p298, %s21, 1
        %p300 = scmp.lt.s32.totalorder %s297, 3
        %s301 = scalar_select %p300, %s297, 3
        %s302 = smul.addr %s301, 8
        %s303 = smul.addr %s299, 32
        %s304 = sadd.s32 %s302, %s303
        %s305 = smul.addr %s304, 8
        %s306 = scalar_lea.vmem %s2, %s305
        %s307 = sadd.s32 %s22, 1
        %p308 = scmp.lt.s32.totalorder %s307, 3
        %s309 = scalar_select %p308, %s307, 3
      $region40: #{basic_block_forward.4} parent=27 // pred_fallthru
        _
    $region28: #{basic_block_forward.4} parent=5 // pred_fallthru
      _
    %p310 = scmp.le.s32.totalorder 1, %s14
    %p311 = scmp.lt.s32.totalorder %s14, 9
    %p312 = pnand %p310, %p311
    %p313 = pneg %p312
    // Predicated region
    $region41: #{basic_block_forward.4} parent=5 // pred_check
      _
    $region42: #{basic_block_forward.4} parent=5 // pred_check_branch
      %315 = sbr.rel (%p312) target = $region44
    $region43: #{basic_block_forward.4} parent=5 // pred_region
      %s316 = ssub.s32 %s14, 1
      %s317 = ssub.s32 %s24, 1
      %p318 = scmp.gt.s32.totalorder %s317, 0
      %s319 = scalar_select %p318, %s317, 0
      %p320 = scmp.lt.s32.totalorder %s23, 1
      %s321 = scalar_select %p320, %s23, 1
      %p322 = scmp.lt.s32.totalorder %s319, 3
      %s323 = scalar_select %p322, %s319, 3
      %s324 = smul.addr %s323, 8
      %s325 = smul.addr %s321, 32
      %s326 = sadd.s32 %s324, %s325
      %s327 = smul.addr %s326, 8
      %s328 = scalar_lea.vmem %s0, %s327
      %p329 = pneg %p60
      %p330 = pneg %p57
      %p331 = scmp.lt.s32.totalorder %s23, 1
      %s332 = scalar_select %p331, %s23, 1
      %p333 = scmp.lt.s32.totalorder %s24, 3
      %s334 = scalar_select %p333, %s24, 3
      %s335 = smul.addr %s334, 8
      %s336 = smul.addr %s332, 32
      %s337 = sadd.s32 %s335, %s336
      %s338 = smul.addr %s337, 8
      %s339 = scalar_lea.vmem %s1, %s338
      %p340 = pneg %p88
      %p341 = pneg %p85
      %s342 = sadd.s32 %s24, 1
      %p343 = scmp.lt.s32.totalorder %s342, 3
      %s344 = scalar_select %p343, %s342, 3
      %p345 = scmp.lt.s32.totalorder %s23, 1
      %s346 = scalar_select %p345, %s23, 1
      %p347 = scmp.lt.s32.totalorder %s344, 3
      %s348 = scalar_select %p347, %s344, 3
      %s349 = smul.addr %s348, 8
      %s350 = smul.addr %s346, 32
      %s351 = sadd.s32 %s349, %s350
      %s352 = smul.addr %s351, 8
      %s353 = scalar_lea.vmem %s2, %s352
      %p354 = pneg %p122
      %p355 = pneg %p119
      %p356 = pneg %p143
      %p357 = pneg %p140
      %p358 = pneg %p164
      %p359 = pneg %p161
      %p360 = pneg %p185
      %p361 = pneg %p182
      %p362 = pneg %p213
      %p363 = pneg %p210
      %p364 = scmp.lt.s32.totalorder %s23, 1
      %s365 = scalar_select %p364, %s23, 1
      %p366 = scmp.lt.s32.totalorder %s24, 3
      %s367 = scalar_select %p366, %s24, 3
      %s368 = smul.addr %s367, 8
      %s369 = smul.addr %s365, 32
      %s370 = sadd.s32 %s368, %s369
      %s371 = smul.addr %s370, 8
      %s372 = scalar_lea.vmem %s6, %s371
      %p373 = pneg %p234
      %p374 = pneg %p231
      %s375 = ssub.s32 %s24, 1
      %p376 = scmp.gt.s32.totalorder %s375, 0
      %s377 = scalar_select %p376, %s375, 0
      %p378 = scmp.lt.s32.totalorder %s23, 1
      %s379 = scalar_select %p378, %s23, 1
      %p380 = scmp.lt.s32.totalorder %s377, 3
      %s381 = scalar_select %p380, %s377, 3
      %s382 = smul.addr %s381, 8
      %s383 = smul.addr %s379, 32
      %s384 = sadd.s32 %s382, %s383
      %s385 = smul.addr %s384, 8
      %s386 = scalar_lea.vmem %s0, %s385
      %s387 = ssub.s32 %s24, 1
      %p388 = scmp.gt.s32.totalorder %s387, 0
      %s389 = scalar_select %p388, %s387, 0
      %p390 = scmp.lt.s32.totalorder %s23, 1
      %s391 = scalar_select %p390, %s23, 1
      %p392 = scmp.lt.s32.totalorder %s24, 3
      %s393 = scalar_select %p392, %s24, 3
      %s394 = smul.addr %s393, 8
      %s395 = smul.addr %s391, 32
      %s396 = sadd.s32 %s394, %s395
      %s397 = smul.addr %s396, 8
      %s398 = scalar_lea.vmem %s1, %s397
      %s399 = sadd.s32 %s24, 1
      %p400 = scmp.lt.s32.totalorder %s399, 3
      %s401 = scalar_select %p400, %s399, 3
      %p402 = scmp.lt.s32.totalorder %s23, 1
      %s403 = scalar_select %p402, %s23, 1
      %p404 = scmp.lt.s32.totalorder %s401, 3
      %s405 = scalar_select %p404, %s401, 3
      %s406 = smul.addr %s405, 8
      %s407 = smul.addr %s403, 32
      %s408 = sadd.s32 %s406, %s407
      %s409 = smul.addr %s408, 8
      %s410 = scalar_lea.vmem %s2, %s409
      %s411 = sadd.s32 %s24, 1
      %p412 = scmp.lt.s32.totalorder %s411, 3
      %s413 = scalar_select %p412, %s411, 3
      %p414 = scmp.lt.s32.totalorder %s23, 1
      %s415 = scalar_select %p414, %s23, 1
      %p416 = scmp.lt.s32.totalorder %s24, 3
      %s417 = scalar_select %p416, %s24, 3
      %s418 = smul.addr %s417, 8
      %s419 = smul.addr %s415, 32
      %s420 = sadd.s32 %s418, %s419
      %s421 = smul.addr %s420, 8
      %s422 = scalar_lea.vmem %s6, %s421
      %p424 = scmp.eq.s32.totalorder %s23, 0
      %p425 = scmp.eq.s32.totalorder %s24, 0
      %p426 = pnand %p424, %p425
      %p427 = pneg %p426
      // Predicated region
      $region45: #{basic_block_forward.4} parent=43 // pred_check
        _
      $region46: #{basic_block_forward.4} parent=43 // pred_check_branch
        %429 = sbr.rel (%p426) target = $region48
      $region47: #{basic_block_forward.4} parent=43 // pred_region
        %430 = vst [vmem:[#allocation2] sm:$0xff] 0.0
        %431 = vst [vmem:[#allocation2 + $0x8] sm:$0x3] 0.0
        %432 = vst [vmem:[#allocation2 + $0x10] sm:$0xff] 0.0
        %433 = vst [vmem:[#allocation2 + $0x18] sm:$0x3] 0.0
        %434 = vst [vmem:[#allocation2 + $0x20] sm:$0xff] 0.0
        %435 = vst [vmem:[#allocation2 + $0x28] sm:$0x3] 0.0
        %436 = vst [vmem:[#allocation2 + $0x30] sm:$0xff] 0.0
        %437 = vst [vmem:[#allocation2 + $0x38] sm:$0x3] 0.0
        %438 = vst [vmem:[#allocation2 + $0x40] sm:$0xff] 0.0
        %439 = vst [vmem:[#allocation2 + $0x48] sm:$0x3] 0.0
        %440 = vst [vmem:[#allocation2 + $0x50] sm:$0xff] 0.0
        %441 = vst [vmem:[#allocation2 + $0x58] sm:$0x3] 0.0
        %442 = vst [vmem:[#allocation2 + $0x60] sm:$0xff] 0.0
        %443 = vst [vmem:[#allocation2 + $0x68] sm:$0x3] 0.0
        %444 = vst [vmem:[#allocation2 + $0x70] sm:$0xff] 0.0
        %445 = vst [vmem:[#allocation2 + $0x78] sm:$0x3] 0.0
        %446 = vst [vmem:[#allocation2 + $0x80] sm:$0xff] 0.0
        %447 = vst [vmem:[#allocation2 + $0x88] sm:$0x3] 0.0
        %448 = vst [vmem:[#allocation2 + $0x90] sm:$0xff] 0.0
        %449 = vst [vmem:[#allocation2 + $0x98] sm:$0x3] 0.0
        %450 = vst [vmem:[#allocation2 + $0xa0] sm:$0xff] 0.0
        %451 = vst [vmem:[#allocation2 + $0xa8] sm:$0x3] 0.0
        %452 = vst [vmem:[#allocation2 + $0xb0] sm:$0xff] 0.0
        %453 = vst [vmem:[#allocation2 + $0xb8] sm:$0x3] 0.0
        %454 = vst [vmem:[#allocation2 + $0xc0] sm:$0xff] 0.0
        %455 = vst [vmem:[#allocation2 + $0xc8] sm:$0x3] 0.0
        %456 = vst [vmem:[#allocation2 + $0xd0] sm:$0xff] 0.0
        %457 = vst [vmem:[#allocation2 + $0xd8] sm:$0x3] 0.0
        %458 = vst [vmem:[#allocation2 + $0xe0] sm:$0xff] 0.0
        %459 = vst [vmem:[#allocation2 + $0xe8] sm:$0x3] 0.0
        %460 = vst [vmem:[#allocation2 + $0xf0] sm:$0xff] 0.0
        %461 = vst [vmem:[#allocation2 + $0xf8] sm:$0x3] 0.0
        %462 = vst [vmem:[#allocation2 + $0x100] sm:$0xff] 0.0
        %463 = vst [vmem:[#allocation2 + $0x108] sm:$0x3] 0.0
        %464 = vst [vmem:[#allocation2 + $0x110] sm:$0xff] 0.0
        %465 = vst [vmem:[#allocation2 + $0x118] sm:$0x3] 0.0
        %466 = vst [vmem:[#allocation2 + $0x120] sm:$0xff] 0.0
        %467 = vst [vmem:[#allocation2 + $0x128] sm:$0x3] 0.0
        %468 = vst [vmem:[#allocation2 + $0x130] sm:$0xff] 0.0
        %469 = vst [vmem:[#allocation2 + $0x138] sm:$0x3] 0.0
        %470 = vst [vmem:[#allocation2 + $0x140] sm:$0xff] 0.0
        %471 = vst [vmem:[#allocation2 + $0x148] sm:$0x3] 0.0
        %472 = vst [vmem:[#allocation2 + $0x150] sm:$0xff] 0.0
        %473 = vst [vmem:[#allocation2 + $0x158] sm:$0x3] 0.0
        %474 = vst [vmem:[#allocation2 + $0x160] sm:$0xff] 0.0
        %475 = vst [vmem:[#allocation2 + $0x168] sm:$0x3] 0.0
        %476 = vst [vmem:[#allocation2 + $0x170] sm:$0xff] 0.0
        %477 = vst [vmem:[#allocation2 + $0x178] sm:$0x3] 0.0
        %478 = vst [vmem:[#allocation2 + $0x180] sm:$0xff] 0.0
        %479 = vst [vmem:[#allocation2 + $0x188] sm:$0x3] 0.0
        %480 = vst [vmem:[#allocation2 + $0x190] sm:$0xff] 0.0
        %481 = vst [vmem:[#allocation2 + $0x198] sm:$0x3] 0.0
        %482 = vst [vmem:[#allocation2 + $0x1a0] sm:$0xff] 0.0
        %483 = vst [vmem:[#allocation2 + $0x1a8] sm:$0x3] 0.0
        %484 = vst [vmem:[#allocation2 + $0x1b0] sm:$0xff] 0.0
        %485 = vst [vmem:[#allocation2 + $0x1b8] sm:$0x3] 0.0
        %486 = vst [vmem:[#allocation2 + $0x1c0] sm:$0xff] 0.0
        %487 = vst [vmem:[#allocation2 + $0x1c8] sm:$0x3] 0.0
        %488 = vst [vmem:[#allocation2 + $0x1d0] sm:$0xff] 0.0
        %489 = vst [vmem:[#allocation2 + $0x1d8] sm:$0x3] 0.0
      $region48: #{basic_block_forward.4} parent=43 // pred_fallthru
        _
      %p490 = scmp.gt.s32.totalorder %s24, 0
      %s491 = scalar_select %p490, 1.0, 0.0
      %v492 = vld [vmem:[%s386] sm:$0xff]
      %v493 = vld [vmem:[%s386 + $0x8] sm:$0xff]
      %v494 = vld [vmem:[%s386 + $0x10] sm:$0xff]
      %v495 = vld [vmem:[%s386 + $0x18] sm:$0xff]
      %v496 = vld [vmem:[%s386 + $0x20] sm:$0xff]
      %v497 = vld [vmem:[%s386 + $0x28] sm:$0xff]
      %v498 = vld [vmem:[%s386 + $0x30] sm:$0xff]
      %v499 = vld [vmem:[%s386 + $0x38] sm:$0xff]
      %v500 = vld [vmem:[%s3] sm:$0x1]
      %v502 = vlaneseq
      %v503 = vshrl.u32 %v502, 7
      %v504 = vsub.s32 0, %v503
      %v505 = vrot.slane %v500, %v504
      %v507 = vmul.f32 %v492, %v505
      %v508 = vmul.f32 %v493, %v505
      %v509 = vmul.f32 %v494, %v505
      %v510 = vmul.f32 %v495, %v505
      %v511 = vmul.f32 %v496, %v505
      %v512 = vmul.f32 %v497, %v505
      %v513 = vmul.f32 %v498, %v505
      %v514 = vmul.f32 %v499, %v505
      %v515 = vld [vmem:[%s4] sm:$0x1]
      %v517 = vlaneseq
      %v518 = vshrl.u32 %v517, 7
      %v519 = vsub.s32 0, %v518
      %v520 = vrot.slane %v515, %v519
      %v522 = vadd.f32 %v507, %v520
      %v523 = vadd.f32 %v508, %v520
      %v524 = vadd.f32 %v509, %v520
      %v525 = vadd.f32 %v510, %v520
      %v526 = vadd.f32 %v511, %v520
      %v527 = vadd.f32 %v512, %v520
      %v528 = vadd.f32 %v513, %v520
      %v529 = vadd.f32 %v514, %v520
      %v530 = vmax.f32 %v522, 0.0
      %v531 = vmax.f32 %v523, 0.0
      %v532 = vmax.f32 %v524, 0.0
      %v533 = vmax.f32 %v525, 0.0
      %v534 = vmax.f32 %v526, 0.0
      %v535 = vmax.f32 %v527, 0.0
      %v536 = vmax.f32 %v528, 0.0
      %v537 = vmax.f32 %v529, 0.0
      %v538 = vstv %s491
      %v539 = vmul.f32 %v530, %v538
      %v540 = vmul.f32 %v531, %v538
      %v541 = vmul.f32 %v532, %v538
      %v542 = vmul.f32 %v533, %v538
      %v543 = vmul.f32 %v534, %v538
      %v544 = vmul.f32 %v535, %v538
      %v545 = vmul.f32 %v536, %v538
      %v546 = vmul.f32 %v537, %v538
      %s547 = scalar_lea.vmem [#allocation2], 16
      %548 = vst [vmem:[%s547 + $0x1] sm:$0xff] %v539
      %549 = vst [vmem:[%s547 + $0x11] sm:$0xff] %v540
      %550 = vst [vmem:[%s547 + $0x21] sm:$0xff] %v541
      %551 = vst [vmem:[%s547 + $0x31] sm:$0xff] %v542
      %552 = vst [vmem:[%s547 + $0x41] sm:$0xff] %v543
      %553 = vst [vmem:[%s547 + $0x51] sm:$0xff] %v544
      %554 = vst [vmem:[%s547 + $0x61] sm:$0xff] %v545
      %555 = vst [vmem:[%s547 + $0x71] sm:$0xff] %v546
      %v556 = vld [vmem:[%s398] sm:$0xff]
      %v557 = vld [vmem:[%s398 + $0x8] sm:$0xff]
      %v558 = vld [vmem:[%s398 + $0x10] sm:$0xff]
      %v559 = vld [vmem:[%s398 + $0x18] sm:$0xff]
      %v560 = vld [vmem:[%s398 + $0x20] sm:$0xff]
      %v561 = vld [vmem:[%s398 + $0x28] sm:$0xff]
      %v562 = vld [vmem:[%s398 + $0x30] sm:$0xff]
      %v563 = vld [vmem:[%s398 + $0x38] sm:$0xff]
      %v564 = vld [vmem:[%s3] sm:$0x1]
      %v566 = vlaneseq
      %v567 = vshrl.u32 %v566, 7
      %v568 = vsub.s32 0, %v567
      %v569 = vrot.slane %v564, %v568
      %v571 = vmul.f32 %v556, %v569
      %v572 = vmul.f32 %v557, %v569
      %v573 = vmul.f32 %v558, %v569
      %v574 = vmul.f32 %v559, %v569
      %v575 = vmul.f32 %v560, %v569
      %v576 = vmul.f32 %v561, %v569
      %v577 = vmul.f32 %v562, %v569
      %v578 = vmul.f32 %v563, %v569
      %v579 = vld [vmem:[%s4] sm:$0x1]
      %v581 = vlaneseq
      %v582 = vshrl.u32 %v581, 7
      %v583 = vsub.s32 0, %v582
      %v584 = vrot.slane %v579, %v583
      %v586 = vadd.f32 %v571, %v584
      %v587 = vadd.f32 %v572, %v584
      %v588 = vadd.f32 %v573, %v584
      %v589 = vadd.f32 %v574, %v584
      %v590 = vadd.f32 %v575, %v584
      %v591 = vadd.f32 %v576, %v584
      %v592 = vadd.f32 %v577, %v584
      %v593 = vadd.f32 %v578, %v584
      %v594 = vmax.f32 %v586, 0.0
      %v595 = vmax.f32 %v587, 0.0
      %v596 = vmax.f32 %v588, 0.0
      %v597 = vmax.f32 %v589, 0.0
      %v598 = vmax.f32 %v590, 0.0
      %v599 = vmax.f32 %v591, 0.0
      %v600 = vmax.f32 %v592, 0.0
      %v601 = vmax.f32 %v593, 0.0
      %s602 = scalar_lea.vmem [#allocation2], 176
      %603 = vst [vmem:[%s602 + $0x1] sm:$0xff] %v594
      %604 = vst [vmem:[%s602 + $0x11] sm:$0xff] %v595
      %605 = vst [vmem:[%s602 + $0x21] sm:$0xff] %v596
      %606 = vst [vmem:[%s602 + $0x31] sm:$0xff] %v597
      %607 = vst [vmem:[%s602 + $0x41] sm:$0xff] %v598
      %608 = vst [vmem:[%s602 + $0x51] sm:$0xff] %v599
      %609 = vst [vmem:[%s602 + $0x61] sm:$0xff] %v600
      %610 = vst [vmem:[%s602 + $0x71] sm:$0xff] %v601
      %p611 = scmp.lt.s32.totalorder %s24, 3
      %s612 = scalar_select %p611, 1.0, 0.0
      %v613 = vld [vmem:[%s410] sm:$0xff]
      %v614 = vld [vmem:[%s410 + $0x8] sm:$0xff]
      %v615 = vld [vmem:[%s410 + $0x10] sm:$0xff]
      %v616 = vld [vmem:[%s410 + $0x18] sm:$0xff]
      %v617 = vld [vmem:[%s410 + $0x20] sm:$0xff]
      %v618 = vld [vmem:[%s410 + $0x28] sm:$0xff]
      %v619 = vld [vmem:[%s410 + $0x30] sm:$0xff]
      %v620 = vld [vmem:[%s410 + $0x38] sm:$0xff]
      %v621 = vld [vmem:[%s3] sm:$0x1]
      %v623 = vlaneseq
      %v624 = vshrl.u32 %v623, 7
      %v625 = vsub.s32 0, %v624
      %v626 = vrot.slane %v621, %v625
      %v628 = vmul.f32 %v613, %v626
      %v629 = vmul.f32 %v614, %v626
      %v630 = vmul.f32 %v615, %v626
      %v631 = vmul.f32 %v616, %v626
      %v632 = vmul.f32 %v617, %v626
      %v633 = vmul.f32 %v618, %v626
      %v634 = vmul.f32 %v619, %v626
      %v635 = vmul.f32 %v620, %v626
      %v636 = vld [vmem:[%s4] sm:$0x1]
      %v638 = vlaneseq
      %v639 = vshrl.u32 %v638, 7
      %v640 = vsub.s32 0, %v639
      %v641 = vrot.slane %v636, %v640
      %v643 = vadd.f32 %v628, %v641
      %v644 = vadd.f32 %v629, %v641
      %v645 = vadd.f32 %v630, %v641
      %v646 = vadd.f32 %v631, %v641
      %v647 = vadd.f32 %v632, %v641
      %v648 = vadd.f32 %v633, %v641
      %v649 = vadd.f32 %v634, %v641
      %v650 = vadd.f32 %v635, %v641
      %v651 = vmax.f32 %v643, 0.0
      %v652 = vmax.f32 %v644, 0.0
      %v653 = vmax.f32 %v645, 0.0
      %v654 = vmax.f32 %v646, 0.0
      %v655 = vmax.f32 %v647, 0.0
      %v656 = vmax.f32 %v648, 0.0
      %v657 = vmax.f32 %v649, 0.0
      %v658 = vmax.f32 %v650, 0.0
      %v659 = vstv %s612
      %v660 = vmul.f32 %v651, %v659
      %v661 = vmul.f32 %v652, %v659
      %v662 = vmul.f32 %v653, %v659
      %v663 = vmul.f32 %v654, %v659
      %v664 = vmul.f32 %v655, %v659
      %v665 = vmul.f32 %v656, %v659
      %v666 = vmul.f32 %v657, %v659
      %v667 = vmul.f32 %v658, %v659
      %s668 = scalar_lea.vmem [#allocation2], 336
      %669 = vst [vmem:[%s668 + $0x1] sm:$0xff] %v660
      %670 = vst [vmem:[%s668 + $0x11] sm:$0xff] %v661
      %671 = vst [vmem:[%s668 + $0x21] sm:$0xff] %v662
      %672 = vst [vmem:[%s668 + $0x31] sm:$0xff] %v663
      %673 = vst [vmem:[%s668 + $0x41] sm:$0xff] %v664
      %674 = vst [vmem:[%s668 + $0x51] sm:$0xff] %v665
      %675 = vst [vmem:[%s668 + $0x61] sm:$0xff] %v666
      %676 = vst [vmem:[%s668 + $0x71] sm:$0xff] %v667
      %v677 = vld [vmem:[#allocation2] sm:$0xff]
      %v678 = vld [vmem:[#allocation2 + $0x8] sm:$0x3]
      %v679 = vld [vmem:[#allocation2 + $0x10] sm:$0xff]
      %v680 = vld [vmem:[#allocation2 + $0x18] sm:$0x3]
      %v681 = vld [vmem:[#allocation2 + $0x20] sm:$0xff]
      %v682 = vld [vmem:[#allocation2 + $0x28] sm:$0x3]
      %v683 = vld [vmem:[#allocation2 + $0x30] sm:$0xff]
      %v684 = vld [vmem:[#allocation2 + $0x38] sm:$0x3]
      %v685 = vld [vmem:[#allocation2 + $0x40] sm:$0xff]
      %v686 = vld [vmem:[#allocation2 + $0x48] sm:$0x3]
      %v687 = vld [vmem:[#allocation2 + $0x50] sm:$0xff]
      %v688 = vld [vmem:[#allocation2 + $0x58] sm:$0x3]
      %v689 = vld [vmem:[#allocation2 + $0x60] sm:$0xff]
      %v690 = vld [vmem:[#allocation2 + $0x68] sm:$0x3]
      %v691 = vld [vmem:[#allocation2 + $0x70] sm:$0xff]
      %v692 = vld [vmem:[#allocation2 + $0x78] sm:$0x3]
      %v693 = vld [vmem:[#allocation2 + $0x80] sm:$0xff]
      %v694 = vld [vmem:[#allocation2 + $0x88] sm:$0x3]
      %v695 = vld [vmem:[#allocation2 + $0x90] sm:$0xff]
      %v696 = vld [vmem:[#allocation2 + $0x98] sm:$0x3]
      %vm713 = vcmask 1046528
      %v714 = vrot.slane %v677, 1
      %v715 = vrot.slane %v678, 1
      %v716 = vsel %vm713, %v714, %v715
      %v717 = vrot.slane %v679, 1
      %v718 = vrot.slane %v680, 1
      %v719 = vsel %vm713, %v717, %v718
      %v720 = vrot.slane %v681, 1
      %v721 = vrot.slane %v682, 1
      %v722 = vsel %vm713, %v720, %v721
      %v723 = vrot.slane %v683, 1
      %v724 = vrot.slane %v684, 1
      %v725 = vsel %vm713, %v723, %v724
      %v726 = vrot.slane %v685, 1
      %v727 = vrot.slane %v686, 1
      %v728 = vsel %vm713, %v726, %v727
      %v729 = vrot.slane %v687, 1
      %v730 = vrot.slane %v688, 1
      %v731 = vsel %vm713, %v729, %v730
      %v732 = vrot.slane %v689, 1
      %v733 = vrot.slane %v690, 1
      %v734 = vsel %vm713, %v732, %v733
      %v735 = vrot.slane %v691, 1
      %v736 = vrot.slane %v692, 1
      %v737 = vsel %vm713, %v735, %v736
      %vm746 = vcmask 1045504
      %v747 = vrot.slane %v677, 2
      %v748 = vrot.slane %v678, 2
      %v749 = vsel %vm746, %v747, %v748
      %v750 = vrot.slane %v679, 2
      %v751 = vrot.slane %v680, 2
      %v752 = vsel %vm746, %v750, %v751
      %v753 = vrot.slane %v681, 2
      %v754 = vrot.slane %v682, 2
      %v755 = vsel %vm746, %v753, %v754
      %v756 = vrot.slane %v683, 2
      %v757 = vrot.slane %v684, 2
      %v758 = vsel %vm746, %v756, %v757
      %v759 = vrot.slane %v685, 2
      %v760 = vrot.slane %v686, 2
      %v761 = vsel %vm746, %v759, %v760
      %v762 = vrot.slane %v687, 2
      %v763 = vrot.slane %v688, 2
      %v764 = vsel %vm746, %v762, %v763
      %v765 = vrot.slane %v689, 2
      %v766 = vrot.slane %v690, 2
      %v767 = vsel %vm746, %v765, %v766
      %v768 = vrot.slane %v691, 2
      %v769 = vrot.slane %v692, 2
      %v770 = vsel %vm746, %v768, %v769
      %v781 = vrot.slane %v693, 1
      %v782 = vrot.slane %v694, 1
      %v783 = vsel %vm713, %v781, %v782
      %v785 = vrot.slane %v693, 2
      %v786 = vrot.slane %v694, 2
      %v787 = vsel %vm746, %v785, %v786
      %v791 = vrot.slane %v695, 1
      %v792 = vrot.slane %v696, 1
      %v793 = vsel %vm713, %v791, %v792
      %v795 = vrot.slane %v695, 2
      %v796 = vrot.slane %v696, 2
      %v797 = vsel %vm746, %v795, %v796
      %s799 = scalar_lea.vmem [#allocation2], 160
      %v800 = vld [vmem:[%s799] sm:$0xff]
      %v801 = vld [vmem:[%s799 + $0x8] sm:$0x3]
      %v802 = vld [vmem:[%s799 + $0x10] sm:$0xff]
      %v803 = vld [vmem:[%s799 + $0x18] sm:$0x3]
      %v804 = vld [vmem:[%s799 + $0x20] sm:$0xff]
      %v805 = vld [vmem:[%s799 + $0x28] sm:$0x3]
      %v806 = vld [vmem:[%s799 + $0x30] sm:$0xff]
      %v807 = vld [vmem:[%s799 + $0x38] sm:$0x3]
      %v808 = vld [vmem:[%s799 + $0x40] sm:$0xff]
      %v809 = vld [vmem:[%s799 + $0x48] sm:$0x3]
      %v810 = vld [vmem:[%s799 + $0x50] sm:$0xff]
      %v811 = vld [vmem:[%s799 + $0x58] sm:$0x3]
      %v812 = vld [vmem:[%s799 + $0x60] sm:$0xff]
      %v813 = vld [vmem:[%s799 + $0x68] sm:$0x3]
      %v814 = vld [vmem:[%s799 + $0x70] sm:$0xff]
      %v815 = vld [vmem:[%s799 + $0x78] sm:$0x3]
      %v816 = vld [vmem:[%s799 + $0x80] sm:$0xff]
      %v817 = vld [vmem:[%s799 + $0x88] sm:$0x3]
      %v818 = vld [vmem:[%s799 + $0x90] sm:$0xff]
      %v819 = vld [vmem:[%s799 + $0x98] sm:$0x3]
      %v836 = vrot.slane %v800, 1
      %v837 = vrot.slane %v801, 1
      %v838 = vsel %vm713, %v836, %v837
      %v839 = vrot.slane %v802, 1
      %v840 = vrot.slane %v803, 1
      %v841 = vsel %vm713, %v839, %v840
      %v842 = vrot.slane %v804, 1
      %v843 = vrot.slane %v805, 1
      %v844 = vsel %vm713, %v842, %v843
      %v845 = vrot.slane %v806, 1
      %v846 = vrot.slane %v807, 1
      %v847 = vsel %vm713, %v845, %v846
      %v848 = vrot.slane %v808, 1
      %v849 = vrot.slane %v809, 1
      %v850 = vsel %vm713, %v848, %v849
      %v851 = vrot.slane %v810, 1
      %v852 = vrot.slane %v811, 1
      %v853 = vsel %vm713, %v851, %v852
      %v854 = vrot.slane %v812, 1
      %v855 = vrot.slane %v813, 1
      %v856 = vsel %vm713, %v854, %v855
      %v857 = vrot.slane %v814, 1
      %v858 = vrot.slane %v815, 1
      %v859 = vsel %vm713, %v857, %v858
      %v868 = vrot.slane %v800, 2
      %v869 = vrot.slane %v801, 2
      %v870 = vsel %vm746, %v868, %v869
      %v871 = vrot.slane %v802, 2
      %v872 = vrot.slane %v803, 2
      %v873 = vsel %vm746, %v871, %v872
      %v874 = vrot.slane %v804, 2
      %v875 = vrot.slane %v805, 2
      %v876 = vsel %vm746, %v874, %v875
      %v877 = vrot.slane %v806, 2
      %v878 = vrot.slane %v807, 2
      %v879 = vsel %vm746, %v877, %v878
      %v880 = vrot.slane %v808, 2
      %v881 = vrot.slane %v809, 2
      %v882 = vsel %vm746, %v880, %v881
      %v883 = vrot.slane %v810, 2
      %v884 = vrot.slane %v811, 2
      %v885 = vsel %vm746, %v883, %v884
      %v886 = vrot.slane %v812, 2
      %v887 = vrot.slane %v813, 2
      %v888 = vsel %vm746, %v886, %v887
      %v889 = vrot.slane %v814, 2
      %v890 = vrot.slane %v815, 2
      %v891 = vsel %vm746, %v889, %v890
      %v902 = vrot.slane %v816, 1
      %v903 = vrot.slane %v817, 1
      %v904 = vsel %vm713, %v902, %v903
      %v906 = vrot.slane %v816, 2
      %v907 = vrot.slane %v817, 2
      %v908 = vsel %vm746, %v906, %v907
      %v912 = vrot.slane %v818, 1
      %v913 = vrot.slane %v819, 1
      %v914 = vsel %vm713, %v912, %v913
      %v916 = vrot.slane %v818, 2
      %v917 = vrot.slane %v819, 2
      %v918 = vsel %vm746, %v916, %v917
      %s920 = scalar_lea.vmem [#allocation2], 320
      %v921 = vld [vmem:[%s920] sm:$0xff]
      %v922 = vld [vmem:[%s920 + $0x8] sm:$0x3]
      %v923 = vld [vmem:[%s920 + $0x10] sm:$0xff]
      %v924 = vld [vmem:[%s920 + $0x18] sm:$0x3]
      %v925 = vld [vmem:[%s920 + $0x20] sm:$0xff]
      %v926 = vld [vmem:[%s920 + $0x28] sm:$0x3]
      %v927 = vld [vmem:[%s920 + $0x30] sm:$0xff]
      %v928 = vld [vmem:[%s920 + $0x38] sm:$0x3]
      %v929 = vld [vmem:[%s920 + $0x40] sm:$0xff]
      %v930 = vld [vmem:[%s920 + $0x48] sm:$0x3]
      %v931 = vld [vmem:[%s920 + $0x50] sm:$0xff]
      %v932 = vld [vmem:[%s920 + $0x58] sm:$0x3]
      %v933 = vld [vmem:[%s920 + $0x60] sm:$0xff]
      %v934 = vld [vmem:[%s920 + $0x68] sm:$0x3]
      %v935 = vld [vmem:[%s920 + $0x70] sm:$0xff]
      %v936 = vld [vmem:[%s920 + $0x78] sm:$0x3]
      %v937 = vld [vmem:[%s920 + $0x80] sm:$0xff]
      %v938 = vld [vmem:[%s920 + $0x88] sm:$0x3]
      %v939 = vld [vmem:[%s920 + $0x90] sm:$0xff]
      %v940 = vld [vmem:[%s920 + $0x98] sm:$0x3]
      %v957 = vrot.slane %v921, 1
      %v958 = vrot.slane %v922, 1
      %v959 = vsel %vm713, %v957, %v958
      %v960 = vrot.slane %v923, 1
      %v961 = vrot.slane %v924, 1
      %v962 = vsel %vm713, %v960, %v961
      %v963 = vrot.slane %v925, 1
      %v964 = vrot.slane %v926, 1
      %v965 = vsel %vm713, %v963, %v964
      %v966 = vrot.slane %v927, 1
      %v967 = vrot.slane %v928, 1
      %v968 = vsel %vm713, %v966, %v967
      %v969 = vrot.slane %v929, 1
      %v970 = vrot.slane %v930, 1
      %v971 = vsel %vm713, %v969, %v970
      %v972 = vrot.slane %v931, 1
      %v973 = vrot.slane %v932, 1
      %v974 = vsel %vm713, %v972, %v973
      %v975 = vrot.slane %v933, 1
      %v976 = vrot.slane %v934, 1
      %v977 = vsel %vm713, %v975, %v976
      %v978 = vrot.slane %v935, 1
      %v979 = vrot.slane %v936, 1
      %v980 = vsel %vm713, %v978, %v979
      %v989 = vrot.slane %v921, 2
      %v990 = vrot.slane %v922, 2
      %v991 = vsel %vm746, %v989, %v990
      %v992 = vrot.slane %v923, 2
      %v993 = vrot.slane %v924, 2
      %v994 = vsel %vm746, %v992, %v993
      %v995 = vrot.slane %v925, 2
      %v996 = vrot.slane %v926, 2
      %v997 = vsel %vm746, %v995, %v996
      %v998 = vrot.slane %v927, 2
      %v999 = vrot.slane %v928, 2
      %v1000 = vsel %vm746, %v998, %v999
      %v1001 = vrot.slane %v929, 2
      %v1002 = vrot.slane %v930, 2
      %v1003 = vsel %vm746, %v1001, %v1002
      %v1004 = vrot.slane %v931, 2
      %v1005 = vrot.slane %v932, 2
      %v1006 = vsel %vm746, %v1004, %v1005
      %v1007 = vrot.slane %v933, 2
      %v1008 = vrot.slane %v934, 2
      %v1009 = vsel %vm746, %v1007, %v1008
      %v1010 = vrot.slane %v935, 2
      %v1011 = vrot.slane %v936, 2
      %v1012 = vsel %vm746, %v1010, %v1011
      %v1023 = vrot.slane %v937, 1
      %v1024 = vrot.slane %v938, 1
      %v1025 = vsel %vm713, %v1023, %v1024
      %v1027 = vrot.slane %v937, 2
      %v1028 = vrot.slane %v938, 2
      %v1029 = vsel %vm746, %v1027, %v1028
      %v1033 = vrot.slane %v939, 1
      %v1034 = vrot.slane %v940, 1
      %v1035 = vsel %vm713, %v1033, %v1034
      %v1037 = vrot.slane %v939, 2
      %v1038 = vrot.slane %v940, 2
      %v1039 = vsel %vm746, %v1037, %v1038
      %v1041 = vpack.c.bf16 %v679, %v677
      %v1042 = vpack.c.bf16 %v719, %v716
      %v1043 = vpack.c.bf16 %v752, %v749
      %v1044 = vpack.c.bf16 %v681, %v679
      %v1045 = vpack.c.bf16 %v722, %v719
      %v1046 = vpack.c.bf16 %v755, %v752
      %v1047 = vpack.c.bf16 %v683, %v681
      %v1048 = vpack.c.bf16 %v725, %v722
      %v1049 = vpack.c.bf16 %v758, %v755
      %v1050 = vpack.c.bf16 %v802, %v800
      %v1051 = vpack.c.bf16 %v841, %v838
      %v1052 = vpack.c.bf16 %v873, %v870
      %v1053 = vpack.c.bf16 %v804, %v802
      %v1054 = vpack.c.bf16 %v844, %v841
      %v1055 = vpack.c.bf16 %v876, %v873
      %v1056 = vpack.c.bf16 %v806, %v804
      %v1057 = vpack.c.bf16 %v847, %v844
      %v1058 = vpack.c.bf16 %v879, %v876
      %v1059 = vpack.c.bf16 %v923, %v921
      %v1060 = vpack.c.bf16 %v962, %v959
      %v1061 = vpack.c.bf16 %v994, %v991
      %v1062 = vpack.c.bf16 %v925, %v923
      %v1063 = vpack.c.bf16 %v965, %v962
      %v1064 = vpack.c.bf16 %v997, %v994
      %v1065 = vpack.c.bf16 %v927, %v925
      %v1066 = vpack.c.bf16 %v968, %v965
      %v1067 = vpack.c.bf16 %v1000, %v997
      %v1068 = vpack.c.bf16 %v685, %v683
      %v1069 = vpack.c.bf16 %v728, %v725
      %v1070 = vpack.c.bf16 %v761, %v758
      %v1071 = vpack.c.bf16 %v687, %v685
      %v1072 = vpack.c.bf16 %v731, %v728
      %v1073 = vpack.c.bf16 %v764, %v761
      %v1074 = vpack.c.bf16 %v808, %v806
      %v1075 = vpack.c.bf16 %v850, %v847
      %v1076 = vpack.c.bf16 %v882, %v879
      %v1077 = vpack.c.bf16 %v810, %v808
      %v1078 = vpack.c.bf16 %v853, %v850
      %v1079 = vpack.c.bf16 %v885, %v882
      %v1080 = vpack.c.bf16 %v929, %v927
      %v1081 = vpack.c.bf16 %v971, %v968
      %v1082 = vpack.c.bf16 %v1003, %v1000
      %v1083 = vpack.c.bf16 %v931, %v929
      %v1084 = vpack.c.bf16 %v974, %v971
      %v1085 = vpack.c.bf16 %v1006, %v1003
      %v1086 = vpack.c.bf16 %v689, %v687
      %v1087 = vpack.c.bf16 %v734, %v731
      %v1088 = vpack.c.bf16 %v767, %v764
      %v1089 = vpack.c.bf16 %v691, %v689
      %v1090 = vpack.c.bf16 %v737, %v734
      %v1091 = vpack.c.bf16 %v770, %v767
      %v1092 = vpack.c.bf16 %v812, %v810
      %v1093 = vpack.c.bf16 %v856, %v853
      %v1094 = vpack.c.bf16 %v888, %v885
      %v1095 = vpack.c.bf16 %v814, %v812
      %v1096 = vpack.c.bf16 %v859, %v856
      %v1097 = vpack.c.bf16 %v891, %v888
      %v1098 = vpack.c.bf16 %v933, %v931
      %v1099 = vpack.c.bf16 %v977, %v974
      %v1100 = vpack.c.bf16 %v1009, %v1006
      %v1101 = vpack.c.bf16 %v935, %v933
      %v1102 = vpack.c.bf16 %v980, %v977
      %v1103 = vpack.c.bf16 %v1012, %v1009
      %v1104 = vpack.c.bf16 %v693, %v691
      %v1105 = vpack.c.bf16 %v783, %v737
      %v1106 = vpack.c.bf16 %v787, %v770
      %v1107 = vpack.c.bf16 %v695, %v693
      %v1108 = vpack.c.bf16 %v793, %v783
      %v1109 = vpack.c.bf16 %v797, %v787
      %v1110 = vpack.c.bf16 %v816, %v814
      %v1111 = vpack.c.bf16 %v904, %v859
      %v1112 = vpack.c.bf16 %v908, %v891
      %v1113 = vpack.c.bf16 %v818, %v816
      %v1114 = vpack.c.bf16 %v914, %v904
      %v1115 = vpack.c.bf16 %v918, %v908
      %v1116 = vpack.c.bf16 %v937, %v935
      %v1117 = vpack.c.bf16 %v1025, %v980
      %v1118 = vpack.c.bf16 %v1029, %v1012
      %v1119 = vpack.c.bf16 %v939, %v937
      %v1120 = vpack.c.bf16 %v1035, %v1025
      %v1121 = vpack.c.bf16 %v1039, %v1029
      %v1122 = vld [vmem:[%s5] sm:$0xf]
      %v1123 = vld [vmem:[%s5 + $0x4] sm:$0xf]
      %v1124 = vld [vmem:[%s5 + $0x8] sm:$0xf]
      %v1125 = vld [vmem:[%s5 + $0xc] sm:$0xf]
      %v1126 = vld [vmem:[%s5 + $0x10] sm:$0xf]
      %v1127 = vld [vmem:[%s5 + $0x14] sm:$0xf]
      %v1128 = vld [vmem:[%s5 + $0x18] sm:$0xf]
      %v1129 = vld [vmem:[%s5 + $0x1c] sm:$0xf]
      %v1130 = vld [vmem:[%s5 + $0x20] sm:$0xf]
      %v1131 = vld [vmem:[%s5 + $0x24] sm:$0xf]
      %v1132 = vld [vmem:[%s5 + $0x28] sm:$0xf]
      %v1133 = vld [vmem:[%s5 + $0x2c] sm:$0xf]
      %v1134 = vld [vmem:[%s5 + $0x30] sm:$0xf]
      %v1135 = vld [vmem:[%s5 + $0x34] sm:$0xf]
      %v1136 = vld [vmem:[%s5 + $0x38] sm:$0xf]
      %v1137 = vld [vmem:[%s5 + $0x3c] sm:$0xf]
      %v1138 = vld [vmem:[%s5 + $0x40] sm:$0xf]
      %v1139 = vld [vmem:[%s5 + $0x44] sm:$0xf]
      %v1140 = vld [vmem:[%s5 + $0x48] sm:$0xf]
      %v1141 = vld [vmem:[%s5 + $0x4c] sm:$0xf]
      %v1142 = vld [vmem:[%s5 + $0x50] sm:$0xf]
      %v1143 = vld [vmem:[%s5 + $0x54] sm:$0xf]
      %v1144 = vld [vmem:[%s5 + $0x58] sm:$0xf]
      %v1145 = vld [vmem:[%s5 + $0x5c] sm:$0xf]
      %v1146 = vld [vmem:[%s5 + $0x60] sm:$0xf]
      %v1147 = vld [vmem:[%s5 + $0x64] sm:$0xf]
      %v1148 = vld [vmem:[%s5 + $0x68] sm:$0xf]
      %v1149 = vld [vmem:[%s5 + $0x6c] sm:$0xf]
      %v1150 = vld [vmem:[%s5 + $0x70] sm:$0xf]
      %v1151 = vld [vmem:[%s5 + $0x74] sm:$0xf]
      %v1152 = vld [vmem:[%s5 + $0x78] sm:$0xf]
      %v1153 = vld [vmem:[%s5 + $0x7c] sm:$0xf]
      %v1154 = vld [vmem:[%s5 + $0x80] sm:$0xf]
      %v1155 = vld [vmem:[%s5 + $0x84] sm:$0xf]
      %v1156 = vld [vmem:[%s5 + $0x88] sm:$0xf]
      %v1157 = vld [vmem:[%s5 + $0x8c] sm:$0xf]
      %v1158 = vld [vmem:[%s5 + $0x90] sm:$0xf]
      %v1159 = vld [vmem:[%s5 + $0x94] sm:$0xf]
      %v1160 = vld [vmem:[%s5 + $0x98] sm:$0xf]
      %v1161 = vld [vmem:[%s5 + $0x9c] sm:$0xf]
      %v1162 = vld [vmem:[%s5 + $0xa0] sm:$0xf]
      %v1163 = vld [vmem:[%s5 + $0xa4] sm:$0xf]
      %v1164 = vld [vmem:[%s5 + $0xa8] sm:$0xf]
      %v1165 = vld [vmem:[%s5 + $0xac] sm:$0xf]
      %v1166 = vld [vmem:[%s5 + $0xb0] sm:$0xf]
      %v1167 = vld [vmem:[%s5 + $0xb4] sm:$0xf]
      %v1168 = vld [vmem:[%s5 + $0xb8] sm:$0xf]
      %v1169 = vld [vmem:[%s5 + $0xbc] sm:$0xf]
      %v1170 = vld [vmem:[%s5 + $0xc0] sm:$0xf]
      %v1171 = vld [vmem:[%s5 + $0xc4] sm:$0xf]
      %v1172 = vld [vmem:[%s5 + $0xc8] sm:$0xf]
      %v1173 = vld [vmem:[%s5 + $0xcc] sm:$0xf]
      %v1174 = vld [vmem:[%s5 + $0xd0] sm:$0xf]
      %v1175 = vld [vmem:[%s5 + $0xd4] sm:$0xf]
      %v1176 = vld [vmem:[%s5 + $0xd8] sm:$0xf]
      %v1177 = vld [vmem:[%s5 + $0xdc] sm:$0xf]
      %v1178 = vld [vmem:[%s5 + $0xe0] sm:$0xf]
      %v1179 = vld [vmem:[%s5 + $0xe4] sm:$0xf]
      %v1180 = vld [vmem:[%s5 + $0xe8] sm:$0xf]
      %v1181 = vld [vmem:[%s5 + $0xec] sm:$0xf]
      %v1182 = vld [vmem:[%s5 + $0xf0] sm:$0xf]
      %v1183 = vld [vmem:[%s5 + $0xf4] sm:$0xf]
      %v1184 = vld [vmem:[%s5 + $0xf8] sm:$0xf]
      %v1185 = vld [vmem:[%s5 + $0xfc] sm:$0xf]
      %v1186 = vld [vmem:[%s5 + $0x100] sm:$0xf]
      %v1187 = vld [vmem:[%s5 + $0x104] sm:$0xf]
      %v1188 = vld [vmem:[%s5 + $0x108] sm:$0xf]
      %v1189 = vld [vmem:[%s5 + $0x10c] sm:$0xf]
      %v1190 = vld [vmem:[%s5 + $0x110] sm:$0xf]
      %v1191 = vld [vmem:[%s5 + $0x114] sm:$0xf]
      %v1192 = vld [vmem:[%s5 + $0x118] sm:$0xf]
      %v1193 = vld [vmem:[%s5 + $0x11c] sm:$0xf]
      %v1194 = vld [vmem:[%s5 + $0x120] sm:$0xf]
      %v1195 = vld [vmem:[%s5 + $0x124] sm:$0xf]
      %v1196 = vld [vmem:[%s5 + $0x128] sm:$0xf]
      %v1197 = vld [vmem:[%s5 + $0x12c] sm:$0xf]
      %v1198 = vld [vmem:[%s5 + $0x130] sm:$0xf]
      %v1199 = vld [vmem:[%s5 + $0x134] sm:$0xf]
      %v1200 = vld [vmem:[%s5 + $0x138] sm:$0xf]
      %v1201 = vld [vmem:[%s5 + $0x13c] sm:$0xf]
      %v1202 = vld [vmem:[%s5 + $0x140] sm:$0xf]
      %v1203 = vld [vmem:[%s5 + $0x144] sm:$0xf]
      %v1204 = vld [vmem:[%s5 + $0x148] sm:$0xf]
      %v1205 = vld [vmem:[%s5 + $0x14c] sm:$0xf]
      %v1206 = vld [vmem:[%s5 + $0x150] sm:$0xf]
      %v1207 = vld [vmem:[%s5 + $0x154] sm:$0xf]
      %v1208 = vld [vmem:[%s5 + $0x158] sm:$0xf]
      %v1209 = vld [vmem:[%s5 + $0x15c] sm:$0xf]
      %v1210 = vld [vmem:[%s5 + $0x160] sm:$0xf]
      %v1211 = vld [vmem:[%s5 + $0x164] sm:$0xf]
      %v1212 = vld [vmem:[%s5 + $0x168] sm:$0xf]
      %v1213 = vld [vmem:[%s5 + $0x16c] sm:$0xf]
      %v1214 = vld [vmem:[%s5 + $0x170] sm:$0xf]
      %v1215 = vld [vmem:[%s5 + $0x174] sm:$0xf]
      %v1216 = vld [vmem:[%s5 + $0x178] sm:$0xf]
      %v1217 = vld [vmem:[%s5 + $0x17c] sm:$0xf]
      %v1218 = vld [vmem:[%s5 + $0x180] sm:$0xf]
      %v1219 = vld [vmem:[%s5 + $0x184] sm:$0xf]
      %v1220 = vld [vmem:[%s5 + $0x188] sm:$0xf]
      %v1221 = vld [vmem:[%s5 + $0x18c] sm:$0xf]
      %v1222 = vld [vmem:[%s5 + $0x190] sm:$0xf]
      %v1223 = vld [vmem:[%s5 + $0x194] sm:$0xf]
      %v1224 = vld [vmem:[%s5 + $0x198] sm:$0xf]
      %v1225 = vld [vmem:[%s5 + $0x19c] sm:$0xf]
      %v1226 = vld [vmem:[%s5 + $0x1a0] sm:$0xf]
      %v1227 = vld [vmem:[%s5 + $0x1a4] sm:$0xf]
      %v1228 = vld [vmem:[%s5 + $0x1a8] sm:$0xf]
      %v1229 = vld [vmem:[%s5 + $0x1ac] sm:$0xf]
      %v1230 = vld [vmem:[%s5 + $0x1b0] sm:$0xf]
      %v1231 = vld [vmem:[%s5 + $0x1b4] sm:$0xf]
      %v1232 = vld [vmem:[%s5 + $0x1b8] sm:$0xf]
      %v1233 = vld [vmem:[%s5 + $0x1bc] sm:$0xf]
      %v1234 = vld [vmem:[%s5 + $0x1c0] sm:$0xf]
      %v1235 = vld [vmem:[%s5 + $0x1c4] sm:$0xf]
      %v1236 = vld [vmem:[%s5 + $0x1c8] sm:$0xf]
      %v1237 = vld [vmem:[%s5 + $0x1cc] sm:$0xf]
      %v1238 = vld [vmem:[%s5 + $0x1d0] sm:$0xf]
      %v1239 = vld [vmem:[%s5 + $0x1d4] sm:$0xf]
      %v1240 = vld [vmem:[%s5 + $0x1d8] sm:$0xf]
      %v1241 = vld [vmem:[%s5 + $0x1dc] sm:$0xf]
      %v1242 = vld [vmem:[%s5 + $0x1e0] sm:$0xf]
      %v1243 = vld [vmem:[%s5 + $0x1e4] sm:$0xf]
      %v1244 = vld [vmem:[%s5 + $0x1e8] sm:$0xf]
      %v1245 = vld [vmem:[%s5 + $0x1ec] sm:$0xf]
      %v1246 = vld [vmem:[%s5 + $0x1f0] sm:$0xf]
      %v1247 = vld [vmem:[%s5 + $0x1f4] sm:$0xf]
      %v1248 = vld [vmem:[%s5 + $0x1f8] sm:$0xf]
      %v1249 = vld [vmem:[%s5 + $0x1fc] sm:$0xf]
      %v1250 = vld [vmem:[%s5 + $0x200] sm:$0xf]
      %v1251 = vld [vmem:[%s5 + $0x204] sm:$0xf]
      %v1252 = vld [vmem:[%s5 + $0x208] sm:$0xf]
      %v1253 = vld [vmem:[%s5 + $0x20c] sm:$0xf]
      %v1254 = vld [vmem:[%s5 + $0x210] sm:$0xf]
      %v1255 = vld [vmem:[%s5 + $0x214] sm:$0xf]
      %v1256 = vld [vmem:[%s5 + $0x218] sm:$0xf]
      %v1257 = vld [vmem:[%s5 + $0x21c] sm:$0xf]
      %v1258 = vld [vmem:[%s5 + $0x220] sm:$0xf]
      %v1259 = vld [vmem:[%s5 + $0x224] sm:$0xf]
      %v1260 = vld [vmem:[%s5 + $0x228] sm:$0xf]
      %v1261 = vld [vmem:[%s5 + $0x22c] sm:$0xf]
      %v1262 = vld [vmem:[%s5 + $0x230] sm:$0xf]
      %v1263 = vld [vmem:[%s5 + $0x234] sm:$0xf]
      %v1264 = vld [vmem:[%s5 + $0x238] sm:$0xf]
      %v1265 = vld [vmem:[%s5 + $0x23c] sm:$0xf]
      %v1266 = vld [vmem:[%s5 + $0x240] sm:$0xf]
      %v1267 = vld [vmem:[%s5 + $0x244] sm:$0xf]
      %v1268 = vld [vmem:[%s5 + $0x248] sm:$0xf]
      %v1269 = vld [vmem:[%s5 + $0x24c] sm:$0xf]
      %v1270 = vld [vmem:[%s5 + $0x250] sm:$0xf]
      %v1271 = vld [vmem:[%s5 + $0x254] sm:$0xf]
      %v1272 = vld [vmem:[%s5 + $0x258] sm:$0xf]
      %v1273 = vld [vmem:[%s5 + $0x25c] sm:$0xf]
      %v1274 = vld [vmem:[%s5 + $0x260] sm:$0xf]
      %v1275 = vld [vmem:[%s5 + $0x264] sm:$0xf]
      %v1276 = vld [vmem:[%s5 + $0x268] sm:$0xf]
      %v1277 = vld [vmem:[%s5 + $0x26c] sm:$0xf]
      %v1278 = vld [vmem:[%s5 + $0x270] sm:$0xf]
      %v1279 = vld [vmem:[%s5 + $0x274] sm:$0xf]
      %v1280 = vld [vmem:[%s5 + $0x278] sm:$0xf]
      %v1281 = vld [vmem:[%s5 + $0x27c] sm:$0xf]
      %v1282 = vld [vmem:[%s5 + $0x280] sm:$0xf]
      %v1283 = vld [vmem:[%s5 + $0x284] sm:$0xf]
      %v1284 = vld [vmem:[%s5 + $0x288] sm:$0xf]
      %v1285 = vld [vmem:[%s5 + $0x28c] sm:$0xf]
      %v1286 = vld [vmem:[%s5 + $0x290] sm:$0xf]
      %v1287 = vld [vmem:[%s5 + $0x294] sm:$0xf]
      %v1288 = vld [vmem:[%s5 + $0x298] sm:$0xf]
      %v1289 = vld [vmem:[%s5 + $0x29c] sm:$0xf]
      %v1290 = vld [vmem:[%s5 + $0x2a0] sm:$0xf]
      %v1291 = vld [vmem:[%s5 + $0x2a4] sm:$0xf]
      %v1292 = vld [vmem:[%s5 + $0x2a8] sm:$0xf]
      %v1293 = vld [vmem:[%s5 + $0x2ac] sm:$0xf]
      %v1294 = vld [vmem:[%s5 + $0x2b0] sm:$0xf]
      %v1295 = vld [vmem:[%s5 + $0x2b4] sm:$0xf]
      %v1296 = vld [vmem:[%s5 + $0x2b8] sm:$0xf]
      %v1297 = vld [vmem:[%s5 + $0x2bc] sm:$0xf]
      %v1298 = vld [vmem:[%s5 + $0x2c0] sm:$0xf]
      %v1299 = vld [vmem:[%s5 + $0x2c4] sm:$0xf]
      %v1300 = vld [vmem:[%s5 + $0x2c8] sm:$0xf]
      %v1301 = vld [vmem:[%s5 + $0x2cc] sm:$0xf]
      %v1302 = vld [vmem:[%s5 + $0x2d0] sm:$0xf]
      %v1303 = vld [vmem:[%s5 + $0x2d4] sm:$0xf]
      %v1304 = vld [vmem:[%s5 + $0x2d8] sm:$0xf]
      %v1305 = vld [vmem:[%s5 + $0x2dc] sm:$0xf]
      %v1306 = vld [vmem:[%s5 + $0x2e0] sm:$0xf]
      %v1307 = vld [vmem:[%s5 + $0x2e4] sm:$0xf]
      %v1308 = vld [vmem:[%s5 + $0x2e8] sm:$0xf]
      %v1309 = vld [vmem:[%s5 + $0x2ec] sm:$0xf]
      %v1310 = vld [vmem:[%s5 + $0x2f0] sm:$0xf]
      %v1311 = vld [vmem:[%s5 + $0x2f4] sm:$0xf]
      %v1312 = vld [vmem:[%s5 + $0x2f8] sm:$0xf]
      %v1313 = vld [vmem:[%s5 + $0x2fc] sm:$0xf]
      %v1314 = vld [vmem:[%s5 + $0x300] sm:$0xf]
      %v1315 = vld [vmem:[%s5 + $0x304] sm:$0xf]
      %v1316 = vld [vmem:[%s5 + $0x308] sm:$0xf]
      %v1317 = vld [vmem:[%s5 + $0x30c] sm:$0xf]
      %v1318 = vld [vmem:[%s5 + $0x310] sm:$0xf]
      %v1319 = vld [vmem:[%s5 + $0x314] sm:$0xf]
      %v1320 = vld [vmem:[%s5 + $0x318] sm:$0xf]
      %v1321 = vld [vmem:[%s5 + $0x31c] sm:$0xf]
      %v1322 = vld [vmem:[%s5 + $0x320] sm:$0xf]
      %v1323 = vld [vmem:[%s5 + $0x324] sm:$0xf]
      %v1324 = vld [vmem:[%s5 + $0x328] sm:$0xf]
      %v1325 = vld [vmem:[%s5 + $0x32c] sm:$0xf]
      %v1326 = vld [vmem:[%s5 + $0x330] sm:$0xf]
      %v1327 = vld [vmem:[%s5 + $0x334] sm:$0xf]
      %v1328 = vld [vmem:[%s5 + $0x338] sm:$0xf]
      %v1329 = vld [vmem:[%s5 + $0x33c] sm:$0xf]
      %v1330 = vld [vmem:[%s5 + $0x340] sm:$0xf]
      %v1331 = vld [vmem:[%s5 + $0x344] sm:$0xf]
      %v1332 = vld [vmem:[%s5 + $0x348] sm:$0xf]
      %v1333 = vld [vmem:[%s5 + $0x34c] sm:$0xf]
      %v1334 = vld [vmem:[%s5 + $0x350] sm:$0xf]
      %v1335 = vld [vmem:[%s5 + $0x354] sm:$0xf]
      %v1336 = vld [vmem:[%s5 + $0x358] sm:$0xf]
      %v1337 = vld [vmem:[%s5 + $0x35c] sm:$0xf]
      %v1338 = vld [vmem:[%s5 + $0x360] sm:$0xf]
      %v1339 = vld [vmem:[%s5 + $0x364] sm:$0xf]
      %v1340 = vld [vmem:[%s5 + $0x368] sm:$0xf]
      %v1341 = vld [vmem:[%s5 + $0x36c] sm:$0xf]
      %v1342 = vld [vmem:[%s5 + $0x370] sm:$0xf]
      %v1343 = vld [vmem:[%s5 + $0x374] sm:$0xf]
      %v1344 = vld [vmem:[%s5 + $0x378] sm:$0xf]
      %v1345 = vld [vmem:[%s5 + $0x37c] sm:$0xf]
      %v1346 = vld [vmem:[%s5 + $0x380] sm:$0xf]
      %v1347 = vld [vmem:[%s5 + $0x384] sm:$0xf]
      %v1348 = vld [vmem:[%s5 + $0x388] sm:$0xf]
      %v1349 = vld [vmem:[%s5 + $0x38c] sm:$0xf]
      %v1350 = vld [vmem:[%s5 + $0x390] sm:$0xf]
      %v1351 = vld [vmem:[%s5 + $0x394] sm:$0xf]
      %v1352 = vld [vmem:[%s5 + $0x398] sm:$0xf]
      %v1353 = vld [vmem:[%s5 + $0x39c] sm:$0xf]
      %v1354 = vld [vmem:[%s5 + $0x3a0] sm:$0xf]
      %v1355 = vld [vmem:[%s5 + $0x3a4] sm:$0xf]
      %v1356 = vld [vmem:[%s5 + $0x3a8] sm:$0xf]
      %v1357 = vld [vmem:[%s5 + $0x3ac] sm:$0xf]
      %v1358 = vld [vmem:[%s5 + $0x3b0] sm:$0xf]
      %v1359 = vld [vmem:[%s5 + $0x3b4] sm:$0xf]
      %v1360 = vld [vmem:[%s5 + $0x3b8] sm:$0xf]
      %v1361 = vld [vmem:[%s5 + $0x3bc] sm:$0xf]
      %v1362 = vld [vmem:[%s5 + $0x3c0] sm:$0xf]
      %v1363 = vld [vmem:[%s5 + $0x3c4] sm:$0xf]
      %v1364 = vld [vmem:[%s5 + $0x3c8] sm:$0xf]
      %v1365 = vld [vmem:[%s5 + $0x3cc] sm:$0xf]
      %v1366 = vld [vmem:[%s5 + $0x3d0] sm:$0xf]
      %v1367 = vld [vmem:[%s5 + $0x3d4] sm:$0xf]
      %v1368 = vld [vmem:[%s5 + $0x3d8] sm:$0xf]
      %v1369 = vld [vmem:[%s5 + $0x3dc] sm:$0xf]
      %v1370 = vld [vmem:[%s5 + $0x3e0] sm:$0xf]
      %v1371 = vld [vmem:[%s5 + $0x3e4] sm:$0xf]
      %v1372 = vld [vmem:[%s5 + $0x3e8] sm:$0xf]
      %v1373 = vld [vmem:[%s5 + $0x3ec] sm:$0xf]
      %v1374 = vld [vmem:[%s5 + $0x3f0] sm:$0xf]
      %v1375 = vld [vmem:[%s5 + $0x3f4] sm:$0xf]
      %v1376 = vld [vmem:[%s5 + $0x3f8] sm:$0xf]
      %v1377 = vld [vmem:[%s5 + $0x3fc] sm:$0xf]
      %v1378 = vld [vmem:[%s5 + $0x400] sm:$0xf]
      %v1379 = vld [vmem:[%s5 + $0x404] sm:$0xf]
      %v1380 = vld [vmem:[%s5 + $0x408] sm:$0xf]
      %v1381 = vld [vmem:[%s5 + $0x40c] sm:$0xf]
      %v1382 = vld [vmem:[%s5 + $0x410] sm:$0xf]
      %v1383 = vld [vmem:[%s5 + $0x414] sm:$0xf]
      %v1384 = vld [vmem:[%s5 + $0x418] sm:$0xf]
      %v1385 = vld [vmem:[%s5 + $0x41c] sm:$0xf]
      %v1386 = vld [vmem:[%s5 + $0x420] sm:$0xf]
      %v1387 = vld [vmem:[%s5 + $0x424] sm:$0xf]
      %v1388 = vld [vmem:[%s5 + $0x428] sm:$0xf]
      %v1389 = vld [vmem:[%s5 + $0x42c] sm:$0xf]
      %v1390 = vld [vmem:[%s5 + $0x430] sm:$0xf]
      %v1391 = vld [vmem:[%s5 + $0x434] sm:$0xf]
      %v1392 = vld [vmem:[%s5 + $0x438] sm:$0xf]
      %v1393 = vld [vmem:[%s5 + $0x43c] sm:$0xf]
      %v1394 = vld [vmem:[%s5 + $0x440] sm:$0xf]
      %v1395 = vld [vmem:[%s5 + $0x444] sm:$0xf]
      %v1396 = vld [vmem:[%s5 + $0x448] sm:$0xf]
      %v1397 = vld [vmem:[%s5 + $0x44c] sm:$0xf]
      %v1398 = vld [vmem:[%s5 + $0x450] sm:$0xf]
      %v1399 = vld [vmem:[%s5 + $0x454] sm:$0xf]
      %v1400 = vld [vmem:[%s5 + $0x458] sm:$0xf]
      %v1401 = vld [vmem:[%s5 + $0x45c] sm:$0xf]
      %v1402 = vld [vmem:[%s5 + $0x460] sm:$0xf]
      %v1403 = vld [vmem:[%s5 + $0x464] sm:$0xf]
      %v1404 = vld [vmem:[%s5 + $0x468] sm:$0xf]
      %v1405 = vld [vmem:[%s5 + $0x46c] sm:$0xf]
      %v1406 = vld [vmem:[%s5 + $0x470] sm:$0xf]
      %v1407 = vld [vmem:[%s5 + $0x474] sm:$0xf]
      %v1408 = vld [vmem:[%s5 + $0x478] sm:$0xf]
      %v1409 = vld [vmem:[%s5 + $0x47c] sm:$0xf]
      %v1410 = vld [vmem:[%s5 + $0x480] sm:$0xf]
      %v1411 = vld [vmem:[%s5 + $0x484] sm:$0xf]
      %v1412 = vld [vmem:[%s5 + $0x488] sm:$0xf]
      %v1413 = vld [vmem:[%s5 + $0x48c] sm:$0xf]
      %v1414 = vld [vmem:[%s5 + $0x490] sm:$0xf]
      %v1415 = vld [vmem:[%s5 + $0x494] sm:$0xf]
      %v1416 = vld [vmem:[%s5 + $0x498] sm:$0xf]
      %v1417 = vld [vmem:[%s5 + $0x49c] sm:$0xf]
      %v1418 = vld [vmem:[%s5 + $0x4a0] sm:$0xf]
      %v1419 = vld [vmem:[%s5 + $0x4a4] sm:$0xf]
      %v1420 = vld [vmem:[%s5 + $0x4a8] sm:$0xf]
      %v1421 = vld [vmem:[%s5 + $0x4ac] sm:$0xf]
      %v1422 = vld [vmem:[%s5 + $0x4b0] sm:$0xf]
      %v1423 = vld [vmem:[%s5 + $0x4b4] sm:$0xf]
      %v1424 = vld [vmem:[%s5 + $0x4b8] sm:$0xf]
      %v1425 = vld [vmem:[%s5 + $0x4bc] sm:$0xf]
      %v1426 = vld [vmem:[%s5 + $0x4c0] sm:$0xf]
      %v1427 = vld [vmem:[%s5 + $0x4c4] sm:$0xf]
      %v1428 = vld [vmem:[%s5 + $0x4c8] sm:$0xf]
      %v1429 = vld [vmem:[%s5 + $0x4cc] sm:$0xf]
      %v1430 = vld [vmem:[%s5 + $0x4d0] sm:$0xf]
      %v1431 = vld [vmem:[%s5 + $0x4d4] sm:$0xf]
      %v1432 = vld [vmem:[%s5 + $0x4d8] sm:$0xf]
      %v1433 = vld [vmem:[%s5 + $0x4dc] sm:$0xf]
      %v1434 = vld [vmem:[%s5 + $0x4e0] sm:$0xf]
      %v1435 = vld [vmem:[%s5 + $0x4e4] sm:$0xf]
      %v1436 = vld [vmem:[%s5 + $0x4e8] sm:$0xf]
      %v1437 = vld [vmem:[%s5 + $0x4ec] sm:$0xf]
      %v1438 = vld [vmem:[%s5 + $0x4f0] sm:$0xf]
      %v1439 = vld [vmem:[%s5 + $0x4f4] sm:$0xf]
      %v1440 = vld [vmem:[%s5 + $0x4f8] sm:$0xf]
      %v1441 = vld [vmem:[%s5 + $0x4fc] sm:$0xf]
      %v1442 = vld [vmem:[%s5 + $0x500] sm:$0xf]
      %v1443 = vld [vmem:[%s5 + $0x504] sm:$0xf]
      %v1444 = vld [vmem:[%s5 + $0x508] sm:$0xf]
      %v1445 = vld [vmem:[%s5 + $0x50c] sm:$0xf]
      %v1446 = vld [vmem:[%s5 + $0x510] sm:$0xf]
      %v1447 = vld [vmem:[%s5 + $0x514] sm:$0xf]
      %v1448 = vld [vmem:[%s5 + $0x518] sm:$0xf]
      %v1449 = vld [vmem:[%s5 + $0x51c] sm:$0xf]
      %v1450 = vld [vmem:[%s5 + $0x520] sm:$0xf]
      %v1451 = vld [vmem:[%s5 + $0x524] sm:$0xf]
      %v1452 = vld [vmem:[%s5 + $0x528] sm:$0xf]
      %v1453 = vld [vmem:[%s5 + $0x52c] sm:$0xf]
      %v1454 = vld [vmem:[%s5 + $0x530] sm:$0xf]
      %v1455 = vld [vmem:[%s5 + $0x534] sm:$0xf]
      %v1456 = vld [vmem:[%s5 + $0x538] sm:$0xf]
      %v1457 = vld [vmem:[%s5 + $0x53c] sm:$0xf]
      %v1458 = vld [vmem:[%s5 + $0x540] sm:$0xf]
      %v1459 = vld [vmem:[%s5 + $0x544] sm:$0xf]
      %v1460 = vld [vmem:[%s5 + $0x548] sm:$0xf]
      %v1461 = vld [vmem:[%s5 + $0x54c] sm:$0xf]
      %v1462 = vld [vmem:[%s5 + $0x550] sm:$0xf]
      %v1463 = vld [vmem:[%s5 + $0x554] sm:$0xf]
      %v1464 = vld [vmem:[%s5 + $0x558] sm:$0xf]
      %v1465 = vld [vmem:[%s5 + $0x55c] sm:$0xf]
      %v1466 = vld [vmem:[%s5 + $0x560] sm:$0xf]
      %v1467 = vld [vmem:[%s5 + $0x564] sm:$0xf]
      %v1468 = vld [vmem:[%s5 + $0x568] sm:$0xf]
      %v1469 = vld [vmem:[%s5 + $0x56c] sm:$0xf]
      %v1470 = vld [vmem:[%s5 + $0x570] sm:$0xf]
      %v1471 = vld [vmem:[%s5 + $0x574] sm:$0xf]
      %v1472 = vld [vmem:[%s5 + $0x578] sm:$0xf]
      %v1473 = vld [vmem:[%s5 + $0x57c] sm:$0xf]
      %v1474 = vld [vmem:[%s5 + $0x580] sm:$0xf]
      %v1475 = vld [vmem:[%s5 + $0x584] sm:$0xf]
      %v1476 = vld [vmem:[%s5 + $0x588] sm:$0xf]
      %v1477 = vld [vmem:[%s5 + $0x58c] sm:$0xf]
      %v1478 = vld [vmem:[%s5 + $0x590] sm:$0xf]
      %v1479 = vld [vmem:[%s5 + $0x594] sm:$0xf]
      %v1480 = vld [vmem:[%s5 + $0x598] sm:$0xf]
      %v1481 = vld [vmem:[%s5 + $0x59c] sm:$0xf]
      %v1482 = vld [vmem:[%s5 + $0x5a0] sm:$0xf]
      %v1483 = vld [vmem:[%s5 + $0x5a4] sm:$0xf]
      %v1484 = vld [vmem:[%s5 + $0x5a8] sm:$0xf]
      %v1485 = vld [vmem:[%s5 + $0x5ac] sm:$0xf]
      %v1486 = vld [vmem:[%s5 + $0x5b0] sm:$0xf]
      %v1487 = vld [vmem:[%s5 + $0x5b4] sm:$0xf]
      %v1488 = vld [vmem:[%s5 + $0x5b8] sm:$0xf]
      %v1489 = vld [vmem:[%s5 + $0x5bc] sm:$0xf]
      %v1490 = vld [vmem:[%s5 + $0x5c0] sm:$0xf]
      %v1491 = vld [vmem:[%s5 + $0x5c4] sm:$0xf]
      %v1492 = vld [vmem:[%s5 + $0x5c8] sm:$0xf]
      %v1493 = vld [vmem:[%s5 + $0x5cc] sm:$0xf]
      %v1494 = vld [vmem:[%s5 + $0x5d0] sm:$0xf]
      %v1495 = vld [vmem:[%s5 + $0x5d4] sm:$0xf]
      %v1496 = vld [vmem:[%s5 + $0x5d8] sm:$0xf]
      %v1497 = vld [vmem:[%s5 + $0x5dc] sm:$0xf]
      %v1498 = vld [vmem:[%s5 + $0x5e0] sm:$0xf]
      %v1499 = vld [vmem:[%s5 + $0x5e4] sm:$0xf]
      %v1500 = vld [vmem:[%s5 + $0x5e8] sm:$0xf]
      %v1501 = vld [vmem:[%s5 + $0x5ec] sm:$0xf]
      %v1502 = vld [vmem:[%s5 + $0x5f0] sm:$0xf]
      %v1503 = vld [vmem:[%s5 + $0x5f4] sm:$0xf]
      %v1504 = vld [vmem:[%s5 + $0x5f8] sm:$0xf]
      %v1505 = vld [vmem:[%s5 + $0x5fc] sm:$0xf]
      %v1506 = vld [vmem:[%s5 + $0x600] sm:$0xf]
      %v1507 = vld [vmem:[%s5 + $0x604] sm:$0xf]
      %v1508 = vld [vmem:[%s5 + $0x608] sm:$0xf]
      %v1509 = vld [vmem:[%s5 + $0x60c] sm:$0xf]
      %v1510 = vld [vmem:[%s5 + $0x610] sm:$0xf]
      %v1511 = vld [vmem:[%s5 + $0x614] sm:$0xf]
      %v1512 = vld [vmem:[%s5 + $0x618] sm:$0xf]
      %v1513 = vld [vmem:[%s5 + $0x61c] sm:$0xf]
      %v1514 = vld [vmem:[%s5 + $0x620] sm:$0xf]
      %v1515 = vld [vmem:[%s5 + $0x624] sm:$0xf]
      %v1516 = vld [vmem:[%s5 + $0x628] sm:$0xf]
      %v1517 = vld [vmem:[%s5 + $0x62c] sm:$0xf]
      %v1518 = vld [vmem:[%s5 + $0x630] sm:$0xf]
      %v1519 = vld [vmem:[%s5 + $0x634] sm:$0xf]
      %v1520 = vld [vmem:[%s5 + $0x638] sm:$0xf]
      %v1521 = vld [vmem:[%s5 + $0x63c] sm:$0xf]
      %v1522 = vld [vmem:[%s5 + $0x640] sm:$0xf]
      %v1523 = vld [vmem:[%s5 + $0x644] sm:$0xf]
      %v1524 = vld [vmem:[%s5 + $0x648] sm:$0xf]
      %v1525 = vld [vmem:[%s5 + $0x64c] sm:$0xf]
      %v1526 = vld [vmem:[%s5 + $0x650] sm:$0xf]
      %v1527 = vld [vmem:[%s5 + $0x654] sm:$0xf]
      %v1528 = vld [vmem:[%s5 + $0x658] sm:$0xf]
      %v1529 = vld [vmem:[%s5 + $0x65c] sm:$0xf]
      %v1530 = vld [vmem:[%s5 + $0x660] sm:$0xf]
      %v1531 = vld [vmem:[%s5 + $0x664] sm:$0xf]
      %v1532 = vld [vmem:[%s5 + $0x668] sm:$0xf]
      %v1533 = vld [vmem:[%s5 + $0x66c] sm:$0xf]
      %v1534 = vld [vmem:[%s5 + $0x670] sm:$0xf]
      %v1535 = vld [vmem:[%s5 + $0x674] sm:$0xf]
      %v1536 = vld [vmem:[%s5 + $0x678] sm:$0xf]
      %v1537 = vld [vmem:[%s5 + $0x67c] sm:$0xf]
      %v1538 = vld [vmem:[%s5 + $0x680] sm:$0xf]
      %v1539 = vld [vmem:[%s5 + $0x684] sm:$0xf]
      %v1540 = vld [vmem:[%s5 + $0x688] sm:$0xf]
      %v1541 = vld [vmem:[%s5 + $0x68c] sm:$0xf]
      %v1542 = vld [vmem:[%s5 + $0x690] sm:$0xf]
      %v1543 = vld [vmem:[%s5 + $0x694] sm:$0xf]
      %v1544 = vld [vmem:[%s5 + $0x698] sm:$0xf]
      %v1545 = vld [vmem:[%s5 + $0x69c] sm:$0xf]
      %v1546 = vld [vmem:[%s5 + $0x6a0] sm:$0xf]
      %v1547 = vld [vmem:[%s5 + $0x6a4] sm:$0xf]
      %v1548 = vld [vmem:[%s5 + $0x6a8] sm:$0xf]
      %v1549 = vld [vmem:[%s5 + $0x6ac] sm:$0xf]
      %v1550 = vld [vmem:[%s5 + $0x6b0] sm:$0xf]
      %v1551 = vld [vmem:[%s5 + $0x6b4] sm:$0xf]
      %v1552 = vld [vmem:[%s5 + $0x6b8] sm:$0xf]
      %v1553 = vld [vmem:[%s5 + $0x6bc] sm:$0xf]
      %v1986 = vunpack.c.l.b16 %v1122
      %v1987 = vunpack.c.l.b16 %v1123
      %v1988 = vunpack.c.l.b16 %v1124
      %v1989 = vunpack.c.l.b16 %v1125
      %v1990 = vunpack.c.l.b16 %v1126
      %v1991 = vunpack.c.l.b16 %v1127
      %v1992 = vunpack.c.l.b16 %v1128
      %v1993 = vunpack.c.l.b16 %v1129
      %v1994 = vunpack.c.l.b16 %v1130
      %v1995 = vunpack.c.l.b16 %v1131
      %v1996 = vunpack.c.l.b16 %v1132
      %v1997 = vunpack.c.l.b16 %v1133
      %v1998 = vunpack.c.l.b16 %v1134
      %v1999 = vunpack.c.l.b16 %v1135
      %v2000 = vunpack.c.l.b16 %v1136
      %v2001 = vunpack.c.l.b16 %v1137
      %v2002 = vunpack.c.l.b16 %v1138
      %v2003 = vunpack.c.l.b16 %v1139
      %v2004 = vunpack.c.l.b16 %v1140
      %v2005 = vunpack.c.l.b16 %v1141
      %v2006 = vunpack.c.l.b16 %v1142
      %v2007 = vunpack.c.l.b16 %v1143
      %v2008 = vunpack.c.l.b16 %v1144
      %v2009 = vunpack.c.l.b16 %v1145
      %v2010 = vunpack.c.l.b16 %v1146
      %v2011 = vunpack.c.l.b16 %v1147
      %v2012 = vunpack.c.l.b16 %v1148
      %v2013 = vunpack.c.l.b16 %v1149
      %v2014 = vunpack.c.l.b16 %v1150
      %v2015 = vunpack.c.l.b16 %v1151
      %v2016 = vunpack.c.l.b16 %v1152
      %v2017 = vunpack.c.l.b16 %v1153
      %v2018 = vunpack.c.l.b16 %v1154
      %v2019 = vunpack.c.l.b16 %v1155
      %v2020 = vunpack.c.l.b16 %v1156
      %v2021 = vunpack.c.l.b16 %v1157
      %v2022 = vunpack.c.l.b16 %v1158
      %v2023 = vunpack.c.l.b16 %v1159
      %v2024 = vunpack.c.l.b16 %v1160
      %v2025 = vunpack.c.l.b16 %v1161
      %v2026 = vunpack.c.l.b16 %v1162
      %v2027 = vunpack.c.l.b16 %v1163
      %v2028 = vunpack.c.l.b16 %v1164
      %v2029 = vunpack.c.l.b16 %v1165
      %v2030 = vunpack.c.l.b16 %v1166
      %v2031 = vunpack.c.l.b16 %v1167
      %v2032 = vunpack.c.l.b16 %v1168
      %v2033 = vunpack.c.l.b16 %v1169
      %v2034 = vunpack.c.l.b16 %v1170
      %v2035 = vunpack.c.l.b16 %v1171
      %v2036 = vunpack.c.l.b16 %v1172
      %v2037 = vunpack.c.l.b16 %v1173
      %v2038 = vunpack.c.l.b16 %v1174
      %v2039 = vunpack.c.l.b16 %v1175
      %v2040 = vunpack.c.l.b16 %v1176
      %v2041 = vunpack.c.l.b16 %v1177
      %v2042 = vunpack.c.l.b16 %v1178
      %v2043 = vunpack.c.l.b16 %v1179
      %v2044 = vunpack.c.l.b16 %v1180
      %v2045 = vunpack.c.l.b16 %v1181
      %v2046 = vunpack.c.l.b16 %v1182
      %v2047 = vunpack.c.l.b16 %v1183
      %v2048 = vunpack.c.l.b16 %v1184
      %v2049 = vunpack.c.l.b16 %v1185
      %v2050 = vunpack.c.l.b16 %v1186
      %v2051 = vunpack.c.l.b16 %v1187
      %v2052 = vunpack.c.l.b16 %v1188
      %v2053 = vunpack.c.l.b16 %v1189
      %v2054 = vunpack.c.l.b16 %v1190
      %v2055 = vunpack.c.l.b16 %v1191
      %v2056 = vunpack.c.l.b16 %v1192
      %v2057 = vunpack.c.l.b16 %v1193
      %v2058 = vunpack.c.l.b16 %v1194
      %v2059 = vunpack.c.l.b16 %v1195
      %v2060 = vunpack.c.l.b16 %v1196
      %v2061 = vunpack.c.l.b16 %v1197
      %v2062 = vunpack.c.l.b16 %v1198
      %v2063 = vunpack.c.l.b16 %v1199
      %v2064 = vunpack.c.l.b16 %v1200
      %v2065 = vunpack.c.l.b16 %v1201
      %v2066 = vunpack.c.l.b16 %v1202
      %v2067 = vunpack.c.l.b16 %v1203
      %v2068 = vunpack.c.l.b16 %v1204
      %v2069 = vunpack.c.l.b16 %v1205
      %v2070 = vunpack.c.l.b16 %v1206
      %v2071 = vunpack.c.l.b16 %v1207
      %v2072 = vunpack.c.l.b16 %v1208
      %v2073 = vunpack.c.l.b16 %v1209
      %v2074 = vunpack.c.l.b16 %v1210
      %v2075 = vunpack.c.l.b16 %v1211
      %v2076 = vunpack.c.l.b16 %v1212
      %v2077 = vunpack.c.l.b16 %v1213
      %v2078 = vunpack.c.l.b16 %v1214
      %v2079 = vunpack.c.l.b16 %v1215
      %v2080 = vunpack.c.l.b16 %v1216
      %v2081 = vunpack.c.l.b16 %v1217
      %v2082 = vunpack.c.l.b16 %v1218
      %v2083 = vunpack.c.l.b16 %v1219
      %v2084 = vunpack.c.l.b16 %v1220
      %v2085 = vunpack.c.l.b16 %v1221
      %v2086 = vunpack.c.l.b16 %v1222
      %v2087 = vunpack.c.l.b16 %v1223
      %v2088 = vunpack.c.l.b16 %v1224
      %v2089 = vunpack.c.l.b16 %v1225
      %v2090 = vunpack.c.l.b16 %v1226
      %v2091 = vunpack.c.l.b16 %v1227
      %v2092 = vunpack.c.l.b16 %v1228
      %v2093 = vunpack.c.l.b16 %v1229
      %v2094 = vunpack.c.l.b16 %v1230
      %v2095 = vunpack.c.l.b16 %v1231
      %v2096 = vunpack.c.l.b16 %v1232
      %v2097 = vunpack.c.l.b16 %v1233
      %v2098 = vunpack.c.l.b16 %v1234
      %v2099 = vunpack.c.l.b16 %v1235
      %v2100 = vunpack.c.l.b16 %v1236
      %v2101 = vunpack.c.l.b16 %v1237
      %v2102 = vunpack.c.l.b16 %v1238
      %v2103 = vunpack.c.l.b16 %v1239
      %v2104 = vunpack.c.l.b16 %v1240
      %v2105 = vunpack.c.l.b16 %v1241
      %v2106 = vunpack.c.l.b16 %v1242
      %v2107 = vunpack.c.l.b16 %v1243
      %v2108 = vunpack.c.l.b16 %v1244
      %v2109 = vunpack.c.l.b16 %v1245
      %v2110 = vunpack.c.l.b16 %v1246
      %v2111 = vunpack.c.l.b16 %v1247
      %v2112 = vunpack.c.l.b16 %v1248
      %v2113 = vunpack.c.l.b16 %v1249
      %v2114 = vunpack.c.l.b16 %v1250
      %v2115 = vunpack.c.l.b16 %v1251
      %v2116 = vunpack.c.l.b16 %v1252
      %v2117 = vunpack.c.l.b16 %v1253
      %v2118 = vunpack.c.l.b16 %v1254
      %v2119 = vunpack.c.l.b16 %v1255
      %v2120 = vunpack.c.l.b16 %v1256
      %v2121 = vunpack.c.l.b16 %v1257
      %v2122 = vunpack.c.l.b16 %v1258
      %v2123 = vunpack.c.l.b16 %v1259
      %v2124 = vunpack.c.l.b16 %v1260
      %v2125 = vunpack.c.l.b16 %v1261
      %v2126 = vunpack.c.l.b16 %v1262
      %v2127 = vunpack.c.l.b16 %v1263
      %v2128 = vunpack.c.l.b16 %v1264
      %v2129 = vunpack.c.l.b16 %v1265
      %v2130 = vunpack.c.l.b16 %v1266
      %v2131 = vunpack.c.l.b16 %v1267
      %v2132 = vunpack.c.l.b16 %v1268
      %v2133 = vunpack.c.l.b16 %v1269
      %v2134 = vunpack.c.l.b16 %v1270
      %v2135 = vunpack.c.l.b16 %v1271
      %v2136 = vunpack.c.l.b16 %v1272
      %v2137 = vunpack.c.l.b16 %v1273
      %v2138 = vunpack.c.l.b16 %v1274
      %v2139 = vunpack.c.l.b16 %v1275
      %v2140 = vunpack.c.l.b16 %v1276
      %v2141 = vunpack.c.l.b16 %v1277
      %v2142 = vunpack.c.l.b16 %v1278
      %v2143 = vunpack.c.l.b16 %v1279
      %v2144 = vunpack.c.l.b16 %v1280
      %v2145 = vunpack.c.l.b16 %v1281
      %v2146 = vunpack.c.l.b16 %v1282
      %v2147 = vunpack.c.l.b16 %v1283
      %v2148 = vunpack.c.l.b16 %v1284
      %v2149 = vunpack.c.l.b16 %v1285
      %v2150 = vunpack.c.l.b16 %v1286
      %v2151 = vunpack.c.l.b16 %v1287
      %v2152 = vunpack.c.l.b16 %v1288
      %v2153 = vunpack.c.l.b16 %v1289
      %v2154 = vunpack.c.l.b16 %v1290
      %v2155 = vunpack.c.l.b16 %v1291
      %v2156 = vunpack.c.l.b16 %v1292
      %v2157 = vunpack.c.l.b16 %v1293
      %v2158 = vunpack.c.l.b16 %v1294
      %v2159 = vunpack.c.l.b16 %v1295
      %v2160 = vunpack.c.l.b16 %v1296
      %v2161 = vunpack.c.l.b16 %v1297
      %v2162 = vunpack.c.l.b16 %v1298
      %v2163 = vunpack.c.l.b16 %v1299
      %v2164 = vunpack.c.l.b16 %v1300
      %v2165 = vunpack.c.l.b16 %v1301
      %v2166 = vunpack.c.l.b16 %v1302
      %v2167 = vunpack.c.l.b16 %v1303
      %v2168 = vunpack.c.l.b16 %v1304
      %v2169 = vunpack.c.l.b16 %v1305
      %v2170 = vunpack.c.l.b16 %v1306
      %v2171 = vunpack.c.l.b16 %v1307
      %v2172 = vunpack.c.l.b16 %v1308
      %v2173 = vunpack.c.l.b16 %v1309
      %v2174 = vunpack.c.l.b16 %v1310
      %v2175 = vunpack.c.l.b16 %v1311
      %v2176 = vunpack.c.l.b16 %v1312
      %v2177 = vunpack.c.l.b16 %v1313
      %v2178 = vunpack.c.l.b16 %v1314
      %v2179 = vunpack.c.l.b16 %v1315
      %v2180 = vunpack.c.l.b16 %v1316
      %v2181 = vunpack.c.l.b16 %v1317
      %v2182 = vunpack.c.l.b16 %v1318
      %v2183 = vunpack.c.l.b16 %v1319
      %v2184 = vunpack.c.l.b16 %v1320
      %v2185 = vunpack.c.l.b16 %v1321
      %v2186 = vunpack.c.l.b16 %v1322
      %v2187 = vunpack.c.l.b16 %v1323
      %v2188 = vunpack.c.l.b16 %v1324
      %v2189 = vunpack.c.l.b16 %v1325
      %v2190 = vunpack.c.l.b16 %v1326
      %v2191 = vunpack.c.l.b16 %v1327
      %v2192 = vunpack.c.l.b16 %v1328
      %v2193 = vunpack.c.l.b16 %v1329
      %v2194 = vunpack.c.l.b16 %v1330
      %v2195 = vunpack.c.l.b16 %v1331
      %v2196 = vunpack.c.l.b16 %v1332
      %v2197 = vunpack.c.l.b16 %v1333
      %v2198 = vunpack.c.l.b16 %v1334
      %v2199 = vunpack.c.l.b16 %v1335
      %v2200 = vunpack.c.l.b16 %v1336
      %v2201 = vunpack.c.l.b16 %v1337
      %v2202 = vunpack.c.l.b16 %v1338
      %v2203 = vunpack.c.l.b16 %v1339
      %v2204 = vunpack.c.l.b16 %v1340
      %v2205 = vunpack.c.l.b16 %v1341
      %v2206 = vunpack.c.l.b16 %v1342
      %v2207 = vunpack.c.l.b16 %v1343
      %v2208 = vunpack.c.l.b16 %v1344
      %v2209 = vunpack.c.l.b16 %v1345
      %v2210 = vunpack.c.l.b16 %v1346
      %v2211 = vunpack.c.l.b16 %v1347
      %v2212 = vunpack.c.l.b16 %v1348
      %v2213 = vunpack.c.l.b16 %v1349
      %v2214 = vunpack.c.l.b16 %v1350
      %v2215 = vunpack.c.l.b16 %v1351
      %v2216 = vunpack.c.l.b16 %v1352
      %v2217 = vunpack.c.l.b16 %v1353
      %v2218 = vunpack.c.l.b16 %v1354
      %v2219 = vunpack.c.l.b16 %v1355
      %v2220 = vunpack.c.l.b16 %v1356
      %v2221 = vunpack.c.l.b16 %v1357
      %v2222 = vunpack.c.l.b16 %v1358
      %v2223 = vunpack.c.l.b16 %v1359
      %v2224 = vunpack.c.l.b16 %v1360
      %v2225 = vunpack.c.l.b16 %v1361
      %v2226 = vunpack.c.l.b16 %v1362
      %v2227 = vunpack.c.l.b16 %v1363
      %v2228 = vunpack.c.l.b16 %v1364
      %v2229 = vunpack.c.l.b16 %v1365
      %v2230 = vunpack.c.l.b16 %v1366
      %v2231 = vunpack.c.l.b16 %v1367
      %v2232 = vunpack.c.l.b16 %v1368
      %v2233 = vunpack.c.l.b16 %v1369
      %v2234 = vunpack.c.l.b16 %v1370
      %v2235 = vunpack.c.l.b16 %v1371
      %v2236 = vunpack.c.l.b16 %v1372
      %v2237 = vunpack.c.l.b16 %v1373
      %v2238 = vunpack.c.l.b16 %v1374
      %v2239 = vunpack.c.l.b16 %v1375
      %v2240 = vunpack.c.l.b16 %v1376
      %v2241 = vunpack.c.l.b16 %v1377
      %v2242 = vunpack.c.l.b16 %v1378
      %v2243 = vunpack.c.l.b16 %v1379
      %v2244 = vunpack.c.l.b16 %v1380
      %v2245 = vunpack.c.l.b16 %v1381
      %v2246 = vunpack.c.l.b16 %v1382
      %v2247 = vunpack.c.l.b16 %v1383
      %v2248 = vunpack.c.l.b16 %v1384
      %v2249 = vunpack.c.l.b16 %v1385
      %v2250 = vunpack.c.l.b16 %v1386
      %v2251 = vunpack.c.l.b16 %v1387
      %v2252 = vunpack.c.l.b16 %v1388
      %v2253 = vunpack.c.l.b16 %v1389
      %v2254 = vunpack.c.l.b16 %v1390
      %v2255 = vunpack.c.l.b16 %v1391
      %v2256 = vunpack.c.l.b16 %v1392
      %v2257 = vunpack.c.l.b16 %v1393
      %v2258 = vunpack.c.l.b16 %v1394
      %v2259 = vunpack.c.l.b16 %v1395
      %v2260 = vunpack.c.l.b16 %v1396
      %v2261 = vunpack.c.l.b16 %v1397
      %v2262 = vunpack.c.l.b16 %v1398
      %v2263 = vunpack.c.l.b16 %v1399
      %v2264 = vunpack.c.l.b16 %v1400
      %v2265 = vunpack.c.l.b16 %v1401
      %v2266 = vunpack.c.l.b16 %v1402
      %v2267 = vunpack.c.l.b16 %v1403
      %v2268 = vunpack.c.l.b16 %v1404
      %v2269 = vunpack.c.l.b16 %v1405
      %v2270 = vunpack.c.l.b16 %v1406
      %v2271 = vunpack.c.l.b16 %v1407
      %v2272 = vunpack.c.l.b16 %v1408
      %v2273 = vunpack.c.l.b16 %v1409
      %v2274 = vunpack.c.l.b16 %v1410
      %v2275 = vunpack.c.l.b16 %v1411
      %v2276 = vunpack.c.l.b16 %v1412
      %v2277 = vunpack.c.l.b16 %v1413
      %v2278 = vunpack.c.l.b16 %v1414
      %v2279 = vunpack.c.l.b16 %v1415
      %v2280 = vunpack.c.l.b16 %v1416
      %v2281 = vunpack.c.l.b16 %v1417
      %v2282 = vunpack.c.l.b16 %v1418
      %v2283 = vunpack.c.l.b16 %v1419
      %v2284 = vunpack.c.l.b16 %v1420
      %v2285 = vunpack.c.l.b16 %v1421
      %v2286 = vunpack.c.l.b16 %v1422
      %v2287 = vunpack.c.l.b16 %v1423
      %v2288 = vunpack.c.l.b16 %v1424
      %v2289 = vunpack.c.l.b16 %v1425
      %v2290 = vunpack.c.l.b16 %v1426
      %v2291 = vunpack.c.l.b16 %v1427
      %v2292 = vunpack.c.l.b16 %v1428
      %v2293 = vunpack.c.l.b16 %v1429
      %v2294 = vunpack.c.l.b16 %v1430
      %v2295 = vunpack.c.l.b16 %v1431
      %v2296 = vunpack.c.l.b16 %v1432
      %v2297 = vunpack.c.l.b16 %v1433
      %v2298 = vunpack.c.l.b16 %v1434
      %v2299 = vunpack.c.l.b16 %v1435
      %v2300 = vunpack.c.l.b16 %v1436
      %v2301 = vunpack.c.l.b16 %v1437
      %v2302 = vunpack.c.l.b16 %v1438
      %v2303 = vunpack.c.l.b16 %v1439
      %v2304 = vunpack.c.l.b16 %v1440
      %v2305 = vunpack.c.l.b16 %v1441
      %v2306 = vunpack.c.l.b16 %v1442
      %v2307 = vunpack.c.l.b16 %v1443
      %v2308 = vunpack.c.l.b16 %v1444
      %v2309 = vunpack.c.l.b16 %v1445
      %v2310 = vunpack.c.l.b16 %v1446
      %v2311 = vunpack.c.l.b16 %v1447
      %v2312 = vunpack.c.l.b16 %v1448
      %v2313 = vunpack.c.l.b16 %v1449
      %v2314 = vunpack.c.l.b16 %v1450
      %v2315 = vunpack.c.l.b16 %v1451
      %v2316 = vunpack.c.l.b16 %v1452
      %v2317 = vunpack.c.l.b16 %v1453
      %v2318 = vunpack.c.l.b16 %v1454
      %v2319 = vunpack.c.l.b16 %v1455
      %v2320 = vunpack.c.l.b16 %v1456
      %v2321 = vunpack.c.l.b16 %v1457
      %v2322 = vunpack.c.l.b16 %v1458
      %v2323 = vunpack.c.l.b16 %v1459
      %v2324 = vunpack.c.l.b16 %v1460
      %v2325 = vunpack.c.l.b16 %v1461
      %v2326 = vunpack.c.l.b16 %v1462
      %v2327 = vunpack.c.l.b16 %v1463
      %v2328 = vunpack.c.l.b16 %v1464
      %v2329 = vunpack.c.l.b16 %v1465
      %v2330 = vunpack.c.l.b16 %v1466
      %v2331 = vunpack.c.l.b16 %v1467
      %v2332 = vunpack.c.l.b16 %v1468
      %v2333 = vunpack.c.l.b16 %v1469
      %v2334 = vunpack.c.l.b16 %v1470
      %v2335 = vunpack.c.l.b16 %v1471
      %v2336 = vunpack.c.l.b16 %v1472
      %v2337 = vunpack.c.l.b16 %v1473
      %v2338 = vunpack.c.l.b16 %v1474
      %v2339 = vunpack.c.l.b16 %v1475
      %v2340 = vunpack.c.l.b16 %v1476
      %v2341 = vunpack.c.l.b16 %v1477
      %v2342 = vunpack.c.l.b16 %v1478
      %v2343 = vunpack.c.l.b16 %v1479
      %v2344 = vunpack.c.l.b16 %v1480
      %v2345 = vunpack.c.l.b16 %v1481
      %v2346 = vunpack.c.l.b16 %v1482
      %v2347 = vunpack.c.l.b16 %v1483
      %v2348 = vunpack.c.l.b16 %v1484
      %v2349 = vunpack.c.l.b16 %v1485
      %v2350 = vunpack.c.l.b16 %v1486
      %v2351 = vunpack.c.l.b16 %v1487
      %v2352 = vunpack.c.l.b16 %v1488
      %v2353 = vunpack.c.l.b16 %v1489
      %v2354 = vunpack.c.l.b16 %v1490
      %v2355 = vunpack.c.l.b16 %v1491
      %v2356 = vunpack.c.l.b16 %v1492
      %v2357 = vunpack.c.l.b16 %v1493
      %v2358 = vunpack.c.l.b16 %v1494
      %v2359 = vunpack.c.l.b16 %v1495
      %v2360 = vunpack.c.l.b16 %v1496
      %v2361 = vunpack.c.l.b16 %v1497
      %v2362 = vunpack.c.l.b16 %v1498
      %v2363 = vunpack.c.l.b16 %v1499
      %v2364 = vunpack.c.l.b16 %v1500
      %v2365 = vunpack.c.l.b16 %v1501
      %v2366 = vunpack.c.l.b16 %v1502
      %v2367 = vunpack.c.l.b16 %v1503
      %v2368 = vunpack.c.l.b16 %v1504
      %v2369 = vunpack.c.l.b16 %v1505
      %v2370 = vunpack.c.l.b16 %v1506
      %v2371 = vunpack.c.l.b16 %v1507
      %v2372 = vunpack.c.l.b16 %v1508
      %v2373 = vunpack.c.l.b16 %v1509
      %v2374 = vunpack.c.l.b16 %v1510
      %v2375 = vunpack.c.l.b16 %v1511
      %v2376 = vunpack.c.l.b16 %v1512
      %v2377 = vunpack.c.l.b16 %v1513
      %v2378 = vunpack.c.l.b16 %v1514
      %v2379 = vunpack.c.l.b16 %v1515
      %v2380 = vunpack.c.l.b16 %v1516
      %v2381 = vunpack.c.l.b16 %v1517
      %v2382 = vunpack.c.l.b16 %v1518
      %v2383 = vunpack.c.l.b16 %v1519
      %v2384 = vunpack.c.l.b16 %v1520
      %v2385 = vunpack.c.l.b16 %v1521
      %v2386 = vunpack.c.l.b16 %v1522
      %v2387 = vunpack.c.l.b16 %v1523
      %v2388 = vunpack.c.l.b16 %v1524
      %v2389 = vunpack.c.l.b16 %v1525
      %v2390 = vunpack.c.l.b16 %v1526
      %v2391 = vunpack.c.l.b16 %v1527
      %v2392 = vunpack.c.l.b16 %v1528
      %v2393 = vunpack.c.l.b16 %v1529
      %v2394 = vunpack.c.l.b16 %v1530
      %v2395 = vunpack.c.l.b16 %v1531
      %v2396 = vunpack.c.l.b16 %v1532
      %v2397 = vunpack.c.l.b16 %v1533
      %v2398 = vunpack.c.l.b16 %v1534
      %v2399 = vunpack.c.l.b16 %v1535
      %v2400 = vunpack.c.l.b16 %v1536
      %v2401 = vunpack.c.l.b16 %v1537
      %v2402 = vunpack.c.l.b16 %v1538
      %v2403 = vunpack.c.l.b16 %v1539
      %v2404 = vunpack.c.l.b16 %v1540
      %v2405 = vunpack.c.l.b16 %v1541
      %v2406 = vunpack.c.l.b16 %v1542
      %v2407 = vunpack.c.l.b16 %v1543
      %v2408 = vunpack.c.l.b16 %v1544
      %v2409 = vunpack.c.l.b16 %v1545
      %v2410 = vunpack.c.l.b16 %v1546
      %v2411 = vunpack.c.l.b16 %v1547
      %v2412 = vunpack.c.l.b16 %v1548
      %v2413 = vunpack.c.l.b16 %v1549
      %v2414 = vunpack.c.l.b16 %v1550
      %v2415 = vunpack.c.l.b16 %v1551
      %v2416 = vunpack.c.l.b16 %v1552
      %v2417 = vunpack.c.l.b16 %v1553
      %v2418 = vpack.c.b16 %v1987, %v1986
      %v2419 = vpack.c.b16 %v1989, %v1988
      %v2420 = vpack.c.b16 %v1991, %v1990
      %v2421 = vpack.c.b16 %v1993, %v1992
      %v2422 = vpack.c.b16 %v1995, %v1994
      %v2423 = vpack.c.b16 %v1997, %v1996
      %v2424 = vpack.c.b16 %v1999, %v1998
      %v2425 = vpack.c.b16 %v2001, %v2000
      %v2426 = vpack.c.b16 %v2003, %v2002
      %v2427 = vpack.c.b16 %v2005, %v2004
      %v2428 = vpack.c.b16 %v2007, %v2006
      %v2429 = vpack.c.b16 %v2009, %v2008
      %v2430 = vpack.c.b16 %v2011, %v2010
      %v2431 = vpack.c.b16 %v2013, %v2012
      %v2432 = vpack.c.b16 %v2015, %v2014
      %v2433 = vpack.c.b16 %v2017, %v2016
      %v2434 = vpack.c.b16 %v2019, %v2018
      %v2435 = vpack.c.b16 %v2021, %v2020
      %v2436 = vpack.c.b16 %v2023, %v2022
      %v2437 = vpack.c.b16 %v2025, %v2024
      %v2438 = vpack.c.b16 %v2027, %v2026
      %v2439 = vpack.c.b16 %v2029, %v2028
      %v2440 = vpack.c.b16 %v2031, %v2030
      %v2441 = vpack.c.b16 %v2033, %v2032
      %v2442 = vpack.c.b16 %v2035, %v2034
      %v2443 = vpack.c.b16 %v2037, %v2036
      %v2444 = vpack.c.b16 %v2039, %v2038
      %v2445 = vpack.c.b16 %v2041, %v2040
      %v2446 = vpack.c.b16 %v2043, %v2042
      %v2447 = vpack.c.b16 %v2045, %v2044
      %v2448 = vpack.c.b16 %v2047, %v2046
      %v2449 = vpack.c.b16 %v2049, %v2048
      %v2450 = vpack.c.b16 %v2051, %v2050
      %v2451 = vpack.c.b16 %v2053, %v2052
      %v2452 = vpack.c.b16 %v2055, %v2054
      %v2453 = vpack.c.b16 %v2057, %v2056
      %v2454 = vpack.c.b16 %v2059, %v2058
      %v2455 = vpack.c.b16 %v2061, %v2060
      %v2456 = vpack.c.b16 %v2063, %v2062
      %v2457 = vpack.c.b16 %v2065, %v2064
      %v2458 = vpack.c.b16 %v2067, %v2066
      %v2459 = vpack.c.b16 %v2069, %v2068
      %v2460 = vpack.c.b16 %v2071, %v2070
      %v2461 = vpack.c.b16 %v2073, %v2072
      %v2462 = vpack.c.b16 %v2075, %v2074
      %v2463 = vpack.c.b16 %v2077, %v2076
      %v2464 = vpack.c.b16 %v2079, %v2078
      %v2465 = vpack.c.b16 %v2081, %v2080
      %v2466 = vpack.c.b16 %v2083, %v2082
      %v2467 = vpack.c.b16 %v2085, %v2084
      %v2468 = vpack.c.b16 %v2087, %v2086
      %v2469 = vpack.c.b16 %v2089, %v2088
      %v2470 = vpack.c.b16 %v2091, %v2090
      %v2471 = vpack.c.b16 %v2093, %v2092
      %v2472 = vpack.c.b16 %v2095, %v2094
      %v2473 = vpack.c.b16 %v2097, %v2096
      %v2474 = vpack.c.b16 %v2099, %v2098
      %v2475 = vpack.c.b16 %v2101, %v2100
      %v2476 = vpack.c.b16 %v2103, %v2102
      %v2477 = vpack.c.b16 %v2105, %v2104
      %v2478 = vpack.c.b16 %v2107, %v2106
      %v2479 = vpack.c.b16 %v2109, %v2108
      %v2480 = vpack.c.b16 %v2111, %v2110
      %v2481 = vpack.c.b16 %v2113, %v2112
      %v2482 = vpack.c.b16 %v2115, %v2114
      %v2483 = vpack.c.b16 %v2117, %v2116
      %v2484 = vpack.c.b16 %v2119, %v2118
      %v2485 = vpack.c.b16 %v2121, %v2120
      %v2486 = vpack.c.b16 %v2123, %v2122
      %v2487 = vpack.c.b16 %v2125, %v2124
      %v2488 = vpack.c.b16 %v2127, %v2126
      %v2489 = vpack.c.b16 %v2129, %v2128
      %v2490 = vpack.c.b16 %v2131, %v2130
      %v2491 = vpack.c.b16 %v2133, %v2132
      %v2492 = vpack.c.b16 %v2135, %v2134
      %v2493 = vpack.c.b16 %v2137, %v2136
      %v2494 = vpack.c.b16 %v2139, %v2138
      %v2495 = vpack.c.b16 %v2141, %v2140
      %v2496 = vpack.c.b16 %v2143, %v2142
      %v2497 = vpack.c.b16 %v2145, %v2144
      %v2498 = vpack.c.b16 %v2147, %v2146
      %v2499 = vpack.c.b16 %v2149, %v2148
      %v2500 = vpack.c.b16 %v2151, %v2150
      %v2501 = vpack.c.b16 %v2153, %v2152
      %v2502 = vpack.c.b16 %v2155, %v2154
      %v2503 = vpack.c.b16 %v2157, %v2156
      %v2504 = vpack.c.b16 %v2159, %v2158
      %v2505 = vpack.c.b16 %v2161, %v2160
      %v2506 = vpack.c.b16 %v2163, %v2162
      %v2507 = vpack.c.b16 %v2165, %v2164
      %v2508 = vpack.c.b16 %v2167, %v2166
      %v2509 = vpack.c.b16 %v2169, %v2168
      %v2510 = vpack.c.b16 %v2171, %v2170
      %v2511 = vpack.c.b16 %v2173, %v2172
      %v2512 = vpack.c.b16 %v2175, %v2174
      %v2513 = vpack.c.b16 %v2177, %v2176
      %v2514 = vpack.c.b16 %v2179, %v2178
      %v2515 = vpack.c.b16 %v2181, %v2180
      %v2516 = vpack.c.b16 %v2183, %v2182
      %v2517 = vpack.c.b16 %v2185, %v2184
      %v2518 = vpack.c.b16 %v2187, %v2186
      %v2519 = vpack.c.b16 %v2189, %v2188
      %v2520 = vpack.c.b16 %v2191, %v2190
      %v2521 = vpack.c.b16 %v2193, %v2192
      %v2522 = vpack.c.b16 %v2195, %v2194
      %v2523 = vpack.c.b16 %v2197, %v2196
      %v2524 = vpack.c.b16 %v2199, %v2198
      %v2525 = vpack.c.b16 %v2201, %v2200
      %v2526 = vpack.c.b16 %v2203, %v2202
      %v2527 = vpack.c.b16 %v2205, %v2204
      %v2528 = vpack.c.b16 %v2207, %v2206
      %v2529 = vpack.c.b16 %v2209, %v2208
      %v2530 = vpack.c.b16 %v2211, %v2210
      %v2531 = vpack.c.b16 %v2213, %v2212
      %v2532 = vpack.c.b16 %v2215, %v2214
      %v2533 = vpack.c.b16 %v2217, %v2216
      %v2534 = vpack.c.b16 %v2219, %v2218
      %v2535 = vpack.c.b16 %v2221, %v2220
      %v2536 = vpack.c.b16 %v2223, %v2222
      %v2537 = vpack.c.b16 %v2225, %v2224
      %v2538 = vpack.c.b16 %v2227, %v2226
      %v2539 = vpack.c.b16 %v2229, %v2228
      %v2540 = vpack.c.b16 %v2231, %v2230
      %v2541 = vpack.c.b16 %v2233, %v2232
      %v2542 = vpack.c.b16 %v2235, %v2234
      %v2543 = vpack.c.b16 %v2237, %v2236
      %v2544 = vpack.c.b16 %v2239, %v2238
      %v2545 = vpack.c.b16 %v2241, %v2240
      %v2546 = vpack.c.b16 %v2243, %v2242
      %v2547 = vpack.c.b16 %v2245, %v2244
      %v2548 = vpack.c.b16 %v2247, %v2246
      %v2549 = vpack.c.b16 %v2249, %v2248
      %v2550 = vpack.c.b16 %v2251, %v2250
      %v2551 = vpack.c.b16 %v2253, %v2252
      %v2552 = vpack.c.b16 %v2255, %v2254
      %v2553 = vpack.c.b16 %v2257, %v2256
      %v2554 = vpack.c.b16 %v2259, %v2258
      %v2555 = vpack.c.b16 %v2261, %v2260
      %v2556 = vpack.c.b16 %v2263, %v2262
      %v2557 = vpack.c.b16 %v2265, %v2264
      %v2558 = vpack.c.b16 %v2267, %v2266
      %v2559 = vpack.c.b16 %v2269, %v2268
      %v2560 = vpack.c.b16 %v2271, %v2270
      %v2561 = vpack.c.b16 %v2273, %v2272
      %v2562 = vpack.c.b16 %v2275, %v2274
      %v2563 = vpack.c.b16 %v2277, %v2276
      %v2564 = vpack.c.b16 %v2279, %v2278
      %v2565 = vpack.c.b16 %v2281, %v2280
      %v2566 = vpack.c.b16 %v2283, %v2282
      %v2567 = vpack.c.b16 %v2285, %v2284
      %v2568 = vpack.c.b16 %v2287, %v2286
      %v2569 = vpack.c.b16 %v2289, %v2288
      %v2570 = vpack.c.b16 %v2291, %v2290
      %v2571 = vpack.c.b16 %v2293, %v2292
      %v2572 = vpack.c.b16 %v2295, %v2294
      %v2573 = vpack.c.b16 %v2297, %v2296
      %v2574 = vpack.c.b16 %v2299, %v2298
      %v2575 = vpack.c.b16 %v2301, %v2300
      %v2576 = vpack.c.b16 %v2303, %v2302
      %v2577 = vpack.c.b16 %v2305, %v2304
      %v2578 = vpack.c.b16 %v2307, %v2306
      %v2579 = vpack.c.b16 %v2309, %v2308
      %v2580 = vpack.c.b16 %v2311, %v2310
      %v2581 = vpack.c.b16 %v2313, %v2312
      %v2582 = vpack.c.b16 %v2315, %v2314
      %v2583 = vpack.c.b16 %v2317, %v2316
      %v2584 = vpack.c.b16 %v2319, %v2318
      %v2585 = vpack.c.b16 %v2321, %v2320
      %v2586 = vpack.c.b16 %v2323, %v2322
      %v2587 = vpack.c.b16 %v2325, %v2324
      %v2588 = vpack.c.b16 %v2327, %v2326
      %v2589 = vpack.c.b16 %v2329, %v2328
      %v2590 = vpack.c.b16 %v2331, %v2330
      %v2591 = vpack.c.b16 %v2333, %v2332
      %v2592 = vpack.c.b16 %v2335, %v2334
      %v2593 = vpack.c.b16 %v2337, %v2336
      %v2594 = vpack.c.b16 %v2339, %v2338
      %v2595 = vpack.c.b16 %v2341, %v2340
      %v2596 = vpack.c.b16 %v2343, %v2342
      %v2597 = vpack.c.b16 %v2345, %v2344
      %v2598 = vpack.c.b16 %v2347, %v2346
      %v2599 = vpack.c.b16 %v2349, %v2348
      %v2600 = vpack.c.b16 %v2351, %v2350
      %v2601 = vpack.c.b16 %v2353, %v2352
      %v2602 = vpack.c.b16 %v2355, %v2354
      %v2603 = vpack.c.b16 %v2357, %v2356
      %v2604 = vpack.c.b16 %v2359, %v2358
      %v2605 = vpack.c.b16 %v2361, %v2360
      %v2606 = vpack.c.b16 %v2363, %v2362
      %v2607 = vpack.c.b16 %v2365, %v2364
      %v2608 = vpack.c.b16 %v2367, %v2366
      %v2609 = vpack.c.b16 %v2369, %v2368
      %v2610 = vpack.c.b16 %v2371, %v2370
      %v2611 = vpack.c.b16 %v2373, %v2372
      %v2612 = vpack.c.b16 %v2375, %v2374
      %v2613 = vpack.c.b16 %v2377, %v2376
      %v2614 = vpack.c.b16 %v2379, %v2378
      %v2615 = vpack.c.b16 %v2381, %v2380
      %v2616 = vpack.c.b16 %v2383, %v2382
      %v2617 = vpack.c.b16 %v2385, %v2384
      %v2618 = vpack.c.b16 %v2387, %v2386
      %v2619 = vpack.c.b16 %v2389, %v2388
      %v2620 = vpack.c.b16 %v2391, %v2390
      %v2621 = vpack.c.b16 %v2393, %v2392
      %v2622 = vpack.c.b16 %v2395, %v2394
      %v2623 = vpack.c.b16 %v2397, %v2396
      %v2624 = vpack.c.b16 %v2399, %v2398
      %v2625 = vpack.c.b16 %v2401, %v2400
      %v2626 = vpack.c.b16 %v2403, %v2402
      %v2627 = vpack.c.b16 %v2405, %v2404
      %v2628 = vpack.c.b16 %v2407, %v2406
      %v2629 = vpack.c.b16 %v2409, %v2408
      %v2630 = vpack.c.b16 %v2411, %v2410
      %v2631 = vpack.c.b16 %v2413, %v2412
      %v2632 = vpack.c.b16 %v2415, %v2414
      %v2633 = vpack.c.b16 %v2417, %v2416
      %2850 = vmatprep.subr.bf16.mxu0 0
      %2851 = vmatpush1.bf16.msra.mxu0 %v2418
      %2852 = vmatprep.subr.bf16.mxu0 0
      %2853 = vmatpush1.bf16.msra.mxu0 %v2419
      %2854 = vmatprep.subr.bf16.mxu0 0
      %2855 = vmatpush1.bf16.msra.mxu0 %v2420
      %2856 = vmatprep.subr.bf16.mxu0 0
      %2857 = vmatpush1.bf16.msra.mxu0 %v2421
      %2858 = vmatprep.subr.bf16.mxu0 0
      %2859 = vmatpush1.bf16.msra.mxu0 %v2422
      %2860 = vmatprep.subr.bf16.mxu0 0
      %2861 = vmatpush1.bf16.msra.mxu0 %v2423
      %2862 = vmatprep.subr.bf16.mxu0 0
      %2863 = vmatpush1.bf16.msra.mxu0 %v2424
      %2864 = vmatprep.subr.bf16.mxu0 0
      %2865 = vmatpush1.bf16.msra.mxu0 %v2425
      %2866 = vmatprep.subr.bf16.mxu0 0
      %2867 = vmatpush1.bf16.msra.mxu0 %v2426
      %2868 = vmatprep.subr.bf16.mxu0 0
      %2869 = vmatpush1.bf16.msra.mxu0 %v2427
      %2870 = vmatprep.subr.bf16.mxu0 0
      %2871 = vmatpush1.bf16.msra.mxu0 %v2428
      %2872 = vmatprep.subr.bf16.mxu0 0
      %2873 = vmatpush1.bf16.msra.mxu0 %v2429
      %2874 = vmatprep.subr.bf16.mxu0 0
      %2875 = vmatpush1.bf16.msra.mxu0 %v2430
      %2876 = vmatprep.subr.bf16.mxu0 0
      %2877 = vmatpush1.bf16.msra.mxu0 %v2431
      %2878 = vmatprep.subr.bf16.mxu0 0
      %2879 = vmatpush1.bf16.msra.mxu0 %v2432
      %2880 = vmatprep.subr.bf16.mxu0 0
      %2881 = vmatpush1.bf16.msra.mxu0 %v2433
      %2882 = vmatprep.mubr.bf16.mxu0 %v1042
      %2883 = vmatmul.mubr.bf16.gmra.mrb[0].mxu0 %v1041
      %v2884 = vpop.f32.mrb[0].mxu0
      %v2885 = vadd.f32 0.0, %v2884
      %v2886 = vpop.f32.mrb[0].mxu0
      %v2887 = vpop.f32.mrb[0].mxu0
      %v2888 = vadd.f32 0.0, %v2887
      %v2889 = vpop.f32.mrb[0].mxu0
      %2890 = vmatprep.mubr.bf16.mxu0 %v1048
      %2891 = vmatmul.mubr.bf16.gmra.mrb[0].mxu0 %v1047
      %v2892 = vpop.f32.mrb[0].mxu0
      %v2893 = vadd.f32 0.0, %v2892
      %v2894 = vpop.f32.mrb[0].mxu0
      %v2895 = vpop.f32.mrb[0].mxu0
      %v2896 = vadd.f32 0.0, %v2895
      %v2897 = vpop.f32.mrb[0].mxu0
      %2898 = vmatprep.mubr.bf16.mxu0 %v1072
      %2899 = vmatmul.mubr.bf16.gmra.mrb[0].mxu0 %v1071
      %v2900 = vpop.f32.mrb[0].mxu0
      %v2901 = vadd.f32 0.0, %v2900
      %v2902 = vpop.f32.mrb[0].mxu0
      %v2903 = vpop.f32.mrb[0].mxu0
      %v2904 = vadd.f32 0.0, %v2903
      %v2905 = vpop.f32.mrb[0].mxu0
      %2906 = vmatprep.mubr.bf16.mxu0 %v1090
      %2907 = vmatmul.mubr.bf16.gmra.mrb[0].mxu0 %v1089
      %v2908 = vpop.f32.mrb[0].mxu0
      %v2909 = vadd.f32 0.0, %v2908
      %v2910 = vpop.f32.mrb[0].mxu0
      %v2911 = vpop.f32.mrb[0].mxu0
      %v2912 = vadd.f32 0.0, %v2911
      %v2913 = vpop.f32.mrb[0].mxu0
      %2914 = vdwg.mxu0
      %2915 = vmatprep.subr.bf16.mxu0 0
      %2916 = vmatpush1.bf16.msra.mxu0 %v2434
      %2917 = vmatprep.subr.bf16.mxu0 0
      %2918 = vmatpush1.bf16.msra.mxu0 %v2435
      %2919 = vmatprep.subr.bf16.mxu0 0
      %2920 = vmatpush1.bf16.msra.mxu0 %v2436
      %2921 = vmatprep.subr.bf16.mxu0 0
      %2922 = vmatpush1.bf16.msra.mxu0 %v2437
      %2923 = vmatprep.subr.bf16.mxu0 0
      %2924 = vmatpush1.bf16.msra.mxu0 %v2438
      %2925 = vmatprep.subr.bf16.mxu0 0
      %2926 = vmatpush1.bf16.msra.mxu0 %v2439
      %2927 = vmatprep.subr.bf16.mxu0 0
      %2928 = vmatpush1.bf16.msra.mxu0 %v2440
      %2929 = vmatprep.subr.bf16.mxu0 0
      %2930 = vmatpush1.bf16.msra.mxu0 %v2441
      %2931 = vmatprep.subr.bf16.mxu0 0
      %2932 = vmatpush1.bf16.msra.mxu0 %v2442
      %2933 = vmatprep.subr.bf16.mxu0 0
      %2934 = vmatpush1.bf16.msra.mxu0 %v2443
      %2935 = vmatprep.subr.bf16.mxu0 0
      %2936 = vmatpush1.bf16.msra.mxu0 %v2444
      %2937 = vmatprep.subr.bf16.mxu0 0
      %2938 = vmatpush1.bf16.msra.mxu0 %v2445
      %2939 = vmatprep.subr.bf16.mxu0 0
      %2940 = vmatpush1.bf16.msra.mxu0 %v2446
      %2941 = vmatprep.subr.bf16.mxu0 0
      %2942 = vmatpush1.bf16.msra.mxu0 %v2447
      %2943 = vmatprep.subr.bf16.mxu0 0
      %2944 = vmatpush1.bf16.msra.mxu0 %v2448
      %2945 = vmatprep.subr.bf16.mxu0 0
      %2946 = vmatpush1.bf16.msra.mxu0 %v2449
      %2947 = vmatprep.mubr.bf16.mxu0 %v1044
      %2948 = vmatmul.mubr.bf16.gmra.mrb[0].mxu0 %v1043
      %v2949 = vpop.f32.mrb[0].mxu0
      %v2950 = vadd.f32 %v2885, %v2949
      %v2951 = vpop.f32.mrb[0].mxu0
      %v2952 = vpop.f32.mrb[0].mxu0
      %v2953 = vadd.f32 %v2888, %v2952
      %v2954 = vpop.f32.mrb[0].mxu0
      %2955 = vmatprep.mubr.bf16.mxu0 %v1068
      %2956 = vmatmul.mubr.bf16.gmra.mrb[0].mxu0 %v1049
      %v2957 = vpop.f32.mrb[0].mxu0
      %v2958 = vadd.f32 %v2893, %v2957
      %v2959 = vpop.f32.mrb[0].mxu0
      %v2960 = vpop.f32.mrb[0].mxu0
      %v2961 = vadd.f32 %v2896, %v2960
      %v2962 = vpop.f32.mrb[0].mxu0
      %2963 = vmatprep.mubr.bf16.mxu0 %v1086
      %2964 = vmatmul.mubr.bf16.gmra.mrb[0].mxu0 %v1073
      %v2965 = vpop.f32.mrb[0].mxu0
      %v2966 = vadd.f32 %v2901, %v2965
      %v2967 = vpop.f32.mrb[0].mxu0
      %v2968 = vpop.f32.mrb[0].mxu0
      %v2969 = vadd.f32 %v2904, %v2968
      %v2970 = vpop.f32.mrb[0].mxu0
      %2971 = vmatprep.mubr.bf16.mxu0 %v1104
      %2972 = vmatmul.mubr.bf16.gmra.mrb[0].mxu0 %v1091
      %v2973 = vpop.f32.mrb[0].mxu0
      %v2974 = vadd.f32 %v2909, %v2973
      %v2975 = vpop.f32.mrb[0].mxu0
      %v2976 = vpop.f32.mrb[0].mxu0
      %v2977 = vadd.f32 %v2912, %v2976
      %v2978 = vpop.f32.mrb[0].mxu0
      %2979 = vdwg.mxu0
      %2980 = vmatprep.subr.bf16.mxu0 0
      %2981 = vmatpush1.bf16.msra.mxu0 %v2450
      %2982 = vmatprep.subr.bf16.mxu0 0
      %2983 = vmatpush1.bf16.msra.mxu0 %v2451
      %2984 = vmatprep.subr.bf16.mxu0 0
      %2985 = vmatpush1.bf16.msra.mxu0 %v2452
      %2986 = vmatprep.subr.bf16.mxu0 0
      %2987 = vmatpush1.bf16.msra.mxu0 %v2453
      %2988 = vmatprep.subr.bf16.mxu0 0
      %2989 = vmatpush1.bf16.msra.mxu0 %v2454
      %2990 = vmatprep.subr.bf16.mxu0 0
      %2991 = vmatpush1.bf16.msra.mxu0 %v2455
      %2992 = vmatprep.subr.bf16.mxu0 0
      %2993 = vmatpush1.bf16.msra.mxu0 %v2456
      %2994 = vmatprep.subr.bf16.mxu0 0
      %2995 = vmatpush1.bf16.msra.mxu0 %v2457
      %2996 = vmatprep.subr.bf16.mxu0 0
      %2997 = vmatpush1.bf16.msra.mxu0 %v2458
      %2998 = vmatprep.subr.bf16.mxu0 0
      %2999 = vmatpush1.bf16.msra.mxu0 %v2459
      %3000 = vmatprep.subr.bf16.mxu0 0
      %3001 = vmatpush1.bf16.msra.mxu0 %v2460
      %3002 = vmatprep.subr.bf16.mxu0 0
      %3003 = vmatpush1.bf16.msra.mxu0 %v2461
      %3004 = vmatprep.subr.bf16.mxu0 0
      %3005 = vmatpush1.bf16.msra.mxu0 %v2462
      %3006 = vmatprep.subr.bf16.mxu0 0
      %3007 = vmatpush1.bf16.msra.mxu0 %v2463
      %3008 = vmatprep.subr.bf16.mxu0 0
      %3009 = vmatpush1.bf16.msra.mxu0 %v2464
      %3010 = vmatprep.subr.bf16.mxu0 0
      %3011 = vmatpush1.bf16.msra.mxu0 %v2465
      %3012 = vmatprep.mubr.bf16.mxu0 %v1046
      %3013 = vmatmul.mubr.bf16.gmra.mrb[0].mxu0 %v1045
      %v3014 = vpop.f32.mrb[0].mxu0
      %v3015 = vadd.f32 %v2950, %v3014
      %v3016 = vpop.f32.mrb[0].mxu0
      %v3017 = vpop.f32.mrb[0].mxu0
      %v3018 = vadd.f32 %v2953, %v3017
      %v3019 = vpop.f32.mrb[0].mxu0
      %3020 = vmatprep.mubr.bf16.mxu0 %v1070
      %3021 = vmatmul.mubr.bf16.gmra.mrb[0].mxu0 %v1069
      %v3022 = vpop.f32.mrb[0].mxu0
      %v3023 = vadd.f32 %v2958, %v3022
      %v3024 = vpop.f32.mrb[0].mxu0
      %v3025 = vpop.f32.mrb[0].mxu0
      %v3026 = vadd.f32 %v2961, %v3025
      %v3027 = vpop.f32.mrb[0].mxu0
      %3028 = vmatprep.mubr.bf16.mxu0 %v1088
      %3029 = vmatmul.mubr.bf16.gmra.mrb[0].mxu0 %v1087
      %v3030 = vpop.f32.mrb[0].mxu0
      %v3031 = vadd.f32 %v2966, %v3030
      %v3032 = vpop.f32.mrb[0].mxu0
      %v3033 = vpop.f32.mrb[0].mxu0
      %v3034 = vadd.f32 %v2969, %v3033
      %v3035 = vpop.f32.mrb[0].mxu0
      %3036 = vmatprep.mubr.bf16.mxu0 %v1106
      %3037 = vmatmul.mubr.bf16.gmra.mrb[0].mxu0 %v1105
      %v3038 = vpop.f32.mrb[0].mxu0
      %v3039 = vadd.f32 %v2974, %v3038
      %v3040 = vpop.f32.mrb[0].mxu0
      %v3041 = vpop.f32.mrb[0].mxu0
      %v3042 = vadd.f32 %v2977, %v3041
      %v3043 = vpop.f32.mrb[0].mxu0
      %3044 = vdwg.mxu0
      %3045 = vmatprep.subr.bf16.mxu0 0
      %3046 = vmatpush1.bf16.msra.mxu0 %v2466
      %3047 = vmatprep.subr.bf16.mxu0 0
      %3048 = vmatpush1.bf16.msra.mxu0 %v2467
      %3049 = vmatprep.subr.bf16.mxu0 0
      %3050 = vmatpush1.bf16.msra.mxu0 %v2468
      %3051 = vmatprep.subr.bf16.mxu0 0
      %3052 = vmatpush1.bf16.msra.mxu0 %v2469
      %3053 = vmatprep.subr.bf16.mxu0 0
      %3054 = vmatpush1.bf16.msra.mxu0 %v2470
      %3055 = vmatprep.subr.bf16.mxu0 0
      %3056 = vmatpush1.bf16.msra.mxu0 %v2471
      %3057 = vmatprep.subr.bf16.mxu0 0
      %3058 = vmatpush1.bf16.msra.mxu0 %v2472
      %3059 = vmatprep.subr.bf16.mxu0 0
      %3060 = vmatpush1.bf16.msra.mxu0 %v2473
      %3061 = vmatprep.subr.bf16.mxu0 0
      %3062 = vmatpush1.bf16.msra.mxu0 %v2474
      %3063 = vmatprep.subr.bf16.mxu0 0
      %3064 = vmatpush1.bf16.msra.mxu0 %v2475
      %3065 = vmatprep.subr.bf16.mxu0 0
      %3066 = vmatpush1.bf16.msra.mxu0 %v2476
      %3067 = vmatprep.subr.bf16.mxu0 0
      %3068 = vmatpush1.bf16.msra.mxu0 %v2477
      %3069 = vmatprep.subr.bf16.mxu0 0
      %3070 = vmatpush1.bf16.msra.mxu0 %v2478
      %3071 = vmatprep.subr.bf16.mxu0 0
      %3072 = vmatpush1.bf16.msra.mxu0 %v2479
      %3073 = vmatprep.subr.bf16.mxu0 0
      %3074 = vmatpush1.bf16.msra.mxu0 %v2480
      %3075 = vmatprep.subr.bf16.mxu0 0
      %3076 = vmatpush1.bf16.msra.mxu0 %v2481
      %3077 = vmatprep.mubr.bf16.mxu0 %v1048
      %3078 = vmatmul.mubr.bf16.gmra.mrb[0].mxu0 %v1047
      %v3079 = vpop.f32.mrb[0].mxu0
      %v3080 = vadd.f32 %v3015, %v3079
      %v3081 = vpop.f32.mrb[0].mxu0
      %v3082 = vpop.f32.mrb[0].mxu0
      %v3083 = vadd.f32 %v3018, %v3082
      %v3084 = vpop.f32.mrb[0].mxu0
      %3085 = vmatprep.mubr.bf16.mxu0 %v1072
      %3086 = vmatmul.mubr.bf16.gmra.mrb[0].mxu0 %v1071
      %v3087 = vpop.f32.mrb[0].mxu0
      %v3088 = vadd.f32 %v3023, %v3087
      %v3089 = vpop.f32.mrb[0].mxu0
      %v3090 = vpop.f32.mrb[0].mxu0
      %v3091 = vadd.f32 %v3026, %v3090
      %v3092 = vpop.f32.mrb[0].mxu0
      %3093 = vmatprep.mubr.bf16.mxu0 %v1090
      %3094 = vmatmul.mubr.bf16.gmra.mrb[0].mxu0 %v1089
      %v3095 = vpop.f32.mrb[0].mxu0
      %v3096 = vadd.f32 %v3031, %v3095
      %v3097 = vpop.f32.mrb[0].mxu0
      %v3098 = vpop.f32.mrb[0].mxu0
      %v3099 = vadd.f32 %v3034, %v3098
      %v3100 = vpop.f32.mrb[0].mxu0
      %3101 = vmatprep.mubr.bf16.mxu0 %v1108
      %3102 = vmatmul.mubr.bf16.gmra.mrb[0].mxu0 %v1107
      %v3103 = vpop.f32.mrb[0].mxu0
      %v3104 = vadd.f32 %v3039, %v3103
      %v3105 = vpop.f32.mrb[0].mxu0
      %v3106 = vpop.f32.mrb[0].mxu0
      %v3107 = vadd.f32 %v3042, %v3106
      %v3108 = vpop.f32.mrb[0].mxu0
      %3109 = vdwg.mxu0
      %3110 = vmatprep.subr.bf16.mxu0 0
      %3111 = vmatpush1.bf16.msra.mxu0 %v2482
      %3112 = vmatprep.subr.bf16.mxu0 0
      %3113 = vmatpush1.bf16.msra.mxu0 %v2483
      %3114 = vmatprep.subr.bf16.mxu0 0
      %3115 = vmatpush1.bf16.msra.mxu0 %v2484
      %3116 = vmatprep.subr.bf16.mxu0 0
      %3117 = vmatpush1.bf16.msra.mxu0 %v2485
      %3118 = vmatprep.subr.bf16.mxu0 0
      %3119 = vmatpush1.bf16.msra.mxu0 %v2486
      %3120 = vmatprep.subr.bf16.mxu0 0
      %3121 = vmatpush1.bf16.msra.mxu0 %v2487
      %3122 = vmatprep.subr.bf16.mxu0 0
      %3123 = vmatpush1.bf16.msra.mxu0 %v2488
      %3124 = vmatprep.subr.bf16.mxu0 0
      %3125 = vmatpush1.bf16.msra.mxu0 %v2489
      %3126 = vmatprep.subr.bf16.mxu0 0
      %3127 = vmatpush1.bf16.msra.mxu0 %v2490
      %3128 = vmatprep.subr.bf16.mxu0 0
      %3129 = vmatpush1.bf16.msra.mxu0 %v2491
      %3130 = vmatprep.subr.bf16.mxu0 0
      %3131 = vmatpush1.bf16.msra.mxu0 %v2492
      %3132 = vmatprep.subr.bf16.mxu0 0
      %3133 = vmatpush1.bf16.msra.mxu0 %v2493
      %3134 = vmatprep.subr.bf16.mxu0 0
      %3135 = vmatpush1.bf16.msra.mxu0 %v2494
      %3136 = vmatprep.subr.bf16.mxu0 0
      %3137 = vmatpush1.bf16.msra.mxu0 %v2495
      %3138 = vmatprep.subr.bf16.mxu0 0
      %3139 = vmatpush1.bf16.msra.mxu0 %v2496
      %3140 = vmatprep.subr.bf16.mxu0 0
      %3141 = vmatpush1.bf16.msra.mxu0 %v2497
      %3142 = vmatprep.mubr.bf16.mxu0 %v1050
      %3143 = vmatmul.mubr.bf16.gmra.mrb[0].mxu0 %v1049
      %v3144 = vpop.f32.mrb[0].mxu0
      %v3145 = vadd.f32 %v3080, %v3144
      %v3146 = vpop.f32.mrb[0].mxu0
      %v3147 = vpop.f32.mrb[0].mxu0
      %v3148 = vadd.f32 %v3083, %v3147
      %v3149 = vpop.f32.mrb[0].mxu0
      %3150 = vmatprep.mubr.bf16.mxu0 %v1056
      %3151 = vmatmul.mubr.bf16.gmra.mrb[0].mxu0 %v1073
      %v3152 = vpop.f32.mrb[0].mxu0
      %v3153 = vadd.f32 %v3088, %v3152
      %v3154 = vpop.f32.mrb[0].mxu0
      %v3155 = vpop.f32.mrb[0].mxu0
      %v3156 = vadd.f32 %v3091, %v3155
      %v3157 = vpop.f32.mrb[0].mxu0
      %3158 = vmatprep.mubr.bf16.mxu0 %v1077
      %3159 = vmatmul.mubr.bf16.gmra.mrb[0].mxu0 %v1091
      %v3160 = vpop.f32.mrb[0].mxu0
      %v3161 = vadd.f32 %v3096, %v3160
      %v3162 = vpop.f32.mrb[0].mxu0
      %v3163 = vpop.f32.mrb[0].mxu0
      %v3164 = vadd.f32 %v3099, %v3163
      %v3165 = vpop.f32.mrb[0].mxu0
      %3166 = vmatprep.mubr.bf16.mxu0 %v1095
      %3167 = vmatmul.mubr.bf16.gmra.mrb[0].mxu0 %v1109
      %v3168 = vpop.f32.mrb[0].mxu0
      %v3169 = vadd.f32 %v3104, %v3168
      %v3170 = vpop.f32.mrb[0].mxu0
      %v3171 = vpop.f32.mrb[0].mxu0
      %v3172 = vadd.f32 %v3107, %v3171
      %v3173 = vpop.f32.mrb[0].mxu0
      %3174 = vdwg.mxu0
      %3175 = vmatprep.subr.bf16.mxu0 0
      %3176 = vmatpush1.bf16.msra.mxu0 %v2498
      %3177 = vmatprep.subr.bf16.mxu0 0
      %3178 = vmatpush1.bf16.msra.mxu0 %v2499
      %3179 = vmatprep.subr.bf16.mxu0 0
      %3180 = vmatpush1.bf16.msra.mxu0 %v2500
      %3181 = vmatprep.subr.bf16.mxu0 0
      %3182 = vmatpush1.bf16.msra.mxu0 %v2501
      %3183 = vmatprep.subr.bf16.mxu0 0
      %3184 = vmatpush1.bf16.msra.mxu0 %v2502
      %3185 = vmatprep.subr.bf16.mxu0 0
      %3186 = vmatpush1.bf16.msra.mxu0 %v2503
      %3187 = vmatprep.subr.bf16.mxu0 0
      %3188 = vmatpush1.bf16.msra.mxu0 %v2504
      %3189 = vmatprep.subr.bf16.mxu0 0
      %3190 = vmatpush1.bf16.msra.mxu0 %v2505
      %3191 = vmatprep.subr.bf16.mxu0 0
      %3192 = vmatpush1.bf16.msra.mxu0 %v2506
      %3193 = vmatprep.subr.bf16.mxu0 0
      %3194 = vmatpush1.bf16.msra.mxu0 %v2507
      %3195 = vmatprep.subr.bf16.mxu0 0
      %3196 = vmatpush1.bf16.msra.mxu0 %v2508
      %3197 = vmatprep.subr.bf16.mxu0 0
      %3198 = vmatpush1.bf16.msra.mxu0 %v2509
      %3199 = vmatprep.subr.bf16.mxu0 0
      %3200 = vmatpush1.bf16.msra.mxu0 %v2510
      %3201 = vmatprep.subr.bf16.mxu0 0
      %3202 = vmatpush1.bf16.msra.mxu0 %v2511
      %3203 = vmatprep.subr.bf16.mxu0 0
      %3204 = vmatpush1.bf16.msra.mxu0 %v2512
      %3205 = vmatprep.subr.bf16.mxu0 0
      %3206 = vmatpush1.bf16.msra.mxu0 %v2513
      %3207 = vmatprep.mubr.bf16.mxu0 %v1052
      %3208 = vmatmul.mubr.bf16.gmra.mrb[0].mxu0 %v1051
      %v3209 = vpop.f32.mrb[0].mxu0
      %v3210 = vadd.f32 %v3145, %v3209
      %v3211 = vpop.f32.mrb[0].mxu0
      %v3212 = vpop.f32.mrb[0].mxu0
      %v3213 = vadd.f32 %v3148, %v3212
      %v3214 = vpop.f32.mrb[0].mxu0
      %3215 = vmatprep.mubr.bf16.mxu0 %v1058
      %3216 = vmatmul.mubr.bf16.gmra.mrb[0].mxu0 %v1057
      %v3217 = vpop.f32.mrb[0].mxu0
      %v3218 = vadd.f32 %v3153, %v3217
      %v3219 = vpop.f32.mrb[0].mxu0
      %v3220 = vpop.f32.mrb[0].mxu0
      %v3221 = vadd.f32 %v3156, %v3220
      %v3222 = vpop.f32.mrb[0].mxu0
      %3223 = vmatprep.mubr.bf16.mxu0 %v1079
      %3224 = vmatmul.mubr.bf16.gmra.mrb[0].mxu0 %v1078
      %v3225 = vpop.f32.mrb[0].mxu0
      %v3226 = vadd.f32 %v3161, %v3225
      %v3227 = vpop.f32.mrb[0].mxu0
      %v3228 = vpop.f32.mrb[0].mxu0
      %v3229 = vadd.f32 %v3164, %v3228
      %v3230 = vpop.f32.mrb[0].mxu0
      %3231 = vmatprep.mubr.bf16.mxu0 %v1097
      %3232 = vmatmul.mubr.bf16.gmra.mrb[0].mxu0 %v1096
      %v3233 = vpop.f32.mrb[0].mxu0
      %v3234 = vadd.f32 %v3169, %v3233
      %v3235 = vpop.f32.mrb[0].mxu0
      %v3236 = vpop.f32.mrb[0].mxu0
      %v3237 = vadd.f32 %v3172, %v3236
      %v3238 = vpop.f32.mrb[0].mxu0
      %3239 = vdwg.mxu0
      %3240 = vmatprep.subr.bf16.mxu0 0
      %3241 = vmatpush1.bf16.msra.mxu0 %v2514
      %3242 = vmatprep.subr.bf16.mxu0 0
      %3243 = vmatpush1.bf16.msra.mxu0 %v2515
      %3244 = vmatprep.subr.bf16.mxu0 0
      %3245 = vmatpush1.bf16.msra.mxu0 %v2516
      %3246 = vmatprep.subr.bf16.mxu0 0
      %3247 = vmatpush1.bf16.msra.mxu0 %v2517
      %3248 = vmatprep.subr.bf16.mxu0 0
      %3249 = vmatpush1.bf16.msra.mxu0 %v2518
      %3250 = vmatprep.subr.bf16.mxu0 0
      %3251 = vmatpush1.bf16.msra.mxu0 %v2519
      %3252 = vmatprep.subr.bf16.mxu0 0
      %3253 = vmatpush1.bf16.msra.mxu0 %v2520
      %3254 = vmatprep.subr.bf16.mxu0 0
      %3255 = vmatpush1.bf16.msra.mxu0 %v2521
      %3256 = vmatprep.subr.bf16.mxu0 0
      %3257 = vmatpush1.bf16.msra.mxu0 %v2522
      %3258 = vmatprep.subr.bf16.mxu0 0
      %3259 = vmatpush1.bf16.msra.mxu0 %v2523
      %3260 = vmatprep.subr.bf16.mxu0 0
      %3261 = vmatpush1.bf16.msra.mxu0 %v2524
      %3262 = vmatprep.subr.bf16.mxu0 0
      %3263 = vmatpush1.bf16.msra.mxu0 %v2525
      %3264 = vmatprep.subr.bf16.mxu0 0
      %3265 = vmatpush1.bf16.msra.mxu0 %v2526
      %3266 = vmatprep.subr.bf16.mxu0 0
      %3267 = vmatpush1.bf16.msra.mxu0 %v2527
      %3268 = vmatprep.subr.bf16.mxu0 0
      %3269 = vmatpush1.bf16.msra.mxu0 %v2528
      %3270 = vmatprep.subr.bf16.mxu0 0
      %3271 = vmatpush1.bf16.msra.mxu0 %v2529
      %3272 = vmatprep.mubr.bf16.mxu0 %v1054
      %3273 = vmatmul.mubr.bf16.gmra.mrb[0].mxu0 %v1053
      %v3274 = vpop.f32.mrb[0].mxu0
      %v3275 = vadd.f32 %v3210, %v3274
      %v3276 = vpop.f32.mrb[0].mxu0
      %v3277 = vpop.f32.mrb[0].mxu0
      %v3278 = vadd.f32 %v3213, %v3277
      %v3279 = vpop.f32.mrb[0].mxu0
      %3280 = vmatprep.mubr.bf16.mxu0 %v1075
      %3281 = vmatmul.mubr.bf16.gmra.mrb[0].mxu0 %v1074
      %v3282 = vpop.f32.mrb[0].mxu0
      %v3283 = vadd.f32 %v3218, %v3282
      %v3284 = vpop.f32.mrb[0].mxu0
      %v3285 = vpop.f32.mrb[0].mxu0
      %v3286 = vadd.f32 %v3221, %v3285
      %v3287 = vpop.f32.mrb[0].mxu0
      %3288 = vmatprep.mubr.bf16.mxu0 %v1093
      %3289 = vmatmul.mubr.bf16.gmra.mrb[0].mxu0 %v1092
      %v3290 = vpop.f32.mrb[0].mxu0
      %v3291 = vadd.f32 %v3226, %v3290
      %v3292 = vpop.f32.mrb[0].mxu0
      %v3293 = vpop.f32.mrb[0].mxu0
      %v3294 = vadd.f32 %v3229, %v3293
      %v3295 = vpop.f32.mrb[0].mxu0
      %3296 = vmatprep.mubr.bf16.mxu0 %v1111
      %3297 = vmatmul.mubr.bf16.gmra.mrb[0].mxu0 %v1110
      %v3298 = vpop.f32.mrb[0].mxu0
      %v3299 = vadd.f32 %v3234, %v3298
      %v3300 = vpop.f32.mrb[0].mxu0
      %v3301 = vpop.f32.mrb[0].mxu0
      %v3302 = vadd.f32 %v3237, %v3301
      %v3303 = vpop.f32.mrb[0].mxu0
      %3304 = vdwg.mxu0
      %3305 = vmatprep.subr.bf16.mxu0 0
      %3306 = vmatpush1.bf16.msra.mxu0 %v2530
      %3307 = vmatprep.subr.bf16.mxu0 0
      %3308 = vmatpush1.bf16.msra.mxu0 %v2531
      %3309 = vmatprep.subr.bf16.mxu0 0
      %3310 = vmatpush1.bf16.msra.mxu0 %v2532
      %3311 = vmatprep.subr.bf16.mxu0 0
      %3312 = vmatpush1.bf16.msra.mxu0 %v2533
      %3313 = vmatprep.subr.bf16.mxu0 0
      %3314 = vmatpush1.bf16.msra.mxu0 %v2534
      %3315 = vmatprep.subr.bf16.mxu0 0
      %3316 = vmatpush1.bf16.msra.mxu0 %v2535
      %3317 = vmatprep.subr.bf16.mxu0 0
      %3318 = vmatpush1.bf16.msra.mxu0 %v2536
      %3319 = vmatprep.subr.bf16.mxu0 0
      %3320 = vmatpush1.bf16.msra.mxu0 %v2537
      %3321 = vmatprep.subr.bf16.mxu0 0
      %3322 = vmatpush1.bf16.msra.mxu0 %v2538
      %3323 = vmatprep.subr.bf16.mxu0 0
      %3324 = vmatpush1.bf16.msra.mxu0 %v2539
      %3325 = vmatprep.subr.bf16.mxu0 0
      %3326 = vmatpush1.bf16.msra.mxu0 %v2540
      %3327 = vmatprep.subr.bf16.mxu0 0
      %3328 = vmatpush1.bf16.msra.mxu0 %v2541
      %3329 = vmatprep.subr.bf16.mxu0 0
      %3330 = vmatpush1.bf16.msra.mxu0 %v2542
      %3331 = vmatprep.subr.bf16.mxu0 0
      %3332 = vmatpush1.bf16.msra.mxu0 %v2543
      %3333 = vmatprep.subr.bf16.mxu0 0
      %3334 = vmatpush1.bf16.msra.mxu0 %v2544
      %3335 = vmatprep.subr.bf16.mxu0 0
      %3336 = vmatpush1.bf16.msra.mxu0 %v2545
      %3337 = vmatprep.mubr.bf16.mxu0 %v1056
      %3338 = vmatmul.mubr.bf16.gmra.mrb[0].mxu0 %v1055
      %v3339 = vpop.f32.mrb[0].mxu0
      %v3340 = vadd.f32 %v3275, %v3339
      %v3341 = vpop.f32.mrb[0].mxu0
      %v3342 = vpop.f32.mrb[0].mxu0
      %v3343 = vadd.f32 %v3278, %v3342
      %v3344 = vpop.f32.mrb[0].mxu0
      %3345 = vmatprep.mubr.bf16.mxu0 %v1077
      %3346 = vmatmul.mubr.bf16.gmra.mrb[0].mxu0 %v1076
      %v3347 = vpop.f32.mrb[0].mxu0
      %v3348 = vadd.f32 %v3283, %v3347
      %v3349 = vpop.f32.mrb[0].mxu0
      %v3350 = vpop.f32.mrb[0].mxu0
      %v3351 = vadd.f32 %v3286, %v3350
      %v3352 = vpop.f32.mrb[0].mxu0
      %3353 = vmatprep.mubr.bf16.mxu0 %v1095
      %3354 = vmatmul.mubr.bf16.gmra.mrb[0].mxu0 %v1094
      %v3355 = vpop.f32.mrb[0].mxu0
      %v3356 = vadd.f32 %v3291, %v3355
      %v3357 = vpop.f32.mrb[0].mxu0
      %v3358 = vpop.f32.mrb[0].mxu0
      %v3359 = vadd.f32 %v3294, %v3358
      %v3360 = vpop.f32.mrb[0].mxu0
      %3361 = vmatprep.mubr.bf16.mxu0 %v1113
      %3362 = vmatmul.mubr.bf16.gmra.mrb[0].mxu0 %v1112
      %v3363 = vpop.f32.mrb[0].mxu0
      %v3364 = vadd.f32 %v3299, %v3363
      %v3365 = vpop.f32.mrb[0].mxu0
      %v3366 = vpop.f32.mrb[0].mxu0
      %v3367 = vadd.f32 %v3302, %v3366
      %v3368 = vpop.f32.mrb[0].mxu0
      %3369 = vdwg.mxu0
      %3370 = vmatprep.subr.bf16.mxu0 0
      %3371 = vmatpush1.bf16.msra.mxu0 %v2546
      %3372 = vmatprep.subr.bf16.mxu0 0
      %3373 = vmatpush1.bf16.msra.mxu0 %v2547
      %3374 = vmatprep.subr.bf16.mxu0 0
      %3375 = vmatpush1.bf16.msra.mxu0 %v2548
      %3376 = vmatprep.subr.bf16.mxu0 0
      %3377 = vmatpush1.bf16.msra.mxu0 %v2549
      %3378 = vmatprep.subr.bf16.mxu0 0
      %3379 = vmatpush1.bf16.msra.mxu0 %v2550
      %3380 = vmatprep.subr.bf16.mxu0 0
      %3381 = vmatpush1.bf16.msra.mxu0 %v2551
      %3382 = vmatprep.subr.bf16.mxu0 0
      %3383 = vmatpush1.bf16.msra.mxu0 %v2552
      %3384 = vmatprep.subr.bf16.mxu0 0
      %3385 = vmatpush1.bf16.msra.mxu0 %v2553
      %3386 = vmatprep.subr.bf16.mxu0 0
      %3387 = vmatpush1.bf16.msra.mxu0 %v2554
      %3388 = vmatprep.subr.bf16.mxu0 0
      %3389 = vmatpush1.bf16.msra.mxu0 %v2555
      %3390 = vmatprep.subr.bf16.mxu0 0
      %3391 = vmatpush1.bf16.msra.mxu0 %v2556
      %3392 = vmatprep.subr.bf16.mxu0 0
      %3393 = vmatpush1.bf16.msra.mxu0 %v2557
      %3394 = vmatprep.subr.bf16.mxu0 0
      %3395 = vmatpush1.bf16.msra.mxu0 %v2558
      %3396 = vmatprep.subr.bf16.mxu0 0
      %3397 = vmatpush1.bf16.msra.mxu0 %v2559
      %3398 = vmatprep.subr.bf16.mxu0 0
      %3399 = vmatpush1.bf16.msra.mxu0 %v2560
      %3400 = vmatprep.subr.bf16.mxu0 0
      %3401 = vmatpush1.bf16.msra.mxu0 %v2561
      %3402 = vmatprep.mubr.bf16.mxu0 %v1058
      %3403 = vmatmul.mubr.bf16.gmra.mrb[0].mxu0 %v1057
      %v3404 = vpop.f32.mrb[0].mxu0
      %v3405 = vadd.f32 %v3340, %v3404
      %v3406 = vpop.f32.mrb[0].mxu0
      %v3407 = vpop.f32.mrb[0].mxu0
      %v3408 = vadd.f32 %v3343, %v3407
      %v3409 = vpop.f32.mrb[0].mxu0
      %3410 = vmatprep.mubr.bf16.mxu0 %v1079
      %3411 = vmatmul.mubr.bf16.gmra.mrb[0].mxu0 %v1078
      %v3412 = vpop.f32.mrb[0].mxu0
      %v3413 = vadd.f32 %v3348, %v3412
      %v3414 = vpop.f32.mrb[0].mxu0
      %v3415 = vpop.f32.mrb[0].mxu0
      %v3416 = vadd.f32 %v3351, %v3415
      %v3417 = vpop.f32.mrb[0].mxu0
      %3418 = vmatprep.mubr.bf16.mxu0 %v1097
      %3419 = vmatmul.mubr.bf16.gmra.mrb[0].mxu0 %v1096
      %v3420 = vpop.f32.mrb[0].mxu0
      %v3421 = vadd.f32 %v3356, %v3420
      %v3422 = vpop.f32.mrb[0].mxu0
      %v3423 = vpop.f32.mrb[0].mxu0
      %v3424 = vadd.f32 %v3359, %v3423
      %v3425 = vpop.f32.mrb[0].mxu0
      %3426 = vmatprep.mubr.bf16.mxu0 %v1115
      %3427 = vmatmul.mubr.bf16.gmra.mrb[0].mxu0 %v1114
      %v3428 = vpop.f32.mrb[0].mxu0
      %v3429 = vadd.f32 %v3364, %v3428
      %v3430 = vpop.f32.mrb[0].mxu0
      %v3431 = vpop.f32.mrb[0].mxu0
      %v3432 = vadd.f32 %v3367, %v3431
      %v3433 = vpop.f32.mrb[0].mxu0
      %3434 = vdwg.mxu0
      %3435 = vmatprep.subr.bf16.mxu0 0
      %3436 = vmatpush1.bf16.msra.mxu0 %v2562
      %3437 = vmatprep.subr.bf16.mxu0 0
      %3438 = vmatpush1.bf16.msra.mxu0 %v2563
      %3439 = vmatprep.subr.bf16.mxu0 0
      %3440 = vmatpush1.bf16.msra.mxu0 %v2564
      %3441 = vmatprep.subr.bf16.mxu0 0
      %3442 = vmatpush1.bf16.msra.mxu0 %v2565
      %3443 = vmatprep.subr.bf16.mxu0 0
      %3444 = vmatpush1.bf16.msra.mxu0 %v2566
      %3445 = vmatprep.subr.bf16.mxu0 0
      %3446 = vmatpush1.bf16.msra.mxu0 %v2567
      %3447 = vmatprep.subr.bf16.mxu0 0
      %3448 = vmatpush1.bf16.msra.mxu0 %v2568
      %3449 = vmatprep.subr.bf16.mxu0 0
      %3450 = vmatpush1.bf16.msra.mxu0 %v2569
      %3451 = vmatprep.subr.bf16.mxu0 0
      %3452 = vmatpush1.bf16.msra.mxu0 %v2570
      %3453 = vmatprep.subr.bf16.mxu0 0
      %3454 = vmatpush1.bf16.msra.mxu0 %v2571
      %3455 = vmatprep.subr.bf16.mxu0 0
      %3456 = vmatpush1.bf16.msra.mxu0 %v2572
      %3457 = vmatprep.subr.bf16.mxu0 0
      %3458 = vmatpush1.bf16.msra.mxu0 %v2573
      %3459 = vmatprep.subr.bf16.mxu0 0
      %3460 = vmatpush1.bf16.msra.mxu0 %v2574
      %3461 = vmatprep.subr.bf16.mxu0 0
      %3462 = vmatpush1.bf16.msra.mxu0 %v2575
      %3463 = vmatprep.subr.bf16.mxu0 0
      %3464 = vmatpush1.bf16.msra.mxu0 %v2576
      %3465 = vmatprep.subr.bf16.mxu0 0
      %3466 = vmatpush1.bf16.msra.mxu0 %v2577
      %3467 = vmatprep.mubr.bf16.mxu0 %v1060
      %3468 = vmatmul.mubr.bf16.gmra.mrb[0].mxu0 %v1059
      %v3469 = vpop.f32.mrb[0].mxu0
      %v3470 = vadd.f32 %v3405, %v3469
      %v3471 = vpop.f32.mrb[0].mxu0
      %v3472 = vpop.f32.mrb[0].mxu0
      %v3473 = vadd.f32 %v3408, %v3472
      %v3474 = vpop.f32.mrb[0].mxu0
      %3475 = vmatprep.mubr.bf16.mxu0 %v1066
      %3476 = vmatmul.mubr.bf16.gmra.mrb[0].mxu0 %v1065
      %v3477 = vpop.f32.mrb[0].mxu0
      %v3478 = vadd.f32 %v3413, %v3477
      %v3479 = vpop.f32.mrb[0].mxu0
      %v3480 = vpop.f32.mrb[0].mxu0
      %v3481 = vadd.f32 %v3416, %v3480
      %v3482 = vpop.f32.mrb[0].mxu0
      %3483 = vmatprep.mubr.bf16.mxu0 %v1084
      %3484 = vmatmul.mubr.bf16.gmra.mrb[0].mxu0 %v1083
      %v3485 = vpop.f32.mrb[0].mxu0
      %v3486 = vadd.f32 %v3421, %v3485
      %v3487 = vpop.f32.mrb[0].mxu0
      %v3488 = vpop.f32.mrb[0].mxu0
      %v3489 = vadd.f32 %v3424, %v3488
      %v3490 = vpop.f32.mrb[0].mxu0
      %3491 = vmatprep.mubr.bf16.mxu0 %v1102
      %3492 = vmatmul.mubr.bf16.gmra.mrb[0].mxu0 %v1101
      %v3493 = vpop.f32.mrb[0].mxu0
      %v3494 = vadd.f32 %v3429, %v3493
      %v3495 = vpop.f32.mrb[0].mxu0
      %v3496 = vpop.f32.mrb[0].mxu0
      %v3497 = vadd.f32 %v3432, %v3496
      %v3498 = vpop.f32.mrb[0].mxu0
      %3499 = vdwg.mxu0
      %3500 = vmatprep.subr.bf16.mxu0 0
      %3501 = vmatpush1.bf16.msra.mxu0 %v2578
      %3502 = vmatprep.subr.bf16.mxu0 0
      %3503 = vmatpush1.bf16.msra.mxu0 %v2579
      %3504 = vmatprep.subr.bf16.mxu0 0
      %3505 = vmatpush1.bf16.msra.mxu0 %v2580
      %3506 = vmatprep.subr.bf16.mxu0 0
      %3507 = vmatpush1.bf16.msra.mxu0 %v2581
      %3508 = vmatprep.subr.bf16.mxu0 0
      %3509 = vmatpush1.bf16.msra.mxu0 %v2582
      %3510 = vmatprep.subr.bf16.mxu0 0
      %3511 = vmatpush1.bf16.msra.mxu0 %v2583
      %3512 = vmatprep.subr.bf16.mxu0 0
      %3513 = vmatpush1.bf16.msra.mxu0 %v2584
      %3514 = vmatprep.subr.bf16.mxu0 0
      %3515 = vmatpush1.bf16.msra.mxu0 %v2585
      %3516 = vmatprep.subr.bf16.mxu0 0
      %3517 = vmatpush1.bf16.msra.mxu0 %v2586
      %3518 = vmatprep.subr.bf16.mxu0 0
      %3519 = vmatpush1.bf16.msra.mxu0 %v2587
      %3520 = vmatprep.subr.bf16.mxu0 0
      %3521 = vmatpush1.bf16.msra.mxu0 %v2588
      %3522 = vmatprep.subr.bf16.mxu0 0
      %3523 = vmatpush1.bf16.msra.mxu0 %v2589
      %3524 = vmatprep.subr.bf16.mxu0 0
      %3525 = vmatpush1.bf16.msra.mxu0 %v2590
      %3526 = vmatprep.subr.bf16.mxu0 0
      %3527 = vmatpush1.bf16.msra.mxu0 %v2591
      %3528 = vmatprep.subr.bf16.mxu0 0
      %3529 = vmatpush1.bf16.msra.mxu0 %v2592
      %3530 = vmatprep.subr.bf16.mxu0 0
      %3531 = vmatpush1.bf16.msra.mxu0 %v2593
      %3532 = vmatprep.mubr.bf16.mxu0 %v1062
      %3533 = vmatmul.mubr.bf16.gmra.mrb[0].mxu0 %v1061
      %v3534 = vpop.f32.mrb[0].mxu0
      %v3535 = vadd.f32 %v3470, %v3534
      %v3536 = vpop.f32.mrb[0].mxu0
      %v3537 = vpop.f32.mrb[0].mxu0
      %v3538 = vadd.f32 %v3473, %v3537
      %v3539 = vpop.f32.mrb[0].mxu0
      %3540 = vmatprep.mubr.bf16.mxu0 %v1080
      %3541 = vmatmul.mubr.bf16.gmra.mrb[0].mxu0 %v1067
      %v3542 = vpop.f32.mrb[0].mxu0
      %v3543 = vadd.f32 %v3478, %v3542
      %v3544 = vpop.f32.mrb[0].mxu0
      %v3545 = vpop.f32.mrb[0].mxu0
      %v3546 = vadd.f32 %v3481, %v3545
      %v3547 = vpop.f32.mrb[0].mxu0
      %3548 = vmatprep.mubr.bf16.mxu0 %v1098
      %3549 = vmatmul.mubr.bf16.gmra.mrb[0].mxu0 %v1085
      %v3550 = vpop.f32.mrb[0].mxu0
      %v3551 = vadd.f32 %v3486, %v3550
      %v3552 = vpop.f32.mrb[0].mxu0
      %v3553 = vpop.f32.mrb[0].mxu0
      %v3554 = vadd.f32 %v3489, %v3553
      %v3555 = vpop.f32.mrb[0].mxu0
      %3556 = vmatprep.mubr.bf16.mxu0 %v1116
      %3557 = vmatmul.mubr.bf16.gmra.mrb[0].mxu0 %v1103
      %v3558 = vpop.f32.mrb[0].mxu0
      %v3559 = vadd.f32 %v3494, %v3558
      %v3560 = vpop.f32.mrb[0].mxu0
      %v3561 = vpop.f32.mrb[0].mxu0
      %v3562 = vadd.f32 %v3497, %v3561
      %v3563 = vpop.f32.mrb[0].mxu0
      %3564 = vdwg.mxu0
      %3565 = vmatprep.subr.bf16.mxu0 0
      %3566 = vmatpush1.bf16.msra.mxu0 %v2594
      %3567 = vmatprep.subr.bf16.mxu0 0
      %3568 = vmatpush1.bf16.msra.mxu0 %v2595
      %3569 = vmatprep.subr.bf16.mxu0 0
      %3570 = vmatpush1.bf16.msra.mxu0 %v2596
      %3571 = vmatprep.subr.bf16.mxu0 0
      %3572 = vmatpush1.bf16.msra.mxu0 %v2597
      %3573 = vmatprep.subr.bf16.mxu0 0
      %3574 = vmatpush1.bf16.msra.mxu0 %v2598
      %3575 = vmatprep.subr.bf16.mxu0 0
      %3576 = vmatpush1.bf16.msra.mxu0 %v2599
      %3577 = vmatprep.subr.bf16.mxu0 0
      %3578 = vmatpush1.bf16.msra.mxu0 %v2600
      %3579 = vmatprep.subr.bf16.mxu0 0
      %3580 = vmatpush1.bf16.msra.mxu0 %v2601
      %3581 = vmatprep.subr.bf16.mxu0 0
      %3582 = vmatpush1.bf16.msra.mxu0 %v2602
      %3583 = vmatprep.subr.bf16.mxu0 0
      %3584 = vmatpush1.bf16.msra.mxu0 %v2603
      %3585 = vmatprep.subr.bf16.mxu0 0
      %3586 = vmatpush1.bf16.msra.mxu0 %v2604
      %3587 = vmatprep.subr.bf16.mxu0 0
      %3588 = vmatpush1.bf16.msra.mxu0 %v2605
      %3589 = vmatprep.subr.bf16.mxu0 0
      %3590 = vmatpush1.bf16.msra.mxu0 %v2606
      %3591 = vmatprep.subr.bf16.mxu0 0
      %3592 = vmatpush1.bf16.msra.mxu0 %v2607
      %3593 = vmatprep.subr.bf16.mxu0 0
      %3594 = vmatpush1.bf16.msra.mxu0 %v2608
      %3595 = vmatprep.subr.bf16.mxu0 0
      %3596 = vmatpush1.bf16.msra.mxu0 %v2609
      %3597 = vmatprep.mubr.bf16.mxu0 %v1064
      %3598 = vmatmul.mubr.bf16.gmra.mrb[0].mxu0 %v1063
      %v3599 = vpop.f32.mrb[0].mxu0
      %v3600 = vadd.f32 %v3535, %v3599
      %v3601 = vpop.f32.mrb[0].mxu0
      %v3602 = vpop.f32.mrb[0].mxu0
      %v3603 = vadd.f32 %v3538, %v3602
      %v3604 = vpop.f32.mrb[0].mxu0
      %3605 = vmatprep.mubr.bf16.mxu0 %v1082
      %3606 = vmatmul.mubr.bf16.gmra.mrb[0].mxu0 %v1081
      %v3607 = vpop.f32.mrb[0].mxu0
      %v3608 = vadd.f32 %v3543, %v3607
      %v3609 = vpop.f32.mrb[0].mxu0
      %v3610 = vpop.f32.mrb[0].mxu0
      %v3611 = vadd.f32 %v3546, %v3610
      %v3612 = vpop.f32.mrb[0].mxu0
      %3613 = vmatprep.mubr.bf16.mxu0 %v1100
      %3614 = vmatmul.mubr.bf16.gmra.mrb[0].mxu0 %v1099
      %v3615 = vpop.f32.mrb[0].mxu0
      %v3616 = vadd.f32 %v3551, %v3615
      %v3617 = vpop.f32.mrb[0].mxu0
      %v3618 = vpop.f32.mrb[0].mxu0
      %v3619 = vadd.f32 %v3554, %v3618
      %v3620 = vpop.f32.mrb[0].mxu0
      %3621 = vmatprep.mubr.bf16.mxu0 %v1118
      %3622 = vmatmul.mubr.bf16.gmra.mrb[0].mxu0 %v1117
      %v3623 = vpop.f32.mrb[0].mxu0
      %v3624 = vadd.f32 %v3559, %v3623
      %v3625 = vpop.f32.mrb[0].mxu0
      %v3626 = vpop.f32.mrb[0].mxu0
      %v3627 = vadd.f32 %v3562, %v3626
      %v3628 = vpop.f32.mrb[0].mxu0
      %3629 = vdwg.mxu0
      %3630 = vmatprep.subr.bf16.mxu0 0
      %3631 = vmatpush1.bf16.msra.mxu0 %v2610
      %3632 = vmatprep.subr.bf16.mxu0 0
      %3633 = vmatpush1.bf16.msra.mxu0 %v2611
      %3634 = vmatprep.subr.bf16.mxu0 0
      %3635 = vmatpush1.bf16.msra.mxu0 %v2612
      %3636 = vmatprep.subr.bf16.mxu0 0
      %3637 = vmatpush1.bf16.msra.mxu0 %v2613
      %3638 = vmatprep.subr.bf16.mxu0 0
      %3639 = vmatpush1.bf16.msra.mxu0 %v2614
      %3640 = vmatprep.subr.bf16.mxu0 0
      %3641 = vmatpush1.bf16.msra.mxu0 %v2615
      %3642 = vmatprep.subr.bf16.mxu0 0
      %3643 = vmatpush1.bf16.msra.mxu0 %v2616
      %3644 = vmatprep.subr.bf16.mxu0 0
      %3645 = vmatpush1.bf16.msra.mxu0 %v2617
      %3646 = vmatprep.subr.bf16.mxu0 0
      %3647 = vmatpush1.bf16.msra.mxu0 %v2618
      %3648 = vmatprep.subr.bf16.mxu0 0
      %3649 = vmatpush1.bf16.msra.mxu0 %v2619
      %3650 = vmatprep.subr.bf16.mxu0 0
      %3651 = vmatpush1.bf16.msra.mxu0 %v2620
      %3652 = vmatprep.subr.bf16.mxu0 0
      %3653 = vmatpush1.bf16.msra.mxu0 %v2621
      %3654 = vmatprep.subr.bf16.mxu0 0
      %3655 = vmatpush1.bf16.msra.mxu0 %v2622
      %3656 = vmatprep.subr.bf16.mxu0 0
      %3657 = vmatpush1.bf16.msra.mxu0 %v2623
      %3658 = vmatprep.subr.bf16.mxu0 0
      %3659 = vmatpush1.bf16.msra.mxu0 %v2624
      %3660 = vmatprep.subr.bf16.mxu0 0
      %3661 = vmatpush1.bf16.msra.mxu0 %v2625
      %3662 = vmatprep.mubr.bf16.mxu0 %v1066
      %3663 = vmatmul.mubr.bf16.gmra.mrb[0].mxu0 %v1065
      %v3664 = vpop.f32.mrb[0].mxu0
      %v3665 = vadd.f32 %v3600, %v3664
      %v3666 = vpop.f32.mrb[0].mxu0
      %v3667 = vpop.f32.mrb[0].mxu0
      %v3668 = vadd.f32 %v3603, %v3667
      %v3669 = vpop.f32.mrb[0].mxu0
      %3670 = vmatprep.mubr.bf16.mxu0 %v1084
      %3671 = vmatmul.mubr.bf16.gmra.mrb[0].mxu0 %v1083
      %v3672 = vpop.f32.mrb[0].mxu0
      %v3673 = vadd.f32 %v3608, %v3672
      %v3674 = vpop.f32.mrb[0].mxu0
      %v3675 = vpop.f32.mrb[0].mxu0
      %v3676 = vadd.f32 %v3611, %v3675
      %v3677 = vpop.f32.mrb[0].mxu0
      %3678 = vmatprep.mubr.bf16.mxu0 %v1102
      %3679 = vmatmul.mubr.bf16.gmra.mrb[0].mxu0 %v1101
      %v3680 = vpop.f32.mrb[0].mxu0
      %v3681 = vadd.f32 %v3616, %v3680
      %v3682 = vpop.f32.mrb[0].mxu0
      %v3683 = vpop.f32.mrb[0].mxu0
      %v3684 = vadd.f32 %v3619, %v3683
      %v3685 = vpop.f32.mrb[0].mxu0
      %3686 = vmatprep.mubr.bf16.mxu0 %v1120
      %3687 = vmatmul.mubr.bf16.gmra.mrb[0].mxu0 %v1119
      %v3688 = vpop.f32.mrb[0].mxu0
      %v3689 = vadd.f32 %v3624, %v3688
      %v3690 = vpop.f32.mrb[0].mxu0
      %v3691 = vpop.f32.mrb[0].mxu0
      %v3692 = vadd.f32 %v3627, %v3691
      %v3693 = vpop.f32.mrb[0].mxu0
      %3694 = vdwg.mxu0
      %3695 = vmatprep.subr.bf16.mxu0 0
      %3696 = vmatpush1.bf16.msra.mxu0 %v2626
      %3697 = vmatprep.subr.bf16.mxu0 0
      %3698 = vmatpush1.bf16.msra.mxu0 %v2627
      %3699 = vmatprep.subr.bf16.mxu0 0
      %3700 = vmatpush1.bf16.msra.mxu0 %v2628
      %3701 = vmatprep.subr.bf16.mxu0 0
      %3702 = vmatpush1.bf16.msra.mxu0 %v2629
      %3703 = vmatprep.subr.bf16.mxu0 0
      %3704 = vmatpush1.bf16.msra.mxu0 %v2630
      %3705 = vmatprep.subr.bf16.mxu0 0
      %3706 = vmatpush1.bf16.msra.mxu0 %v2631
      %3707 = vmatprep.subr.bf16.mxu0 0
      %3708 = vmatpush1.bf16.msra.mxu0 %v2632
      %3709 = vmatprep.subr.bf16.mxu0 0
      %3710 = vmatpush1.bf16.msra.mxu0 %v2633
      %3711 = vmatprep.subr.bf16.mxu0 0
      %3712 = vmatpush1.bf16.msra.mxu0 0
      %3713 = vmatprep.subr.bf16.mxu0 0
      %3714 = vmatpush1.bf16.msra.mxu0 0
      %3715 = vmatprep.subr.bf16.mxu0 0
      %3716 = vmatpush1.bf16.msra.mxu0 0
      %3717 = vmatprep.subr.bf16.mxu0 0
      %3718 = vmatpush1.bf16.msra.mxu0 0
      %3719 = vmatprep.subr.bf16.mxu0 0
      %3720 = vmatpush1.bf16.msra.mxu0 0
      %3721 = vmatprep.subr.bf16.mxu0 0
      %3722 = vmatpush1.bf16.msra.mxu0 0
      %3723 = vmatprep.subr.bf16.mxu0 0
      %3724 = vmatpush1.bf16.msra.mxu0 0
      %3725 = vmatprep.subr.bf16.mxu0 0
      %3726 = vmatpush1.bf16.msra.mxu0 0
      %3727 = vmatprep.mubr.bf16.mxu0 0
      %3728 = vmatmul.mubr.bf16.gmra.mrb[0].mxu0 %v1067
      %v3729 = vpop.f32.mrb[0].mxu0
      %v3730 = vadd.f32 %v3665, %v3729
      %v3731 = vpop.f32.mrb[0].mxu0
      %v3732 = vpop.f32.mrb[0].mxu0
      %v3733 = vadd.f32 %v3668, %v3732
      %v3734 = vpop.f32.mrb[0].mxu0
      %3735 = vmatprep.mubr.bf16.mxu0 0
      %3736 = vmatmul.mubr.bf16.gmra.mrb[0].mxu0 %v1085
      %v3737 = vpop.f32.mrb[0].mxu0
      %v3738 = vadd.f32 %v3673, %v3737
      %v3739 = vpop.f32.mrb[0].mxu0
      %v3740 = vpop.f32.mrb[0].mxu0
      %v3741 = vadd.f32 %v3676, %v3740
      %v3742 = vpop.f32.mrb[0].mxu0
      %3743 = vmatprep.mubr.bf16.mxu0 0
      %3744 = vmatmul.mubr.bf16.gmra.mrb[0].mxu0 %v1103
      %v3745 = vpop.f32.mrb[0].mxu0
      %v3746 = vadd.f32 %v3681, %v3745
      %v3747 = vpop.f32.mrb[0].mxu0
      %v3748 = vpop.f32.mrb[0].mxu0
      %v3749 = vadd.f32 %v3684, %v3748
      %v3750 = vpop.f32.mrb[0].mxu0
      %3751 = vmatprep.mubr.bf16.mxu0 0
      %3752 = vmatmul.mubr.bf16.gmra.mrb[0].mxu0 %v1121
      %v3753 = vpop.f32.mrb[0].mxu0
      %v3754 = vadd.f32 %v3689, %v3753
      %v3755 = vpop.f32.mrb[0].mxu0
      %v3756 = vpop.f32.mrb[0].mxu0
      %v3757 = vadd.f32 %v3692, %v3756
      %v3758 = vpop.f32.mrb[0].mxu0
      %3759 = vdwg.mxu0
      %3760 = vst [vmem:[%s422] sm:$0xff] %v3730
      %3761 = vst [vmem:[%s422 + $0x8] sm:$0xff] %v3733
      %3762 = vst [vmem:[%s422 + $0x10] sm:$0xff] %v3738
      %3763 = vst [vmem:[%s422 + $0x18] sm:$0xff] %v3741
      %3764 = vst [vmem:[%s422 + $0x20] sm:$0xff] %v3746
      %3765 = vst [vmem:[%s422 + $0x28] sm:$0xff] %v3749
      %3766 = vst [vmem:[%s422 + $0x30] sm:$0xff] %v3754
      %3767 = vst [vmem:[%s422 + $0x38] sm:$0xff] %v3757
      %v3768 = vadd.f32 %v3730, %v3733
      %v3769 = vadd.f32 %v3768, %v3738
      %v3770 = vadd.f32 %v3769, %v3741
      %v3771 = vadd.f32 %v3770, %v3746
      %v3772 = vadd.f32 %v3771, %v3749
      %v3773 = vadd.f32 %v3772, %v3754
      %v3774 = vadd.f32 %v3773, %v3757
      %v3775 = vrot.slane %v3774, 4
      %v3776 = vadd.f32 %v3774, %v3775
      %v3777 = vrot.slane %v3776, 2
      %v3778 = vadd.f32 %v3776, %v3777
      %v3779 = vrot.slane %v3778, 1
      %v3780 = vadd.f32 %v3778, %v3779
      %v3781 = vmul.f32 %v3730, %v3730
      %v3782 = vmul.f32 %v3733, %v3733
      %v3783 = vmul.f32 %v3738, %v3738
      %v3784 = vmul.f32 %v3741, %v3741
      %v3785 = vmul.f32 %v3746, %v3746
      %v3786 = vmul.f32 %v3749, %v3749
      %v3787 = vmul.f32 %v3754, %v3754
      %v3788 = vmul.f32 %v3757, %v3757
      %v3789 = vadd.f32 %v3781, %v3782
      %v3790 = vadd.f32 %v3789, %v3783
      %v3791 = vadd.f32 %v3790, %v3784
      %v3792 = vadd.f32 %v3791, %v3785
      %v3793 = vadd.f32 %v3792, %v3786
      %v3794 = vadd.f32 %v3793, %v3787
      %v3795 = vadd.f32 %v3794, %v3788
      %v3796 = vrot.slane %v3795, 4
      %v3797 = vadd.f32 %v3795, %v3796
      %v3798 = vrot.slane %v3797, 2
      %v3799 = vadd.f32 %v3797, %v3798
      %v3800 = vrot.slane %v3799, 1
      %v3801 = vadd.f32 %v3799, %v3800
      // Predicated region
      $region49: #{basic_block_forward.4} parent=43 // pred_check
        _
      $region50: #{basic_block_forward.4} parent=43 // pred_check_branch
        %3803 = sbr.rel (%p426) target = $region52
      $region51: #{basic_block_forward.4} parent=43 // pred_region
        %3804 = vst [vmem:[%s7] sm:$0x3] 0.0
      $region52: #{basic_block_forward.4} parent=43 // pred_fallthru
        _
      %v3805 = vld [vmem:[%s7] sm:$0x3]
      %vm3806 = vcmask 1040384
      %v3807 = vsel %vm3806, %v3780, %v3801
      %v3808 = vadd.f32 %v3805, %v3807
      %3809 = vst [vmem:[%s7] sm:$0x3] %v3808
      %p3810 = scmp.lt.s32.totalorder %s23, 1
      %s3811 = scalar_select %p3810, %s23, 1
      %p3812 = scmp.lt.s32.totalorder %s24, 3
      %s3813 = scalar_select %p3812, %s24, 3
      %s3814 = smul.addr %s3813, 8
      %s3815 = smul.addr %s3811, 32
      %s3816 = sadd.s32 %s3814, %s3815
      %s3817 = smul.addr %s3816, 8
      %s3818 = scalar_lea.vmem %s6, %s3817
      // Predicated region
      $region53: #{basic_block_forward.4} parent=43 // pred_check
        %p3819 = pneg %p210
      $region54: #{basic_block_forward.4} parent=43 // pred_check_branch
        %3821 = sbr.rel (%p3819) target = $region56
      $region55: #{basic_block_forward.4} parent=43 // pred_region
        _
      $region56: #{basic_block_forward.4} parent=43 // pred_fallthru
        _
      // Predicated region
      $region57: #{basic_block_forward.4} parent=43 // pred_check
        %p3822 = pneg %p231
      $region58: #{basic_block_forward.4} parent=43 // pred_check_branch
        %3824 = sbr.rel (%p3822) target = $region60
      $region59: #{basic_block_forward.4} parent=43 // pred_region
        _
      $region60: #{basic_block_forward.4} parent=43 // pred_fallthru
        _
      // Predicated region
      $region61: #{basic_block_forward.4} parent=43 // pred_check
        %p3825 = pneg %p231
      $region62: #{basic_block_forward.4} parent=43 // pred_check_branch
        %3827 = sbr.rel (%p3825) target = $region64
      $region63: #{basic_block_forward.4} parent=43 // pred_region
        _
      $region64: #{basic_block_forward.4} parent=43 // pred_fallthru
        _
    $region44: #{basic_block_forward.4} parent=5 // pred_fallthru
      _
    %p3828 = scmp.le.s32.totalorder 2, %s14
    // Predicated region
    $region65: #{basic_block_forward.4} parent=5 // pred_check
      %p3829 = pneg %p3828
    $region66: #{basic_block_forward.4} parent=5 // pred_check_branch
      %3831 = sbr.rel (%p3829) target = $region68
    $region67: #{basic_block_forward.4} parent=5 // pred_region
      %s3832 = ssub.s32 %s14, 2
      // Predicated region
      $region69: #{basic_block_forward.4} parent=67 // pred_check
        %p3833 = pneg %p216
      $region70: #{basic_block_forward.4} parent=67 // pred_check_branch
        %3835 = sbr.rel (%p3833) target = $region72
      $region71: #{basic_block_forward.4} parent=67 // pred_region
        %p3836 = scmp.lt.s32.totalorder %s25, 1
        %s3837 = scalar_select %p3836, %s25, 1
        %p3838 = scmp.lt.s32.totalorder %s26, 3
        %s3839 = scalar_select %p3838, %s26, 3
        %s3840 = smul.addr %s3839, 8
        %s3841 = smul.addr %s3837, 32
        %s3842 = sadd.s32 %s3840, %s3841
        %s3843 = smul.addr %s3842, 8
        %s3844 = scalar_lea.vmem %s6, %s3843
      $region72: #{basic_block_forward.4} parent=67 // pred_fallthru
        _
    $region68: #{basic_block_forward.4} parent=5 // pred_fallthru
      _
  $region6: #{basic_block_forward.4} parent=0 // loop_footer
    %s18 = sadd.s32 1, %s14
  $region7: #{basic_block_forward.4} parent=0 // loop_footer_branch
    %13 = sbr.rel target = $region3
  $region8: #{basic_block_forward.4} parent=0 // loop_exit
    _

// kernel: basic_block_forward.3
$region0: #{basic_block_forward.3}
  #allocation0 [shape = 'u32[]', space=smem, size = 0x4, offset = 0x4, fixed_abs, tag = 'smem constant byte address 0x4 - core index']
  #allocation1 [shape = 'u32[144,128]{1,0:T(1,128)}', space=vmem, size = 0x12000, scoped, tag = 'internal scratch']
  #allocation2 [shape = 'f32[3,10,10,128]{3,2,1,0:T(8,128)}', space=vmem, size = 0x3c000, scoped, tag = 'scratch operand']
  %s0 = inlined_call_operand.hbm [shape: f32[2,4,8,8,128], index: 0, kind: input, shape index: {}, may-alias: {0,1,2}]
  %s1 = inlined_call_operand.hbm [shape: f32[2,4,8,8,128], index: 1, kind: input, shape index: {}, may-alias: {0,1,2}]
  %s2 = inlined_call_operand.hbm [shape: f32[2,4,8,8,128], index: 2, kind: input, shape index: {}, may-alias: {0,1,2}]
  %s3 = inlined_call_operand.vmem [shape: f32[1,128], index: 3, kind: input, shape index: {}]
  %s4 = inlined_call_operand.vmem [shape: f32[1,128], index: 4, kind: input, shape index: {}]
  %s5 = inlined_call_operand.hbm [shape: bf16[3456,128], index: 5, kind: input, shape index: {}]
  %s6 = inlined_call_operand.vmem [shape: f32[2,4,8,8,128], index: 6, kind: output, shape index: {0}]
  %s7 = inlined_call_operand.vmem [shape: f32[2,128], index: 7, kind: output, shape index: {1}]
  %8 = xla_tuple %s6, %s7
  %s9 = sld [smem:[#allocation0]]
  $region89: #{basic_block_forward.3} parent=0
    _
  %s11 = ssub.s32 1, %s9
  %s12 = scalar_select 0, %s11, %s9
  $region1: #{basic_block_forward.3} parent=0
    #allocation3 [shape = 'u8[65536]{0}', space=vmem, size = 0x10000, scoped, tag = 'input window, operand 0']
    #allocation4 [shape = 's32[2]{0}', space=sflag, size = 0x8, scoped, tag = 'scoped memory for basic_block_forward.3']
    #allocation5 [shape = 'u8[65536]{0}', space=vmem, size = 0x10000, scoped, tag = 'input window, operand 1']
    #allocation6 [shape = 's32[2]{0}', space=sflag, size = 0x8, scoped, tag = 'scoped memory for basic_block_forward.3']
    #allocation7 [shape = 'u8[65536]{0}', space=vmem, size = 0x10000, scoped, tag = 'input window, operand 2']
    #allocation8 [shape = 'u8[884736]{0}', space=vmem, size = 0xd8000, scoped, tag = 'input window, operand 5, single buffered']
    #allocation9 [shape = 's32[1]{0}', space=sflag, size = 0x4, scoped, tag = 'scoped memory for basic_block_forward.3']
    %13 = vsyncpa [#allocation4], 0
    %s14 = scalar_lea.sflag [#allocation4], 1
    %15 = vsyncpa %s14, 0
    %16 = vsyncpa [#allocation6], 0
    %s17 = scalar_lea.sflag [#allocation6], 1
    %18 = vsyncpa %s17, 0
    %19 = vsyncpa [#allocation9], 0
    loop: start=0, step=1, limit=10
    $region2: #{basic_block_forward.3} parent=1 // loop_pre_header
      _
    $region3: #{basic_block_forward.3} parent=1 // loop_header
      %s21 = sphi 0, %s25
      %p22 = scmp.ge.s32.totalorder %s21, 10
      %s28 = sphi 0, %s40
      %s29 = sphi 0, %s36
      %s30 = sphi 0, %s28
      %s31 = sphi 0, %s29
      %s32 = sphi 0, %s30
      %s33 = sphi 0, %s31
      %s51 = sphi 0, %s53
      %s54 = sphi 0, %s51
      %s55 = sphi 0, %s54
      %s71 = sphi 0, %s55
      %s79 = sphi 0, %s81
      %s82 = sphi 0, %s79
      %s83 = sphi 0, %s82
      %s99 = sphi 0, %s83
      %s113 = sphi 0, %s115
      %s116 = sphi 0, %s113
      %s117 = sphi 0, %s116
      %s133 = sphi 0, %s117
      %s137 = sphi 0, %s137
      %s139 = sphi 0, %s137
      %s140 = sphi 0, %s139
      %s154 = sphi 0, %s140
      %s158 = sphi 0, %s158
      %s160 = sphi 0, %s158
      %s161 = sphi 0, %s160
      %s175 = sphi 0, %s161
      %s179 = sphi 0, %s179
      %s181 = sphi 0, %s179
      %s182 = sphi 0, %s181
      %s196 = sphi 0, %s182
      %s204 = sphi 0, %s206
      %s207 = sphi 0, %s204
      %s208 = sphi 0, %s207
      %s224 = sphi 0, %s208
      %s228 = sphi 0, %s228
      %s230 = sphi 0, %s228
      %s231 = sphi 0, %s230
      %s245 = sphi 0, %s231
    $region4: #{basic_block_forward.3} parent=1 // loop_header_branch
      %24 = sbr.rel (%p22) target = $region8
    $region5: #{basic_block_forward.3} parent=1 // loop_body
      %s26 = ssub.s32 %s21, 1
      %s27 = ssub.s32 %s21, 2
      %s34 = sadd.s32 1, %s29
      %p35 = scmp.ge.s32.totalorder %s34, 4
      %s36 = scalar_select %p35, 0, %s34
      %s37 = sadd.s32 1, %s28
      %s38 = scalar_select %p35, %s37, %s28
      %p39 = scmp.ge.s32.totalorder %s38, 2
      %s40 = scalar_select %p39, 0, %s38
      %s41 = ssub.s32 %s29, 1
      %p42 = scmp.gt.s32.totalorder %s41, 0
      %s43 = scalar_select %p42, %s41, 0
      %s44 = ssub.s32 %s36, 1
      %p45 = scmp.gt.s32.totalorder %s44, 0
      %s46 = scalar_select %p45, %s44, 0
      %s47 = ssub.s32 %s28, %s40
      %s48 = ssub.s32 %s43, %s46
      %s49 = sor.u32 %s47, %s48
      %p50 = scmp.eq.s32.totalorder %s49, 0
      %s52 = sadd.s32 %s51, 1
      %s53 = scalar_select %p50, %s51, %s52
      %p56 = pneg %p50
      %p57 = scmp.eq.s32.totalorder %s21, 7
      %p58 = por %p56, %p57
      %p59 = scmp.ne.s32.totalorder %s51, %s54
      %p60 = scmp.eq.s32.totalorder %s21, 0
      %p61 = por %p59, %p60
      %p62 = scmp.ne.s32.totalorder %s51, %s54
      %p63 = scmp.eq.s32.totalorder %s26, 7
      %p64 = por %p62, %p63
      %p65 = scmp.ne.s32.totalorder %s54, %s55
      %p66 = scmp.eq.s32.totalorder %s26, 0
      %p67 = por %p65, %p66
      %p68 = scmp.ne.s32.totalorder %s54, %s55
      %p69 = scmp.eq.s32.totalorder %s27, 7
      %p70 = por %p68, %p69
      %p72 = scmp.ne.s32.totalorder %s55, %s71
      %p73 = scmp.eq.s32.totalorder %s27, 0
      %p74 = por %p72, %p73
      %s75 = ssub.s32 %s28, %s40
      %s76 = ssub.s32 %s29, %s36
      %s77 = sor.u32 %s75, %s76
      %p78 = scmp.eq.s32.totalorder %s77, 0
      %s80 = sadd.s32 %s79, 1
      %s81 = scalar_select %p78, %s79, %s80
      %p84 = pneg %p78
      %p85 = scmp.eq.s32.totalorder %s21, 7
      %p86 = por %p84, %p85
      %p87 = scmp.ne.s32.totalorder %s79, %s82
      %p88 = scmp.eq.s32.totalorder %s21, 0
      %p89 = por %p87, %p88
      %p90 = scmp.ne.s32.totalorder %s79, %s82
      %p91 = scmp.eq.s32.totalorder %s26, 7
      %p92 = por %p90, %p91
      %p93 = scmp.ne.s32.totalorder %s82, %s83
      %p94 = scmp.eq.s32.totalorder %s26, 0
      %p95 = por %p93, %p94
      %p96 = scmp.ne.s32.totalorder %s82, %s83
      %p97 = scmp.eq.s32.totalorder %s27, 7
      %p98 = por %p96, %p97
      %p100 = scmp.ne.s32.totalorder %s83, %s99
      %p101 = scmp.eq.s32.totalorder %s27, 0
      %p102 = por %p100, %p101
      %s103 = sadd.s32 %s29, 1
      %p104 = scmp.lt.s32.totalorder %s103, 3
      %s105 = scalar_select %p104, %s103, 3
      %s106 = sadd.s32 %s36, 1
      %p107 = scmp.lt.s32.totalorder %s106, 3
      %s108 = scalar_select %p107, %s106, 3
      %s109 = ssub.s32 %s28, %s40
      %s110 = ssub.s32 %s105, %s108
      %s111 = sor.u32 %s109, %s110
      %p112 = scmp.eq.s32.totalorder %s111, 0
      %s114 = sadd.s32 %s113, 1
      %s115 = scalar_select %p112, %s113, %s114
      %p118 = pneg %p112
      %p119 = scmp.eq.s32.totalorder %s21, 7
      %p120 = por %p118, %p119
      %p121 = scmp.ne.s32.totalorder %s113, %s116
      %p122 = scmp.eq.s32.totalorder %s21, 0
      %p123 = por %p121, %p122
      %p124 = scmp.ne.s32.totalorder %s113, %s116
      %p125 = scmp.eq.s32.totalorder %s26, 7
      %p126 = por %p124, %p125
      %p127 = scmp.ne.s32.totalorder %s116, %s117
      %p128 = scmp.eq.s32.totalorder %s26, 0
      %p129 = por %p127, %p128
      %p130 = scmp.ne.s32.totalorder %s116, %s117
      %p131 = scmp.eq.s32.totalorder %s27, 7
      %p132 = por %p130, %p131
      %p134 = scmp.ne.s32.totalorder %s117, %s133
      %p135 = scmp.eq.s32.totalorder %s27, 0
      %p136 = por %p134, %p135
      %s138 = sadd.s32 %s137, 1
      %p141 = scmp.eq.s32.totalorder %s21, 7
      %p142 = scmp.ne.s32.totalorder %s137, %s139
      %p143 = scmp.eq.s32.totalorder %s21, 0
      %p144 = por %p142, %p143
      %p145 = scmp.ne.s32.totalorder %s137, %s139
      %p146 = scmp.eq.s32.totalorder %s26, 7
      %p147 = por %p145, %p146
      %p148 = scmp.ne.s32.totalorder %s139, %s140
      %p149 = scmp.eq.s32.totalorder %s26, 0
      %p150 = por %p148, %p149
      %p151 = scmp.ne.s32.totalorder %s139, %s140
      %p152 = scmp.eq.s32.totalorder %s27, 7
      %p153 = por %p151, %p152
      %p155 = scmp.ne.s32.totalorder %s140, %s154
      %p156 = scmp.eq.s32.totalorder %s27, 0
      %p157 = por %p155, %p156
      %s159 = sadd.s32 %s158, 1
      %p162 = scmp.eq.s32.totalorder %s21, 7
      %p163 = scmp.ne.s32.totalorder %s158, %s160
      %p164 = scmp.eq.s32.totalorder %s21, 0
      %p165 = por %p163, %p164
      %p166 = scmp.ne.s32.totalorder %s158, %s160
      %p167 = scmp.eq.s32.totalorder %s26, 7
      %p168 = por %p166, %p167
      %p169 = scmp.ne.s32.totalorder %s160, %s161
      %p170 = scmp.eq.s32.totalorder %s26, 0
      %p171 = por %p169, %p170
      %p172 = scmp.ne.s32.totalorder %s160, %s161
      %p173 = scmp.eq.s32.totalorder %s27, 7
      %p174 = por %p172, %p173
      %p176 = scmp.ne.s32.totalorder %s161, %s175
      %p177 = scmp.eq.s32.totalorder %s27, 0
      %p178 = por %p176, %p177
      %s180 = sadd.s32 %s179, 1
      %p183 = scmp.eq.s32.totalorder %s21, 7
      %p184 = scmp.ne.s32.totalorder %s179, %s181
      %p185 = scmp.eq.s32.totalorder %s21, 0
      %p186 = por %p184, %p185
      %p187 = scmp.ne.s32.totalorder %s179, %s181
      %p188 = scmp.eq.s32.totalorder %s26, 7
      %p189 = por %p187, %p188
      %p190 = scmp.ne.s32.totalorder %s181, %s182
      %p191 = scmp.eq.s32.totalorder %s26, 0
      %p192 = por %p190, %p191
      %p193 = scmp.ne.s32.totalorder %s181, %s182
      %p194 = scmp.eq.s32.totalorder %s27, 7
      %p195 = por %p193, %p194
      %p197 = scmp.ne.s32.totalorder %s182, %s196
      %p198 = scmp.eq.s32.totalorder %s27, 0
      %p199 = por %p197, %p198
      %s200 = ssub.s32 %s28, %s40
      %s201 = ssub.s32 %s29, %s36
      %s202 = sor.u32 %s200, %s201
      %p203 = scmp.eq.s32.totalorder %s202, 0
      %s205 = sadd.s32 %s204, 1
      %s206 = scalar_select %p203, %s204, %s205
      %p209 = pneg %p203
      %p210 = scmp.eq.s32.totalorder %s21, 7
      %p211 = por %p209, %p210
      %p212 = scmp.ne.s32.totalorder %s204, %s207
      %p213 = scmp.eq.s32.totalorder %s21, 0
      %p214 = por %p212, %p213
      %p215 = scmp.ne.s32.totalorder %s204, %s207
      %p216 = scmp.eq.s32.totalorder %s26, 7
      %p217 = por %p215, %p216
      %p218 = scmp.ne.s32.totalorder %s207, %s208
      %p219 = scmp.eq.s32.totalorder %s26, 0
      %p220 = por %p218, %p219
      %p221 = scmp.ne.s32.totalorder %s207, %s208
      %p222 = scmp.eq.s32.totalorder %s27, 7
      %p223 = por %p221, %p222
      %p225 = scmp.ne.s32.totalorder %s208, %s224
      %p226 = scmp.eq.s32.totalorder %s27, 0
      %p227 = por %p225, %p226
      %s229 = sadd.s32 %s228, 1
      %p232 = scmp.eq.s32.totalorder %s21, 7
      %p233 = scmp.ne.s32.totalorder %s228, %s230
      %p234 = scmp.eq.s32.totalorder %s21, 0
      %p235 = por %p233, %p234
      %p236 = scmp.ne.s32.totalorder %s228, %s230
      %p237 = scmp.eq.s32.totalorder %s26, 7
      %p238 = por %p236, %p237
      %p239 = scmp.ne.s32.totalorder %s230, %s231
      %p240 = scmp.eq.s32.totalorder %s26, 0
      %p241 = por %p239, %p240
      %p242 = scmp.ne.s32.totalorder %s230, %s231
      %p243 = scmp.eq.s32.totalorder %s27, 7
      %p244 = por %p242, %p243
      %p246 = scmp.ne.s32.totalorder %s231, %s245
      %p247 = scmp.eq.s32.totalorder %s27, 0
      %p248 = por %p246, %p247
      %p249 = scmp.le.s32.totalorder 1, %s21
      %p250 = scmp.lt.s32.totalorder %s21, 9
      %p251 = pnand %p249, %p250
      %p252 = pneg %p251
      // Predicated region
      $region9: #{basic_block_forward.3} parent=5 // pred_check
        _
      $region10: #{basic_block_forward.3} parent=5 // pred_check_branch
        %254 = sbr.rel (%p251) target = $region12
      $region11: #{basic_block_forward.3} parent=5 // pred_region
        %s255 = ssub.s32 %s21, 1
        // Predicated region
        $region13: #{basic_block_forward.3} parent=11 // pred_check
          %p256 = pneg %p150
        $region14: #{basic_block_forward.3} parent=11 // pred_check_branch
          %258 = sbr.rel (%p256) target = $region16
        $region15: #{basic_block_forward.3} parent=11 // pred_region
          _
        $region16: #{basic_block_forward.3} parent=11 // pred_fallthru
          _
        // Predicated region
        $region17: #{basic_block_forward.3} parent=11 // pred_check
          %p259 = pneg %p171
        $region18: #{basic_block_forward.3} parent=11 // pred_check_branch
          %261 = sbr.rel (%p259) target = $region20
        $region19: #{basic_block_forward.3} parent=11 // pred_region
          _
        $region20: #{basic_block_forward.3} parent=11 // pred_fallthru
          _
        // Predicated region
        $region21: #{basic_block_forward.3} parent=11 // pred_check
          %p262 = pneg %p192
        $region22: #{basic_block_forward.3} parent=11 // pred_check_branch
          %264 = sbr.rel (%p262) target = $region24
        $region23: #{basic_block_forward.3} parent=11 // pred_region
          %s266 = ssub.s32 27648, 27648
          %267 = vsyncadd [#allocation9], %s266
          %s268 = sshll.u32 [#allocation8], 4
          %s269 = int_to_ptr.vmem [resolvable:$true] %s268
          %274 = dma.hbm_to_vmem [thread:$0]  %s5, 27648, %s269, [#allocation9], 64, 64, 4
        $region24: #{basic_block_forward.3} parent=11 // pred_fallthru
          _
      $region12: #{basic_block_forward.3} parent=5 // pred_fallthru
        _
      %p275 = scmp.lt.s32.totalorder %s21, 8
      // Predicated region
      $region25: #{basic_block_forward.3} parent=5 // pred_check
        %p276 = pneg %p275
      $region26: #{basic_block_forward.3} parent=5 // pred_check_branch
        %278 = sbr.rel (%p276) target = $region28
      $region27: #{basic_block_forward.3} parent=5 // pred_region
        // Predicated region
        $region29: #{basic_block_forward.3} parent=27 // pred_check
          %p279 = pneg %p61
        $region30: #{basic_block_forward.3} parent=27 // pred_check_branch
          %281 = sbr.rel (%p279) target = $region32
        $region31: #{basic_block_forward.3} parent=27 // pred_region
          %s282 = sand.u32 %s51, 1
          %s283 = scalar_lea.sflag [#allocation4], %s282
          %s284 = sand.u32 %s51, 1
          %s285 = smul.addr %s284, 64
          %s286 = scalar_lea.vmem [#allocation3], %s285
          %s287 = ssub.s32 %s29, 1
          %p288 = scmp.gt.s32.totalorder %s287, 0
          %s289 = scalar_select %p288, %s287, 0
          %s291 = ssub.s32 1024, 1024
          %292 = vsyncadd %s283, %s291
          %s293 = smul.addr %s289, 8
          %s294 = smul.addr %s28, 32
          %s295 = sadd.s32 %s293, %s294
          %s296 = smul.addr %s295, 128
          %s297 = scalar_lea.hbm %s0, %s296
          %s298 = sshll.u32 %s286, 4
          %s299 = int_to_ptr.vmem [resolvable:$true] %s298
          %304 = dma.hbm_to_vmem [thread:$0]  %s297, 1024, %s299, %s283, 128, 128, 8
        $region32: #{basic_block_forward.3} parent=27 // pred_fallthru
          _
        // Predicated region
        $region33: #{basic_block_forward.3} parent=27 // pred_check
          %p305 = pneg %p89
        $region34: #{basic_block_forward.3} parent=27 // pred_check_branch
          %307 = sbr.rel (%p305) target = $region36
        $region35: #{basic_block_forward.3} parent=27 // pred_region
          %s308 = sand.u32 %s21, 1
          %s309 = scalar_lea.sflag [#allocation6], %s308
          %s310 = sand.u32 %s79, 1
          %s311 = smul.addr %s310, 64
          %s312 = scalar_lea.vmem [#allocation5], %s311
          %s314 = ssub.s32 1024, 1024
          %315 = vsyncadd %s309, %s314
          %s316 = smul.addr %s29, 8
          %s317 = smul.addr %s28, 32
          %s318 = sadd.s32 %s316, %s317
          %s319 = smul.addr %s318, 128
          %s320 = scalar_lea.hbm %s1, %s319
          %s321 = sshll.u32 %s312, 4
          %s322 = int_to_ptr.vmem [resolvable:$true] %s321
          %327 = dma.hbm_to_vmem [thread:$0]  %s320, 1024, %s322, %s309, 128, 128, 8
        $region36: #{basic_block_forward.3} parent=27 // pred_fallthru
          _
        // Predicated region
        $region37: #{basic_block_forward.3} parent=27 // pred_check
          %p328 = pneg %p123
        $region38: #{basic_block_forward.3} parent=27 // pred_check_branch
          %330 = sbr.rel (%p328) target = $region40
        $region39: #{basic_block_forward.3} parent=27 // pred_region
          %s331 = sand.u32 %s21, 1
          %s332 = scalar_lea.sflag [#allocation6], %s331
          %s333 = sand.u32 %s113, 1
          %s334 = smul.addr %s333, 64
          %s335 = scalar_lea.vmem [#allocation7], %s334
          %s336 = sadd.s32 %s29, 1
          %p337 = scmp.lt.s32.totalorder %s336, 3
          %s338 = scalar_select %p337, %s336, 3
          %s340 = ssub.s32 1024, 1024
          %341 = vsyncadd %s332, %s340
          %s342 = smul.addr %s338, 8
          %s343 = smul.addr %s28, 32
          %s344 = sadd.s32 %s342, %s343
          %s345 = smul.addr %s344, 128
          %s346 = scalar_lea.hbm %s2, %s345
          %s347 = sshll.u32 %s335, 4
          %s348 = int_to_ptr.vmem [resolvable:$true] %s347
          %353 = dma.hbm_to_vmem [thread:$0]  %s346, 1024, %s348, %s332, 128, 128, 8
        $region40: #{basic_block_forward.3} parent=27 // pred_fallthru
          _
      $region28: #{basic_block_forward.3} parent=5 // pred_fallthru
        _
      %p354 = scmp.le.s32.totalorder 1, %s21
      %p355 = scmp.lt.s32.totalorder %s21, 9
      %p356 = pnand %p354, %p355
      %p357 = pneg %p356
      // Predicated region
      $region41: #{basic_block_forward.3} parent=5 // pred_check
        _
      $region42: #{basic_block_forward.3} parent=5 // pred_check_branch
        %359 = sbr.rel (%p356) target = $region44
      $region43: #{basic_block_forward.3} parent=5 // pred_region
        %s360 = ssub.s32 %s21, 1
        %s361 = sand.u32 %s54, 1
        %s362 = scalar_lea.sflag [#allocation4], %s361
        %s363 = sand.u32 %s54, 1
        %s364 = smul.addr %s363, 64
        %s365 = scalar_lea.vmem [#allocation3], %s364
        // Predicated region
        $region45: #{basic_block_forward.3} parent=43 // pred_check
          %p366 = pneg %p67
        $region46: #{basic_block_forward.3} parent=43 // pred_check_branch
          %368 = sbr.rel (%p366) target = $region48
        $region47: #{basic_block_forward.3} parent=43 // pred_region
          %369 = dma.done %s362, 1024
        $region48: #{basic_block_forward.3} parent=43 // pred_fallthru
          _
        %s370 = sand.u32 %s26, 1
        %s371 = scalar_lea.sflag [#allocation6], %s370
        %s372 = sand.u32 %s82, 1
        %s373 = smul.addr %s372, 64
        %s374 = scalar_lea.vmem [#allocation5], %s373
        // Predicated region
        $region49: #{basic_block_forward.3} parent=43 // pred_check
          %p375 = pneg %p95
        $region50: #{basic_block_forward.3} parent=43 // pred_check_branch
          %377 = sbr.rel (%p375) target = $region52
        $region51: #{basic_block_forward.3} parent=43 // pred_region
          %378 = dma.done %s371, 1024
        $region52: #{basic_block_forward.3} parent=43 // pred_fallthru
          _
        %s379 = sand.u32 %s26, 1
        %s380 = scalar_lea.sflag [#allocation6], %s379
        %s381 = sand.u32 %s116, 1
        %s382 = smul.addr %s381, 64
        %s383 = scalar_lea.vmem [#allocation7], %s382
        // Predicated region
        $region53: #{basic_block_forward.3} parent=43 // pred_check
          %p384 = pneg %p129
        $region54: #{basic_block_forward.3} parent=43 // pred_check_branch
          %386 = sbr.rel (%p384) target = $region56
        $region55: #{basic_block_forward.3} parent=43 // pred_region
          %387 = dma.done %s380, 1024
        $region56: #{basic_block_forward.3} parent=43 // pred_fallthru
          _
        // Predicated region
        $region57: #{basic_block_forward.3} parent=43 // pred_check
          %p388 = pneg %p192
        $region58: #{basic_block_forward.3} parent=43 // pred_check_branch
          %390 = sbr.rel (%p388) target = $region60
        $region59: #{basic_block_forward.3} parent=43 // pred_region
          %391 = dma.done [#allocation9], 27648
        $region60: #{basic_block_forward.3} parent=43 // pred_fallthru
          _
        %s392 = sand.u32 %s54, 1
        %s393 = scalar_lea.sflag [#allocation4], %s392
        %s394 = sand.u32 %s54, 1
        %s395 = smul.addr %s394, 64
        %s396 = scalar_lea.vmem [#allocation3], %s395
        %p397 = pneg %p67
        %p398 = pneg %p64
        %s399 = sand.u32 %s26, 1
        %s400 = scalar_lea.sflag [#allocation6], %s399
        %s401 = sand.u32 %s82, 1
        %s402 = smul.addr %s401, 64
        %s403 = scalar_lea.vmem [#allocation5], %s402
        %p404 = pneg %p95
        %p405 = pneg %p92
        %s406 = sand.u32 %s26, 1
        %s407 = scalar_lea.sflag [#allocation6], %s406
        %s408 = sand.u32 %s116, 1
        %s409 = smul.addr %s408, 64
        %s410 = scalar_lea.vmem [#allocation7], %s409
        %p411 = pneg %p129
        %p412 = pneg %p126
        %p413 = pneg %p150
        %p414 = pneg %p147
        %p415 = pneg %p171
        %p416 = pneg %p168
        %p417 = pneg %p192
        %p418 = pneg %p189
        %p419 = pneg %p220
        %p420 = pneg %p217
        %p421 = scmp.lt.s32.totalorder %s30, 1
        %s422 = scalar_select %p421, %s30, 1
        %p423 = scmp.lt.s32.totalorder %s31, 3
        %s424 = scalar_select %p423, %s31, 3
        %s425 = smul.addr %s424, 8
        %s426 = smul.addr %s422, 32
        %s427 = sadd.s32 %s425, %s426
        %s428 = smul.addr %s427, 8
        %s429 = scalar_lea.vmem %s6, %s428
        %p430 = pneg %p241
        %p431 = pneg %p238
        %s432 = ssub.s32 %s31, 1
        %p433 = scmp.gt.s32.totalorder %s432, 0
        %s434 = scalar_select %p433, %s432, 0
        %s435 = sadd.s32 %s31, 1
        %p436 = scmp.lt.s32.totalorder %s435, 3
        %s437 = scalar_select %p436, %s435, 3
        %p438 = scmp.lt.s32.totalorder %s30, 1
        %s439 = scalar_select %p438, %s30, 1
        %p440 = scmp.lt.s32.totalorder %s31, 3
        %s441 = scalar_select %p440, %s31, 3
        %s442 = smul.addr %s441, 8
        %s443 = smul.addr %s439, 32
        %s444 = sadd.s32 %s442, %s443
        %s445 = smul.addr %s444, 8
        %s446 = scalar_lea.vmem %s6, %s445
        %p448 = scmp.eq.s32.totalorder %s30, 0
        %p449 = scmp.eq.s32.totalorder %s31, 0
        %p450 = pnand %p448, %p449
        %p451 = pneg %p450
        // Predicated region
        $region61: #{basic_block_forward.3} parent=43 // pred_check
          _
        $region62: #{basic_block_forward.3} parent=43 // pred_check_branch
          %453 = sbr.rel (%p450) target = $region64
        $region63: #{basic_block_forward.3} parent=43 // pred_region
          %454 = vst [vmem:[#allocation2] sm:$0xff] 0.0
          %455 = vst [vmem:[#allocation2 + $0x8] sm:$0x3] 0.0
          %456 = vst [vmem:[#allocation2 + $0x10] sm:$0xff] 0.0
          %457 = vst [vmem:[#allocation2 + $0x18] sm:$0x3] 0.0
          %458 = vst [vmem:[#allocation2 + $0x20] sm:$0xff] 0.0
          %459 = vst [vmem:[#allocation2 + $0x28] sm:$0x3] 0.0
          %460 = vst [vmem:[#allocation2 + $0x30] sm:$0xff] 0.0
          %461 = vst [vmem:[#allocation2 + $0x38] sm:$0x3] 0.0
          %462 = vst [vmem:[#allocation2 + $0x40] sm:$0xff] 0.0
          %463 = vst [vmem:[#allocation2 + $0x48] sm:$0x3] 0.0
          %464 = vst [vmem:[#allocation2 + $0x50] sm:$0xff] 0.0
          %465 = vst [vmem:[#allocation2 + $0x58] sm:$0x3] 0.0
          %466 = vst [vmem:[#allocation2 + $0x60] sm:$0xff] 0.0
          %467 = vst [vmem:[#allocation2 + $0x68] sm:$0x3] 0.0
          %468 = vst [vmem:[#allocation2 + $0x70] sm:$0xff] 0.0
          %469 = vst [vmem:[#allocation2 + $0x78] sm:$0x3] 0.0
          %470 = vst [vmem:[#allocation2 + $0x80] sm:$0xff] 0.0
          %471 = vst [vmem:[#allocation2 + $0x88] sm:$0x3] 0.0
          %472 = vst [vmem:[#allocation2 + $0x90] sm:$0xff] 0.0
          %473 = vst [vmem:[#allocation2 + $0x98] sm:$0x3] 0.0
          %474 = vst [vmem:[#allocation2 + $0xa0] sm:$0xff] 0.0
          %475 = vst [vmem:[#allocation2 + $0xa8] sm:$0x3] 0.0
          %476 = vst [vmem:[#allocation2 + $0xb0] sm:$0xff] 0.0
          %477 = vst [vmem:[#allocation2 + $0xb8] sm:$0x3] 0.0
          %478 = vst [vmem:[#allocation2 + $0xc0] sm:$0xff] 0.0
          %479 = vst [vmem:[#allocation2 + $0xc8] sm:$0x3] 0.0
          %480 = vst [vmem:[#allocation2 + $0xd0] sm:$0xff] 0.0
          %481 = vst [vmem:[#allocation2 + $0xd8] sm:$0x3] 0.0
          %482 = vst [vmem:[#allocation2 + $0xe0] sm:$0xff] 0.0
          %483 = vst [vmem:[#allocation2 + $0xe8] sm:$0x3] 0.0
          %484 = vst [vmem:[#allocation2 + $0xf0] sm:$0xff] 0.0
          %485 = vst [vmem:[#allocation2 + $0xf8] sm:$0x3] 0.0
          %486 = vst [vmem:[#allocation2 + $0x100] sm:$0xff] 0.0
          %487 = vst [vmem:[#allocation2 + $0x108] sm:$0x3] 0.0
          %488 = vst [vmem:[#allocation2 + $0x110] sm:$0xff] 0.0
          %489 = vst [vmem:[#allocation2 + $0x118] sm:$0x3] 0.0
          %490 = vst [vmem:[#allocation2 + $0x120] sm:$0xff] 0.0
          %491 = vst [vmem:[#allocation2 + $0x128] sm:$0x3] 0.0
          %492 = vst [vmem:[#allocation2 + $0x130] sm:$0xff] 0.0
          %493 = vst [vmem:[#allocation2 + $0x138] sm:$0x3] 0.0
          %494 = vst [vmem:[#allocation2 + $0x140] sm:$0xff] 0.0
          %495 = vst [vmem:[#allocation2 + $0x148] sm:$0x3] 0.0
          %496 = vst [vmem:[#allocation2 + $0x150] sm:$0xff] 0.0
          %497 = vst [vmem:[#allocation2 + $0x158] sm:$0x3] 0.0
          %498 = vst [vmem:[#allocation2 + $0x160] sm:$0xff] 0.0
          %499 = vst [vmem:[#allocation2 + $0x168] sm:$0x3] 0.0
          %500 = vst [vmem:[#allocation2 + $0x170] sm:$0xff] 0.0
          %501 = vst [vmem:[#allocation2 + $0x178] sm:$0x3] 0.0
          %502 = vst [vmem:[#allocation2 + $0x180] sm:$0xff] 0.0
          %503 = vst [vmem:[#allocation2 + $0x188] sm:$0x3] 0.0
          %504 = vst [vmem:[#allocation2 + $0x190] sm:$0xff] 0.0
          %505 = vst [vmem:[#allocation2 + $0x198] sm:$0x3] 0.0
          %506 = vst [vmem:[#allocation2 + $0x1a0] sm:$0xff] 0.0
          %507 = vst [vmem:[#allocation2 + $0x1a8] sm:$0x3] 0.0
          %508 = vst [vmem:[#allocation2 + $0x1b0] sm:$0xff] 0.0
          %509 = vst [vmem:[#allocation2 + $0x1b8] sm:$0x3] 0.0
          %510 = vst [vmem:[#allocation2 + $0x1c0] sm:$0xff] 0.0
          %511 = vst [vmem:[#allocation2 + $0x1c8] sm:$0x3] 0.0
          %512 = vst [vmem:[#allocation2 + $0x1d0] sm:$0xff] 0.0
          %513 = vst [vmem:[#allocation2 + $0x1d8] sm:$0x3] 0.0
        $region64: #{basic_block_forward.3} parent=43 // pred_fallthru
          _
        %p514 = scmp.gt.s32.totalorder %s31, 0
        %s515 = scalar_select %p514, 1.0, 0.0
        %v516 = vld [vmem:[%s365] sm:$0xff]
        %v517 = vld [vmem:[%s365 + $0x8] sm:$0xff]
        %v518 = vld [vmem:[%s365 + $0x10] sm:$0xff]
        %v519 = vld [vmem:[%s365 + $0x18] sm:$0xff]
        %v520 = vld [vmem:[%s365 + $0x20] sm:$0xff]
        %v521 = vld [vmem:[%s365 + $0x28] sm:$0xff]
        %v522 = vld [vmem:[%s365 + $0x30] sm:$0xff]
        %v523 = vld [vmem:[%s365 + $0x38] sm:$0xff]
        %v524 = vstv %s515
        %v525 = vmul.f32 %v516, %v524
        %v526 = vmul.f32 %v517, %v524
        %v527 = vmul.f32 %v518, %v524
        %v528 = vmul.f32 %v519, %v524
        %v529 = vmul.f32 %v520, %v524
        %v530 = vmul.f32 %v521, %v524
        %v531 = vmul.f32 %v522, %v524
        %v532 = vmul.f32 %v523, %v524
        %s533 = scalar_lea.vmem [#allocation2], 16
        %534 = vst [vmem:[%s533 + $0x1] sm:$0xff] %v525
        %535 = vst [vmem:[%s533 + $0x11] sm:$0xff] %v526
        %536 = vst [vmem:[%s533 + $0x21] sm:$0xff] %v527
        %537 = vst [vmem:[%s533 + $0x31] sm:$0xff] %v528
        %538 = vst [vmem:[%s533 + $0x41] sm:$0xff] %v529
        %539 = vst [vmem:[%s533 + $0x51] sm:$0xff] %v530
        %540 = vst [vmem:[%s533 + $0x61] sm:$0xff] %v531
        %541 = vst [vmem:[%s533 + $0x71] sm:$0xff] %v532
        %v542 = vld [vmem:[%s374] sm:$0xff]
        %v543 = vld [vmem:[%s374 + $0x8] sm:$0xff]
        %v544 = vld [vmem:[%s374 + $0x10] sm:$0xff]
        %v545 = vld [vmem:[%s374 + $0x18] sm:$0xff]
        %v546 = vld [vmem:[%s374 + $0x20] sm:$0xff]
        %v547 = vld [vmem:[%s374 + $0x28] sm:$0xff]
        %v548 = vld [vmem:[%s374 + $0x30] sm:$0xff]
        %v549 = vld [vmem:[%s374 + $0x38] sm:$0xff]
        %s550 = scalar_lea.vmem [#allocation2], 176
        %551 = vst [vmem:[%s550 + $0x1] sm:$0xff] %v542
        %552 = vst [vmem:[%s550 + $0x11] sm:$0xff] %v543
        %553 = vst [vmem:[%s550 + $0x21] sm:$0xff] %v544
        %554 = vst [vmem:[%s550 + $0x31] sm:$0xff] %v545
        %555 = vst [vmem:[%s550 + $0x41] sm:$0xff] %v546
        %556 = vst [vmem:[%s550 + $0x51] sm:$0xff] %v547
        %557 = vst [vmem:[%s550 + $0x61] sm:$0xff] %v548
        %558 = vst [vmem:[%s550 + $0x71] sm:$0xff] %v549
        %p559 = scmp.lt.s32.totalorder %s31, 3
        %s560 = scalar_select %p559, 1.0, 0.0
        %v561 = vld [vmem:[%s383] sm:$0xff]
        %v562 = vld [vmem:[%s383 + $0x8] sm:$0xff]
        %v563 = vld [vmem:[%s383 + $0x10] sm:$0xff]
        %v564 = vld [vmem:[%s383 + $0x18] sm:$0xff]
        %v565 = vld [vmem:[%s383 + $0x20] sm:$0xff]
        %v566 = vld [vmem:[%s383 + $0x28] sm:$0xff]
        %v567 = vld [vmem:[%s383 + $0x30] sm:$0xff]
        %v568 = vld [vmem:[%s383 + $0x38] sm:$0xff]
        %v569 = vstv %s560
        %v570 = vmul.f32 %v561, %v569
        %v571 = vmul.f32 %v562, %v569
        %v572 = vmul.f32 %v563, %v569
        %v573 = vmul.f32 %v564, %v569
        %v574 = vmul.f32 %v565, %v569
        %v575 = vmul.f32 %v566, %v569
        %v576 = vmul.f32 %v567, %v569
        %v577 = vmul.f32 %v568, %v569
        %s578 = scalar_lea.vmem [#allocation2], 336
        %579 = vst [vmem:[%s578 + $0x1] sm:$0xff] %v570
        %580 = vst [vmem:[%s578 + $0x11] sm:$0xff] %v571
        %581 = vst [vmem:[%s578 + $0x21] sm:$0xff] %v572
        %582 = vst [vmem:[%s578 + $0x31] sm:$0xff] %v573
        %583 = vst [vmem:[%s578 + $0x41] sm:$0xff] %v574
        %584 = vst [vmem:[%s578 + $0x51] sm:$0xff] %v575
        %585 = vst [vmem:[%s578 + $0x61] sm:$0xff] %v576
        %586 = vst [vmem:[%s578 + $0x71] sm:$0xff] %v577
        %v587 = vld [vmem:[#allocation2] sm:$0xff]
        %v588 = vld [vmem:[#allocation2 + $0x8] sm:$0x3]
        %v589 = vld [vmem:[#allocation2 + $0x10] sm:$0xff]
        %v590 = vld [vmem:[#allocation2 + $0x18] sm:$0x3]
        %v591 = vld [vmem:[#allocation2 + $0x20] sm:$0xff]
        %v592 = vld [vmem:[#allocation2 + $0x28] sm:$0x3]
        %v593 = vld [vmem:[#allocation2 + $0x30] sm:$0xff]
        %v594 = vld [vmem:[#allocation2 + $0x38] sm:$0x3]
        %v595 = vld [vmem:[#allocation2 + $0x40] sm:$0xff]
        %v596 = vld [vmem:[#allocation2 + $0x48] sm:$0x3]
        %v597 = vld [vmem:[#allocation2 + $0x50] sm:$0xff]
        %v598 = vld [vmem:[#allocation2 + $0x58] sm:$0x3]
        %v599 = vld [vmem:[#allocation2 + $0x60] sm:$0xff]
        %v600 = vld [vmem:[#allocation2 + $0x68] sm:$0x3]
        %v601 = vld [vmem:[#allocation2 + $0x70] sm:$0xff]
        %v602 = vld [vmem:[#allocation2 + $0x78] sm:$0x3]
        %v603 = vld [vmem:[#allocation2 + $0x80] sm:$0xff]
        %v604 = vld [vmem:[#allocation2 + $0x88] sm:$0x3]
        %v605 = vld [vmem:[#allocation2 + $0x90] sm:$0xff]
        %v606 = vld [vmem:[#allocation2 + $0x98] sm:$0x3]
        %vm623 = vcmask 1046528
        %v624 = vrot.slane %v587, 1
        %v625 = vrot.slane %v588, 1
        %v626 = vsel %vm623, %v624, %v625
        %v627 = vrot.slane %v589, 1
        %v628 = vrot.slane %v590, 1
        %v629 = vsel %vm623, %v627, %v628
        %v630 = vrot.slane %v591, 1
        %v631 = vrot.slane %v592, 1
        %v632 = vsel %vm623, %v630, %v631
        %v633 = vrot.slane %v593, 1
        %v634 = vrot.slane %v594, 1
        %v635 = vsel %vm623, %v633, %v634
        %v636 = vrot.slane %v595, 1
        %v637 = vrot.slane %v596, 1
        %v638 = vsel %vm623, %v636, %v637
        %v639 = vrot.slane %v597, 1
        %v640 = vrot.slane %v598, 1
        %v641 = vsel %vm623, %v639, %v640
        %v642 = vrot.slane %v599, 1
        %v643 = vrot.slane %v600, 1
        %v644 = vsel %vm623, %v642, %v643
        %v645 = vrot.slane %v601, 1
        %v646 = vrot.slane %v602, 1
        %v647 = vsel %vm623, %v645, %v646
        %vm656 = vcmask 1045504
        %v657 = vrot.slane %v587, 2
        %v658 = vrot.slane %v588, 2
        %v659 = vsel %vm656, %v657, %v658
        %v660 = vrot.slane %v589, 2
        %v661 = vrot.slane %v590, 2
        %v662 = vsel %vm656, %v660, %v661
        %v663 = vrot.slane %v591, 2
        %v664 = vrot.slane %v592, 2
        %v665 = vsel %vm656, %v663, %v664
        %v666 = vrot.slane %v593, 2
        %v667 = vrot.slane %v594, 2
        %v668 = vsel %vm656, %v666, %v667
        %v669 = vrot.slane %v595, 2
        %v670 = vrot.slane %v596, 2
        %v671 = vsel %vm656, %v669, %v670
        %v672 = vrot.slane %v597, 2
        %v673 = vrot.slane %v598, 2
        %v674 = vsel %vm656, %v672, %v673
        %v675 = vrot.slane %v599, 2
        %v676 = vrot.slane %v600, 2
        %v677 = vsel %vm656, %v675, %v676
        %v678 = vrot.slane %v601, 2
        %v679 = vrot.slane %v602, 2
        %v680 = vsel %vm656, %v678, %v679
        %v691 = vrot.slane %v603, 1
        %v692 = vrot.slane %v604, 1
        %v693 = vsel %vm623, %v691, %v692
        %v695 = vrot.slane %v603, 2
        %v696 = vrot.slane %v604, 2
        %v697 = vsel %vm656, %v695, %v696
        %v701 = vrot.slane %v605, 1
        %v702 = vrot.slane %v606, 1
        %v703 = vsel %vm623, %v701, %v702
        %v705 = vrot.slane %v605, 2
        %v706 = vrot.slane %v606, 2
        %v707 = vsel %vm656, %v705, %v706
        %s709 = scalar_lea.vmem [#allocation2], 160
        %v710 = vld [vmem:[%s709] sm:$0xff]
        %v711 = vld [vmem:[%s709 + $0x8] sm:$0x3]
        %v712 = vld [vmem:[%s709 + $0x10] sm:$0xff]
        %v713 = vld [vmem:[%s709 + $0x18] sm:$0x3]
        %v714 = vld [vmem:[%s709 + $0x20] sm:$0xff]
        %v715 = vld [vmem:[%s709 + $0x28] sm:$0x3]
        %v716 = vld [vmem:[%s709 + $0x30] sm:$0xff]
        %v717 = vld [vmem:[%s709 + $0x38] sm:$0x3]
        %v718 = vld [vmem:[%s709 + $0x40] sm:$0xff]
        %v719 = vld [vmem:[%s709 + $0x48] sm:$0x3]
        %v720 = vld [vmem:[%s709 + $0x50] sm:$0xff]
        %v721 = vld [vmem:[%s709 + $0x58] sm:$0x3]
        %v722 = vld [vmem:[%s709 + $0x60] sm:$0xff]
        %v723 = vld [vmem:[%s709 + $0x68] sm:$0x3]
        %v724 = vld [vmem:[%s709 + $0x70] sm:$0xff]
        %v725 = vld [vmem:[%s709 + $0x78] sm:$0x3]
        %v726 = vld [vmem:[%s709 + $0x80] sm:$0xff]
        %v727 = vld [vmem:[%s709 + $0x88] sm:$0x3]
        %v728 = vld [vmem:[%s709 + $0x90] sm:$0xff]
        %v729 = vld [vmem:[%s709 + $0x98] sm:$0x3]
        %v746 = vrot.slane %v710, 1
        %v747 = vrot.slane %v711, 1
        %v748 = vsel %vm623, %v746, %v747
        %v749 = vrot.slane %v712, 1
        %v750 = vrot.slane %v713, 1
        %v751 = vsel %vm623, %v749, %v750
        %v752 = vrot.slane %v714, 1
        %v753 = vrot.slane %v715, 1
        %v754 = vsel %vm623, %v752, %v753
        %v755 = vrot.slane %v716, 1
        %v756 = vrot.slane %v717, 1
        %v757 = vsel %vm623, %v755, %v756
        %v758 = vrot.slane %v718, 1
        %v759 = vrot.slane %v719, 1
        %v760 = vsel %vm623, %v758, %v759
        %v761 = vrot.slane %v720, 1
        %v762 = vrot.slane %v721, 1
        %v763 = vsel %vm623, %v761, %v762
        %v764 = vrot.slane %v722, 1
        %v765 = vrot.slane %v723, 1
        %v766 = vsel %vm623, %v764, %v765
        %v767 = vrot.slane %v724, 1
        %v768 = vrot.slane %v725, 1
        %v769 = vsel %vm623, %v767, %v768
        %v778 = vrot.slane %v710, 2
        %v779 = vrot.slane %v711, 2
        %v780 = vsel %vm656, %v778, %v779
        %v781 = vrot.slane %v712, 2
        %v782 = vrot.slane %v713, 2
        %v783 = vsel %vm656, %v781, %v782
        %v784 = vrot.slane %v714, 2
        %v785 = vrot.slane %v715, 2
        %v786 = vsel %vm656, %v784, %v785
        %v787 = vrot.slane %v716, 2
        %v788 = vrot.slane %v717, 2
        %v789 = vsel %vm656, %v787, %v788
        %v790 = vrot.slane %v718, 2
        %v791 = vrot.slane %v719, 2
        %v792 = vsel %vm656, %v790, %v791
        %v793 = vrot.slane %v720, 2
        %v794 = vrot.slane %v721, 2
        %v795 = vsel %vm656, %v793, %v794
        %v796 = vrot.slane %v722, 2
        %v797 = vrot.slane %v723, 2
        %v798 = vsel %vm656, %v796, %v797
        %v799 = vrot.slane %v724, 2
        %v800 = vrot.slane %v725, 2
        %v801 = vsel %vm656, %v799, %v800
        %v812 = vrot.slane %v726, 1
        %v813 = vrot.slane %v727, 1
        %v814 = vsel %vm623, %v812, %v813
        %v816 = vrot.slane %v726, 2
        %v817 = vrot.slane %v727, 2
        %v818 = vsel %vm656, %v816, %v817
        %v822 = vrot.slane %v728, 1
        %v823 = vrot.slane %v729, 1
        %v824 = vsel %vm623, %v822, %v823
        %v826 = vrot.slane %v728, 2
        %v827 = vrot.slane %v729, 2
        %v828 = vsel %vm656, %v826, %v827
        %s830 = scalar_lea.vmem [#allocation2], 320
        %v831 = vld [vmem:[%s830] sm:$0xff]
        %v832 = vld [vmem:[%s830 + $0x8] sm:$0x3]
        %v833 = vld [vmem:[%s830 + $0x10] sm:$0xff]
        %v834 = vld [vmem:[%s830 + $0x18] sm:$0x3]
        %v835 = vld [vmem:[%s830 + $0x20] sm:$0xff]
        %v836 = vld [vmem:[%s830 + $0x28] sm:$0x3]
        %v837 = vld [vmem:[%s830 + $0x30] sm:$0xff]
        %v838 = vld [vmem:[%s830 + $0x38] sm:$0x3]
        %v839 = vld [vmem:[%s830 + $0x40] sm:$0xff]
        %v840 = vld [vmem:[%s830 + $0x48] sm:$0x3]
        %v841 = vld [vmem:[%s830 + $0x50] sm:$0xff]
        %v842 = vld [vmem:[%s830 + $0x58] sm:$0x3]
        %v843 = vld [vmem:[%s830 + $0x60] sm:$0xff]
        %v844 = vld [vmem:[%s830 + $0x68] sm:$0x3]
        %v845 = vld [vmem:[%s830 + $0x70] sm:$0xff]
        %v846 = vld [vmem:[%s830 + $0x78] sm:$0x3]
        %v847 = vld [vmem:[%s830 + $0x80] sm:$0xff]
        %v848 = vld [vmem:[%s830 + $0x88] sm:$0x3]
        %v849 = vld [vmem:[%s830 + $0x90] sm:$0xff]
        %v850 = vld [vmem:[%s830 + $0x98] sm:$0x3]
        %v867 = vrot.slane %v831, 1
        %v868 = vrot.slane %v832, 1
        %v869 = vsel %vm623, %v867, %v868
        %v870 = vrot.slane %v833, 1
        %v871 = vrot.slane %v834, 1
        %v872 = vsel %vm623, %v870, %v871
        %v873 = vrot.slane %v835, 1
        %v874 = vrot.slane %v836, 1
        %v875 = vsel %vm623, %v873, %v874
        %v876 = vrot.slane %v837, 1
        %v877 = vrot.slane %v838, 1
        %v878 = vsel %vm623, %v876, %v877
        %v879 = vrot.slane %v839, 1
        %v880 = vrot.slane %v840, 1
        %v881 = vsel %vm623, %v879, %v880
        %v882 = vrot.slane %v841, 1
        %v883 = vrot.slane %v842, 1
        %v884 = vsel %vm623, %v882, %v883
        %v885 = vrot.slane %v843, 1
        %v886 = vrot.slane %v844, 1
        %v887 = vsel %vm623, %v885, %v886
        %v888 = vrot.slane %v845, 1
        %v889 = vrot.slane %v846, 1
        %v890 = vsel %vm623, %v888, %v889
        %v899 = vrot.slane %v831, 2
        %v900 = vrot.slane %v832, 2
        %v901 = vsel %vm656, %v899, %v900
        %v902 = vrot.slane %v833, 2
        %v903 = vrot.slane %v834, 2
        %v904 = vsel %vm656, %v902, %v903
        %v905 = vrot.slane %v835, 2
        %v906 = vrot.slane %v836, 2
        %v907 = vsel %vm656, %v905, %v906
        %v908 = vrot.slane %v837, 2
        %v909 = vrot.slane %v838, 2
        %v910 = vsel %vm656, %v908, %v909
        %v911 = vrot.slane %v839, 2
        %v912 = vrot.slane %v840, 2
        %v913 = vsel %vm656, %v911, %v912
        %v914 = vrot.slane %v841, 2
        %v915 = vrot.slane %v842, 2
        %v916 = vsel %vm656, %v914, %v915
        %v917 = vrot.slane %v843, 2
        %v918 = vrot.slane %v844, 2
        %v919 = vsel %vm656, %v917, %v918
        %v920 = vrot.slane %v845, 2
        %v921 = vrot.slane %v846, 2
        %v922 = vsel %vm656, %v920, %v921
        %v933 = vrot.slane %v847, 1
        %v934 = vrot.slane %v848, 1
        %v935 = vsel %vm623, %v933, %v934
        %v937 = vrot.slane %v847, 2
        %v938 = vrot.slane %v848, 2
        %v939 = vsel %vm656, %v937, %v938
        %v943 = vrot.slane %v849, 1
        %v944 = vrot.slane %v850, 1
        %v945 = vsel %vm623, %v943, %v944
        %v947 = vrot.slane %v849, 2
        %v948 = vrot.slane %v850, 2
        %v949 = vsel %vm656, %v947, %v948
        %v951 = vpack.c.bf16 %v589, %v587
        %v952 = vpack.c.bf16 %v629, %v626
        %v953 = vpack.c.bf16 %v662, %v659
        %v954 = vpack.c.bf16 %v591, %v589
        %v955 = vpack.c.bf16 %v632, %v629
        %v956 = vpack.c.bf16 %v665, %v662
        %v957 = vpack.c.bf16 %v593, %v591
        %v958 = vpack.c.bf16 %v635, %v632
        %v959 = vpack.c.bf16 %v668, %v665
        %v960 = vpack.c.bf16 %v712, %v710
        %v961 = vpack.c.bf16 %v751, %v748
        %v962 = vpack.c.bf16 %v783, %v780
        %v963 = vpack.c.bf16 %v714, %v712
        %v964 = vpack.c.bf16 %v754, %v751
        %v965 = vpack.c.bf16 %v786, %v783
        %v966 = vpack.c.bf16 %v716, %v714
        %v967 = vpack.c.bf16 %v757, %v754
        %v968 = vpack.c.bf16 %v789, %v786
        %v969 = vpack.c.bf16 %v833, %v831
        %v970 = vpack.c.bf16 %v872, %v869
        %v971 = vpack.c.bf16 %v904, %v901
        %v972 = vpack.c.bf16 %v835, %v833
        %v973 = vpack.c.bf16 %v875, %v872
        %v974 = vpack.c.bf16 %v907, %v904
        %v975 = vpack.c.bf16 %v837, %v835
        %v976 = vpack.c.bf16 %v878, %v875
        %v977 = vpack.c.bf16 %v910, %v907
        %v978 = vpack.c.bf16 %v595, %v593
        %v979 = vpack.c.bf16 %v638, %v635
        %v980 = vpack.c.bf16 %v671, %v668
        %v981 = vpack.c.bf16 %v597, %v595
        %v982 = vpack.c.bf16 %v641, %v638
        %v983 = vpack.c.bf16 %v674, %v671
        %v984 = vpack.c.bf16 %v718, %v716
        %v985 = vpack.c.bf16 %v760, %v757
        %v986 = vpack.c.bf16 %v792, %v789
        %v987 = vpack.c.bf16 %v720, %v718
        %v988 = vpack.c.bf16 %v763, %v760
        %v989 = vpack.c.bf16 %v795, %v792
        %v990 = vpack.c.bf16 %v839, %v837
        %v991 = vpack.c.bf16 %v881, %v878
        %v992 = vpack.c.bf16 %v913, %v910
        %v993 = vpack.c.bf16 %v841, %v839
        %v994 = vpack.c.bf16 %v884, %v881
        %v995 = vpack.c.bf16 %v916, %v913
        %v996 = vpack.c.bf16 %v599, %v597
        %v997 = vpack.c.bf16 %v644, %v641
        %v998 = vpack.c.bf16 %v677, %v674
        %v999 = vpack.c.bf16 %v601, %v599
        %v1000 = vpack.c.bf16 %v647, %v644
        %v1001 = vpack.c.bf16 %v680, %v677
        %v1002 = vpack.c.bf16 %v722, %v720
        %v1003 = vpack.c.bf16 %v766, %v763
        %v1004 = vpack.c.bf16 %v798, %v795
        %v1005 = vpack.c.bf16 %v724, %v722
        %v1006 = vpack.c.bf16 %v769, %v766
        %v1007 = vpack.c.bf16 %v801, %v798
        %v1008 = vpack.c.bf16 %v843, %v841
        %v1009 = vpack.c.bf16 %v887, %v884
        %v1010 = vpack.c.bf16 %v919, %v916
        %v1011 = vpack.c.bf16 %v845, %v843
        %v1012 = vpack.c.bf16 %v890, %v887
        %v1013 = vpack.c.bf16 %v922, %v919
        %v1014 = vpack.c.bf16 %v603, %v601
        %v1015 = vpack.c.bf16 %v693, %v647
        %v1016 = vpack.c.bf16 %v697, %v680
        %v1017 = vpack.c.bf16 %v605, %v603
        %v1018 = vpack.c.bf16 %v703, %v693
        %v1019 = vpack.c.bf16 %v707, %v697
        %v1020 = vpack.c.bf16 %v726, %v724
        %v1021 = vpack.c.bf16 %v814, %v769
        %v1022 = vpack.c.bf16 %v818, %v801
        %v1023 = vpack.c.bf16 %v728, %v726
        %v1024 = vpack.c.bf16 %v824, %v814
        %v1025 = vpack.c.bf16 %v828, %v818
        %v1026 = vpack.c.bf16 %v847, %v845
        %v1027 = vpack.c.bf16 %v935, %v890
        %v1028 = vpack.c.bf16 %v939, %v922
        %v1029 = vpack.c.bf16 %v849, %v847
        %v1030 = vpack.c.bf16 %v945, %v935
        %v1031 = vpack.c.bf16 %v949, %v939
        %v1032 = vld [vmem:[#allocation8] sm:$0xf]
        %v1033 = vld [vmem:[#allocation8 + $0x4] sm:$0xf]
        %v1034 = vld [vmem:[#allocation8 + $0x8] sm:$0xf]
        %v1035 = vld [vmem:[#allocation8 + $0xc] sm:$0xf]
        %v1036 = vld [vmem:[#allocation8 + $0x10] sm:$0xf]
        %v1037 = vld [vmem:[#allocation8 + $0x14] sm:$0xf]
        %v1038 = vld [vmem:[#allocation8 + $0x18] sm:$0xf]
        %v1039 = vld [vmem:[#allocation8 + $0x1c] sm:$0xf]
        %v1040 = vld [vmem:[#allocation8 + $0x20] sm:$0xf]
        %v1041 = vld [vmem:[#allocation8 + $0x24] sm:$0xf]
        %v1042 = vld [vmem:[#allocation8 + $0x28] sm:$0xf]
        %v1043 = vld [vmem:[#allocation8 + $0x2c] sm:$0xf]
        %v1044 = vld [vmem:[#allocation8 + $0x30] sm:$0xf]
        %v1045 = vld [vmem:[#allocation8 + $0x34] sm:$0xf]
        %v1046 = vld [vmem:[#allocation8 + $0x38] sm:$0xf]
        %v1047 = vld [vmem:[#allocation8 + $0x3c] sm:$0xf]
        %v1048 = vld [vmem:[#allocation8 + $0x40] sm:$0xf]
        %v1049 = vld [vmem:[#allocation8 + $0x44] sm:$0xf]
        %v1050 = vld [vmem:[#allocation8 + $0x48] sm:$0xf]
        %v1051 = vld [vmem:[#allocation8 + $0x4c] sm:$0xf]
        %v1052 = vld [vmem:[#allocation8 + $0x50] sm:$0xf]
        %v1053 = vld [vmem:[#allocation8 + $0x54] sm:$0xf]
        %v1054 = vld [vmem:[#allocation8 + $0x58] sm:$0xf]
        %v1055 = vld [vmem:[#allocation8 + $0x5c] sm:$0xf]
        %v1056 = vld [vmem:[#allocation8 + $0x60] sm:$0xf]
        %v1057 = vld [vmem:[#allocation8 + $0x64] sm:$0xf]
        %v1058 = vld [vmem:[#allocation8 + $0x68] sm:$0xf]
        %v1059 = vld [vmem:[#allocation8 + $0x6c] sm:$0xf]
        %v1060 = vld [vmem:[#allocation8 + $0x70] sm:$0xf]
        %v1061 = vld [vmem:[#allocation8 + $0x74] sm:$0xf]
        %v1062 = vld [vmem:[#allocation8 + $0x78] sm:$0xf]
        %v1063 = vld [vmem:[#allocation8 + $0x7c] sm:$0xf]
        %v1064 = vld [vmem:[#allocation8 + $0x80] sm:$0xf]
        %v1065 = vld [vmem:[#allocation8 + $0x84] sm:$0xf]
        %v1066 = vld [vmem:[#allocation8 + $0x88] sm:$0xf]
        %v1067 = vld [vmem:[#allocation8 + $0x8c] sm:$0xf]
        %v1068 = vld [vmem:[#allocation8 + $0x90] sm:$0xf]
        %v1069 = vld [vmem:[#allocation8 + $0x94] sm:$0xf]
        %v1070 = vld [vmem:[#allocation8 + $0x98] sm:$0xf]
        %v1071 = vld [vmem:[#allocation8 + $0x9c] sm:$0xf]
        %v1072 = vld [vmem:[#allocation8 + $0xa0] sm:$0xf]
        %v1073 = vld [vmem:[#allocation8 + $0xa4] sm:$0xf]
        %v1074 = vld [vmem:[#allocation8 + $0xa8] sm:$0xf]
        %v1075 = vld [vmem:[#allocation8 + $0xac] sm:$0xf]
        %v1076 = vld [vmem:[#allocation8 + $0xb0] sm:$0xf]
        %v1077 = vld [vmem:[#allocation8 + $0xb4] sm:$0xf]
        %v1078 = vld [vmem:[#allocation8 + $0xb8] sm:$0xf]
        %v1079 = vld [vmem:[#allocation8 + $0xbc] sm:$0xf]
        %v1080 = vld [vmem:[#allocation8 + $0xc0] sm:$0xf]
        %v1081 = vld [vmem:[#allocation8 + $0xc4] sm:$0xf]
        %v1082 = vld [vmem:[#allocation8 + $0xc8] sm:$0xf]
        %v1083 = vld [vmem:[#allocation8 + $0xcc] sm:$0xf]
        %v1084 = vld [vmem:[#allocation8 + $0xd0] sm:$0xf]
        %v1085 = vld [vmem:[#allocation8 + $0xd4] sm:$0xf]
        %v1086 = vld [vmem:[#allocation8 + $0xd8] sm:$0xf]
        %v1087 = vld [vmem:[#allocation8 + $0xdc] sm:$0xf]
        %v1088 = vld [vmem:[#allocation8 + $0xe0] sm:$0xf]
        %v1089 = vld [vmem:[#allocation8 + $0xe4] sm:$0xf]
        %v1090 = vld [vmem:[#allocation8 + $0xe8] sm:$0xf]
        %v1091 = vld [vmem:[#allocation8 + $0xec] sm:$0xf]
        %v1092 = vld [vmem:[#allocation8 + $0xf0] sm:$0xf]
        %v1093 = vld [vmem:[#allocation8 + $0xf4] sm:$0xf]
        %v1094 = vld [vmem:[#allocation8 + $0xf8] sm:$0xf]
        %v1095 = vld [vmem:[#allocation8 + $0xfc] sm:$0xf]
        %v1096 = vld [vmem:[#allocation8 + $0x100] sm:$0xf]
        %v1097 = vld [vmem:[#allocation8 + $0x104] sm:$0xf]
        %v1098 = vld [vmem:[#allocation8 + $0x108] sm:$0xf]
        %v1099 = vld [vmem:[#allocation8 + $0x10c] sm:$0xf]
        %v1100 = vld [vmem:[#allocation8 + $0x110] sm:$0xf]
        %v1101 = vld [vmem:[#allocation8 + $0x114] sm:$0xf]
        %v1102 = vld [vmem:[#allocation8 + $0x118] sm:$0xf]
        %v1103 = vld [vmem:[#allocation8 + $0x11c] sm:$0xf]
        %v1104 = vld [vmem:[#allocation8 + $0x120] sm:$0xf]
        %v1105 = vld [vmem:[#allocation8 + $0x124] sm:$0xf]
        %v1106 = vld [vmem:[#allocation8 + $0x128] sm:$0xf]
        %v1107 = vld [vmem:[#allocation8 + $0x12c] sm:$0xf]
        %v1108 = vld [vmem:[#allocation8 + $0x130] sm:$0xf]
        %v1109 = vld [vmem:[#allocation8 + $0x134] sm:$0xf]
        %v1110 = vld [vmem:[#allocation8 + $0x138] sm:$0xf]
        %v1111 = vld [vmem:[#allocation8 + $0x13c] sm:$0xf]
        %v1112 = vld [vmem:[#allocation8 + $0x140] sm:$0xf]
        %v1113 = vld [vmem:[#allocation8 + $0x144] sm:$0xf]
        %v1114 = vld [vmem:[#allocation8 + $0x148] sm:$0xf]
        %v1115 = vld [vmem:[#allocation8 + $0x14c] sm:$0xf]
        %v1116 = vld [vmem:[#allocation8 + $0x150] sm:$0xf]
        %v1117 = vld [vmem:[#allocation8 + $0x154] sm:$0xf]
        %v1118 = vld [vmem:[#allocation8 + $0x158] sm:$0xf]
        %v1119 = vld [vmem:[#allocation8 + $0x15c] sm:$0xf]
        %v1120 = vld [vmem:[#allocation8 + $0x160] sm:$0xf]
        %v1121 = vld [vmem:[#allocation8 + $0x164] sm:$0xf]
        %v1122 = vld [vmem:[#allocation8 + $0x168] sm:$0xf]
        %v1123 = vld [vmem:[#allocation8 + $0x16c] sm:$0xf]
        %v1124 = vld [vmem:[#allocation8 + $0x170] sm:$0xf]
        %v1125 = vld [vmem:[#allocation8 + $0x174] sm:$0xf]
        %v1126 = vld [vmem:[#allocation8 + $0x178] sm:$0xf]
        %v1127 = vld [vmem:[#allocation8 + $0x17c] sm:$0xf]
        %v1128 = vld [vmem:[#allocation8 + $0x180] sm:$0xf]
        %v1129 = vld [vmem:[#allocation8 + $0x184] sm:$0xf]
        %v1130 = vld [vmem:[#allocation8 + $0x188] sm:$0xf]
        %v1131 = vld [vmem:[#allocation8 + $0x18c] sm:$0xf]
        %v1132 = vld [vmem:[#allocation8 + $0x190] sm:$0xf]
        %v1133 = vld [vmem:[#allocation8 + $0x194] sm:$0xf]
        %v1134 = vld [vmem:[#allocation8 + $0x198] sm:$0xf]
        %v1135 = vld [vmem:[#allocation8 + $0x19c] sm:$0xf]
        %v1136 = vld [vmem:[#allocation8 + $0x1a0] sm:$0xf]
        %v1137 = vld [vmem:[#allocation8 + $0x1a4] sm:$0xf]
        %v1138 = vld [vmem:[#allocation8 + $0x1a8] sm:$0xf]
        %v1139 = vld [vmem:[#allocation8 + $0x1ac] sm:$0xf]
        %v1140 = vld [vmem:[#allocation8 + $0x1b0] sm:$0xf]
        %v1141 = vld [vmem:[#allocation8 + $0x1b4] sm:$0xf]
        %v1142 = vld [vmem:[#allocation8 + $0x1b8] sm:$0xf]
        %v1143 = vld [vmem:[#allocation8 + $0x1bc] sm:$0xf]
        %v1144 = vld [vmem:[#allocation8 + $0x1c0] sm:$0xf]
        %v1145 = vld [vmem:[#allocation8 + $0x1c4] sm:$0xf]
        %v1146 = vld [vmem:[#allocation8 + $0x1c8] sm:$0xf]
        %v1147 = vld [vmem:[#allocation8 + $0x1cc] sm:$0xf]
        %v1148 = vld [vmem:[#allocation8 + $0x1d0] sm:$0xf]
        %v1149 = vld [vmem:[#allocation8 + $0x1d4] sm:$0xf]
        %v1150 = vld [vmem:[#allocation8 + $0x1d8] sm:$0xf]
        %v1151 = vld [vmem:[#allocation8 + $0x1dc] sm:$0xf]
        %v1152 = vld [vmem:[#allocation8 + $0x1e0] sm:$0xf]
        %v1153 = vld [vmem:[#allocation8 + $0x1e4] sm:$0xf]
        %v1154 = vld [vmem:[#allocation8 + $0x1e8] sm:$0xf]
        %v1155 = vld [vmem:[#allocation8 + $0x1ec] sm:$0xf]
        %v1156 = vld [vmem:[#allocation8 + $0x1f0] sm:$0xf]
        %v1157 = vld [vmem:[#allocation8 + $0x1f4] sm:$0xf]
        %v1158 = vld [vmem:[#allocation8 + $0x1f8] sm:$0xf]
        %v1159 = vld [vmem:[#allocation8 + $0x1fc] sm:$0xf]
        %v1160 = vld [vmem:[#allocation8 + $0x200] sm:$0xf]
        %v1161 = vld [vmem:[#allocation8 + $0x204] sm:$0xf]
        %v1162 = vld [vmem:[#allocation8 + $0x208] sm:$0xf]
        %v1163 = vld [vmem:[#allocation8 + $0x20c] sm:$0xf]
        %v1164 = vld [vmem:[#allocation8 + $0x210] sm:$0xf]
        %v1165 = vld [vmem:[#allocation8 + $0x214] sm:$0xf]
        %v1166 = vld [vmem:[#allocation8 + $0x218] sm:$0xf]
        %v1167 = vld [vmem:[#allocation8 + $0x21c] sm:$0xf]
        %v1168 = vld [vmem:[#allocation8 + $0x220] sm:$0xf]
        %v1169 = vld [vmem:[#allocation8 + $0x224] sm:$0xf]
        %v1170 = vld [vmem:[#allocation8 + $0x228] sm:$0xf]
        %v1171 = vld [vmem:[#allocation8 + $0x22c] sm:$0xf]
        %v1172 = vld [vmem:[#allocation8 + $0x230] sm:$0xf]
        %v1173 = vld [vmem:[#allocation8 + $0x234] sm:$0xf]
        %v1174 = vld [vmem:[#allocation8 + $0x238] sm:$0xf]
        %v1175 = vld [vmem:[#allocation8 + $0x23c] sm:$0xf]
        %v1176 = vld [vmem:[#allocation8 + $0x240] sm:$0xf]
        %v1177 = vld [vmem:[#allocation8 + $0x244] sm:$0xf]
        %v1178 = vld [vmem:[#allocation8 + $0x248] sm:$0xf]
        %v1179 = vld [vmem:[#allocation8 + $0x24c] sm:$0xf]
        %v1180 = vld [vmem:[#allocation8 + $0x250] sm:$0xf]
        %v1181 = vld [vmem:[#allocation8 + $0x254] sm:$0xf]
        %v1182 = vld [vmem:[#allocation8 + $0x258] sm:$0xf]
        %v1183 = vld [vmem:[#allocation8 + $0x25c] sm:$0xf]
        %v1184 = vld [vmem:[#allocation8 + $0x260] sm:$0xf]
        %v1185 = vld [vmem:[#allocation8 + $0x264] sm:$0xf]
        %v1186 = vld [vmem:[#allocation8 + $0x268] sm:$0xf]
        %v1187 = vld [vmem:[#allocation8 + $0x26c] sm:$0xf]
        %v1188 = vld [vmem:[#allocation8 + $0x270] sm:$0xf]
        %v1189 = vld [vmem:[#allocation8 + $0x274] sm:$0xf]
        %v1190 = vld [vmem:[#allocation8 + $0x278] sm:$0xf]
        %v1191 = vld [vmem:[#allocation8 + $0x27c] sm:$0xf]
        %v1192 = vld [vmem:[#allocation8 + $0x280] sm:$0xf]
        %v1193 = vld [vmem:[#allocation8 + $0x284] sm:$0xf]
        %v1194 = vld [vmem:[#allocation8 + $0x288] sm:$0xf]
        %v1195 = vld [vmem:[#allocation8 + $0x28c] sm:$0xf]
        %v1196 = vld [vmem:[#allocation8 + $0x290] sm:$0xf]
        %v1197 = vld [vmem:[#allocation8 + $0x294] sm:$0xf]
        %v1198 = vld [vmem:[#allocation8 + $0x298] sm:$0xf]
        %v1199 = vld [vmem:[#allocation8 + $0x29c] sm:$0xf]
        %v1200 = vld [vmem:[#allocation8 + $0x2a0] sm:$0xf]
        %v1201 = vld [vmem:[#allocation8 + $0x2a4] sm:$0xf]
        %v1202 = vld [vmem:[#allocation8 + $0x2a8] sm:$0xf]
        %v1203 = vld [vmem:[#allocation8 + $0x2ac] sm:$0xf]
        %v1204 = vld [vmem:[#allocation8 + $0x2b0] sm:$0xf]
        %v1205 = vld [vmem:[#allocation8 + $0x2b4] sm:$0xf]
        %v1206 = vld [vmem:[#allocation8 + $0x2b8] sm:$0xf]
        %v1207 = vld [vmem:[#allocation8 + $0x2bc] sm:$0xf]
        %v1208 = vld [vmem:[#allocation8 + $0x2c0] sm:$0xf]
        %v1209 = vld [vmem:[#allocation8 + $0x2c4] sm:$0xf]
        %v1210 = vld [vmem:[#allocation8 + $0x2c8] sm:$0xf]
        %v1211 = vld [vmem:[#allocation8 + $0x2cc] sm:$0xf]
        %v1212 = vld [vmem:[#allocation8 + $0x2d0] sm:$0xf]
        %v1213 = vld [vmem:[#allocation8 + $0x2d4] sm:$0xf]
        %v1214 = vld [vmem:[#allocation8 + $0x2d8] sm:$0xf]
        %v1215 = vld [vmem:[#allocation8 + $0x2dc] sm:$0xf]
        %v1216 = vld [vmem:[#allocation8 + $0x2e0] sm:$0xf]
        %v1217 = vld [vmem:[#allocation8 + $0x2e4] sm:$0xf]
        %v1218 = vld [vmem:[#allocation8 + $0x2e8] sm:$0xf]
        %v1219 = vld [vmem:[#allocation8 + $0x2ec] sm:$0xf]
        %v1220 = vld [vmem:[#allocation8 + $0x2f0] sm:$0xf]
        %v1221 = vld [vmem:[#allocation8 + $0x2f4] sm:$0xf]
        %v1222 = vld [vmem:[#allocation8 + $0x2f8] sm:$0xf]
        %v1223 = vld [vmem:[#allocation8 + $0x2fc] sm:$0xf]
        %v1224 = vld [vmem:[#allocation8 + $0x300] sm:$0xf]
        %v1225 = vld [vmem:[#allocation8 + $0x304] sm:$0xf]
        %v1226 = vld [vmem:[#allocation8 + $0x308] sm:$0xf]
        %v1227 = vld [vmem:[#allocation8 + $0x30c] sm:$0xf]
        %v1228 = vld [vmem:[#allocation8 + $0x310] sm:$0xf]
        %v1229 = vld [vmem:[#allocation8 + $0x314] sm:$0xf]
        %v1230 = vld [vmem:[#allocation8 + $0x318] sm:$0xf]
        %v1231 = vld [vmem:[#allocation8 + $0x31c] sm:$0xf]
        %v1232 = vld [vmem:[#allocation8 + $0x320] sm:$0xf]
        %v1233 = vld [vmem:[#allocation8 + $0x324] sm:$0xf]
        %v1234 = vld [vmem:[#allocation8 + $0x328] sm:$0xf]
        %v1235 = vld [vmem:[#allocation8 + $0x32c] sm:$0xf]
        %v1236 = vld [vmem:[#allocation8 + $0x330] sm:$0xf]
        %v1237 = vld [vmem:[#allocation8 + $0x334] sm:$0xf]
        %v1238 = vld [vmem:[#allocation8 + $0x338] sm:$0xf]
        %v1239 = vld [vmem:[#allocation8 + $0x33c] sm:$0xf]
        %v1240 = vld [vmem:[#allocation8 + $0x340] sm:$0xf]
        %v1241 = vld [vmem:[#allocation8 + $0x344] sm:$0xf]
        %v1242 = vld [vmem:[#allocation8 + $0x348] sm:$0xf]
        %v1243 = vld [vmem:[#allocation8 + $0x34c] sm:$0xf]
        %v1244 = vld [vmem:[#allocation8 + $0x350] sm:$0xf]
        %v1245 = vld [vmem:[#allocation8 + $0x354] sm:$0xf]
        %v1246 = vld [vmem:[#allocation8 + $0x358] sm:$0xf]
        %v1247 = vld [vmem:[#allocation8 + $0x35c] sm:$0xf]
        %v1248 = vld [vmem:[#allocation8 + $0x360] sm:$0xf]
        %v1249 = vld [vmem:[#allocation8 + $0x364] sm:$0xf]
        %v1250 = vld [vmem:[#allocation8 + $0x368] sm:$0xf]
        %v1251 = vld [vmem:[#allocation8 + $0x36c] sm:$0xf]
        %v1252 = vld [vmem:[#allocation8 + $0x370] sm:$0xf]
        %v1253 = vld [vmem:[#allocation8 + $0x374] sm:$0xf]
        %v1254 = vld [vmem:[#allocation8 + $0x378] sm:$0xf]
        %v1255 = vld [vmem:[#allocation8 + $0x37c] sm:$0xf]
        %v1256 = vld [vmem:[#allocation8 + $0x380] sm:$0xf]
        %v1257 = vld [vmem:[#allocation8 + $0x384] sm:$0xf]
        %v1258 = vld [vmem:[#allocation8 + $0x388] sm:$0xf]
        %v1259 = vld [vmem:[#allocation8 + $0x38c] sm:$0xf]
        %v1260 = vld [vmem:[#allocation8 + $0x390] sm:$0xf]
        %v1261 = vld [vmem:[#allocation8 + $0x394] sm:$0xf]
        %v1262 = vld [vmem:[#allocation8 + $0x398] sm:$0xf]
        %v1263 = vld [vmem:[#allocation8 + $0x39c] sm:$0xf]
        %v1264 = vld [vmem:[#allocation8 + $0x3a0] sm:$0xf]
        %v1265 = vld [vmem:[#allocation8 + $0x3a4] sm:$0xf]
        %v1266 = vld [vmem:[#allocation8 + $0x3a8] sm:$0xf]
        %v1267 = vld [vmem:[#allocation8 + $0x3ac] sm:$0xf]
        %v1268 = vld [vmem:[#allocation8 + $0x3b0] sm:$0xf]
        %v1269 = vld [vmem:[#allocation8 + $0x3b4] sm:$0xf]
        %v1270 = vld [vmem:[#allocation8 + $0x3b8] sm:$0xf]
        %v1271 = vld [vmem:[#allocation8 + $0x3bc] sm:$0xf]
        %v1272 = vld [vmem:[#allocation8 + $0x3c0] sm:$0xf]
        %v1273 = vld [vmem:[#allocation8 + $0x3c4] sm:$0xf]
        %v1274 = vld [vmem:[#allocation8 + $0x3c8] sm:$0xf]
        %v1275 = vld [vmem:[#allocation8 + $0x3cc] sm:$0xf]
        %v1276 = vld [vmem:[#allocation8 + $0x3d0] sm:$0xf]
        %v1277 = vld [vmem:[#allocation8 + $0x3d4] sm:$0xf]
        %v1278 = vld [vmem:[#allocation8 + $0x3d8] sm:$0xf]
        %v1279 = vld [vmem:[#allocation8 + $0x3dc] sm:$0xf]
        %v1280 = vld [vmem:[#allocation8 + $0x3e0] sm:$0xf]
        %v1281 = vld [vmem:[#allocation8 + $0x3e4] sm:$0xf]
        %v1282 = vld [vmem:[#allocation8 + $0x3e8] sm:$0xf]
        %v1283 = vld [vmem:[#allocation8 + $0x3ec] sm:$0xf]
        %v1284 = vld [vmem:[#allocation8 + $0x3f0] sm:$0xf]
        %v1285 = vld [vmem:[#allocation8 + $0x3f4] sm:$0xf]
        %v1286 = vld [vmem:[#allocation8 + $0x3f8] sm:$0xf]
        %v1287 = vld [vmem:[#allocation8 + $0x3fc] sm:$0xf]
        %v1288 = vld [vmem:[#allocation8 + $0x400] sm:$0xf]
        %v1289 = vld [vmem:[#allocation8 + $0x404] sm:$0xf]
        %v1290 = vld [vmem:[#allocation8 + $0x408] sm:$0xf]
        %v1291 = vld [vmem:[#allocation8 + $0x40c] sm:$0xf]
        %v1292 = vld [vmem:[#allocation8 + $0x410] sm:$0xf]
        %v1293 = vld [vmem:[#allocation8 + $0x414] sm:$0xf]
        %v1294 = vld [vmem:[#allocation8 + $0x418] sm:$0xf]
        %v1295 = vld [vmem:[#allocation8 + $0x41c] sm:$0xf]
        %v1296 = vld [vmem:[#allocation8 + $0x420] sm:$0xf]
        %v1297 = vld [vmem:[#allocation8 + $0x424] sm:$0xf]
        %v1298 = vld [vmem:[#allocation8 + $0x428] sm:$0xf]
        %v1299 = vld [vmem:[#allocation8 + $0x42c] sm:$0xf]
        %v1300 = vld [vmem:[#allocation8 + $0x430] sm:$0xf]
        %v1301 = vld [vmem:[#allocation8 + $0x434] sm:$0xf]
        %v1302 = vld [vmem:[#allocation8 + $0x438] sm:$0xf]
        %v1303 = vld [vmem:[#allocation8 + $0x43c] sm:$0xf]
        %v1304 = vld [vmem:[#allocation8 + $0x440] sm:$0xf]
        %v1305 = vld [vmem:[#allocation8 + $0x444] sm:$0xf]
        %v1306 = vld [vmem:[#allocation8 + $0x448] sm:$0xf]
        %v1307 = vld [vmem:[#allocation8 + $0x44c] sm:$0xf]
        %v1308 = vld [vmem:[#allocation8 + $0x450] sm:$0xf]
        %v1309 = vld [vmem:[#allocation8 + $0x454] sm:$0xf]
        %v1310 = vld [vmem:[#allocation8 + $0x458] sm:$0xf]
        %v1311 = vld [vmem:[#allocation8 + $0x45c] sm:$0xf]
        %v1312 = vld [vmem:[#allocation8 + $0x460] sm:$0xf]
        %v1313 = vld [vmem:[#allocation8 + $0x464] sm:$0xf]
        %v1314 = vld [vmem:[#allocation8 + $0x468] sm:$0xf]
        %v1315 = vld [vmem:[#allocation8 + $0x46c] sm:$0xf]
        %v1316 = vld [vmem:[#allocation8 + $0x470] sm:$0xf]
        %v1317 = vld [vmem:[#allocation8 + $0x474] sm:$0xf]
        %v1318 = vld [vmem:[#allocation8 + $0x478] sm:$0xf]
        %v1319 = vld [vmem:[#allocation8 + $0x47c] sm:$0xf]
        %v1320 = vld [vmem:[#allocation8 + $0x480] sm:$0xf]
        %v1321 = vld [vmem:[#allocation8 + $0x484] sm:$0xf]
        %v1322 = vld [vmem:[#allocation8 + $0x488] sm:$0xf]
        %v1323 = vld [vmem:[#allocation8 + $0x48c] sm:$0xf]
        %v1324 = vld [vmem:[#allocation8 + $0x490] sm:$0xf]
        %v1325 = vld [vmem:[#allocation8 + $0x494] sm:$0xf]
        %v1326 = vld [vmem:[#allocation8 + $0x498] sm:$0xf]
        %v1327 = vld [vmem:[#allocation8 + $0x49c] sm:$0xf]
        %v1328 = vld [vmem:[#allocation8 + $0x4a0] sm:$0xf]
        %v1329 = vld [vmem:[#allocation8 + $0x4a4] sm:$0xf]
        %v1330 = vld [vmem:[#allocation8 + $0x4a8] sm:$0xf]
        %v1331 = vld [vmem:[#allocation8 + $0x4ac] sm:$0xf]
        %v1332 = vld [vmem:[#allocation8 + $0x4b0] sm:$0xf]
        %v1333 = vld [vmem:[#allocation8 + $0x4b4] sm:$0xf]
        %v1334 = vld [vmem:[#allocation8 + $0x4b8] sm:$0xf]
        %v1335 = vld [vmem:[#allocation8 + $0x4bc] sm:$0xf]
        %v1336 = vld [vmem:[#allocation8 + $0x4c0] sm:$0xf]
        %v1337 = vld [vmem:[#allocation8 + $0x4c4] sm:$0xf]
        %v1338 = vld [vmem:[#allocation8 + $0x4c8] sm:$0xf]
        %v1339 = vld [vmem:[#allocation8 + $0x4cc] sm:$0xf]
        %v1340 = vld [vmem:[#allocation8 + $0x4d0] sm:$0xf]
        %v1341 = vld [vmem:[#allocation8 + $0x4d4] sm:$0xf]
        %v1342 = vld [vmem:[#allocation8 + $0x4d8] sm:$0xf]
        %v1343 = vld [vmem:[#allocation8 + $0x4dc] sm:$0xf]
        %v1344 = vld [vmem:[#allocation8 + $0x4e0] sm:$0xf]
        %v1345 = vld [vmem:[#allocation8 + $0x4e4] sm:$0xf]
        %v1346 = vld [vmem:[#allocation8 + $0x4e8] sm:$0xf]
        %v1347 = vld [vmem:[#allocation8 + $0x4ec] sm:$0xf]
        %v1348 = vld [vmem:[#allocation8 + $0x4f0] sm:$0xf]
        %v1349 = vld [vmem:[#allocation8 + $0x4f4] sm:$0xf]
        %v1350 = vld [vmem:[#allocation8 + $0x4f8] sm:$0xf]
        %v1351 = vld [vmem:[#allocation8 + $0x4fc] sm:$0xf]
        %v1352 = vld [vmem:[#allocation8 + $0x500] sm:$0xf]
        %v1353 = vld [vmem:[#allocation8 + $0x504] sm:$0xf]
        %v1354 = vld [vmem:[#allocation8 + $0x508] sm:$0xf]
        %v1355 = vld [vmem:[#allocation8 + $0x50c] sm:$0xf]
        %v1356 = vld [vmem:[#allocation8 + $0x510] sm:$0xf]
        %v1357 = vld [vmem:[#allocation8 + $0x514] sm:$0xf]
        %v1358 = vld [vmem:[#allocation8 + $0x518] sm:$0xf]
        %v1359 = vld [vmem:[#allocation8 + $0x51c] sm:$0xf]
        %v1360 = vld [vmem:[#allocation8 + $0x520] sm:$0xf]
        %v1361 = vld [vmem:[#allocation8 + $0x524] sm:$0xf]
        %v1362 = vld [vmem:[#allocation8 + $0x528] sm:$0xf]
        %v1363 = vld [vmem:[#allocation8 + $0x52c] sm:$0xf]
        %v1364 = vld [vmem:[#allocation8 + $0x530] sm:$0xf]
        %v1365 = vld [vmem:[#allocation8 + $0x534] sm:$0xf]
        %v1366 = vld [vmem:[#allocation8 + $0x538] sm:$0xf]
        %v1367 = vld [vmem:[#allocation8 + $0x53c] sm:$0xf]
        %v1368 = vld [vmem:[#allocation8 + $0x540] sm:$0xf]
        %v1369 = vld [vmem:[#allocation8 + $0x544] sm:$0xf]
        %v1370 = vld [vmem:[#allocation8 + $0x548] sm:$0xf]
        %v1371 = vld [vmem:[#allocation8 + $0x54c] sm:$0xf]
        %v1372 = vld [vmem:[#allocation8 + $0x550] sm:$0xf]
        %v1373 = vld [vmem:[#allocation8 + $0x554] sm:$0xf]
        %v1374 = vld [vmem:[#allocation8 + $0x558] sm:$0xf]
        %v1375 = vld [vmem:[#allocation8 + $0x55c] sm:$0xf]
        %v1376 = vld [vmem:[#allocation8 + $0x560] sm:$0xf]
        %v1377 = vld [vmem:[#allocation8 + $0x564] sm:$0xf]
        %v1378 = vld [vmem:[#allocation8 + $0x568] sm:$0xf]
        %v1379 = vld [vmem:[#allocation8 + $0x56c] sm:$0xf]
        %v1380 = vld [vmem:[#allocation8 + $0x570] sm:$0xf]
        %v1381 = vld [vmem:[#allocation8 + $0x574] sm:$0xf]
        %v1382 = vld [vmem:[#allocation8 + $0x578] sm:$0xf]
        %v1383 = vld [vmem:[#allocation8 + $0x57c] sm:$0xf]
        %v1384 = vld [vmem:[#allocation8 + $0x580] sm:$0xf]
        %v1385 = vld [vmem:[#allocation8 + $0x584] sm:$0xf]
        %v1386 = vld [vmem:[#allocation8 + $0x588] sm:$0xf]
        %v1387 = vld [vmem:[#allocation8 + $0x58c] sm:$0xf]
        %v1388 = vld [vmem:[#allocation8 + $0x590] sm:$0xf]
        %v1389 = vld [vmem:[#allocation8 + $0x594] sm:$0xf]
        %v1390 = vld [vmem:[#allocation8 + $0x598] sm:$0xf]
        %v1391 = vld [vmem:[#allocation8 + $0x59c] sm:$0xf]
        %v1392 = vld [vmem:[#allocation8 + $0x5a0] sm:$0xf]
        %v1393 = vld [vmem:[#allocation8 + $0x5a4] sm:$0xf]
        %v1394 = vld [vmem:[#allocation8 + $0x5a8] sm:$0xf]
        %v1395 = vld [vmem:[#allocation8 + $0x5ac] sm:$0xf]
        %v1396 = vld [vmem:[#allocation8 + $0x5b0] sm:$0xf]
        %v1397 = vld [vmem:[#allocation8 + $0x5b4] sm:$0xf]
        %v1398 = vld [vmem:[#allocation8 + $0x5b8] sm:$0xf]
        %v1399 = vld [vmem:[#allocation8 + $0x5bc] sm:$0xf]
        %v1400 = vld [vmem:[#allocation8 + $0x5c0] sm:$0xf]
        %v1401 = vld [vmem:[#allocation8 + $0x5c4] sm:$0xf]
        %v1402 = vld [vmem:[#allocation8 + $0x5c8] sm:$0xf]
        %v1403 = vld [vmem:[#allocation8 + $0x5cc] sm:$0xf]
        %v1404 = vld [vmem:[#allocation8 + $0x5d0] sm:$0xf]
        %v1405 = vld [vmem:[#allocation8 + $0x5d4] sm:$0xf]
        %v1406 = vld [vmem:[#allocation8 + $0x5d8] sm:$0xf]
        %v1407 = vld [vmem:[#allocation8 + $0x5dc] sm:$0xf]
        %v1408 = vld [vmem:[#allocation8 + $0x5e0] sm:$0xf]
        %v1409 = vld [vmem:[#allocation8 + $0x5e4] sm:$0xf]
        %v1410 = vld [vmem:[#allocation8 + $0x5e8] sm:$0xf]
        %v1411 = vld [vmem:[#allocation8 + $0x5ec] sm:$0xf]
        %v1412 = vld [vmem:[#allocation8 + $0x5f0] sm:$0xf]
        %v1413 = vld [vmem:[#allocation8 + $0x5f4] sm:$0xf]
        %v1414 = vld [vmem:[#allocation8 + $0x5f8] sm:$0xf]
        %v1415 = vld [vmem:[#allocation8 + $0x5fc] sm:$0xf]
        %v1416 = vld [vmem:[#allocation8 + $0x600] sm:$0xf]
        %v1417 = vld [vmem:[#allocation8 + $0x604] sm:$0xf]
        %v1418 = vld [vmem:[#allocation8 + $0x608] sm:$0xf]
        %v1419 = vld [vmem:[#allocation8 + $0x60c] sm:$0xf]
        %v1420 = vld [vmem:[#allocation8 + $0x610] sm:$0xf]
        %v1421 = vld [vmem:[#allocation8 + $0x614] sm:$0xf]
        %v1422 = vld [vmem:[#allocation8 + $0x618] sm:$0xf]
        %v1423 = vld [vmem:[#allocation8 + $0x61c] sm:$0xf]
        %v1424 = vld [vmem:[#allocation8 + $0x620] sm:$0xf]
        %v1425 = vld [vmem:[#allocation8 + $0x624] sm:$0xf]
        %v1426 = vld [vmem:[#allocation8 + $0x628] sm:$0xf]
        %v1427 = vld [vmem:[#allocation8 + $0x62c] sm:$0xf]
        %v1428 = vld [vmem:[#allocation8 + $0x630] sm:$0xf]
        %v1429 = vld [vmem:[#allocation8 + $0x634] sm:$0xf]
        %v1430 = vld [vmem:[#allocation8 + $0x638] sm:$0xf]
        %v1431 = vld [vmem:[#allocation8 + $0x63c] sm:$0xf]
        %v1432 = vld [vmem:[#allocation8 + $0x640] sm:$0xf]
        %v1433 = vld [vmem:[#allocation8 + $0x644] sm:$0xf]
        %v1434 = vld [vmem:[#allocation8 + $0x648] sm:$0xf]
        %v1435 = vld [vmem:[#allocation8 + $0x64c] sm:$0xf]
        %v1436 = vld [vmem:[#allocation8 + $0x650] sm:$0xf]
        %v1437 = vld [vmem:[#allocation8 + $0x654] sm:$0xf]
        %v1438 = vld [vmem:[#allocation8 + $0x658] sm:$0xf]
        %v1439 = vld [vmem:[#allocation8 + $0x65c] sm:$0xf]
        %v1440 = vld [vmem:[#allocation8 + $0x660] sm:$0xf]
        %v1441 = vld [vmem:[#allocation8 + $0x664] sm:$0xf]
        %v1442 = vld [vmem:[#allocation8 + $0x668] sm:$0xf]
        %v1443 = vld [vmem:[#allocation8 + $0x66c] sm:$0xf]
        %v1444 = vld [vmem:[#allocation8 + $0x670] sm:$0xf]
        %v1445 = vld [vmem:[#allocation8 + $0x674] sm:$0xf]
        %v1446 = vld [vmem:[#allocation8 + $0x678] sm:$0xf]
        %v1447 = vld [vmem:[#allocation8 + $0x67c] sm:$0xf]
        %v1448 = vld [vmem:[#allocation8 + $0x680] sm:$0xf]
        %v1449 = vld [vmem:[#allocation8 + $0x684] sm:$0xf]
        %v1450 = vld [vmem:[#allocation8 + $0x688] sm:$0xf]
        %v1451 = vld [vmem:[#allocation8 + $0x68c] sm:$0xf]
        %v1452 = vld [vmem:[#allocation8 + $0x690] sm:$0xf]
        %v1453 = vld [vmem:[#allocation8 + $0x694] sm:$0xf]
        %v1454 = vld [vmem:[#allocation8 + $0x698] sm:$0xf]
        %v1455 = vld [vmem:[#allocation8 + $0x69c] sm:$0xf]
        %v1456 = vld [vmem:[#allocation8 + $0x6a0] sm:$0xf]
        %v1457 = vld [vmem:[#allocation8 + $0x6a4] sm:$0xf]
        %v1458 = vld [vmem:[#allocation8 + $0x6a8] sm:$0xf]
        %v1459 = vld [vmem:[#allocation8 + $0x6ac] sm:$0xf]
        %v1460 = vld [vmem:[#allocation8 + $0x6b0] sm:$0xf]
        %v1461 = vld [vmem:[#allocation8 + $0x6b4] sm:$0xf]
        %v1462 = vld [vmem:[#allocation8 + $0x6b8] sm:$0xf]
        %v1463 = vld [vmem:[#allocation8 + $0x6bc] sm:$0xf]
        %v1896 = vunpack.c.l.b16 %v1032
        %v1897 = vunpack.c.l.b16 %v1033
        %v1898 = vunpack.c.l.b16 %v1034
        %v1899 = vunpack.c.l.b16 %v1035
        %v1900 = vunpack.c.l.b16 %v1036
        %v1901 = vunpack.c.l.b16 %v1037
        %v1902 = vunpack.c.l.b16 %v1038
        %v1903 = vunpack.c.l.b16 %v1039
        %v1904 = vunpack.c.l.b16 %v1040
        %v1905 = vunpack.c.l.b16 %v1041
        %v1906 = vunpack.c.l.b16 %v1042
        %v1907 = vunpack.c.l.b16 %v1043
        %v1908 = vunpack.c.l.b16 %v1044
        %v1909 = vunpack.c.l.b16 %v1045
        %v1910 = vunpack.c.l.b16 %v1046
        %v1911 = vunpack.c.l.b16 %v1047
        %v1912 = vunpack.c.l.b16 %v1048
        %v1913 = vunpack.c.l.b16 %v1049
        %v1914 = vunpack.c.l.b16 %v1050
        %v1915 = vunpack.c.l.b16 %v1051
        %v1916 = vunpack.c.l.b16 %v1052
        %v1917 = vunpack.c.l.b16 %v1053
        %v1918 = vunpack.c.l.b16 %v1054
        %v1919 = vunpack.c.l.b16 %v1055
        %v1920 = vunpack.c.l.b16 %v1056
        %v1921 = vunpack.c.l.b16 %v1057
        %v1922 = vunpack.c.l.b16 %v1058
        %v1923 = vunpack.c.l.b16 %v1059
        %v1924 = vunpack.c.l.b16 %v1060
        %v1925 = vunpack.c.l.b16 %v1061
        %v1926 = vunpack.c.l.b16 %v1062
        %v1927 = vunpack.c.l.b16 %v1063
        %v1928 = vunpack.c.l.b16 %v1064
        %v1929 = vunpack.c.l.b16 %v1065
        %v1930 = vunpack.c.l.b16 %v1066
        %v1931 = vunpack.c.l.b16 %v1067
        %v1932 = vunpack.c.l.b16 %v1068
        %v1933 = vunpack.c.l.b16 %v1069
        %v1934 = vunpack.c.l.b16 %v1070
        %v1935 = vunpack.c.l.b16 %v1071
        %v1936 = vunpack.c.l.b16 %v1072
        %v1937 = vunpack.c.l.b16 %v1073
        %v1938 = vunpack.c.l.b16 %v1074
        %v1939 = vunpack.c.l.b16 %v1075
        %v1940 = vunpack.c.l.b16 %v1076
        %v1941 = vunpack.c.l.b16 %v1077
        %v1942 = vunpack.c.l.b16 %v1078
        %v1943 = vunpack.c.l.b16 %v1079
        %v1944 = vunpack.c.l.b16 %v1080
        %v1945 = vunpack.c.l.b16 %v1081
        %v1946 = vunpack.c.l.b16 %v1082
        %v1947 = vunpack.c.l.b16 %v1083
        %v1948 = vunpack.c.l.b16 %v1084
        %v1949 = vunpack.c.l.b16 %v1085
        %v1950 = vunpack.c.l.b16 %v1086
        %v1951 = vunpack.c.l.b16 %v1087
        %v1952 = vunpack.c.l.b16 %v1088
        %v1953 = vunpack.c.l.b16 %v1089
        %v1954 = vunpack.c.l.b16 %v1090
        %v1955 = vunpack.c.l.b16 %v1091
        %v1956 = vunpack.c.l.b16 %v1092
        %v1957 = vunpack.c.l.b16 %v1093
        %v1958 = vunpack.c.l.b16 %v1094
        %v1959 = vunpack.c.l.b16 %v1095
        %v1960 = vunpack.c.l.b16 %v1096
        %v1961 = vunpack.c.l.b16 %v1097
        %v1962 = vunpack.c.l.b16 %v1098
        %v1963 = vunpack.c.l.b16 %v1099
        %v1964 = vunpack.c.l.b16 %v1100
        %v1965 = vunpack.c.l.b16 %v1101
        %v1966 = vunpack.c.l.b16 %v1102
        %v1967 = vunpack.c.l.b16 %v1103
        %v1968 = vunpack.c.l.b16 %v1104
        %v1969 = vunpack.c.l.b16 %v1105
        %v1970 = vunpack.c.l.b16 %v1106
        %v1971 = vunpack.c.l.b16 %v1107
        %v1972 = vunpack.c.l.b16 %v1108
        %v1973 = vunpack.c.l.b16 %v1109
        %v1974 = vunpack.c.l.b16 %v1110
        %v1975 = vunpack.c.l.b16 %v1111
        %v1976 = vunpack.c.l.b16 %v1112
        %v1977 = vunpack.c.l.b16 %v1113
        %v1978 = vunpack.c.l.b16 %v1114
        %v1979 = vunpack.c.l.b16 %v1115
        %v1980 = vunpack.c.l.b16 %v1116
        %v1981 = vunpack.c.l.b16 %v1117
        %v1982 = vunpack.c.l.b16 %v1118
        %v1983 = vunpack.c.l.b16 %v1119
        %v1984 = vunpack.c.l.b16 %v1120
        %v1985 = vunpack.c.l.b16 %v1121
        %v1986 = vunpack.c.l.b16 %v1122
        %v1987 = vunpack.c.l.b16 %v1123
        %v1988 = vunpack.c.l.b16 %v1124
        %v1989 = vunpack.c.l.b16 %v1125
        %v1990 = vunpack.c.l.b16 %v1126
        %v1991 = vunpack.c.l.b16 %v1127
        %v1992 = vunpack.c.l.b16 %v1128
        %v1993 = vunpack.c.l.b16 %v1129
        %v1994 = vunpack.c.l.b16 %v1130
        %v1995 = vunpack.c.l.b16 %v1131
        %v1996 = vunpack.c.l.b16 %v1132
        %v1997 = vunpack.c.l.b16 %v1133
        %v1998 = vunpack.c.l.b16 %v1134
        %v1999 = vunpack.c.l.b16 %v1135
        %v2000 = vunpack.c.l.b16 %v1136
        %v2001 = vunpack.c.l.b16 %v1137
        %v2002 = vunpack.c.l.b16 %v1138
        %v2003 = vunpack.c.l.b16 %v1139
        %v2004 = vunpack.c.l.b16 %v1140
        %v2005 = vunpack.c.l.b16 %v1141
        %v2006 = vunpack.c.l.b16 %v1142
        %v2007 = vunpack.c.l.b16 %v1143
        %v2008 = vunpack.c.l.b16 %v1144
        %v2009 = vunpack.c.l.b16 %v1145
        %v2010 = vunpack.c.l.b16 %v1146
        %v2011 = vunpack.c.l.b16 %v1147
        %v2012 = vunpack.c.l.b16 %v1148
        %v2013 = vunpack.c.l.b16 %v1149
        %v2014 = vunpack.c.l.b16 %v1150
        %v2015 = vunpack.c.l.b16 %v1151
        %v2016 = vunpack.c.l.b16 %v1152
        %v2017 = vunpack.c.l.b16 %v1153
        %v2018 = vunpack.c.l.b16 %v1154
        %v2019 = vunpack.c.l.b16 %v1155
        %v2020 = vunpack.c.l.b16 %v1156
        %v2021 = vunpack.c.l.b16 %v1157
        %v2022 = vunpack.c.l.b16 %v1158
        %v2023 = vunpack.c.l.b16 %v1159
        %v2024 = vunpack.c.l.b16 %v1160
        %v2025 = vunpack.c.l.b16 %v1161
        %v2026 = vunpack.c.l.b16 %v1162
        %v2027 = vunpack.c.l.b16 %v1163
        %v2028 = vunpack.c.l.b16 %v1164
        %v2029 = vunpack.c.l.b16 %v1165
        %v2030 = vunpack.c.l.b16 %v1166
        %v2031 = vunpack.c.l.b16 %v1167
        %v2032 = vunpack.c.l.b16 %v1168
        %v2033 = vunpack.c.l.b16 %v1169
        %v2034 = vunpack.c.l.b16 %v1170
        %v2035 = vunpack.c.l.b16 %v1171
        %v2036 = vunpack.c.l.b16 %v1172
        %v2037 = vunpack.c.l.b16 %v1173
        %v2038 = vunpack.c.l.b16 %v1174
        %v2039 = vunpack.c.l.b16 %v1175
        %v2040 = vunpack.c.l.b16 %v1176
        %v2041 = vunpack.c.l.b16 %v1177
        %v2042 = vunpack.c.l.b16 %v1178
        %v2043 = vunpack.c.l.b16 %v1179
        %v2044 = vunpack.c.l.b16 %v1180
        %v2045 = vunpack.c.l.b16 %v1181
        %v2046 = vunpack.c.l.b16 %v1182
        %v2047 = vunpack.c.l.b16 %v1183
        %v2048 = vunpack.c.l.b16 %v1184
        %v2049 = vunpack.c.l.b16 %v1185
        %v2050 = vunpack.c.l.b16 %v1186
        %v2051 = vunpack.c.l.b16 %v1187
        %v2052 = vunpack.c.l.b16 %v1188
        %v2053 = vunpack.c.l.b16 %v1189
        %v2054 = vunpack.c.l.b16 %v1190
        %v2055 = vunpack.c.l.b16 %v1191
        %v2056 = vunpack.c.l.b16 %v1192
        %v2057 = vunpack.c.l.b16 %v1193
        %v2058 = vunpack.c.l.b16 %v1194
        %v2059 = vunpack.c.l.b16 %v1195
        %v2060 = vunpack.c.l.b16 %v1196
        %v2061 = vunpack.c.l.b16 %v1197
        %v2062 = vunpack.c.l.b16 %v1198
        %v2063 = vunpack.c.l.b16 %v1199
        %v2064 = vunpack.c.l.b16 %v1200
        %v2065 = vunpack.c.l.b16 %v1201
        %v2066 = vunpack.c.l.b16 %v1202
        %v2067 = vunpack.c.l.b16 %v1203
        %v2068 = vunpack.c.l.b16 %v1204
        %v2069 = vunpack.c.l.b16 %v1205
        %v2070 = vunpack.c.l.b16 %v1206
        %v2071 = vunpack.c.l.b16 %v1207
        %v2072 = vunpack.c.l.b16 %v1208
        %v2073 = vunpack.c.l.b16 %v1209
        %v2074 = vunpack.c.l.b16 %v1210
        %v2075 = vunpack.c.l.b16 %v1211
        %v2076 = vunpack.c.l.b16 %v1212
        %v2077 = vunpack.c.l.b16 %v1213
        %v2078 = vunpack.c.l.b16 %v1214
        %v2079 = vunpack.c.l.b16 %v1215
        %v2080 = vunpack.c.l.b16 %v1216
        %v2081 = vunpack.c.l.b16 %v1217
        %v2082 = vunpack.c.l.b16 %v1218
        %v2083 = vunpack.c.l.b16 %v1219
        %v2084 = vunpack.c.l.b16 %v1220
        %v2085 = vunpack.c.l.b16 %v1221
        %v2086 = vunpack.c.l.b16 %v1222
        %v2087 = vunpack.c.l.b16 %v1223
        %v2088 = vunpack.c.l.b16 %v1224
        %v2089 = vunpack.c.l.b16 %v1225
        %v2090 = vunpack.c.l.b16 %v1226
        %v2091 = vunpack.c.l.b16 %v1227
        %v2092 = vunpack.c.l.b16 %v1228
        %v2093 = vunpack.c.l.b16 %v1229
        %v2094 = vunpack.c.l.b16 %v1230
        %v2095 = vunpack.c.l.b16 %v1231
        %v2096 = vunpack.c.l.b16 %v1232
        %v2097 = vunpack.c.l.b16 %v1233
        %v2098 = vunpack.c.l.b16 %v1234
        %v2099 = vunpack.c.l.b16 %v1235
        %v2100 = vunpack.c.l.b16 %v1236
        %v2101 = vunpack.c.l.b16 %v1237
        %v2102 = vunpack.c.l.b16 %v1238
        %v2103 = vunpack.c.l.b16 %v1239
        %v2104 = vunpack.c.l.b16 %v1240
        %v2105 = vunpack.c.l.b16 %v1241
        %v2106 = vunpack.c.l.b16 %v1242
        %v2107 = vunpack.c.l.b16 %v1243
        %v2108 = vunpack.c.l.b16 %v1244
        %v2109 = vunpack.c.l.b16 %v1245
        %v2110 = vunpack.c.l.b16 %v1246
        %v2111 = vunpack.c.l.b16 %v1247
        %v2112 = vunpack.c.l.b16 %v1248
        %v2113 = vunpack.c.l.b16 %v1249
        %v2114 = vunpack.c.l.b16 %v1250
        %v2115 = vunpack.c.l.b16 %v1251
        %v2116 = vunpack.c.l.b16 %v1252
        %v2117 = vunpack.c.l.b16 %v1253
        %v2118 = vunpack.c.l.b16 %v1254
        %v2119 = vunpack.c.l.b16 %v1255
        %v2120 = vunpack.c.l.b16 %v1256
        %v2121 = vunpack.c.l.b16 %v1257
        %v2122 = vunpack.c.l.b16 %v1258
        %v2123 = vunpack.c.l.b16 %v1259
        %v2124 = vunpack.c.l.b16 %v1260
        %v2125 = vunpack.c.l.b16 %v1261
        %v2126 = vunpack.c.l.b16 %v1262
        %v2127 = vunpack.c.l.b16 %v1263
        %v2128 = vunpack.c.l.b16 %v1264
        %v2129 = vunpack.c.l.b16 %v1265
        %v2130 = vunpack.c.l.b16 %v1266
        %v2131 = vunpack.c.l.b16 %v1267
        %v2132 = vunpack.c.l.b16 %v1268
        %v2133 = vunpack.c.l.b16 %v1269
        %v2134 = vunpack.c.l.b16 %v1270
        %v2135 = vunpack.c.l.b16 %v1271
        %v2136 = vunpack.c.l.b16 %v1272
        %v2137 = vunpack.c.l.b16 %v1273
        %v2138 = vunpack.c.l.b16 %v1274
        %v2139 = vunpack.c.l.b16 %v1275
        %v2140 = vunpack.c.l.b16 %v1276
        %v2141 = vunpack.c.l.b16 %v1277
        %v2142 = vunpack.c.l.b16 %v1278
        %v2143 = vunpack.c.l.b16 %v1279
        %v2144 = vunpack.c.l.b16 %v1280
        %v2145 = vunpack.c.l.b16 %v1281
        %v2146 = vunpack.c.l.b16 %v1282
        %v2147 = vunpack.c.l.b16 %v1283
        %v2148 = vunpack.c.l.b16 %v1284
        %v2149 = vunpack.c.l.b16 %v1285
        %v2150 = vunpack.c.l.b16 %v1286
        %v2151 = vunpack.c.l.b16 %v1287
        %v2152 = vunpack.c.l.b16 %v1288
        %v2153 = vunpack.c.l.b16 %v1289
        %v2154 = vunpack.c.l.b16 %v1290
        %v2155 = vunpack.c.l.b16 %v1291
        %v2156 = vunpack.c.l.b16 %v1292
        %v2157 = vunpack.c.l.b16 %v1293
        %v2158 = vunpack.c.l.b16 %v1294
        %v2159 = vunpack.c.l.b16 %v1295
        %v2160 = vunpack.c.l.b16 %v1296
        %v2161 = vunpack.c.l.b16 %v1297
        %v2162 = vunpack.c.l.b16 %v1298
        %v2163 = vunpack.c.l.b16 %v1299
        %v2164 = vunpack.c.l.b16 %v1300
        %v2165 = vunpack.c.l.b16 %v1301
        %v2166 = vunpack.c.l.b16 %v1302
        %v2167 = vunpack.c.l.b16 %v1303
        %v2168 = vunpack.c.l.b16 %v1304
        %v2169 = vunpack.c.l.b16 %v1305
        %v2170 = vunpack.c.l.b16 %v1306
        %v2171 = vunpack.c.l.b16 %v1307
        %v2172 = vunpack.c.l.b16 %v1308
        %v2173 = vunpack.c.l.b16 %v1309
        %v2174 = vunpack.c.l.b16 %v1310
        %v2175 = vunpack.c.l.b16 %v1311
        %v2176 = vunpack.c.l.b16 %v1312
        %v2177 = vunpack.c.l.b16 %v1313
        %v2178 = vunpack.c.l.b16 %v1314
        %v2179 = vunpack.c.l.b16 %v1315
        %v2180 = vunpack.c.l.b16 %v1316
        %v2181 = vunpack.c.l.b16 %v1317
        %v2182 = vunpack.c.l.b16 %v1318
        %v2183 = vunpack.c.l.b16 %v1319
        %v2184 = vunpack.c.l.b16 %v1320
        %v2185 = vunpack.c.l.b16 %v1321
        %v2186 = vunpack.c.l.b16 %v1322
        %v2187 = vunpack.c.l.b16 %v1323
        %v2188 = vunpack.c.l.b16 %v1324
        %v2189 = vunpack.c.l.b16 %v1325
        %v2190 = vunpack.c.l.b16 %v1326
        %v2191 = vunpack.c.l.b16 %v1327
        %v2192 = vunpack.c.l.b16 %v1328
        %v2193 = vunpack.c.l.b16 %v1329
        %v2194 = vunpack.c.l.b16 %v1330
        %v2195 = vunpack.c.l.b16 %v1331
        %v2196 = vunpack.c.l.b16 %v1332
        %v2197 = vunpack.c.l.b16 %v1333
        %v2198 = vunpack.c.l.b16 %v1334
        %v2199 = vunpack.c.l.b16 %v1335
        %v2200 = vunpack.c.l.b16 %v1336
        %v2201 = vunpack.c.l.b16 %v1337
        %v2202 = vunpack.c.l.b16 %v1338
        %v2203 = vunpack.c.l.b16 %v1339
        %v2204 = vunpack.c.l.b16 %v1340
        %v2205 = vunpack.c.l.b16 %v1341
        %v2206 = vunpack.c.l.b16 %v1342
        %v2207 = vunpack.c.l.b16 %v1343
        %v2208 = vunpack.c.l.b16 %v1344
        %v2209 = vunpack.c.l.b16 %v1345
        %v2210 = vunpack.c.l.b16 %v1346
        %v2211 = vunpack.c.l.b16 %v1347
        %v2212 = vunpack.c.l.b16 %v1348
        %v2213 = vunpack.c.l.b16 %v1349
        %v2214 = vunpack.c.l.b16 %v1350
        %v2215 = vunpack.c.l.b16 %v1351
        %v2216 = vunpack.c.l.b16 %v1352
        %v2217 = vunpack.c.l.b16 %v1353
        %v2218 = vunpack.c.l.b16 %v1354
        %v2219 = vunpack.c.l.b16 %v1355
        %v2220 = vunpack.c.l.b16 %v1356
        %v2221 = vunpack.c.l.b16 %v1357
        %v2222 = vunpack.c.l.b16 %v1358
        %v2223 = vunpack.c.l.b16 %v1359
        %v2224 = vunpack.c.l.b16 %v1360
        %v2225 = vunpack.c.l.b16 %v1361
        %v2226 = vunpack.c.l.b16 %v1362
        %v2227 = vunpack.c.l.b16 %v1363
        %v2228 = vunpack.c.l.b16 %v1364
        %v2229 = vunpack.c.l.b16 %v1365
        %v2230 = vunpack.c.l.b16 %v1366
        %v2231 = vunpack.c.l.b16 %v1367
        %v2232 = vunpack.c.l.b16 %v1368
        %v2233 = vunpack.c.l.b16 %v1369
        %v2234 = vunpack.c.l.b16 %v1370
        %v2235 = vunpack.c.l.b16 %v1371
        %v2236 = vunpack.c.l.b16 %v1372
        %v2237 = vunpack.c.l.b16 %v1373
        %v2238 = vunpack.c.l.b16 %v1374
        %v2239 = vunpack.c.l.b16 %v1375
        %v2240 = vunpack.c.l.b16 %v1376
        %v2241 = vunpack.c.l.b16 %v1377
        %v2242 = vunpack.c.l.b16 %v1378
        %v2243 = vunpack.c.l.b16 %v1379
        %v2244 = vunpack.c.l.b16 %v1380
        %v2245 = vunpack.c.l.b16 %v1381
        %v2246 = vunpack.c.l.b16 %v1382
        %v2247 = vunpack.c.l.b16 %v1383
        %v2248 = vunpack.c.l.b16 %v1384
        %v2249 = vunpack.c.l.b16 %v1385
        %v2250 = vunpack.c.l.b16 %v1386
        %v2251 = vunpack.c.l.b16 %v1387
        %v2252 = vunpack.c.l.b16 %v1388
        %v2253 = vunpack.c.l.b16 %v1389
        %v2254 = vunpack.c.l.b16 %v1390
        %v2255 = vunpack.c.l.b16 %v1391
        %v2256 = vunpack.c.l.b16 %v1392
        %v2257 = vunpack.c.l.b16 %v1393
        %v2258 = vunpack.c.l.b16 %v1394
        %v2259 = vunpack.c.l.b16 %v1395
        %v2260 = vunpack.c.l.b16 %v1396
        %v2261 = vunpack.c.l.b16 %v1397
        %v2262 = vunpack.c.l.b16 %v1398
        %v2263 = vunpack.c.l.b16 %v1399
        %v2264 = vunpack.c.l.b16 %v1400
        %v2265 = vunpack.c.l.b16 %v1401
        %v2266 = vunpack.c.l.b16 %v1402
        %v2267 = vunpack.c.l.b16 %v1403
        %v2268 = vunpack.c.l.b16 %v1404
        %v2269 = vunpack.c.l.b16 %v1405
        %v2270 = vunpack.c.l.b16 %v1406
        %v2271 = vunpack.c.l.b16 %v1407
        %v2272 = vunpack.c.l.b16 %v1408
        %v2273 = vunpack.c.l.b16 %v1409
        %v2274 = vunpack.c.l.b16 %v1410
        %v2275 = vunpack.c.l.b16 %v1411
        %v2276 = vunpack.c.l.b16 %v1412
        %v2277 = vunpack.c.l.b16 %v1413
        %v2278 = vunpack.c.l.b16 %v1414
        %v2279 = vunpack.c.l.b16 %v1415
        %v2280 = vunpack.c.l.b16 %v1416
        %v2281 = vunpack.c.l.b16 %v1417
        %v2282 = vunpack.c.l.b16 %v1418
        %v2283 = vunpack.c.l.b16 %v1419
        %v2284 = vunpack.c.l.b16 %v1420
        %v2285 = vunpack.c.l.b16 %v1421
        %v2286 = vunpack.c.l.b16 %v1422
        %v2287 = vunpack.c.l.b16 %v1423
        %v2288 = vunpack.c.l.b16 %v1424
        %v2289 = vunpack.c.l.b16 %v1425
        %v2290 = vunpack.c.l.b16 %v1426
        %v2291 = vunpack.c.l.b16 %v1427
        %v2292 = vunpack.c.l.b16 %v1428
        %v2293 = vunpack.c.l.b16 %v1429
        %v2294 = vunpack.c.l.b16 %v1430
        %v2295 = vunpack.c.l.b16 %v1431
        %v2296 = vunpack.c.l.b16 %v1432
        %v2297 = vunpack.c.l.b16 %v1433
        %v2298 = vunpack.c.l.b16 %v1434
        %v2299 = vunpack.c.l.b16 %v1435
        %v2300 = vunpack.c.l.b16 %v1436
        %v2301 = vunpack.c.l.b16 %v1437
        %v2302 = vunpack.c.l.b16 %v1438
        %v2303 = vunpack.c.l.b16 %v1439
        %v2304 = vunpack.c.l.b16 %v1440
        %v2305 = vunpack.c.l.b16 %v1441
        %v2306 = vunpack.c.l.b16 %v1442
        %v2307 = vunpack.c.l.b16 %v1443
        %v2308 = vunpack.c.l.b16 %v1444
        %v2309 = vunpack.c.l.b16 %v1445
        %v2310 = vunpack.c.l.b16 %v1446
        %v2311 = vunpack.c.l.b16 %v1447
        %v2312 = vunpack.c.l.b16 %v1448
        %v2313 = vunpack.c.l.b16 %v1449
        %v2314 = vunpack.c.l.b16 %v1450
        %v2315 = vunpack.c.l.b16 %v1451
        %v2316 = vunpack.c.l.b16 %v1452
        %v2317 = vunpack.c.l.b16 %v1453
        %v2318 = vunpack.c.l.b16 %v1454
        %v2319 = vunpack.c.l.b16 %v1455
        %v2320 = vunpack.c.l.b16 %v1456
        %v2321 = vunpack.c.l.b16 %v1457
        %v2322 = vunpack.c.l.b16 %v1458
        %v2323 = vunpack.c.l.b16 %v1459
        %v2324 = vunpack.c.l.b16 %v1460
        %v2325 = vunpack.c.l.b16 %v1461
        %v2326 = vunpack.c.l.b16 %v1462
        %v2327 = vunpack.c.l.b16 %v1463
        %v2328 = vpack.c.b16 %v1897, %v1896
        %v2329 = vpack.c.b16 %v1899, %v1898
        %v2330 = vpack.c.b16 %v1901, %v1900
        %v2331 = vpack.c.b16 %v1903, %v1902
        %v2332 = vpack.c.b16 %v1905, %v1904
        %v2333 = vpack.c.b16 %v1907, %v1906
        %v2334 = vpack.c.b16 %v1909, %v1908
        %v2335 = vpack.c.b16 %v1911, %v1910
        %v2336 = vpack.c.b16 %v1913, %v1912
        %v2337 = vpack.c.b16 %v1915, %v1914
        %v2338 = vpack.c.b16 %v1917, %v1916
        %v2339 = vpack.c.b16 %v1919, %v1918
        %v2340 = vpack.c.b16 %v1921, %v1920
        %v2341 = vpack.c.b16 %v1923, %v1922
        %v2342 = vpack.c.b16 %v1925, %v1924
        %v2343 = vpack.c.b16 %v1927, %v1926
        %v2344 = vpack.c.b16 %v1929, %v1928
        %v2345 = vpack.c.b16 %v1931, %v1930
        %v2346 = vpack.c.b16 %v1933, %v1932
        %v2347 = vpack.c.b16 %v1935, %v1934
        %v2348 = vpack.c.b16 %v1937, %v1936
        %v2349 = vpack.c.b16 %v1939, %v1938
        %v2350 = vpack.c.b16 %v1941, %v1940
        %v2351 = vpack.c.b16 %v1943, %v1942
        %v2352 = vpack.c.b16 %v1945, %v1944
        %v2353 = vpack.c.b16 %v1947, %v1946
        %v2354 = vpack.c.b16 %v1949, %v1948
        %v2355 = vpack.c.b16 %v1951, %v1950
        %v2356 = vpack.c.b16 %v1953, %v1952
        %v2357 = vpack.c.b16 %v1955, %v1954
        %v2358 = vpack.c.b16 %v1957, %v1956
        %v2359 = vpack.c.b16 %v1959, %v1958
        %v2360 = vpack.c.b16 %v1961, %v1960
        %v2361 = vpack.c.b16 %v1963, %v1962
        %v2362 = vpack.c.b16 %v1965, %v1964
        %v2363 = vpack.c.b16 %v1967, %v1966
        %v2364 = vpack.c.b16 %v1969, %v1968
        %v2365 = vpack.c.b16 %v1971, %v1970
        %v2366 = vpack.c.b16 %v1973, %v1972
        %v2367 = vpack.c.b16 %v1975, %v1974
        %v2368 = vpack.c.b16 %v1977, %v1976
        %v2369 = vpack.c.b16 %v1979, %v1978
        %v2370 = vpack.c.b16 %v1981, %v1980
        %v2371 = vpack.c.b16 %v1983, %v1982
        %v2372 = vpack.c.b16 %v1985, %v1984
        %v2373 = vpack.c.b16 %v1987, %v1986
        %v2374 = vpack.c.b16 %v1989, %v1988
        %v2375 = vpack.c.b16 %v1991, %v1990
        %v2376 = vpack.c.b16 %v1993, %v1992
        %v2377 = vpack.c.b16 %v1995, %v1994
        %v2378 = vpack.c.b16 %v1997, %v1996
        %v2379 = vpack.c.b16 %v1999, %v1998
        %v2380 = vpack.c.b16 %v2001, %v2000
        %v2381 = vpack.c.b16 %v2003, %v2002
        %v2382 = vpack.c.b16 %v2005, %v2004
        %v2383 = vpack.c.b16 %v2007, %v2006
        %v2384 = vpack.c.b16 %v2009, %v2008
        %v2385 = vpack.c.b16 %v2011, %v2010
        %v2386 = vpack.c.b16 %v2013, %v2012
        %v2387 = vpack.c.b16 %v2015, %v2014
        %v2388 = vpack.c.b16 %v2017, %v2016
        %v2389 = vpack.c.b16 %v2019, %v2018
        %v2390 = vpack.c.b16 %v2021, %v2020
        %v2391 = vpack.c.b16 %v2023, %v2022
        %v2392 = vpack.c.b16 %v2025, %v2024
        %v2393 = vpack.c.b16 %v2027, %v2026
        %v2394 = vpack.c.b16 %v2029, %v2028
        %v2395 = vpack.c.b16 %v2031, %v2030
        %v2396 = vpack.c.b16 %v2033, %v2032
        %v2397 = vpack.c.b16 %v2035, %v2034
        %v2398 = vpack.c.b16 %v2037, %v2036
        %v2399 = vpack.c.b16 %v2039, %v2038
        %v2400 = vpack.c.b16 %v2041, %v2040
        %v2401 = vpack.c.b16 %v2043, %v2042
        %v2402 = vpack.c.b16 %v2045, %v2044
        %v2403 = vpack.c.b16 %v2047, %v2046
        %v2404 = vpack.c.b16 %v2049, %v2048
        %v2405 = vpack.c.b16 %v2051, %v2050
        %v2406 = vpack.c.b16 %v2053, %v2052
        %v2407 = vpack.c.b16 %v2055, %v2054
        %v2408 = vpack.c.b16 %v2057, %v2056
        %v2409 = vpack.c.b16 %v2059, %v2058
        %v2410 = vpack.c.b16 %v2061, %v2060
        %v2411 = vpack.c.b16 %v2063, %v2062
        %v2412 = vpack.c.b16 %v2065, %v2064
        %v2413 = vpack.c.b16 %v2067, %v2066
        %v2414 = vpack.c.b16 %v2069, %v2068
        %v2415 = vpack.c.b16 %v2071, %v2070
        %v2416 = vpack.c.b16 %v2073, %v2072
        %v2417 = vpack.c.b16 %v2075, %v2074
        %v2418 = vpack.c.b16 %v2077, %v2076
        %v2419 = vpack.c.b16 %v2079, %v2078
        %v2420 = vpack.c.b16 %v2081, %v2080
        %v2421 = vpack.c.b16 %v2083, %v2082
        %v2422 = vpack.c.b16 %v2085, %v2084
        %v2423 = vpack.c.b16 %v2087, %v2086
        %v2424 = vpack.c.b16 %v2089, %v2088
        %v2425 = vpack.c.b16 %v2091, %v2090
        %v2426 = vpack.c.b16 %v2093, %v2092
        %v2427 = vpack.c.b16 %v2095, %v2094
        %v2428 = vpack.c.b16 %v2097, %v2096
        %v2429 = vpack.c.b16 %v2099, %v2098
        %v2430 = vpack.c.b16 %v2101, %v2100
        %v2431 = vpack.c.b16 %v2103, %v2102
        %v2432 = vpack.c.b16 %v2105, %v2104
        %v2433 = vpack.c.b16 %v2107, %v2106
        %v2434 = vpack.c.b16 %v2109, %v2108
        %v2435 = vpack.c.b16 %v2111, %v2110
        %v2436 = vpack.c.b16 %v2113, %v2112
        %v2437 = vpack.c.b16 %v2115, %v2114
        %v2438 = vpack.c.b16 %v2117, %v2116
        %v2439 = vpack.c.b16 %v2119, %v2118
        %v2440 = vpack.c.b16 %v2121, %v2120
        %v2441 = vpack.c.b16 %v2123, %v2122
        %v2442 = vpack.c.b16 %v2125, %v2124
        %v2443 = vpack.c.b16 %v2127, %v2126
        %v2444 = vpack.c.b16 %v2129, %v2128
        %v2445 = vpack.c.b16 %v2131, %v2130
        %v2446 = vpack.c.b16 %v2133, %v2132
        %v2447 = vpack.c.b16 %v2135, %v2134
        %v2448 = vpack.c.b16 %v2137, %v2136
        %v2449 = vpack.c.b16 %v2139, %v2138
        %v2450 = vpack.c.b16 %v2141, %v2140
        %v2451 = vpack.c.b16 %v2143, %v2142
        %v2452 = vpack.c.b16 %v2145, %v2144
        %v2453 = vpack.c.b16 %v2147, %v2146
        %v2454 = vpack.c.b16 %v2149, %v2148
        %v2455 = vpack.c.b16 %v2151, %v2150
        %v2456 = vpack.c.b16 %v2153, %v2152
        %v2457 = vpack.c.b16 %v2155, %v2154
        %v2458 = vpack.c.b16 %v2157, %v2156
        %v2459 = vpack.c.b16 %v2159, %v2158
        %v2460 = vpack.c.b16 %v2161, %v2160
        %v2461 = vpack.c.b16 %v2163, %v2162
        %v2462 = vpack.c.b16 %v2165, %v2164
        %v2463 = vpack.c.b16 %v2167, %v2166
        %v2464 = vpack.c.b16 %v2169, %v2168
        %v2465 = vpack.c.b16 %v2171, %v2170
        %v2466 = vpack.c.b16 %v2173, %v2172
        %v2467 = vpack.c.b16 %v2175, %v2174
        %v2468 = vpack.c.b16 %v2177, %v2176
        %v2469 = vpack.c.b16 %v2179, %v2178
        %v2470 = vpack.c.b16 %v2181, %v2180
        %v2471 = vpack.c.b16 %v2183, %v2182
        %v2472 = vpack.c.b16 %v2185, %v2184
        %v2473 = vpack.c.b16 %v2187, %v2186
        %v2474 = vpack.c.b16 %v2189, %v2188
        %v2475 = vpack.c.b16 %v2191, %v2190
        %v2476 = vpack.c.b16 %v2193, %v2192
        %v2477 = vpack.c.b16 %v2195, %v2194
        %v2478 = vpack.c.b16 %v2197, %v2196
        %v2479 = vpack.c.b16 %v2199, %v2198
        %v2480 = vpack.c.b16 %v2201, %v2200
        %v2481 = vpack.c.b16 %v2203, %v2202
        %v2482 = vpack.c.b16 %v2205, %v2204
        %v2483 = vpack.c.b16 %v2207, %v2206
        %v2484 = vpack.c.b16 %v2209, %v2208
        %v2485 = vpack.c.b16 %v2211, %v2210
        %v2486 = vpack.c.b16 %v2213, %v2212
        %v2487 = vpack.c.b16 %v2215, %v2214
        %v2488 = vpack.c.b16 %v2217, %v2216
        %v2489 = vpack.c.b16 %v2219, %v2218
        %v2490 = vpack.c.b16 %v2221, %v2220
        %v2491 = vpack.c.b16 %v2223, %v2222
        %v2492 = vpack.c.b16 %v2225, %v2224
        %v2493 = vpack.c.b16 %v2227, %v2226
        %v2494 = vpack.c.b16 %v2229, %v2228
        %v2495 = vpack.c.b16 %v2231, %v2230
        %v2496 = vpack.c.b16 %v2233, %v2232
        %v2497 = vpack.c.b16 %v2235, %v2234
        %v2498 = vpack.c.b16 %v2237, %v2236
        %v2499 = vpack.c.b16 %v2239, %v2238
        %v2500 = vpack.c.b16 %v2241, %v2240
        %v2501 = vpack.c.b16 %v2243, %v2242
        %v2502 = vpack.c.b16 %v2245, %v2244
        %v2503 = vpack.c.b16 %v2247, %v2246
        %v2504 = vpack.c.b16 %v2249, %v2248
        %v2505 = vpack.c.b16 %v2251, %v2250
        %v2506 = vpack.c.b16 %v2253, %v2252
        %v2507 = vpack.c.b16 %v2255, %v2254
        %v2508 = vpack.c.b16 %v2257, %v2256
        %v2509 = vpack.c.b16 %v2259, %v2258
        %v2510 = vpack.c.b16 %v2261, %v2260
        %v2511 = vpack.c.b16 %v2263, %v2262
        %v2512 = vpack.c.b16 %v2265, %v2264
        %v2513 = vpack.c.b16 %v2267, %v2266
        %v2514 = vpack.c.b16 %v2269, %v2268
        %v2515 = vpack.c.b16 %v2271, %v2270
        %v2516 = vpack.c.b16 %v2273, %v2272
        %v2517 = vpack.c.b16 %v2275, %v2274
        %v2518 = vpack.c.b16 %v2277, %v2276
        %v2519 = vpack.c.b16 %v2279, %v2278
        %v2520 = vpack.c.b16 %v2281, %v2280
        %v2521 = vpack.c.b16 %v2283, %v2282
        %v2522 = vpack.c.b16 %v2285, %v2284
        %v2523 = vpack.c.b16 %v2287, %v2286
        %v2524 = vpack.c.b16 %v2289, %v2288
        %v2525 = vpack.c.b16 %v2291, %v2290
        %v2526 = vpack.c.b16 %v2293, %v2292
        %v2527 = vpack.c.b16 %v2295, %v2294
        %v2528 = vpack.c.b16 %v2297, %v2296
        %v2529 = vpack.c.b16 %v2299, %v2298
        %v2530 = vpack.c.b16 %v2301, %v2300
        %v2531 = vpack.c.b16 %v2303, %v2302
        %v2532 = vpack.c.b16 %v2305, %v2304
        %v2533 = vpack.c.b16 %v2307, %v2306
        %v2534 = vpack.c.b16 %v2309, %v2308
        %v2535 = vpack.c.b16 %v2311, %v2310
        %v2536 = vpack.c.b16 %v2313, %v2312
        %v2537 = vpack.c.b16 %v2315, %v2314
        %v2538 = vpack.c.b16 %v2317, %v2316
        %v2539 = vpack.c.b16 %v2319, %v2318
        %v2540 = vpack.c.b16 %v2321, %v2320
        %v2541 = vpack.c.b16 %v2323, %v2322
        %v2542 = vpack.c.b16 %v2325, %v2324
        %v2543 = vpack.c.b16 %v2327, %v2326
        %2760 = vmatprep.subr.bf16.mxu0 0
        %2761 = vmatpush1.bf16.msra.mxu0 %v2328
        %2762 = vmatprep.subr.bf16.mxu0 0
        %2763 = vmatpush1.bf16.msra.mxu0 %v2329
        %2764 = vmatprep.subr.bf16.mxu0 0
        %2765 = vmatpush1.bf16.msra.mxu0 %v2330
        %2766 = vmatprep.subr.bf16.mxu0 0
        %2767 = vmatpush1.bf16.msra.mxu0 %v2331
        %2768 = vmatprep.subr.bf16.mxu0 0
        %2769 = vmatpush1.bf16.msra.mxu0 %v2332
        %2770 = vmatprep.subr.bf16.mxu0 0
        %2771 = vmatpush1.bf16.msra.mxu0 %v2333
        %2772 = vmatprep.subr.bf16.mxu0 0
        %2773 = vmatpush1.bf16.msra.mxu0 %v2334
        %2774 = vmatprep.subr.bf16.mxu0 0
        %2775 = vmatpush1.bf16.msra.mxu0 %v2335
        %2776 = vmatprep.subr.bf16.mxu0 0
        %2777 = vmatpush1.bf16.msra.mxu0 %v2336
        %2778 = vmatprep.subr.bf16.mxu0 0
        %2779 = vmatpush1.bf16.msra.mxu0 %v2337
        %2780 = vmatprep.subr.bf16.mxu0 0
        %2781 = vmatpush1.bf16.msra.mxu0 %v2338
        %2782 = vmatprep.subr.bf16.mxu0 0
        %2783 = vmatpush1.bf16.msra.mxu0 %v2339
        %2784 = vmatprep.subr.bf16.mxu0 0
        %2785 = vmatpush1.bf16.msra.mxu0 %v2340
        %2786 = vmatprep.subr.bf16.mxu0 0
        %2787 = vmatpush1.bf16.msra.mxu0 %v2341
        %2788 = vmatprep.subr.bf16.mxu0 0
        %2789 = vmatpush1.bf16.msra.mxu0 %v2342
        %2790 = vmatprep.subr.bf16.mxu0 0
        %2791 = vmatpush1.bf16.msra.mxu0 %v2343
        %2792 = vmatprep.mubr.bf16.mxu0 %v952
        %2793 = vmatmul.mubr.bf16.gmra.mrb[0].mxu0 %v951
        %v2794 = vpop.f32.mrb[0].mxu0
        %v2795 = vadd.f32 0.0, %v2794
        %v2796 = vpop.f32.mrb[0].mxu0
        %v2797 = vpop.f32.mrb[0].mxu0
        %v2798 = vadd.f32 0.0, %v2797
        %v2799 = vpop.f32.mrb[0].mxu0
        %2800 = vmatprep.mubr.bf16.mxu0 %v958
        %2801 = vmatmul.mubr.bf16.gmra.mrb[0].mxu0 %v957
        %v2802 = vpop.f32.mrb[0].mxu0
        %v2803 = vadd.f32 0.0, %v2802
        %v2804 = vpop.f32.mrb[0].mxu0
        %v2805 = vpop.f32.mrb[0].mxu0
        %v2806 = vadd.f32 0.0, %v2805
        %v2807 = vpop.f32.mrb[0].mxu0
        %2808 = vmatprep.mubr.bf16.mxu0 %v982
        %2809 = vmatmul.mubr.bf16.gmra.mrb[0].mxu0 %v981
        %v2810 = vpop.f32.mrb[0].mxu0
        %v2811 = vadd.f32 0.0, %v2810
        %v2812 = vpop.f32.mrb[0].mxu0
        %v2813 = vpop.f32.mrb[0].mxu0
        %v2814 = vadd.f32 0.0, %v2813
        %v2815 = vpop.f32.mrb[0].mxu0
        %2816 = vmatprep.mubr.bf16.mxu0 %v1000
        %2817 = vmatmul.mubr.bf16.gmra.mrb[0].mxu0 %v999
        %v2818 = vpop.f32.mrb[0].mxu0
        %v2819 = vadd.f32 0.0, %v2818
        %v2820 = vpop.f32.mrb[0].mxu0
        %v2821 = vpop.f32.mrb[0].mxu0
        %v2822 = vadd.f32 0.0, %v2821
        %v2823 = vpop.f32.mrb[0].mxu0
        %2824 = vdwg.mxu0
        %2825 = vmatprep.subr.bf16.mxu0 0
        %2826 = vmatpush1.bf16.msra.mxu0 %v2344
        %2827 = vmatprep.subr.bf16.mxu0 0
        %2828 = vmatpush1.bf16.msra.mxu0 %v2345
        %2829 = vmatprep.subr.bf16.mxu0 0
        %2830 = vmatpush1.bf16.msra.mxu0 %v2346
        %2831 = vmatprep.subr.bf16.mxu0 0
        %2832 = vmatpush1.bf16.msra.mxu0 %v2347
        %2833 = vmatprep.subr.bf16.mxu0 0
        %2834 = vmatpush1.bf16.msra.mxu0 %v2348
        %2835 = vmatprep.subr.bf16.mxu0 0
        %2836 = vmatpush1.bf16.msra.mxu0 %v2349
        %2837 = vmatprep.subr.bf16.mxu0 0
        %2838 = vmatpush1.bf16.msra.mxu0 %v2350
        %2839 = vmatprep.subr.bf16.mxu0 0
        %2840 = vmatpush1.bf16.msra.mxu0 %v2351
        %2841 = vmatprep.subr.bf16.mxu0 0
        %2842 = vmatpush1.bf16.msra.mxu0 %v2352
        %2843 = vmatprep.subr.bf16.mxu0 0
        %2844 = vmatpush1.bf16.msra.mxu0 %v2353
        %2845 = vmatprep.subr.bf16.mxu0 0
        %2846 = vmatpush1.bf16.msra.mxu0 %v2354
        %2847 = vmatprep.subr.bf16.mxu0 0
        %2848 = vmatpush1.bf16.msra.mxu0 %v2355
        %2849 = vmatprep.subr.bf16.mxu0 0
        %2850 = vmatpush1.bf16.msra.mxu0 %v2356
        %2851 = vmatprep.subr.bf16.mxu0 0
        %2852 = vmatpush1.bf16.msra.mxu0 %v2357
        %2853 = vmatprep.subr.bf16.mxu0 0
        %2854 = vmatpush1.bf16.msra.mxu0 %v2358
        %2855 = vmatprep.subr.bf16.mxu0 0
        %2856 = vmatpush1.bf16.msra.mxu0 %v2359
        %2857 = vmatprep.mubr.bf16.mxu0 %v954
        %2858 = vmatmul.mubr.bf16.gmra.mrb[0].mxu0 %v953
        %v2859 = vpop.f32.mrb[0].mxu0
        %v2860 = vadd.f32 %v2795, %v2859
        %v2861 = vpop.f32.mrb[0].mxu0
        %v2862 = vpop.f32.mrb[0].mxu0
        %v2863 = vadd.f32 %v2798, %v2862
        %v2864 = vpop.f32.mrb[0].mxu0
        %2865 = vmatprep.mubr.bf16.mxu0 %v978
        %2866 = vmatmul.mubr.bf16.gmra.mrb[0].mxu0 %v959
        %v2867 = vpop.f32.mrb[0].mxu0
        %v2868 = vadd.f32 %v2803, %v2867
        %v2869 = vpop.f32.mrb[0].mxu0
        %v2870 = vpop.f32.mrb[0].mxu0
        %v2871 = vadd.f32 %v2806, %v2870
        %v2872 = vpop.f32.mrb[0].mxu0
        %2873 = vmatprep.mubr.bf16.mxu0 %v996
        %2874 = vmatmul.mubr.bf16.gmra.mrb[0].mxu0 %v983
        %v2875 = vpop.f32.mrb[0].mxu0
        %v2876 = vadd.f32 %v2811, %v2875
        %v2877 = vpop.f32.mrb[0].mxu0
        %v2878 = vpop.f32.mrb[0].mxu0
        %v2879 = vadd.f32 %v2814, %v2878
        %v2880 = vpop.f32.mrb[0].mxu0
        %2881 = vmatprep.mubr.bf16.mxu0 %v1014
        %2882 = vmatmul.mubr.bf16.gmra.mrb[0].mxu0 %v1001
        %v2883 = vpop.f32.mrb[0].mxu0
        %v2884 = vadd.f32 %v2819, %v2883
        %v2885 = vpop.f32.mrb[0].mxu0
        %v2886 = vpop.f32.mrb[0].mxu0
        %v2887 = vadd.f32 %v2822, %v2886
        %v2888 = vpop.f32.mrb[0].mxu0
        %2889 = vdwg.mxu0
        %2890 = vmatprep.subr.bf16.mxu0 0
        %2891 = vmatpush1.bf16.msra.mxu0 %v2360
        %2892 = vmatprep.subr.bf16.mxu0 0
        %2893 = vmatpush1.bf16.msra.mxu0 %v2361
        %2894 = vmatprep.subr.bf16.mxu0 0
        %2895 = vmatpush1.bf16.msra.mxu0 %v2362
        %2896 = vmatprep.subr.bf16.mxu0 0
        %2897 = vmatpush1.bf16.msra.mxu0 %v2363
        %2898 = vmatprep.subr.bf16.mxu0 0
        %2899 = vmatpush1.bf16.msra.mxu0 %v2364
        %2900 = vmatprep.subr.bf16.mxu0 0
        %2901 = vmatpush1.bf16.msra.mxu0 %v2365
        %2902 = vmatprep.subr.bf16.mxu0 0
        %2903 = vmatpush1.bf16.msra.mxu0 %v2366
        %2904 = vmatprep.subr.bf16.mxu0 0
        %2905 = vmatpush1.bf16.msra.mxu0 %v2367
        %2906 = vmatprep.subr.bf16.mxu0 0
        %2907 = vmatpush1.bf16.msra.mxu0 %v2368
        %2908 = vmatprep.subr.bf16.mxu0 0
        %2909 = vmatpush1.bf16.msra.mxu0 %v2369
        %2910 = vmatprep.subr.bf16.mxu0 0
        %2911 = vmatpush1.bf16.msra.mxu0 %v2370
        %2912 = vmatprep.subr.bf16.mxu0 0
        %2913 = vmatpush1.bf16.msra.mxu0 %v2371
        %2914 = vmatprep.subr.bf16.mxu0 0
        %2915 = vmatpush1.bf16.msra.mxu0 %v2372
        %2916 = vmatprep.subr.bf16.mxu0 0
        %2917 = vmatpush1.bf16.msra.mxu0 %v2373
        %2918 = vmatprep.subr.bf16.mxu0 0
        %2919 = vmatpush1.bf16.msra.mxu0 %v2374
        %2920 = vmatprep.subr.bf16.mxu0 0
        %2921 = vmatpush1.bf16.msra.mxu0 %v2375
        %2922 = vmatprep.mubr.bf16.mxu0 %v956
        %2923 = vmatmul.mubr.bf16.gmra.mrb[0].mxu0 %v955
        %v2924 = vpop.f32.mrb[0].mxu0
        %v2925 = vadd.f32 %v2860, %v2924
        %v2926 = vpop.f32.mrb[0].mxu0
        %v2927 = vpop.f32.mrb[0].mxu0
        %v2928 = vadd.f32 %v2863, %v2927
        %v2929 = vpop.f32.mrb[0].mxu0
        %2930 = vmatprep.mubr.bf16.mxu0 %v980
        %2931 = vmatmul.mubr.bf16.gmra.mrb[0].mxu0 %v979
        %v2932 = vpop.f32.mrb[0].mxu0
        %v2933 = vadd.f32 %v2868, %v2932
        %v2934 = vpop.f32.mrb[0].mxu0
        %v2935 = vpop.f32.mrb[0].mxu0
        %v2936 = vadd.f32 %v2871, %v2935
        %v2937 = vpop.f32.mrb[0].mxu0
        %2938 = vmatprep.mubr.bf16.mxu0 %v998
        %2939 = vmatmul.mubr.bf16.gmra.mrb[0].mxu0 %v997
        %v2940 = vpop.f32.mrb[0].mxu0
        %v2941 = vadd.f32 %v2876, %v2940
        %v2942 = vpop.f32.mrb[0].mxu0
        %v2943 = vpop.f32.mrb[0].mxu0
        %v2944 = vadd.f32 %v2879, %v2943
        %v2945 = vpop.f32.mrb[0].mxu0
        %2946 = vmatprep.mubr.bf16.mxu0 %v1016
        %2947 = vmatmul.mubr.bf16.gmra.mrb[0].mxu0 %v1015
        %v2948 = vpop.f32.mrb[0].mxu0
        %v2949 = vadd.f32 %v2884, %v2948
        %v2950 = vpop.f32.mrb[0].mxu0
        %v2951 = vpop.f32.mrb[0].mxu0
        %v2952 = vadd.f32 %v2887, %v2951
        %v2953 = vpop.f32.mrb[0].mxu0
        %2954 = vdwg.mxu0
        %2955 = vmatprep.subr.bf16.mxu0 0
        %2956 = vmatpush1.bf16.msra.mxu0 %v2376
        %2957 = vmatprep.subr.bf16.mxu0 0
        %2958 = vmatpush1.bf16.msra.mxu0 %v2377
        %2959 = vmatprep.subr.bf16.mxu0 0
        %2960 = vmatpush1.bf16.msra.mxu0 %v2378
        %2961 = vmatprep.subr.bf16.mxu0 0
        %2962 = vmatpush1.bf16.msra.mxu0 %v2379
        %2963 = vmatprep.subr.bf16.mxu0 0
        %2964 = vmatpush1.bf16.msra.mxu0 %v2380
        %2965 = vmatprep.subr.bf16.mxu0 0
        %2966 = vmatpush1.bf16.msra.mxu0 %v2381
        %2967 = vmatprep.subr.bf16.mxu0 0
        %2968 = vmatpush1.bf16.msra.mxu0 %v2382
        %2969 = vmatprep.subr.bf16.mxu0 0
        %2970 = vmatpush1.bf16.msra.mxu0 %v2383
        %2971 = vmatprep.subr.bf16.mxu0 0
        %2972 = vmatpush1.bf16.msra.mxu0 %v2384
        %2973 = vmatprep.subr.bf16.mxu0 0
        %2974 = vmatpush1.bf16.msra.mxu0 %v2385
        %2975 = vmatprep.subr.bf16.mxu0 0
        %2976 = vmatpush1.bf16.msra.mxu0 %v2386
        %2977 = vmatprep.subr.bf16.mxu0 0
        %2978 = vmatpush1.bf16.msra.mxu0 %v2387
        %2979 = vmatprep.subr.bf16.mxu0 0
        %2980 = vmatpush1.bf16.msra.mxu0 %v2388
        %2981 = vmatprep.subr.bf16.mxu0 0
        %2982 = vmatpush1.bf16.msra.mxu0 %v2389
        %2983 = vmatprep.subr.bf16.mxu0 0
        %2984 = vmatpush1.bf16.msra.mxu0 %v2390
        %2985 = vmatprep.subr.bf16.mxu0 0
        %2986 = vmatpush1.bf16.msra.mxu0 %v2391
        %2987 = vmatprep.mubr.bf16.mxu0 %v958
        %2988 = vmatmul.mubr.bf16.gmra.mrb[0].mxu0 %v957
        %v2989 = vpop.f32.mrb[0].mxu0
        %v2990 = vadd.f32 %v2925, %v2989
        %v2991 = vpop.f32.mrb[0].mxu0
        %v2992 = vpop.f32.mrb[0].mxu0
        %v2993 = vadd.f32 %v2928, %v2992
        %v2994 = vpop.f32.mrb[0].mxu0
        %2995 = vmatprep.mubr.bf16.mxu0 %v982
        %2996 = vmatmul.mubr.bf16.gmra.mrb[0].mxu0 %v981
        %v2997 = vpop.f32.mrb[0].mxu0
        %v2998 = vadd.f32 %v2933, %v2997
        %v2999 = vpop.f32.mrb[0].mxu0
        %v3000 = vpop.f32.mrb[0].mxu0
        %v3001 = vadd.f32 %v2936, %v3000
        %v3002 = vpop.f32.mrb[0].mxu0
        %3003 = vmatprep.mubr.bf16.mxu0 %v1000
        %3004 = vmatmul.mubr.bf16.gmra.mrb[0].mxu0 %v999
        %v3005 = vpop.f32.mrb[0].mxu0
        %v3006 = vadd.f32 %v2941, %v3005
        %v3007 = vpop.f32.mrb[0].mxu0
        %v3008 = vpop.f32.mrb[0].mxu0
        %v3009 = vadd.f32 %v2944, %v3008
        %v3010 = vpop.f32.mrb[0].mxu0
        %3011 = vmatprep.mubr.bf16.mxu0 %v1018
        %3012 = vmatmul.mubr.bf16.gmra.mrb[0].mxu0 %v1017
        %v3013 = vpop.f32.mrb[0].mxu0
        %v3014 = vadd.f32 %v2949, %v3013
        %v3015 = vpop.f32.mrb[0].mxu0
        %v3016 = vpop.f32.mrb[0].mxu0
        %v3017 = vadd.f32 %v2952, %v3016
        %v3018 = vpop.f32.mrb[0].mxu0
        %3019 = vdwg.mxu0
        %3020 = vmatprep.subr.bf16.mxu0 0
        %3021 = vmatpush1.bf16.msra.mxu0 %v2392
        %3022 = vmatprep.subr.bf16.mxu0 0
        %3023 = vmatpush1.bf16.msra.mxu0 %v2393
        %3024 = vmatprep.subr.bf16.mxu0 0
        %3025 = vmatpush1.bf16.msra.mxu0 %v2394
        %3026 = vmatprep.subr.bf16.mxu0 0
        %3027 = vmatpush1.bf16.msra.mxu0 %v2395
        %3028 = vmatprep.subr.bf16.mxu0 0
        %3029 = vmatpush1.bf16.msra.mxu0 %v2396
        %3030 = vmatprep.subr.bf16.mxu0 0
        %3031 = vmatpush1.bf16.msra.mxu0 %v2397
        %3032 = vmatprep.subr.bf16.mxu0 0
        %3033 = vmatpush1.bf16.msra.mxu0 %v2398
        %3034 = vmatprep.subr.bf16.mxu0 0
        %3035 = vmatpush1.bf16.msra.mxu0 %v2399
        %3036 = vmatprep.subr.bf16.mxu0 0
        %3037 = vmatpush1.bf16.msra.mxu0 %v2400
        %3038 = vmatprep.subr.bf16.mxu0 0
        %3039 = vmatpush1.bf16.msra.mxu0 %v2401
        %3040 = vmatprep.subr.bf16.mxu0 0
        %3041 = vmatpush1.bf16.msra.mxu0 %v2402
        %3042 = vmatprep.subr.bf16.mxu0 0
        %3043 = vmatpush1.bf16.msra.mxu0 %v2403
        %3044 = vmatprep.subr.bf16.mxu0 0
        %3045 = vmatpush1.bf16.msra.mxu0 %v2404
        %3046 = vmatprep.subr.bf16.mxu0 0
        %3047 = vmatpush1.bf16.msra.mxu0 %v2405
        %3048 = vmatprep.subr.bf16.mxu0 0
        %3049 = vmatpush1.bf16.msra.mxu0 %v2406
        %3050 = vmatprep.subr.bf16.mxu0 0
        %3051 = vmatpush1.bf16.msra.mxu0 %v2407
        %3052 = vmatprep.mubr.bf16.mxu0 %v960
        %3053 = vmatmul.mubr.bf16.gmra.mrb[0].mxu0 %v959
        %v3054 = vpop.f32.mrb[0].mxu0
        %v3055 = vadd.f32 %v2990, %v3054
        %v3056 = vpop.f32.mrb[0].mxu0
        %v3057 = vpop.f32.mrb[0].mxu0
        %v3058 = vadd.f32 %v2993, %v3057
        %v3059 = vpop.f32.mrb[0].mxu0
        %3060 = vmatprep.mubr.bf16.mxu0 %v966
        %3061 = vmatmul.mubr.bf16.gmra.mrb[0].mxu0 %v983
        %v3062 = vpop.f32.mrb[0].mxu0
        %v3063 = vadd.f32 %v2998, %v3062
        %v3064 = vpop.f32.mrb[0].mxu0
        %v3065 = vpop.f32.mrb[0].mxu0
        %v3066 = vadd.f32 %v3001, %v3065
        %v3067 = vpop.f32.mrb[0].mxu0
        %3068 = vmatprep.mubr.bf16.mxu0 %v987
        %3069 = vmatmul.mubr.bf16.gmra.mrb[0].mxu0 %v1001
        %v3070 = vpop.f32.mrb[0].mxu0
        %v3071 = vadd.f32 %v3006, %v3070
        %v3072 = vpop.f32.mrb[0].mxu0
        %v3073 = vpop.f32.mrb[0].mxu0
        %v3074 = vadd.f32 %v3009, %v3073
        %v3075 = vpop.f32.mrb[0].mxu0
        %3076 = vmatprep.mubr.bf16.mxu0 %v1005
        %3077 = vmatmul.mubr.bf16.gmra.mrb[0].mxu0 %v1019
        %v3078 = vpop.f32.mrb[0].mxu0
        %v3079 = vadd.f32 %v3014, %v3078
        %v3080 = vpop.f32.mrb[0].mxu0
        %v3081 = vpop.f32.mrb[0].mxu0
        %v3082 = vadd.f32 %v3017, %v3081
        %v3083 = vpop.f32.mrb[0].mxu0
        %3084 = vdwg.mxu0
        %3085 = vmatprep.subr.bf16.mxu0 0
        %3086 = vmatpush1.bf16.msra.mxu0 %v2408
        %3087 = vmatprep.subr.bf16.mxu0 0
        %3088 = vmatpush1.bf16.msra.mxu0 %v2409
        %3089 = vmatprep.subr.bf16.mxu0 0
        %3090 = vmatpush1.bf16.msra.mxu0 %v2410
        %3091 = vmatprep.subr.bf16.mxu0 0
        %3092 = vmatpush1.bf16.msra.mxu0 %v2411
        %3093 = vmatprep.subr.bf16.mxu0 0
        %3094 = vmatpush1.bf16.msra.mxu0 %v2412
        %3095 = vmatprep.subr.bf16.mxu0 0
        %3096 = vmatpush1.bf16.msra.mxu0 %v2413
        %3097 = vmatprep.subr.bf16.mxu0 0
        %3098 = vmatpush1.bf16.msra.mxu0 %v2414
        %3099 = vmatprep.subr.bf16.mxu0 0
        %3100 = vmatpush1.bf16.msra.mxu0 %v2415
        %3101 = vmatprep.subr.bf16.mxu0 0
        %3102 = vmatpush1.bf16.msra.mxu0 %v2416
        %3103 = vmatprep.subr.bf16.mxu0 0
        %3104 = vmatpush1.bf16.msra.mxu0 %v2417
        %3105 = vmatprep.subr.bf16.mxu0 0
        %3106 = vmatpush1.bf16.msra.mxu0 %v2418
        %3107 = vmatprep.subr.bf16.mxu0 0
        %3108 = vmatpush1.bf16.msra.mxu0 %v2419
        %3109 = vmatprep.subr.bf16.mxu0 0
        %3110 = vmatpush1.bf16.msra.mxu0 %v2420
        %3111 = vmatprep.subr.bf16.mxu0 0
        %3112 = vmatpush1.bf16.msra.mxu0 %v2421
        %3113 = vmatprep.subr.bf16.mxu0 0
        %3114 = vmatpush1.bf16.msra.mxu0 %v2422
        %3115 = vmatprep.subr.bf16.mxu0 0
        %3116 = vmatpush1.bf16.msra.mxu0 %v2423
        %3117 = vmatprep.mubr.bf16.mxu0 %v962
        %3118 = vmatmul.mubr.bf16.gmra.mrb[0].mxu0 %v961
        %v3119 = vpop.f32.mrb[0].mxu0
        %v3120 = vadd.f32 %v3055, %v3119
        %v3121 = vpop.f32.mrb[0].mxu0
        %v3122 = vpop.f32.mrb[0].mxu0
        %v3123 = vadd.f32 %v3058, %v3122
        %v3124 = vpop.f32.mrb[0].mxu0
        %3125 = vmatprep.mubr.bf16.mxu0 %v968
        %3126 = vmatmul.mubr.bf16.gmra.mrb[0].mxu0 %v967
        %v3127 = vpop.f32.mrb[0].mxu0
        %v3128 = vadd.f32 %v3063, %v3127
        %v3129 = vpop.f32.mrb[0].mxu0
        %v3130 = vpop.f32.mrb[0].mxu0
        %v3131 = vadd.f32 %v3066, %v3130
        %v3132 = vpop.f32.mrb[0].mxu0
        %3133 = vmatprep.mubr.bf16.mxu0 %v989
        %3134 = vmatmul.mubr.bf16.gmra.mrb[0].mxu0 %v988
        %v3135 = vpop.f32.mrb[0].mxu0
        %v3136 = vadd.f32 %v3071, %v3135
        %v3137 = vpop.f32.mrb[0].mxu0
        %v3138 = vpop.f32.mrb[0].mxu0
        %v3139 = vadd.f32 %v3074, %v3138
        %v3140 = vpop.f32.mrb[0].mxu0
        %3141 = vmatprep.mubr.bf16.mxu0 %v1007
        %3142 = vmatmul.mubr.bf16.gmra.mrb[0].mxu0 %v1006
        %v3143 = vpop.f32.mrb[0].mxu0
        %v3144 = vadd.f32 %v3079, %v3143
        %v3145 = vpop.f32.mrb[0].mxu0
        %v3146 = vpop.f32.mrb[0].mxu0
        %v3147 = vadd.f32 %v3082, %v3146
        %v3148 = vpop.f32.mrb[0].mxu0
        %3149 = vdwg.mxu0
        %3150 = vmatprep.subr.bf16.mxu0 0
        %3151 = vmatpush1.bf16.msra.mxu0 %v2424
        %3152 = vmatprep.subr.bf16.mxu0 0
        %3153 = vmatpush1.bf16.msra.mxu0 %v2425
        %3154 = vmatprep.subr.bf16.mxu0 0
        %3155 = vmatpush1.bf16.msra.mxu0 %v2426
        %3156 = vmatprep.subr.bf16.mxu0 0
        %3157 = vmatpush1.bf16.msra.mxu0 %v2427
        %3158 = vmatprep.subr.bf16.mxu0 0
        %3159 = vmatpush1.bf16.msra.mxu0 %v2428
        %3160 = vmatprep.subr.bf16.mxu0 0
        %3161 = vmatpush1.bf16.msra.mxu0 %v2429
        %3162 = vmatprep.subr.bf16.mxu0 0
        %3163 = vmatpush1.bf16.msra.mxu0 %v2430
        %3164 = vmatprep.subr.bf16.mxu0 0
        %3165 = vmatpush1.bf16.msra.mxu0 %v2431
        %3166 = vmatprep.subr.bf16.mxu0 0
        %3167 = vmatpush1.bf16.msra.mxu0 %v2432
        %3168 = vmatprep.subr.bf16.mxu0 0
        %3169 = vmatpush1.bf16.msra.mxu0 %v2433
        %3170 = vmatprep.subr.bf16.mxu0 0
        %3171 = vmatpush1.bf16.msra.mxu0 %v2434
        %3172 = vmatprep.subr.bf16.mxu0 0
        %3173 = vmatpush1.bf16.msra.mxu0 %v2435
        %3174 = vmatprep.subr.bf16.mxu0 0
        %3175 = vmatpush1.bf16.msra.mxu0 %v2436
        %3176 = vmatprep.subr.bf16.mxu0 0
        %3177 = vmatpush1.bf16.msra.mxu0 %v2437
        %3178 = vmatprep.subr.bf16.mxu0 0
        %3179 = vmatpush1.bf16.msra.mxu0 %v2438
        %3180 = vmatprep.subr.bf16.mxu0 0
        %3181 = vmatpush1.bf16.msra.mxu0 %v2439
        %3182 = vmatprep.mubr.bf16.mxu0 %v964
        %3183 = vmatmul.mubr.bf16.gmra.mrb[0].mxu0 %v963
        %v3184 = vpop.f32.mrb[0].mxu0
        %v3185 = vadd.f32 %v3120, %v3184
        %v3186 = vpop.f32.mrb[0].mxu0
        %v3187 = vpop.f32.mrb[0].mxu0
        %v3188 = vadd.f32 %v3123, %v3187
        %v3189 = vpop.f32.mrb[0].mxu0
        %3190 = vmatprep.mubr.bf16.mxu0 %v985
        %3191 = vmatmul.mubr.bf16.gmra.mrb[0].mxu0 %v984
        %v3192 = vpop.f32.mrb[0].mxu0
        %v3193 = vadd.f32 %v3128, %v3192
        %v3194 = vpop.f32.mrb[0].mxu0
        %v3195 = vpop.f32.mrb[0].mxu0
        %v3196 = vadd.f32 %v3131, %v3195
        %v3197 = vpop.f32.mrb[0].mxu0
        %3198 = vmatprep.mubr.bf16.mxu0 %v1003
        %3199 = vmatmul.mubr.bf16.gmra.mrb[0].mxu0 %v1002
        %v3200 = vpop.f32.mrb[0].mxu0
        %v3201 = vadd.f32 %v3136, %v3200
        %v3202 = vpop.f32.mrb[0].mxu0
        %v3203 = vpop.f32.mrb[0].mxu0
        %v3204 = vadd.f32 %v3139, %v3203
        %v3205 = vpop.f32.mrb[0].mxu0
        %3206 = vmatprep.mubr.bf16.mxu0 %v1021
        %3207 = vmatmul.mubr.bf16.gmra.mrb[0].mxu0 %v1020
        %v3208 = vpop.f32.mrb[0].mxu0
        %v3209 = vadd.f32 %v3144, %v3208
        %v3210 = vpop.f32.mrb[0].mxu0
        %v3211 = vpop.f32.mrb[0].mxu0
        %v3212 = vadd.f32 %v3147, %v3211
        %v3213 = vpop.f32.mrb[0].mxu0
        %3214 = vdwg.mxu0
        %3215 = vmatprep.subr.bf16.mxu0 0
        %3216 = vmatpush1.bf16.msra.mxu0 %v2440
        %3217 = vmatprep.subr.bf16.mxu0 0
        %3218 = vmatpush1.bf16.msra.mxu0 %v2441
        %3219 = vmatprep.subr.bf16.mxu0 0
        %3220 = vmatpush1.bf16.msra.mxu0 %v2442
        %3221 = vmatprep.subr.bf16.mxu0 0
        %3222 = vmatpush1.bf16.msra.mxu0 %v2443
        %3223 = vmatprep.subr.bf16.mxu0 0
        %3224 = vmatpush1.bf16.msra.mxu0 %v2444
        %3225 = vmatprep.subr.bf16.mxu0 0
        %3226 = vmatpush1.bf16.msra.mxu0 %v2445
        %3227 = vmatprep.subr.bf16.mxu0 0
        %3228 = vmatpush1.bf16.msra.mxu0 %v2446
        %3229 = vmatprep.subr.bf16.mxu0 0
        %3230 = vmatpush1.bf16.msra.mxu0 %v2447
        %3231 = vmatprep.subr.bf16.mxu0 0
        %3232 = vmatpush1.bf16.msra.mxu0 %v2448
        %3233 = vmatprep.subr.bf16.mxu0 0
        %3234 = vmatpush1.bf16.msra.mxu0 %v2449
        %3235 = vmatprep.subr.bf16.mxu0 0
        %3236 = vmatpush1.bf16.msra.mxu0 %v2450
        %3237 = vmatprep.subr.bf16.mxu0 0
        %3238 = vmatpush1.bf16.msra.mxu0 %v2451
        %3239 = vmatprep.subr.bf16.mxu0 0
        %3240 = vmatpush1.bf16.msra.mxu0 %v2452
        %3241 = vmatprep.subr.bf16.mxu0 0
        %3242 = vmatpush1.bf16.msra.mxu0 %v2453
        %3243 = vmatprep.subr.bf16.mxu0 0
        %3244 = vmatpush1.bf16.msra.mxu0 %v2454
        %3245 = vmatprep.subr.bf16.mxu0 0
        %3246 = vmatpush1.bf16.msra.mxu0 %v2455
        %3247 = vmatprep.mubr.bf16.mxu0 %v966
        %3248 = vmatmul.mubr.bf16.gmra.mrb[0].mxu0 %v965
        %v3249 = vpop.f32.mrb[0].mxu0
        %v3250 = vadd.f32 %v3185, %v3249
        %v3251 = vpop.f32.mrb[0].mxu0
        %v3252 = vpop.f32.mrb[0].mxu0
        %v3253 = vadd.f32 %v3188, %v3252
        %v3254 = vpop.f32.mrb[0].mxu0
        %3255 = vmatprep.mubr.bf16.mxu0 %v987
        %3256 = vmatmul.mubr.bf16.gmra.mrb[0].mxu0 %v986
        %v3257 = vpop.f32.mrb[0].mxu0
        %v3258 = vadd.f32 %v3193, %v3257
        %v3259 = vpop.f32.mrb[0].mxu0
        %v3260 = vpop.f32.mrb[0].mxu0
        %v3261 = vadd.f32 %v3196, %v3260
        %v3262 = vpop.f32.mrb[0].mxu0
        %3263 = vmatprep.mubr.bf16.mxu0 %v1005
        %3264 = vmatmul.mubr.bf16.gmra.mrb[0].mxu0 %v1004
        %v3265 = vpop.f32.mrb[0].mxu0
        %v3266 = vadd.f32 %v3201, %v3265
        %v3267 = vpop.f32.mrb[0].mxu0
        %v3268 = vpop.f32.mrb[0].mxu0
        %v3269 = vadd.f32 %v3204, %v3268
        %v3270 = vpop.f32.mrb[0].mxu0
        %3271 = vmatprep.mubr.bf16.mxu0 %v1023
        %3272 = vmatmul.mubr.bf16.gmra.mrb[0].mxu0 %v1022
        %v3273 = vpop.f32.mrb[0].mxu0
        %v3274 = vadd.f32 %v3209, %v3273
        %v3275 = vpop.f32.mrb[0].mxu0
        %v3276 = vpop.f32.mrb[0].mxu0
        %v3277 = vadd.f32 %v3212, %v3276
        %v3278 = vpop.f32.mrb[0].mxu0
        %3279 = vdwg.mxu0
        %3280 = vmatprep.subr.bf16.mxu0 0
        %3281 = vmatpush1.bf16.msra.mxu0 %v2456
        %3282 = vmatprep.subr.bf16.mxu0 0
        %3283 = vmatpush1.bf16.msra.mxu0 %v2457
        %3284 = vmatprep.subr.bf16.mxu0 0
        %3285 = vmatpush1.bf16.msra.mxu0 %v2458
        %3286 = vmatprep.subr.bf16.mxu0 0
        %3287 = vmatpush1.bf16.msra.mxu0 %v2459
        %3288 = vmatprep.subr.bf16.mxu0 0
        %3289 = vmatpush1.bf16.msra.mxu0 %v2460
        %3290 = vmatprep.subr.bf16.mxu0 0
        %3291 = vmatpush1.bf16.msra.mxu0 %v2461
        %3292 = vmatprep.subr.bf16.mxu0 0
        %3293 = vmatpush1.bf16.msra.mxu0 %v2462
        %3294 = vmatprep.subr.bf16.mxu0 0
        %3295 = vmatpush1.bf16.msra.mxu0 %v2463
        %3296 = vmatprep.subr.bf16.mxu0 0
        %3297 = vmatpush1.bf16.msra.mxu0 %v2464
        %3298 = vmatprep.subr.bf16.mxu0 0
        %3299 = vmatpush1.bf16.msra.mxu0 %v2465
        %3300 = vmatprep.subr.bf16.mxu0 0
        %3301 = vmatpush1.bf16.msra.mxu0 %v2466
        %3302 = vmatprep.subr.bf16.mxu0 0
        %3303 = vmatpush1.bf16.msra.mxu0 %v2467
        %3304 = vmatprep.subr.bf16.mxu0 0
        %3305 = vmatpush1.bf16.msra.mxu0 %v2468
        %3306 = vmatprep.subr.bf16.mxu0 0
        %3307 = vmatpush1.bf16.msra.mxu0 %v2469
        %3308 = vmatprep.subr.bf16.mxu0 0
        %3309 = vmatpush1.bf16.msra.mxu0 %v2470
        %3310 = vmatprep.subr.bf16.mxu0 0
        %3311 = vmatpush1.bf16.msra.mxu0 %v2471
        %3312 = vmatprep.mubr.bf16.mxu0 %v968
        %3313 = vmatmul.mubr.bf16.gmra.mrb[0].mxu0 %v967
        %v3314 = vpop.f32.mrb[0].mxu0
        %v3315 = vadd.f32 %v3250, %v3314
        %v3316 = vpop.f32.mrb[0].mxu0
        %v3317 = vpop.f32.mrb[0].mxu0
        %v3318 = vadd.f32 %v3253, %v3317
        %v3319 = vpop.f32.mrb[0].mxu0
        %3320 = vmatprep.mubr.bf16.mxu0 %v989
        %3321 = vmatmul.mubr.bf16.gmra.mrb[0].mxu0 %v988
        %v3322 = vpop.f32.mrb[0].mxu0
        %v3323 = vadd.f32 %v3258, %v3322
        %v3324 = vpop.f32.mrb[0].mxu0
        %v3325 = vpop.f32.mrb[0].mxu0
        %v3326 = vadd.f32 %v3261, %v3325
        %v3327 = vpop.f32.mrb[0].mxu0
        %3328 = vmatprep.mubr.bf16.mxu0 %v1007
        %3329 = vmatmul.mubr.bf16.gmra.mrb[0].mxu0 %v1006
        %v3330 = vpop.f32.mrb[0].mxu0
        %v3331 = vadd.f32 %v3266, %v3330
        %v3332 = vpop.f32.mrb[0].mxu0
        %v3333 = vpop.f32.mrb[0].mxu0
        %v3334 = vadd.f32 %v3269, %v3333
        %v3335 = vpop.f32.mrb[0].mxu0
        %3336 = vmatprep.mubr.bf16.mxu0 %v1025
        %3337 = vmatmul.mubr.bf16.gmra.mrb[0].mxu0 %v1024
        %v3338 = vpop.f32.mrb[0].mxu0
        %v3339 = vadd.f32 %v3274, %v3338
        %v3340 = vpop.f32.mrb[0].mxu0
        %v3341 = vpop.f32.mrb[0].mxu0
        %v3342 = vadd.f32 %v3277, %v3341
        %v3343 = vpop.f32.mrb[0].mxu0
        %3344 = vdwg.mxu0
        %3345 = vmatprep.subr.bf16.mxu0 0
        %3346 = vmatpush1.bf16.msra.mxu0 %v2472
        %3347 = vmatprep.subr.bf16.mxu0 0
        %3348 = vmatpush1.bf16.msra.mxu0 %v2473
        %3349 = vmatprep.subr.bf16.mxu0 0
        %3350 = vmatpush1.bf16.msra.mxu0 %v2474
        %3351 = vmatprep.subr.bf16.mxu0 0
        %3352 = vmatpush1.bf16.msra.mxu0 %v2475
        %3353 = vmatprep.subr.bf16.mxu0 0
        %3354 = vmatpush1.bf16.msra.mxu0 %v2476
        %3355 = vmatprep.subr.bf16.mxu0 0
        %3356 = vmatpush1.bf16.msra.mxu0 %v2477
        %3357 = vmatprep.subr.bf16.mxu0 0
        %3358 = vmatpush1.bf16.msra.mxu0 %v2478
        %3359 = vmatprep.subr.bf16.mxu0 0
        %3360 = vmatpush1.bf16.msra.mxu0 %v2479
        %3361 = vmatprep.subr.bf16.mxu0 0
        %3362 = vmatpush1.bf16.msra.mxu0 %v2480
        %3363 = vmatprep.subr.bf16.mxu0 0
        %3364 = vmatpush1.bf16.msra.mxu0 %v2481
        %3365 = vmatprep.subr.bf16.mxu0 0
        %3366 = vmatpush1.bf16.msra.mxu0 %v2482
        %3367 = vmatprep.subr.bf16.mxu0 0
        %3368 = vmatpush1.bf16.msra.mxu0 %v2483
        %3369 = vmatprep.subr.bf16.mxu0 0
        %3370 = vmatpush1.bf16.msra.mxu0 %v2484
        %3371 = vmatprep.subr.bf16.mxu0 0
        %3372 = vmatpush1.bf16.msra.mxu0 %v2485
        %3373 = vmatprep.subr.bf16.mxu0 0
        %3374 = vmatpush1.bf16.msra.mxu0 %v2486
        %3375 = vmatprep.subr.bf16.mxu0 0
        %3376 = vmatpush1.bf16.msra.mxu0 %v2487
        %3377 = vmatprep.mubr.bf16.mxu0 %v970
        %3378 = vmatmul.mubr.bf16.gmra.mrb[0].mxu0 %v969
        %v3379 = vpop.f32.mrb[0].mxu0
        %v3380 = vadd.f32 %v3315, %v3379
        %v3381 = vpop.f32.mrb[0].mxu0
        %v3382 = vpop.f32.mrb[0].mxu0
        %v3383 = vadd.f32 %v3318, %v3382
        %v3384 = vpop.f32.mrb[0].mxu0
        %3385 = vmatprep.mubr.bf16.mxu0 %v976
        %3386 = vmatmul.mubr.bf16.gmra.mrb[0].mxu0 %v975
        %v3387 = vpop.f32.mrb[0].mxu0
        %v3388 = vadd.f32 %v3323, %v3387
        %v3389 = vpop.f32.mrb[0].mxu0
        %v3390 = vpop.f32.mrb[0].mxu0
        %v3391 = vadd.f32 %v3326, %v3390
        %v3392 = vpop.f32.mrb[0].mxu0
        %3393 = vmatprep.mubr.bf16.mxu0 %v994
        %3394 = vmatmul.mubr.bf16.gmra.mrb[0].mxu0 %v993
        %v3395 = vpop.f32.mrb[0].mxu0
        %v3396 = vadd.f32 %v3331, %v3395
        %v3397 = vpop.f32.mrb[0].mxu0
        %v3398 = vpop.f32.mrb[0].mxu0
        %v3399 = vadd.f32 %v3334, %v3398
        %v3400 = vpop.f32.mrb[0].mxu0
        %3401 = vmatprep.mubr.bf16.mxu0 %v1012
        %3402 = vmatmul.mubr.bf16.gmra.mrb[0].mxu0 %v1011
        %v3403 = vpop.f32.mrb[0].mxu0
        %v3404 = vadd.f32 %v3339, %v3403
        %v3405 = vpop.f32.mrb[0].mxu0
        %v3406 = vpop.f32.mrb[0].mxu0
        %v3407 = vadd.f32 %v3342, %v3406
        %v3408 = vpop.f32.mrb[0].mxu0
        %3409 = vdwg.mxu0
        %3410 = vmatprep.subr.bf16.mxu0 0
        %3411 = vmatpush1.bf16.msra.mxu0 %v2488
        %3412 = vmatprep.subr.bf16.mxu0 0
        %3413 = vmatpush1.bf16.msra.mxu0 %v2489
        %3414 = vmatprep.subr.bf16.mxu0 0
        %3415 = vmatpush1.bf16.msra.mxu0 %v2490
        %3416 = vmatprep.subr.bf16.mxu0 0
        %3417 = vmatpush1.bf16.msra.mxu0 %v2491
        %3418 = vmatprep.subr.bf16.mxu0 0
        %3419 = vmatpush1.bf16.msra.mxu0 %v2492
        %3420 = vmatprep.subr.bf16.mxu0 0
        %3421 = vmatpush1.bf16.msra.mxu0 %v2493
        %3422 = vmatprep.subr.bf16.mxu0 0
        %3423 = vmatpush1.bf16.msra.mxu0 %v2494
        %3424 = vmatprep.subr.bf16.mxu0 0
        %3425 = vmatpush1.bf16.msra.mxu0 %v2495
        %3426 = vmatprep.subr.bf16.mxu0 0
        %3427 = vmatpush1.bf16.msra.mxu0 %v2496
        %3428 = vmatprep.subr.bf16.mxu0 0
        %3429 = vmatpush1.bf16.msra.mxu0 %v2497
        %3430 = vmatprep.subr.bf16.mxu0 0
        %3431 = vmatpush1.bf16.msra.mxu0 %v2498
        %3432 = vmatprep.subr.bf16.mxu0 0
        %3433 = vmatpush1.bf16.msra.mxu0 %v2499
        %3434 = vmatprep.subr.bf16.mxu0 0
        %3435 = vmatpush1.bf16.msra.mxu0 %v2500
        %3436 = vmatprep.subr.bf16.mxu0 0
        %3437 = vmatpush1.bf16.msra.mxu0 %v2501
        %3438 = vmatprep.subr.bf16.mxu0 0
        %3439 = vmatpush1.bf16.msra.mxu0 %v2502
        %3440 = vmatprep.subr.bf16.mxu0 0
        %3441 = vmatpush1.bf16.msra.mxu0 %v2503
        %3442 = vmatprep.mubr.bf16.mxu0 %v972
        %3443 = vmatmul.mubr.bf16.gmra.mrb[0].mxu0 %v971
        %v3444 = vpop.f32.mrb[0].mxu0
        %v3445 = vadd.f32 %v3380, %v3444
        %v3446 = vpop.f32.mrb[0].mxu0
        %v3447 = vpop.f32.mrb[0].mxu0
        %v3448 = vadd.f32 %v3383, %v3447
        %v3449 = vpop.f32.mrb[0].mxu0
        %3450 = vmatprep.mubr.bf16.mxu0 %v990
        %3451 = vmatmul.mubr.bf16.gmra.mrb[0].mxu0 %v977
        %v3452 = vpop.f32.mrb[0].mxu0
        %v3453 = vadd.f32 %v3388, %v3452
        %v3454 = vpop.f32.mrb[0].mxu0
        %v3455 = vpop.f32.mrb[0].mxu0
        %v3456 = vadd.f32 %v3391, %v3455
        %v3457 = vpop.f32.mrb[0].mxu0
        %3458 = vmatprep.mubr.bf16.mxu0 %v1008
        %3459 = vmatmul.mubr.bf16.gmra.mrb[0].mxu0 %v995
        %v3460 = vpop.f32.mrb[0].mxu0
        %v3461 = vadd.f32 %v3396, %v3460
        %v3462 = vpop.f32.mrb[0].mxu0
        %v3463 = vpop.f32.mrb[0].mxu0
        %v3464 = vadd.f32 %v3399, %v3463
        %v3465 = vpop.f32.mrb[0].mxu0
        %3466 = vmatprep.mubr.bf16.mxu0 %v1026
        %3467 = vmatmul.mubr.bf16.gmra.mrb[0].mxu0 %v1013
        %v3468 = vpop.f32.mrb[0].mxu0
        %v3469 = vadd.f32 %v3404, %v3468
        %v3470 = vpop.f32.mrb[0].mxu0
        %v3471 = vpop.f32.mrb[0].mxu0
        %v3472 = vadd.f32 %v3407, %v3471
        %v3473 = vpop.f32.mrb[0].mxu0
        %3474 = vdwg.mxu0
        %3475 = vmatprep.subr.bf16.mxu0 0
        %3476 = vmatpush1.bf16.msra.mxu0 %v2504
        %3477 = vmatprep.subr.bf16.mxu0 0
        %3478 = vmatpush1.bf16.msra.mxu0 %v2505
        %3479 = vmatprep.subr.bf16.mxu0 0
        %3480 = vmatpush1.bf16.msra.mxu0 %v2506
        %3481 = vmatprep.subr.bf16.mxu0 0
        %3482 = vmatpush1.bf16.msra.mxu0 %v2507
        %3483 = vmatprep.subr.bf16.mxu0 0
        %3484 = vmatpush1.bf16.msra.mxu0 %v2508
        %3485 = vmatprep.subr.bf16.mxu0 0
        %3486 = vmatpush1.bf16.msra.mxu0 %v2509
        %3487 = vmatprep.subr.bf16.mxu0 0
        %3488 = vmatpush1.bf16.msra.mxu0 %v2510
        %3489 = vmatprep.subr.bf16.mxu0 0
        %3490 = vmatpush1.bf16.msra.mxu0 %v2511
        %3491 = vmatprep.subr.bf16.mxu0 0
        %3492 = vmatpush1.bf16.msra.mxu0 %v2512
        %3493 = vmatprep.subr.bf16.mxu0 0
        %3494 = vmatpush1.bf16.msra.mxu0 %v2513
        %3495 = vmatprep.subr.bf16.mxu0 0
        %3496 = vmatpush1.bf16.msra.mxu0 %v2514
        %3497 = vmatprep.subr.bf16.mxu0 0
        %3498 = vmatpush1.bf16.msra.mxu0 %v2515
        %3499 = vmatprep.subr.bf16.mxu0 0
        %3500 = vmatpush1.bf16.msra.mxu0 %v2516
        %3501 = vmatprep.subr.bf16.mxu0 0
        %3502 = vmatpush1.bf16.msra.mxu0 %v2517
        %3503 = vmatprep.subr.bf16.mxu0 0
        %3504 = vmatpush1.bf16.msra.mxu0 %v2518
        %3505 = vmatprep.subr.bf16.mxu0 0
        %3506 = vmatpush1.bf16.msra.mxu0 %v2519
        %3507 = vmatprep.mubr.bf16.mxu0 %v974
        %3508 = vmatmul.mubr.bf16.gmra.mrb[0].mxu0 %v973
        %v3509 = vpop.f32.mrb[0].mxu0
        %v3510 = vadd.f32 %v3445, %v3509
        %v3511 = vpop.f32.mrb[0].mxu0
        %v3512 = vpop.f32.mrb[0].mxu0
        %v3513 = vadd.f32 %v3448, %v3512
        %v3514 = vpop.f32.mrb[0].mxu0
        %3515 = vmatprep.mubr.bf16.mxu0 %v992
        %3516 = vmatmul.mubr.bf16.gmra.mrb[0].mxu0 %v991
        %v3517 = vpop.f32.mrb[0].mxu0
        %v3518 = vadd.f32 %v3453, %v3517
        %v3519 = vpop.f32.mrb[0].mxu0
        %v3520 = vpop.f32.mrb[0].mxu0
        %v3521 = vadd.f32 %v3456, %v3520
        %v3522 = vpop.f32.mrb[0].mxu0
        %3523 = vmatprep.mubr.bf16.mxu0 %v1010
        %3524 = vmatmul.mubr.bf16.gmra.mrb[0].mxu0 %v1009
        %v3525 = vpop.f32.mrb[0].mxu0
        %v3526 = vadd.f32 %v3461, %v3525
        %v3527 = vpop.f32.mrb[0].mxu0
        %v3528 = vpop.f32.mrb[0].mxu0
        %v3529 = vadd.f32 %v3464, %v3528
        %v3530 = vpop.f32.mrb[0].mxu0
        %3531 = vmatprep.mubr.bf16.mxu0 %v1028
        %3532 = vmatmul.mubr.bf16.gmra.mrb[0].mxu0 %v1027
        %v3533 = vpop.f32.mrb[0].mxu0
        %v3534 = vadd.f32 %v3469, %v3533
        %v3535 = vpop.f32.mrb[0].mxu0
        %v3536 = vpop.f32.mrb[0].mxu0
        %v3537 = vadd.f32 %v3472, %v3536
        %v3538 = vpop.f32.mrb[0].mxu0
        %3539 = vdwg.mxu0
        %3540 = vmatprep.subr.bf16.mxu0 0
        %3541 = vmatpush1.bf16.msra.mxu0 %v2520
        %3542 = vmatprep.subr.bf16.mxu0 0
        %3543 = vmatpush1.bf16.msra.mxu0 %v2521
        %3544 = vmatprep.subr.bf16.mxu0 0
        %3545 = vmatpush1.bf16.msra.mxu0 %v2522
        %3546 = vmatprep.subr.bf16.mxu0 0
        %3547 = vmatpush1.bf16.msra.mxu0 %v2523
        %3548 = vmatprep.subr.bf16.mxu0 0
        %3549 = vmatpush1.bf16.msra.mxu0 %v2524
        %3550 = vmatprep.subr.bf16.mxu0 0
        %3551 = vmatpush1.bf16.msra.mxu0 %v2525
        %3552 = vmatprep.subr.bf16.mxu0 0
        %3553 = vmatpush1.bf16.msra.mxu0 %v2526
        %3554 = vmatprep.subr.bf16.mxu0 0
        %3555 = vmatpush1.bf16.msra.mxu0 %v2527
        %3556 = vmatprep.subr.bf16.mxu0 0
        %3557 = vmatpush1.bf16.msra.mxu0 %v2528
        %3558 = vmatprep.subr.bf16.mxu0 0
        %3559 = vmatpush1.bf16.msra.mxu0 %v2529
        %3560 = vmatprep.subr.bf16.mxu0 0
        %3561 = vmatpush1.bf16.msra.mxu0 %v2530
        %3562 = vmatprep.subr.bf16.mxu0 0
        %3563 = vmatpush1.bf16.msra.mxu0 %v2531
        %3564 = vmatprep.subr.bf16.mxu0 0
        %3565 = vmatpush1.bf16.msra.mxu0 %v2532
        %3566 = vmatprep.subr.bf16.mxu0 0
        %3567 = vmatpush1.bf16.msra.mxu0 %v2533
        %3568 = vmatprep.subr.bf16.mxu0 0
        %3569 = vmatpush1.bf16.msra.mxu0 %v2534
        %3570 = vmatprep.subr.bf16.mxu0 0
        %3571 = vmatpush1.bf16.msra.mxu0 %v2535
        %3572 = vmatprep.mubr.bf16.mxu0 %v976
        %3573 = vmatmul.mubr.bf16.gmra.mrb[0].mxu0 %v975
        %v3574 = vpop.f32.mrb[0].mxu0
        %v3575 = vadd.f32 %v3510, %v3574
        %v3576 = vpop.f32.mrb[0].mxu0
        %v3577 = vpop.f32.mrb[0].mxu0
        %v3578 = vadd.f32 %v3513, %v3577
        %v3579 = vpop.f32.mrb[0].mxu0
        %3580 = vmatprep.mubr.bf16.mxu0 %v994
        %3581 = vmatmul.mubr.bf16.gmra.mrb[0].mxu0 %v993
        %v3582 = vpop.f32.mrb[0].mxu0
        %v3583 = vadd.f32 %v3518, %v3582
        %v3584 = vpop.f32.mrb[0].mxu0
        %v3585 = vpop.f32.mrb[0].mxu0
        %v3586 = vadd.f32 %v3521, %v3585
        %v3587 = vpop.f32.mrb[0].mxu0
        %3588 = vmatprep.mubr.bf16.mxu0 %v1012
        %3589 = vmatmul.mubr.bf16.gmra.mrb[0].mxu0 %v1011
        %v3590 = vpop.f32.mrb[0].mxu0
        %v3591 = vadd.f32 %v3526, %v3590
        %v3592 = vpop.f32.mrb[0].mxu0
        %v3593 = vpop.f32.mrb[0].mxu0
        %v3594 = vadd.f32 %v3529, %v3593
        %v3595 = vpop.f32.mrb[0].mxu0
        %3596 = vmatprep.mubr.bf16.mxu0 %v1030
        %3597 = vmatmul.mubr.bf16.gmra.mrb[0].mxu0 %v1029
        %v3598 = vpop.f32.mrb[0].mxu0
        %v3599 = vadd.f32 %v3534, %v3598
        %v3600 = vpop.f32.mrb[0].mxu0
        %v3601 = vpop.f32.mrb[0].mxu0
        %v3602 = vadd.f32 %v3537, %v3601
        %v3603 = vpop.f32.mrb[0].mxu0
        %3604 = vdwg.mxu0
        %3605 = vmatprep.subr.bf16.mxu0 0
        %3606 = vmatpush1.bf16.msra.mxu0 %v2536
        %3607 = vmatprep.subr.bf16.mxu0 0
        %3608 = vmatpush1.bf16.msra.mxu0 %v2537
        %3609 = vmatprep.subr.bf16.mxu0 0
        %3610 = vmatpush1.bf16.msra.mxu0 %v2538
        %3611 = vmatprep.subr.bf16.mxu0 0
        %3612 = vmatpush1.bf16.msra.mxu0 %v2539
        %3613 = vmatprep.subr.bf16.mxu0 0
        %3614 = vmatpush1.bf16.msra.mxu0 %v2540
        %3615 = vmatprep.subr.bf16.mxu0 0
        %3616 = vmatpush1.bf16.msra.mxu0 %v2541
        %3617 = vmatprep.subr.bf16.mxu0 0
        %3618 = vmatpush1.bf16.msra.mxu0 %v2542
        %3619 = vmatprep.subr.bf16.mxu0 0
        %3620 = vmatpush1.bf16.msra.mxu0 %v2543
        %3621 = vmatprep.subr.bf16.mxu0 0
        %3622 = vmatpush1.bf16.msra.mxu0 0
        %3623 = vmatprep.subr.bf16.mxu0 0
        %3624 = vmatpush1.bf16.msra.mxu0 0
        %3625 = vmatprep.subr.bf16.mxu0 0
        %3626 = vmatpush1.bf16.msra.mxu0 0
        %3627 = vmatprep.subr.bf16.mxu0 0
        %3628 = vmatpush1.bf16.msra.mxu0 0
        %3629 = vmatprep.subr.bf16.mxu0 0
        %3630 = vmatpush1.bf16.msra.mxu0 0
        %3631 = vmatprep.subr.bf16.mxu0 0
        %3632 = vmatpush1.bf16.msra.mxu0 0
        %3633 = vmatprep.subr.bf16.mxu0 0
        %3634 = vmatpush1.bf16.msra.mxu0 0
        %3635 = vmatprep.subr.bf16.mxu0 0
        %3636 = vmatpush1.bf16.msra.mxu0 0
        %3637 = vmatprep.mubr.bf16.mxu0 0
        %3638 = vmatmul.mubr.bf16.gmra.mrb[0].mxu0 %v977
        %v3639 = vpop.f32.mrb[0].mxu0
        %v3640 = vadd.f32 %v3575, %v3639
        %v3641 = vpop.f32.mrb[0].mxu0
        %v3642 = vpop.f32.mrb[0].mxu0
        %v3643 = vadd.f32 %v3578, %v3642
        %v3644 = vpop.f32.mrb[0].mxu0
        %3645 = vmatprep.mubr.bf16.mxu0 0
        %3646 = vmatmul.mubr.bf16.gmra.mrb[0].mxu0 %v995
        %v3647 = vpop.f32.mrb[0].mxu0
        %v3648 = vadd.f32 %v3583, %v3647
        %v3649 = vpop.f32.mrb[0].mxu0
        %v3650 = vpop.f32.mrb[0].mxu0
        %v3651 = vadd.f32 %v3586, %v3650
        %v3652 = vpop.f32.mrb[0].mxu0
        %3653 = vmatprep.mubr.bf16.mxu0 0
        %3654 = vmatmul.mubr.bf16.gmra.mrb[0].mxu0 %v1013
        %v3655 = vpop.f32.mrb[0].mxu0
        %v3656 = vadd.f32 %v3591, %v3655
        %v3657 = vpop.f32.mrb[0].mxu0
        %v3658 = vpop.f32.mrb[0].mxu0
        %v3659 = vadd.f32 %v3594, %v3658
        %v3660 = vpop.f32.mrb[0].mxu0
        %3661 = vmatprep.mubr.bf16.mxu0 0
        %3662 = vmatmul.mubr.bf16.gmra.mrb[0].mxu0 %v1031
        %v3663 = vpop.f32.mrb[0].mxu0
        %v3664 = vadd.f32 %v3599, %v3663
        %v3665 = vpop.f32.mrb[0].mxu0
        %v3666 = vpop.f32.mrb[0].mxu0
        %v3667 = vadd.f32 %v3602, %v3666
        %v3668 = vpop.f32.mrb[0].mxu0
        %3669 = vdwg.mxu0
        %3670 = vst [vmem:[%s446] sm:$0xff] %v3640
        %3671 = vst [vmem:[%s446 + $0x8] sm:$0xff] %v3643
        %3672 = vst [vmem:[%s446 + $0x10] sm:$0xff] %v3648
        %3673 = vst [vmem:[%s446 + $0x18] sm:$0xff] %v3651
        %3674 = vst [vmem:[%s446 + $0x20] sm:$0xff] %v3656
        %3675 = vst [vmem:[%s446 + $0x28] sm:$0xff] %v3659
        %3676 = vst [vmem:[%s446 + $0x30] sm:$0xff] %v3664
        %3677 = vst [vmem:[%s446 + $0x38] sm:$0xff] %v3667
        %v3678 = vadd.f32 %v3640, %v3643
        %v3679 = vadd.f32 %v3678, %v3648
        %v3680 = vadd.f32 %v3679, %v3651
        %v3681 = vadd.f32 %v3680, %v3656
        %v3682 = vadd.f32 %v3681, %v3659
        %v3683 = vadd.f32 %v3682, %v3664
        %v3684 = vadd.f32 %v3683, %v3667
        %v3685 = vrot.slane %v3684, 4
        %v3686 = vadd.f32 %v3684, %v3685
        %v3687 = vrot.slane %v3686, 2
        %v3688 = vadd.f32 %v3686, %v3687
        %v3689 = vrot.slane %v3688, 1
        %v3690 = vadd.f32 %v3688, %v3689
        %v3691 = vmul.f32 %v3640, %v3640
        %v3692 = vmul.f32 %v3643, %v3643
        %v3693 = vmul.f32 %v3648, %v3648
        %v3694 = vmul.f32 %v3651, %v3651
        %v3695 = vmul.f32 %v3656, %v3656
        %v3696 = vmul.f32 %v3659, %v3659
        %v3697 = vmul.f32 %v3664, %v3664
        %v3698 = vmul.f32 %v3667, %v3667
        %v3699 = vadd.f32 %v3691, %v3692
        %v3700 = vadd.f32 %v3699, %v3693
        %v3701 = vadd.f32 %v3700, %v3694
        %v3702 = vadd.f32 %v3701, %v3695
        %v3703 = vadd.f32 %v3702, %v3696
        %v3704 = vadd.f32 %v3703, %v3697
        %v3705 = vadd.f32 %v3704, %v3698
        %v3706 = vrot.slane %v3705, 4
        %v3707 = vadd.f32 %v3705, %v3706
        %v3708 = vrot.slane %v3707, 2
        %v3709 = vadd.f32 %v3707, %v3708
        %v3710 = vrot.slane %v3709, 1
        %v3711 = vadd.f32 %v3709, %v3710
        // Predicated region
        $region65: #{basic_block_forward.3} parent=43 // pred_check
          _
        $region66: #{basic_block_forward.3} parent=43 // pred_check_branch
          %3713 = sbr.rel (%p450) target = $region68
        $region67: #{basic_block_forward.3} parent=43 // pred_region
          %3714 = vst [vmem:[%s7] sm:$0x3] 0.0
        $region68: #{basic_block_forward.3} parent=43 // pred_fallthru
          _
        %v3715 = vld [vmem:[%s7] sm:$0x3]
        %vm3716 = vcmask 1040384
        %v3717 = vsel %vm3716, %v3690, %v3711
        %v3718 = vadd.f32 %v3715, %v3717
        %3719 = vst [vmem:[%s7] sm:$0x3] %v3718
        %p3720 = scmp.lt.s32.totalorder %s30, 1
        %s3721 = scalar_select %p3720, %s30, 1
        %p3722 = scmp.lt.s32.totalorder %s31, 3
        %s3723 = scalar_select %p3722, %s31, 3
        %s3724 = smul.addr %s3723, 8
        %s3725 = smul.addr %s3721, 32
        %s3726 = sadd.s32 %s3724, %s3725
        %s3727 = smul.addr %s3726, 8
        %s3728 = scalar_lea.vmem %s6, %s3727
        // Predicated region
        $region69: #{basic_block_forward.3} parent=43 // pred_check
          %p3729 = pneg %p217
        $region70: #{basic_block_forward.3} parent=43 // pred_check_branch
          %3731 = sbr.rel (%p3729) target = $region72
        $region71: #{basic_block_forward.3} parent=43 // pred_region
          _
        $region72: #{basic_block_forward.3} parent=43 // pred_fallthru
          _
        // Predicated region
        $region73: #{basic_block_forward.3} parent=43 // pred_check
          %p3732 = pneg %p238
        $region74: #{basic_block_forward.3} parent=43 // pred_check_branch
          %3734 = sbr.rel (%p3732) target = $region76
        $region75: #{basic_block_forward.3} parent=43 // pred_region
          _
        $region76: #{basic_block_forward.3} parent=43 // pred_fallthru
          _
        // Predicated region
        $region77: #{basic_block_forward.3} parent=43 // pred_check
          %p3735 = pneg %p238
        $region78: #{basic_block_forward.3} parent=43 // pred_check_branch
          %3737 = sbr.rel (%p3735) target = $region80
        $region79: #{basic_block_forward.3} parent=43 // pred_region
          _
        $region80: #{basic_block_forward.3} parent=43 // pred_fallthru
          _
      $region44: #{basic_block_forward.3} parent=5 // pred_fallthru
        _
      %p3738 = scmp.le.s32.totalorder 2, %s21
      // Predicated region
      $region81: #{basic_block_forward.3} parent=5 // pred_check
        %p3739 = pneg %p3738
      $region82: #{basic_block_forward.3} parent=5 // pred_check_branch
        %3741 = sbr.rel (%p3739) target = $region84
      $region83: #{basic_block_forward.3} parent=5 // pred_region
        %s3742 = ssub.s32 %s21, 2
        // Predicated region
        $region85: #{basic_block_forward.3} parent=83 // pred_check
          %p3743 = pneg %p223
        $region86: #{basic_block_forward.3} parent=83 // pred_check_branch
          %3745 = sbr.rel (%p3743) target = $region88
        $region87: #{basic_block_forward.3} parent=83 // pred_region
          %p3746 = scmp.lt.s32.totalorder %s32, 1
          %s3747 = scalar_select %p3746, %s32, 1
          %p3748 = scmp.lt.s32.totalorder %s33, 3
          %s3749 = scalar_select %p3748, %s33, 3
          %s3750 = smul.addr %s3749, 8
          %s3751 = smul.addr %s3747, 32
          %s3752 = sadd.s32 %s3750, %s3751
          %s3753 = smul.addr %s3752, 8
          %s3754 = scalar_lea.vmem %s6, %s3753
        $region88: #{basic_block_forward.3} parent=83 // pred_fallthru
          _
      $region84: #{basic_block_forward.3} parent=5 // pred_fallthru
        _
    $region6: #{basic_block_forward.3} parent=1 // loop_footer
      %s25 = sadd.s32 1, %s21
    $region7: #{basic_block_forward.3} parent=1 // loop_footer_branch
      %20 = sbr.rel target = $region3
    $region8: #{basic_block_forward.3} parent=1 // loop_exit
      _
    %3755 = vsyncpa [#allocation4], 1
    %s3756 = scalar_lea.sflag [#allocation4], 1
    %3757 = vsyncpa %s3756, 1
    %3758 = vsyncpa [#allocation6], 1
    %s3759 = scalar_lea.sflag [#allocation6], 1
    %3760 = vsyncpa %s3759, 1
    %3761 = vsyncpa [#allocation9], 1

</llo_original>
